<compile_context>
chip_gen: v7x
topology: tpu7x:2x2x1
jax: 0.10.0
libtpu: 0.0.40
codegen_flags: <defaults>
</compile_context>

<pallas_src>
import jax
import jax.numpy as jnp
from jax.experimental import pallas as pl
from jax.experimental.pallas import tpu as pltpu

NUM_BLOCKS = 8
FEATURE_DIM = 16
EXPANSION = 3
HIDDEN_DIM = FEATURE_DIM * EXPANSION          # 48
FOLD_DIM = 3 * HIDDEN_DIM                     # 144 = widest dx-folded conv input
RES_SCALE = 1.0


# ---------------------------------------------------------------------------
# Fused kernel: one grid step == one batch element, whole network
# ---------------------------------------------------------------------------
def _fused_kernel(disp_ref, img_ref, un_ref,
                  w_in_ref, b_in_ref, w1_ref, b1_ref, w2_ref, b2_ref,
                  w_out_ref, b_out_ref,
                  out_ref, wpad_ref, fold_ref):
    H, W = out_ref.shape[1], out_ref.shape[2]
    C, HID = FEATURE_DIM, HIDDEN_DIM
    f32 = jnp.float32

    # Re-zero only the halo strips every grid step (interiors are fully
    # rewritten before each read) -> correct when the batch axis is
    # core-sharded across TensorCores.
    fold_ref[0:1] = jnp.zeros((1, W, FOLD_DIM), f32)
    fold_ref[H + 1:H + 2] = jnp.zeros((1, W, FOLD_DIM), f32)
    wpad_ref[:, 0:1, :] = jnp.zeros((H, 1, HID), f32)
    wpad_ref[:, W + 1:W + 2, :] = jnp.zeros((H, 1, HID), f32)

    def conv3x3(a, tap, cout):
        """3x3 SAME conv of value `a` (H, W, cin); tap(dy) -> (3*cin, cout).

        dx is folded into the contraction: build one (H, W, 3*cin) slab
        [x(w-1) | x(w) | x(w+1)], store it into the H-haloed fold scratch,
        then run 3 matmuls whose LHS reads are free leading-axis dy offsets.
        """
        cin = a.shape[-1]
        k = 3 * cin
        wpad_ref[:, 1:W + 1, 0:cin] = a                 # stage for W shifts
        left = wpad_ref[:, 0:W, 0:cin]                  # x[., w-1, :] (0 at w=0)
        right = wpad_ref[:, 2:W + 2, 0:cin]             # x[., w+1, :] (0 at w=W-1)
        fold_ref[1:H + 1, :, 0:k] = jnp.concatenate([left, a, right], axis=-1)
        acc = jnp.zeros((H, W, cout), f32)
        for dy in range(3):
            acc = acc + jax.lax.dot_general(
                fold_ref[dy:dy + H, :, 0:k], tap(dy),
                dimension_numbers=(((2,), (0,)), ((), ())),
                preferred_element_type=f32)
        return acc

    disp = disp_ref[0]                                  # (H, W, 1)
    img = img_ref[0]                                    # (H, W, 3)
    un_b = jnp.broadcast_to(un_ref[0], (H, W, C))       # hoisted broadcast

    # ---- in_conv over cat([disp, img]) ----
    feat = conv3x3(jnp.concatenate([disp, img], axis=-1),
                   lambda dy: w_in_ref[dy], C) + b_in_ref[...]

    # ---- 8 residual blocks (fori_loop: bounded live ranges, small trace) ----
    def block_body(b, feat):
        f = feat * un_b                                 # feat = feat * un_map
        h = conv3x3(jnp.concatenate([disp, f], axis=-1),
                    lambda dy: w1_ref[b, dy], HID)
        h = jnp.maximum(h + b1_ref[b], 0.0)             # ReLU
        res = conv3x3(h, lambda dy: w2_ref[b, dy], C)
        return f + (res + b2_ref[b]) * RES_SCALE        # residual add

    feat = jax.lax.fori_loop(0, NUM_BLOCKS, block_body, feat)

    # ---- out_conv + residual disp add ----
    res = conv3x3(feat, lambda dy: w_out_ref[dy], 1)
    out_ref[0] = disp + res + b_out_ref[...]


# ---------------------------------------------------------------------------
# pallas_call wrapper (NHWC)
# ---------------------------------------------------------------------------
def _full_spec(shape):
    nd = len(shape)
    return pl.BlockSpec(shape, lambda n, _nd=nd: (0,) * _nd)


def _fold_w(w):
    """(3, 3, cin, cout) HWIO -> (3, 3*cin, cout); row = dx*cin + c, matching
    the [x(w-1) | x(w) | x(w+1)] channel layout of the fold slab."""
    kh, kw, cin, cout = w.shape
    return w.reshape(kh, kw * cin, cout)


def context_adjustment_nhwc(disp, img, un, params):
    """disp/un: (N,H,W,1), img: (N,H,W,3), float32.  Returns (N,H,W,1)."""
    N, H, W, _ = img.shape
    C, HID = FEATURE_DIM, HIDDEN_DIM

    w_in = _fold_w(params["in_w"])                                 # (3, 12, 16)
    w_out = _fold_w(params["out_w"])                               # (3, 48, 1)
    b_in = params["in_b"].reshape(1, C)
    b_out = params["out_b"].reshape(1, 1)
    w1s = jnp.stack([_fold_w(bp["w1"]) for bp in params["blocks"]])  # (8,3,51,48)
    b1s = jnp.stack([bp["b1"].reshape(1, HID) for bp in params["blocks"]])
    w2s = jnp.stack([_fold_w(bp["w2"]) for bp in params["blocks"]])  # (8,3,144,16)
    b2s = jnp.stack([bp["b2"].reshape(1, C) for bp in params["blocks"]])

    return pl.pallas_call(
        _fused_kernel,
        out_shape=jax.ShapeDtypeStruct((N, H, W, 1), jnp.float32),
        grid=(N,),
        in_specs=[
            pl.BlockSpec((1, H, W, 1), lambda n: (n, 0, 0, 0)),
            pl.BlockSpec((1, H, W, 3), lambda n: (n, 0, 0, 0)),
            pl.BlockSpec((1, H, W, 1), lambda n: (n, 0, 0, 0)),
            _full_spec(w_in.shape), _full_spec(b_in.shape),
            _full_spec(w1s.shape), _full_spec(b1s.shape),
            _full_spec(w2s.shape), _full_spec(b2s.shape),
            _full_spec(w_out.shape), _full_spec(b_out.shape),
        ],
        out_specs=pl.BlockSpec((1, H, W, 1), lambda n: (n, 0, 0, 0)),
        scratch_shapes=[
            pltpu.VMEM((H, W + 2, HID), jnp.float32),       # W-halo staging
            pltpu.VMEM((H + 2, W, FOLD_DIM), jnp.float32),  # dx-folded im2col
        ],
        compiler_params=pltpu.CompilerParams(
            dimension_semantics=("parallel",),
            vmem_limit_bytes=32 * 1024 * 1024),
    )(disp, img, un, w_in, b_in, w1s, b1s, w2s, b2s, w_out, b_out)


# ---------------------------------------------------------------------------
# Full forward (NCHW in / NCHW out, like the PyTorch module)
# ---------------------------------------------------------------------------
@jax.jit
def context_adjustment_forward(disp_raw, img, un_map, params):
    """disp_raw: (N,1,H,W), img: (N,3,H,W), un_map: (N,1,H,W) -> (N,1,H,W)."""
    N, _, H, W = img.shape
    disp = disp_raw.reshape(N, H, W, 1)        # free (size-1 channel move)
    un = un_map.reshape(N, H, W, 1)            # free
    img_ = jnp.transpose(img, (0, 2, 3, 1))    # the only real transpose
    out = context_adjustment_nhwc(disp, img_, un, params)
    return out.reshape(N, 1, H, W)             # free


# ---------------------------------------------------------------------------
# Pure-JAX reference (for correctness check)
# ---------------------------------------------------------------------------
def _conv_ref(x, w, b):
    out = jax.lax.conv_general_dilated(
        x, w, window_strides=(1, 1), padding="SAME",
        dimension_numbers=("NHWC", "HWIO", "NHWC"))
    return out + b.reshape(1, 1, 1, -1)


def forward_ref(disp_raw, img, un_map, params):
    N, _, H, W = img.shape
    disp = disp_raw.reshape(N, H, W, 1)
    un = un_map.reshape(N, H, W, 1)
    img_ = jnp.transpose(img, (0, 2, 3, 1))
    feat = _conv_ref(jnp.concatenate([disp, img_], -1),
                     params["in_w"], params["in_b"])
    for bp in params["blocks"]:
        f = feat * un
        h = jax.nn.relu(_conv_ref(jnp.concatenate([disp, f], -1),
                                  bp["w1"], bp["b1"]))
        feat = f + _conv_ref(h, bp["w2"], bp["b2"]) * RES_SCALE
    res = _conv_ref(feat, params["out_w"], params["out_b"])
    return (disp + res).reshape(N, 1, H, W)


# ---------------------------------------------------------------------------
# Deterministic parameter init (synthetic; matches nn.Conv2d shapes, HWIO)
# ---------------------------------------------------------------------------
def init_params(key):
    def conv_init(k, cin, cout):
        kw, kb = jax.random.split(k)
        scale = 1.0 / jnp.sqrt(9.0 * cin)
        w = jax.random.normal(kw, (3, 3, cin, cout), jnp.float32) * scale
        b = jax.random.normal(kb, (cout,), jnp.float32) * 0.01
        return w, b

    keys = jax.random.split(key, 2 + 2 * NUM_BLOCKS)
    in_w, in_b = conv_init(keys[0], 4, FEATURE_DIM)
    out_w, out_b = conv_init(keys[1], FEATURE_DIM, 1)
    blocks = []
    for i in range(NUM_BLOCKS):
        w1, b1 = conv_init(keys[2 + 2 * i], FEATURE_DIM + 1, HIDDEN_DIM)
        w2, b2 = conv_init(keys[3 + 2 * i], HIDDEN_DIM, FEATURE_DIM)
        blocks.append({"w1": w1, "b1": b1, "w2": w2, "b2": b2})
    return {"in_w": in_w, "in_b": in_b, "out_w": out_w, "out_b": out_b,
            "blocks": blocks}


if __name__ == "__main__":
    key = jax.random.PRNGKey(0)
    k_p, k_d, k_i, k_u = jax.random.split(key, 4)
    N, H, W = 2, 16, 16
    disp_raw = jax.random.normal(k_d, (N, 1, H, W), jnp.float32)
    img = jax.random.normal(k_i, (N, 3, H, W), jnp.float32)
    un_map = jax.nn.sigmoid(jax.random.normal(k_u, (N, 1, H, W), jnp.float32))
    params = init_params(k_p)

    out = context_adjustment_forward(disp_raw, img, un_map, params)
    out = jax.block_until_ready(out)

    ref = forward_ref(disp_raw, img, un_map, params)
    assert out.shape == (N, 1, H, W), out.shape
    max_err = float(jnp.max(jnp.abs(out - ref)))
    assert jnp.allclose(out, ref, atol=2e-4, rtol=2e-4), max_err
    print("KERNEL_OK")
</pallas_src>

<mosaic_0001>
module attributes {stable_mosaic.version = 11 : i64} {
  func.func @_fused_kernel(%arg0: i32, %arg1: memref<1x16x16x1xf32, #tpu.memory_space<vmem>>, %arg2: memref<1x16x16x3xf32, #tpu.memory_space<vmem>>, %arg3: memref<1x16x16x1xf32, #tpu.memory_space<vmem>>, %arg4: memref<3x12x16xf32, #tpu.memory_space<vmem>>, %arg5: memref<1x16xf32, #tpu.memory_space<vmem>>, %arg6: memref<8x3x51x48xf32, #tpu.memory_space<vmem>>, %arg7: memref<8x1x48xf32, #tpu.memory_space<vmem>>, %arg8: memref<8x3x144x16xf32, #tpu.memory_space<vmem>>, %arg9: memref<8x1x16xf32, #tpu.memory_space<vmem>>, %arg10: memref<3x48x1xf32, #tpu.memory_space<vmem>>, %arg11: memref<1x1xf32, #tpu.memory_space<vmem>>, %arg12: memref<1x16x16x1xf32, #tpu.memory_space<vmem>>, %arg13: memref<16x18x48xf32, #tpu.memory_space<vmem>>, %arg14: memref<18x16x144xf32, #tpu.memory_space<vmem>>) attributes {dimension_semantics = [#tpu.dimension_semantics<parallel>], iteration_bounds = array<i64: 2>, scalar_prefetch = 0 : i64, scratch_operands = 2 : i64, tpu.core_type = #tpu.core_type<tc>, window_params = [{transform_indices = @transform_0, window_bounds = array<i64: 1, 16, 16, 1>}, {transform_indices = @transform_1, window_bounds = array<i64: 1, 16, 16, 3>}, {transform_indices = @transform_2, window_bounds = array<i64: 1, 16, 16, 1>}, {pipeline_mode = #tpu.pipeline_mode<synchronous>, transform_indices = @transform_3, window_bounds = array<i64: 3, 12, 16>}, {pipeline_mode = #tpu.pipeline_mode<synchronous>, transform_indices = @transform_4, window_bounds = array<i64: 1, 16>}, {pipeline_mode = #tpu.pipeline_mode<synchronous>, transform_indices = @transform_5, window_bounds = array<i64: 8, 3, 51, 48>}, {pipeline_mode = #tpu.pipeline_mode<synchronous>, transform_indices = @transform_6, window_bounds = array<i64: 8, 1, 48>}, {pipeline_mode = #tpu.pipeline_mode<synchronous>, transform_indices = @transform_7, window_bounds = array<i64: 8, 3, 144, 16>}, {pipeline_mode = #tpu.pipeline_mode<synchronous>, transform_indices = @transform_8, window_bounds = array<i64: 8, 1, 16>}, {pipeline_mode = #tpu.pipeline_mode<synchronous>, transform_indices = @transform_9, window_bounds = array<i64: 3, 48, 1>}, {pipeline_mode = #tpu.pipeline_mode<synchronous>, transform_indices = @transform_10, window_bounds = array<i64: 1, 1>}, {transform_indices = @transform_11, window_bounds = array<i64: 1, 16, 16, 1>}]} {
    %cst = arith.constant 0.000000e+00 : f32
    %0 = vector.broadcast %cst : f32 to vector<1x16x144xf32>
    %c0 = arith.constant 0 : index
    %c0_0 = arith.constant 0 : index
    %c0_1 = arith.constant 0 : index
    %1 = vector.load %arg14[%c0, %c0_0, %c0_1] : memref<18x16x144xf32, #tpu.memory_space<vmem>>, vector<1x16x144xf32>
    tpu.vector_store %arg14[%c0, %c0_0, %c0_1], %0 {strides = array<i32>} : memref<18x16x144xf32, #tpu.memory_space<vmem>>, vector<1x16x144xf32>,
    %cst_2 = arith.constant 0.000000e+00 : f32
    %2 = vector.broadcast %cst_2 : f32 to vector<1x16x144xf32>
    %c17 = arith.constant 17 : index
    %c0_3 = arith.constant 0 : index
    %c0_4 = arith.constant 0 : index
    %3 = vector.load %arg14[%c17, %c0_3, %c0_4] : memref<18x16x144xf32, #tpu.memory_space<vmem>>, vector<1x16x144xf32>
    tpu.vector_store %arg14[%c17, %c0_3, %c0_4], %2 {strides = array<i32>} : memref<18x16x144xf32, #tpu.memory_space<vmem>>, vector<1x16x144xf32>,
    %cst_5 = arith.constant 0.000000e+00 : f32
    %4 = vector.broadcast %cst_5 : f32 to vector<16x1x48xf32>
    %c0_6 = arith.constant 0 : index
    %c0_7 = arith.constant 0 : index
    %c0_8 = arith.constant 0 : index
    %5 = vector.load %arg13[%c0_6, %c0_7, %c0_8] : memref<16x18x48xf32, #tpu.memory_space<vmem>>, vector<16x1x48xf32>
    tpu.vector_store %arg13[%c0_6, %c0_7, %c0_8], %4 {strides = array<i32>} : memref<16x18x48xf32, #tpu.memory_space<vmem>>, vector<16x1x48xf32>,
    %cst_9 = arith.constant 0.000000e+00 : f32
    %6 = vector.broadcast %cst_9 : f32 to vector<16x1x48xf32>
    %c0_10 = arith.constant 0 : index
    %c17_11 = arith.constant 17 : index
    %c0_12 = arith.constant 0 : index
    %7 = vector.load %arg13[%c0_10, %c17_11, %c0_12] : memref<16x18x48xf32, #tpu.memory_space<vmem>>, vector<16x1x48xf32>
    tpu.vector_store %arg13[%c0_10, %c17_11, %c0_12], %6 {strides = array<i32>} : memref<16x18x48xf32, #tpu.memory_space<vmem>>, vector<16x1x48xf32>,
    %c0_13 = arith.constant 0 : index
    %c0_14 = arith.constant 0 : index
    %c0_15 = arith.constant 0 : index
    %c0_16 = arith.constant 0 : index
    %8 = vector.load %arg1[%c0_13, %c0_14, %c0_15, %c0_16] : memref<1x16x16x1xf32, #tpu.memory_space<vmem>>, vector<1x16x16x1xf32>
    %9 = vector.shape_cast %8 : vector<1x16x16x1xf32> to vector<16x16x1xf32>
    %c0_17 = arith.constant 0 : index
    %c0_18 = arith.constant 0 : index
    %c0_19 = arith.constant 0 : index
    %c0_20 = arith.constant 0 : index
    %10 = vector.load %arg2[%c0_17, %c0_18, %c0_19, %c0_20] : memref<1x16x16x3xf32, #tpu.memory_space<vmem>>, vector<1x16x16x3xf32>
    %11 = vector.shape_cast %10 : vector<1x16x16x3xf32> to vector<16x16x3xf32>
    %c0_21 = arith.constant 0 : index
    %c0_22 = arith.constant 0 : index
    %c0_23 = arith.constant 0 : index
    %c0_24 = arith.constant 0 : index
    %12 = vector.load %arg3[%c0_21, %c0_22, %c0_23, %c0_24] : memref<1x16x16x1xf32, #tpu.memory_space<vmem>>, vector<1x16x16x1xf32>
    %13 = vector.shape_cast %12 : vector<1x16x16x1xf32> to vector<16x16x1xf32>
    %14 = vector.shape_cast %13 : vector<16x16x1xf32> to vector<16x16x1xf32>
    %15 = vector.broadcast %14 : vector<16x16x1xf32> to vector<16x16x16xf32>
    %16 = tpu.concatenate %9, %11 in 2 : vector<16x16x1xf32>, vector<16x16x3xf32> -> vector<16x16x4xf32>
    %c0_25 = arith.constant 0 : index
    %c1 = arith.constant 1 : index
    %c0_26 = arith.constant 0 : index
    %17 = vector.load %arg13[%c0_25, %c1, %c0_26] : memref<16x18x48xf32, #tpu.memory_space<vmem>>, vector<16x16x4xf32>
    tpu.vector_store %arg13[%c0_25, %c1, %c0_26], %16 {strides = array<i32>} : memref<16x18x48xf32, #tpu.memory_space<vmem>>, vector<16x16x4xf32>,
    %c0_27 = arith.constant 0 : index
    %c0_28 = arith.constant 0 : index
    %c0_29 = arith.constant 0 : index
    %18 = vector.load %arg13[%c0_27, %c0_28, %c0_29] : memref<16x18x48xf32, #tpu.memory_space<vmem>>, vector<16x16x4xf32>
    %c0_30 = arith.constant 0 : index
    %c2 = arith.constant 2 : index
    %c0_31 = arith.constant 0 : index
    %19 = vector.load %arg13[%c0_30, %c2, %c0_31] : memref<16x18x48xf32, #tpu.memory_space<vmem>>, vector<16x16x4xf32>
    %20 = tpu.concatenate %18, %16, %19 in 2 : vector<16x16x4xf32>, vector<16x16x4xf32>, vector<16x16x4xf32> -> vector<16x16x12xf32>
    %c1_32 = arith.constant 1 : index
    %c0_33 = arith.constant 0 : index
    %c0_34 = arith.constant 0 : index
    %21 = vector.load %arg14[%c1_32, %c0_33, %c0_34] : memref<18x16x144xf32, #tpu.memory_space<vmem>>, vector<16x16x12xf32>
    tpu.vector_store %arg14[%c1_32, %c0_33, %c0_34], %20 {strides = array<i32>} : memref<18x16x144xf32, #tpu.memory_space<vmem>>, vector<16x16x12xf32>,
    %cst_35 = arith.constant 0.000000e+00 : f32
    %22 = vector.broadcast %cst_35 : f32 to vector<16x16x16xf32>
    %c0_36 = arith.constant 0 : index
    %c0_37 = arith.constant 0 : index
    %c0_38 = arith.constant 0 : index
    %23 = vector.load %arg14[%c0_36, %c0_37, %c0_38] : memref<18x16x144xf32, #tpu.memory_space<vmem>>, vector<16x16x12xf32>
    %c0_39 = arith.constant 0 : index
    %c0_40 = arith.constant 0 : index
    %c0_41 = arith.constant 0 : index
    %24 = vector.load %arg4[%c0_39, %c0_40, %c0_41] : memref<3x12x16xf32, #tpu.memory_space<vmem>>, vector<1x12x16xf32>
    %25 = vector.shape_cast %24 : vector<1x12x16xf32> to vector<12x16xf32>
    %cst_42 = arith.constant dense<0.000000e+00> : vector<16x16x16xf32>
    %26 = tpu.matmul %23, %25, %cst_42 {dimension_numbers = #tpu.dot_dimension_numbers<[2], [0], [0, 1], [1], [0, 0, 0, 1, 1, 1], [], []>} : vector<16x16x12xf32>, vector<12x16xf32>, vector<16x16x16xf32> -> vector<16x16x16xf32>
    %27 = arith.addf %22, %26 : vector<16x16x16xf32>
    %c1_43 = arith.constant 1 : index
    %c0_44 = arith.constant 0 : index
    %c0_45 = arith.constant 0 : index
    %28 = vector.load %arg14[%c1_43, %c0_44, %c0_45] : memref<18x16x144xf32, #tpu.memory_space<vmem>>, vector<16x16x12xf32>
    %c1_46 = arith.constant 1 : index
    %c0_47 = arith.constant 0 : index
    %c0_48 = arith.constant 0 : index
    %29 = vector.load %arg4[%c1_46, %c0_47, %c0_48] : memref<3x12x16xf32, #tpu.memory_space<vmem>>, vector<1x12x16xf32>
    %30 = vector.shape_cast %29 : vector<1x12x16xf32> to vector<12x16xf32>
    %cst_49 = arith.constant dense<0.000000e+00> : vector<16x16x16xf32>
    %31 = tpu.matmul %28, %30, %cst_49 {dimension_numbers = #tpu.dot_dimension_numbers<[2], [0], [0, 1], [1], [0, 0, 0, 1, 1, 1], [], []>} : vector<16x16x12xf32>, vector<12x16xf32>, vector<16x16x16xf32> -> vector<16x16x16xf32>
    %32 = arith.addf %27, %31 : vector<16x16x16xf32>
    %c2_50 = arith.constant 2 : index
    %c0_51 = arith.constant 0 : index
    %c0_52 = arith.constant 0 : index
    %33 = vector.load %arg14[%c2_50, %c0_51, %c0_52] : memref<18x16x144xf32, #tpu.memory_space<vmem>>, vector<16x16x12xf32>
    %c2_53 = arith.constant 2 : index
    %c0_54 = arith.constant 0 : index
    %c0_55 = arith.constant 0 : index
    %34 = vector.load %arg4[%c2_53, %c0_54, %c0_55] : memref<3x12x16xf32, #tpu.memory_space<vmem>>, vector<1x12x16xf32>
    %35 = vector.shape_cast %34 : vector<1x12x16xf32> to vector<12x16xf32>
    %cst_56 = arith.constant dense<0.000000e+00> : vector<16x16x16xf32>
    %36 = tpu.matmul %33, %35, %cst_56 {dimension_numbers = #tpu.dot_dimension_numbers<[2], [0], [0, 1], [1], [0, 0, 0, 1, 1, 1], [], []>} : vector<16x16x12xf32>, vector<12x16xf32>, vector<16x16x16xf32> -> vector<16x16x16xf32>
    %37 = arith.addf %32, %36 : vector<16x16x16xf32>
    %c0_57 = arith.constant 0 : index
    %c0_58 = arith.constant 0 : index
    %38 = vector.load %arg5[%c0_57, %c0_58] : memref<1x16xf32, #tpu.memory_space<vmem>>, vector<1x16xf32>
    %39 = vector.shape_cast %38 : vector<1x16xf32> to vector<1x1x16xf32>
    %40 = vector.broadcast %39 : vector<1x1x16xf32> to vector<16x16x16xf32>
    %41 = arith.addf %37, %40 : vector<16x16x16xf32>
    %c0_i32 = arith.constant 0 : i32
    %c8_i32 = arith.constant 8 : i32
    %42 = arith.addi %c0_i32, %c8_i32 : i32
    %c1_i32 = arith.constant 1 : i32
    %43 = scf.for %arg15 = %c0_i32 to %42 step %c1_i32 iter_args(%arg16 = %41) -> (vector<16x16x16xf32>)  : i32 {
      %73 = arith.mulf %arg16, %15 : vector<16x16x16xf32>
      %74 = tpu.concatenate %9, %73 in 2 : vector<16x16x1xf32>, vector<16x16x16xf32> -> vector<16x16x17xf32>
      %c0_100 = arith.constant 0 : index
      %c1_101 = arith.constant 1 : index
      %c0_102 = arith.constant 0 : index
      %75 = vector.load %arg13[%c0_100, %c1_101, %c0_102] : memref<16x18x48xf32, #tpu.memory_space<vmem>>, vector<16x16x17xf32>
      tpu.vector_store %arg13[%c0_100, %c1_101, %c0_102], %74 {strides = array<i32>} : memref<16x18x48xf32, #tpu.memory_space<vmem>>, vector<16x16x17xf32>,
      %c0_103 = arith.constant 0 : index
      %c0_104 = arith.constant 0 : index
      %c0_105 = arith.constant 0 : index
      %76 = vector.load %arg13[%c0_103, %c0_104, %c0_105] : memref<16x18x48xf32, #tpu.memory_space<vmem>>, vector<16x16x17xf32>
      %c0_106 = arith.constant 0 : index
      %c2_107 = arith.constant 2 : index
      %c0_108 = arith.constant 0 : index
      %77 = vector.load %arg13[%c0_106, %c2_107, %c0_108] : memref<16x18x48xf32, #tpu.memory_space<vmem>>, vector<16x16x17xf32>
      %78 = tpu.concatenate %76, %74, %77 in 2 : vector<16x16x17xf32>, vector<16x16x17xf32>, vector<16x16x17xf32> -> vector<16x16x51xf32>
      %c1_109 = arith.constant 1 : index
      %c0_110 = arith.constant 0 : index
      %c0_111 = arith.constant 0 : index
      %79 = vector.load %arg14[%c1_109, %c0_110, %c0_111] : memref<18x16x144xf32, #tpu.memory_space<vmem>>, vector<16x16x51xf32>
      tpu.vector_store %arg14[%c1_109, %c0_110, %c0_111], %78 {strides = array<i32>} : memref<18x16x144xf32, #tpu.memory_space<vmem>>, vector<16x16x51xf32>,
      %cst_112 = arith.constant 0.000000e+00 : f32
      %80 = vector.broadcast %cst_112 : f32 to vector<16x16x48xf32>
      %c0_113 = arith.constant 0 : index
      %c0_114 = arith.constant 0 : index
      %c0_115 = arith.constant 0 : index
      %81 = vector.load %arg14[%c0_113, %c0_114, %c0_115] : memref<18x16x144xf32, #tpu.memory_space<vmem>>, vector<16x16x51xf32>
      %82 = arith.index_cast %arg15 : i32 to index
      %c0_116 = arith.constant 0 : index
      %c0_117 = arith.constant 0 : index
      %c0_118 = arith.constant 0 : index
      %83 = vector.load %arg6[%82, %c0_116, %c0_117, %c0_118] : memref<8x3x51x48xf32, #tpu.memory_space<vmem>>, vector<1x1x51x48xf32>
      %84 = vector.shape_cast %83 : vector<1x1x51x48xf32> to vector<51x48xf32>
      %cst_119 = arith.constant dense<0.000000e+00> : vector<16x16x48xf32>
      %85 = tpu.matmul %81, %84, %cst_119 {dimension_numbers = #tpu.dot_dimension_numbers<[2], [0], [0, 1], [1], [0, 0, 0, 1, 1, 1], [], []>} : vector<16x16x51xf32>, vector<51x48xf32>, vector<16x16x48xf32> -> vector<16x16x48xf32>
      %86 = arith.addf %80, %85 : vector<16x16x48xf32>
      %c1_120 = arith.constant 1 : index
      %c0_121 = arith.constant 0 : index
      %c0_122 = arith.constant 0 : index
      %87 = vector.load %arg14[%c1_120, %c0_121, %c0_122] : memref<18x16x144xf32, #tpu.memory_space<vmem>>, vector<16x16x51xf32>
      %88 = arith.index_cast %arg15 : i32 to index
      %c1_123 = arith.constant 1 : index
      %c0_124 = arith.constant 0 : index
      %c0_125 = arith.constant 0 : index
      %89 = vector.load %arg6[%88, %c1_123, %c0_124, %c0_125] : memref<8x3x51x48xf32, #tpu.memory_space<vmem>>, vector<1x1x51x48xf32>
      %90 = vector.shape_cast %89 : vector<1x1x51x48xf32> to vector<51x48xf32>
      %cst_126 = arith.constant dense<0.000000e+00> : vector<16x16x48xf32>
      %91 = tpu.matmul %87, %90, %cst_126 {dimension_numbers = #tpu.dot_dimension_numbers<[2], [0], [0, 1], [1], [0, 0, 0, 1, 1, 1], [], []>} : vector<16x16x51xf32>, vector<51x48xf32>, vector<16x16x48xf32> -> vector<16x16x48xf32>
      %92 = arith.addf %86, %91 : vector<16x16x48xf32>
      %c2_127 = arith.constant 2 : index
      %c0_128 = arith.constant 0 : index
      %c0_129 = arith.constant 0 : index
      %93 = vector.load %arg14[%c2_127, %c0_128, %c0_129] : memref<18x16x144xf32, #tpu.memory_space<vmem>>, vector<16x16x51xf32>
      %94 = arith.index_cast %arg15 : i32 to index
      %c2_130 = arith.constant 2 : index
      %c0_131 = arith.constant 0 : index
      %c0_132 = arith.constant 0 : index
      %95 = vector.load %arg6[%94, %c2_130, %c0_131, %c0_132] : memref<8x3x51x48xf32, #tpu.memory_space<vmem>>, vector<1x1x51x48xf32>
      %96 = vector.shape_cast %95 : vector<1x1x51x48xf32> to vector<51x48xf32>
      %cst_133 = arith.constant dense<0.000000e+00> : vector<16x16x48xf32>
      %97 = tpu.matmul %93, %96, %cst_133 {dimension_numbers = #tpu.dot_dimension_numbers<[2], [0], [0, 1], [1], [0, 0, 0, 1, 1, 1], [], []>} : vector<16x16x51xf32>, vector<51x48xf32>, vector<16x16x48xf32> -> vector<16x16x48xf32>
      %98 = arith.addf %92, %97 : vector<16x16x48xf32>
      %99 = arith.index_cast %arg15 : i32 to index
      %c0_134 = arith.constant 0 : index
      %c0_135 = arith.constant 0 : index
      %100 = vector.load %arg7[%99, %c0_134, %c0_135] : memref<8x1x48xf32, #tpu.memory_space<vmem>>, vector<1x1x48xf32>
      %101 = vector.shape_cast %100 : vector<1x1x48xf32> to vector<1x48xf32>
      %102 = vector.shape_cast %101 : vector<1x48xf32> to vector<1x1x48xf32>
      %103 = vector.broadcast %102 : vector<1x1x48xf32> to vector<16x16x48xf32>
      %104 = arith.addf %98, %103 : vector<16x16x48xf32>
      %cst_136 = arith.constant 0.000000e+00 : f32
      %105 = vector.broadcast %cst_136 : f32 to vector<16x16x48xf32>
      %106 = arith.maximumf %104, %105 : vector<16x16x48xf32>
      %c0_137 = arith.constant 0 : index
      %c1_138 = arith.constant 1 : index
      %c0_139 = arith.constant 0 : index
      %107 = vector.load %arg13[%c0_137, %c1_138, %c0_139] : memref<16x18x48xf32, #tpu.memory_space<vmem>>, vector<16x16x48xf32>
      tpu.vector_store %arg13[%c0_137, %c1_138, %c0_139], %106 {strides = array<i32>} : memref<16x18x48xf32, #tpu.memory_space<vmem>>, vector<16x16x48xf32>,
      %c0_140 = arith.constant 0 : index
      %c0_141 = arith.constant 0 : index
      %c0_142 = arith.constant 0 : index
      %108 = vector.load %arg13[%c0_140, %c0_141, %c0_142] : memref<16x18x48xf32, #tpu.memory_space<vmem>>, vector<16x16x48xf32>
      %c0_143 = arith.constant 0 : index
      %c2_144 = arith.constant 2 : index
      %c0_145 = arith.constant 0 : index
      %109 = vector.load %arg13[%c0_143, %c2_144, %c0_145] : memref<16x18x48xf32, #tpu.memory_space<vmem>>, vector<16x16x48xf32>
      %110 = tpu.concatenate %108, %106, %109 in 2 : vector<16x16x48xf32>, vector<16x16x48xf32>, vector<16x16x48xf32> -> vector<16x16x144xf32>
      %c1_146 = arith.constant 1 : index
      %c0_147 = arith.constant 0 : index
      %c0_148 = arith.constant 0 : index
      %111 = vector.load %arg14[%c1_146, %c0_147, %c0_148] : memref<18x16x144xf32, #tpu.memory_space<vmem>>, vector<16x16x144xf32>
      tpu.vector_store %arg14[%c1_146, %c0_147, %c0_148], %110 {strides = array<i32>} : memref<18x16x144xf32, #tpu.memory_space<vmem>>, vector<16x16x144xf32>,
      %cst_149 = arith.constant 0.000000e+00 : f32
      %112 = vector.broadcast %cst_149 : f32 to vector<16x16x16xf32>
      %c0_150 = arith.constant 0 : index
      %c0_151 = arith.constant 0 : index
      %c0_152 = arith.constant 0 : index
      %113 = vector.load %arg14[%c0_150, %c0_151, %c0_152] : memref<18x16x144xf32, #tpu.memory_space<vmem>>, vector<16x16x144xf32>
      %114 = arith.index_cast %arg15 : i32 to index
      %c0_153 = arith.constant 0 : index
      %c0_154 = arith.constant 0 : index
      %c0_155 = arith.constant 0 : index
      %115 = vector.load %arg8[%114, %c0_153, %c0_154, %c0_155] : memref<8x3x144x16xf32, #tpu.memory_space<vmem>>, vector<1x1x144x16xf32>
      %116 = vector.shape_cast %115 : vector<1x1x144x16xf32> to vector<144x16xf32>
      %cst_156 = arith.constant dense<0.000000e+00> : vector<16x16x16xf32>
      %117 = tpu.matmul %113, %116, %cst_156 {dimension_numbers = #tpu.dot_dimension_numbers<[2], [0], [0, 1], [1], [0, 0, 0, 1, 1, 1], [], []>} : vector<16x16x144xf32>, vector<144x16xf32>, vector<16x16x16xf32> -> vector<16x16x16xf32>
      %118 = arith.addf %112, %117 : vector<16x16x16xf32>
      %c1_157 = arith.constant 1 : index
      %c0_158 = arith.constant 0 : index
      %c0_159 = arith.constant 0 : index
      %119 = vector.load %arg14[%c1_157, %c0_158, %c0_159] : memref<18x16x144xf32, #tpu.memory_space<vmem>>, vector<16x16x144xf32>
      %120 = arith.index_cast %arg15 : i32 to index
      %c1_160 = arith.constant 1 : index
      %c0_161 = arith.constant 0 : index
      %c0_162 = arith.constant 0 : index
      %121 = vector.load %arg8[%120, %c1_160, %c0_161, %c0_162] : memref<8x3x144x16xf32, #tpu.memory_space<vmem>>, vector<1x1x144x16xf32>
      %122 = vector.shape_cast %121 : vector<1x1x144x16xf32> to vector<144x16xf32>
      %cst_163 = arith.constant dense<0.000000e+00> : vector<16x16x16xf32>
      %123 = tpu.matmul %119, %122, %cst_163 {dimension_numbers = #tpu.dot_dimension_numbers<[2], [0], [0, 1], [1], [0, 0, 0, 1, 1, 1], [], []>} : vector<16x16x144xf32>, vector<144x16xf32>, vector<16x16x16xf32> -> vector<16x16x16xf32>
      %124 = arith.addf %118, %123 : vector<16x16x16xf32>
      %c2_164 = arith.constant 2 : index
      %c0_165 = arith.constant 0 : index
      %c0_166 = arith.constant 0 : index
      %125 = vector.load %arg14[%c2_164, %c0_165, %c0_166] : memref<18x16x144xf32, #tpu.memory_space<vmem>>, vector<16x16x144xf32>
      %126 = arith.index_cast %arg15 : i32 to index
      %c2_167 = arith.constant 2 : index
      %c0_168 = arith.constant 0 : index
      %c0_169 = arith.constant 0 : index
      %127 = vector.load %arg8[%126, %c2_167, %c0_168, %c0_169] : memref<8x3x144x16xf32, #tpu.memory_space<vmem>>, vector<1x1x144x16xf32>
      %128 = vector.shape_cast %127 : vector<1x1x144x16xf32> to vector<144x16xf32>
      %cst_170 = arith.constant dense<0.000000e+00> : vector<16x16x16xf32>
      %129 = tpu.matmul %125, %128, %cst_170 {dimension_numbers = #tpu.dot_dimension_numbers<[2], [0], [0, 1], [1], [0, 0, 0, 1, 1, 1], [], []>} : vector<16x16x144xf32>, vector<144x16xf32>, vector<16x16x16xf32> -> vector<16x16x16xf32>
      %130 = arith.addf %124, %129 : vector<16x16x16xf32>
      %131 = arith.index_cast %arg15 : i32 to index
      %c0_171 = arith.constant 0 : index
      %c0_172 = arith.constant 0 : index
      %132 = vector.load %arg9[%131, %c0_171, %c0_172] : memref<8x1x16xf32, #tpu.memory_space<vmem>>, vector<1x1x16xf32>
      %133 = vector.shape_cast %132 : vector<1x1x16xf32> to vector<1x16xf32>
      %134 = vector.shape_cast %133 : vector<1x16xf32> to vector<1x1x16xf32>
      %135 = vector.broadcast %134 : vector<1x1x16xf32> to vector<16x16x16xf32>
      %136 = arith.addf %130, %135 : vector<16x16x16xf32>
      %cst_173 = arith.constant 1.000000e+00 : f32
      %137 = vector.broadcast %cst_173 : f32 to vector<16x16x16xf32>
      %138 = arith.mulf %136, %137 : vector<16x16x16xf32>
      %139 = arith.addf %73, %138 : vector<16x16x16xf32>
      scf.yield %139 : vector<16x16x16xf32>
    }
    %c8_i32_59 = arith.constant 8 : i32
    %c0_60 = arith.constant 0 : index
    %c1_61 = arith.constant 1 : index
    %c0_62 = arith.constant 0 : index
    %44 = vector.load %arg13[%c0_60, %c1_61, %c0_62] : memref<16x18x48xf32, #tpu.memory_space<vmem>>, vector<16x16x16xf32>
    tpu.vector_store %arg13[%c0_60, %c1_61, %c0_62], %43 {strides = array<i32>} : memref<16x18x48xf32, #tpu.memory_space<vmem>>, vector<16x16x16xf32>,
    %c0_63 = arith.constant 0 : index
    %c0_64 = arith.constant 0 : index
    %c0_65 = arith.constant 0 : index
    %45 = vector.load %arg13[%c0_63, %c0_64, %c0_65] : memref<16x18x48xf32, #tpu.memory_space<vmem>>, vector<16x16x16xf32>
    %c0_66 = arith.constant 0 : index
    %c2_67 = arith.constant 2 : index
    %c0_68 = arith.constant 0 : index
    %46 = vector.load %arg13[%c0_66, %c2_67, %c0_68] : memref<16x18x48xf32, #tpu.memory_space<vmem>>, vector<16x16x16xf32>
    %47 = tpu.concatenate %45, %43, %46 in 2 : vector<16x16x16xf32>, vector<16x16x16xf32>, vector<16x16x16xf32> -> vector<16x16x48xf32>
    %c1_69 = arith.constant 1 : index
    %c0_70 = arith.constant 0 : index
    %c0_71 = arith.constant 0 : index
    %48 = vector.load %arg14[%c1_69, %c0_70, %c0_71] : memref<18x16x144xf32, #tpu.memory_space<vmem>>, vector<16x16x48xf32>
    tpu.vector_store %arg14[%c1_69, %c0_70, %c0_71], %47 {strides = array<i32>} : memref<18x16x144xf32, #tpu.memory_space<vmem>>, vector<16x16x48xf32>,
    %cst_72 = arith.constant 0.000000e+00 : f32
    %49 = vector.broadcast %cst_72 : f32 to vector<16x16x1xf32>
    %c0_73 = arith.constant 0 : index
    %c0_74 = arith.constant 0 : index
    %c0_75 = arith.constant 0 : index
    %50 = vector.load %arg14[%c0_73, %c0_74, %c0_75] : memref<18x16x144xf32, #tpu.memory_space<vmem>>, vector<16x16x48xf32>
    %c0_76 = arith.constant 0 : index
    %c0_77 = arith.constant 0 : index
    %c0_78 = arith.constant 0 : index
    %51 = vector.load %arg10[%c0_76, %c0_77, %c0_78] : memref<3x48x1xf32, #tpu.memory_space<vmem>>, vector<1x48x1xf32>
    %52 = vector.shape_cast %51 : vector<1x48x1xf32> to vector<48x1xf32>
    %cst_79 = arith.constant dense<0.000000e+00> : vector<16x16x1xf32>
    %53 = tpu.matmul %50, %52, %cst_79 {dimension_numbers = #tpu.dot_dimension_numbers<[2], [0], [0, 1], [1], [0, 0, 0, 1, 1, 1], [], []>} : vector<16x16x48xf32>, vector<48x1xf32>, vector<16x16x1xf32> -> vector<16x16x1xf32>
    %54 = arith.addf %49, %53 : vector<16x16x1xf32>
    %c1_80 = arith.constant 1 : index
    %c0_81 = arith.constant 0 : index
    %c0_82 = arith.constant 0 : index
    %55 = vector.load %arg14[%c1_80, %c0_81, %c0_82] : memref<18x16x144xf32, #tpu.memory_space<vmem>>, vector<16x16x48xf32>
    %c1_83 = arith.constant 1 : index
    %c0_84 = arith.constant 0 : index
    %c0_85 = arith.constant 0 : index
    %56 = vector.load %arg10[%c1_83, %c0_84, %c0_85] : memref<3x48x1xf32, #tpu.memory_space<vmem>>, vector<1x48x1xf32>
    %57 = vector.shape_cast %56 : vector<1x48x1xf32> to vector<48x1xf32>
    %cst_86 = arith.constant dense<0.000000e+00> : vector<16x16x1xf32>
    %58 = tpu.matmul %55, %57, %cst_86 {dimension_numbers = #tpu.dot_dimension_numbers<[2], [0], [0, 1], [1], [0, 0, 0, 1, 1, 1], [], []>} : vector<16x16x48xf32>, vector<48x1xf32>, vector<16x16x1xf32> -> vector<16x16x1xf32>
    %59 = arith.addf %54, %58 : vector<16x16x1xf32>
    %c2_87 = arith.constant 2 : index
    %c0_88 = arith.constant 0 : index
    %c0_89 = arith.constant 0 : index
    %60 = vector.load %arg14[%c2_87, %c0_88, %c0_89] : memref<18x16x144xf32, #tpu.memory_space<vmem>>, vector<16x16x48xf32>
    %c2_90 = arith.constant 2 : index
    %c0_91 = arith.constant 0 : index
    %c0_92 = arith.constant 0 : index
    %61 = vector.load %arg10[%c2_90, %c0_91, %c0_92] : memref<3x48x1xf32, #tpu.memory_space<vmem>>, vector<1x48x1xf32>
    %62 = vector.shape_cast %61 : vector<1x48x1xf32> to vector<48x1xf32>
    %cst_93 = arith.constant dense<0.000000e+00> : vector<16x16x1xf32>
    %63 = tpu.matmul %60, %62, %cst_93 {dimension_numbers = #tpu.dot_dimension_numbers<[2], [0], [0, 1], [1], [0, 0, 0, 1, 1, 1], [], []>} : vector<16x16x48xf32>, vector<48x1xf32>, vector<16x16x1xf32> -> vector<16x16x1xf32>
    %64 = arith.addf %59, %63 : vector<16x16x1xf32>
    %65 = arith.addf %9, %64 : vector<16x16x1xf32>
    %c0_94 = arith.constant 0 : index
    %c0_95 = arith.constant 0 : index
    %66 = vector.load %arg11[%c0_94, %c0_95] : memref<1x1xf32, #tpu.memory_space<vmem>>, vector<1x1xf32>
    %67 = vector.shape_cast %66 : vector<1x1xf32> to vector<1x1x1xf32>
    %68 = vector.broadcast %67 : vector<1x1x1xf32> to vector<16x16x1xf32>
    %69 = arith.addf %65, %68 : vector<16x16x1xf32>
    %c0_96 = arith.constant 0 : index
    %c0_97 = arith.constant 0 : index
    %c0_98 = arith.constant 0 : index
    %c0_99 = arith.constant 0 : index
    %70 = vector.load %arg12[%c0_96, %c0_97, %c0_98, %c0_99] : memref<1x16x16x1xf32, #tpu.memory_space<vmem>>, vector<1x16x16x1xf32>
    %71 = vector.shape_cast %70 : vector<1x16x16x1xf32> to vector<16x16x1xf32>
    %72 = vector.shape_cast %69 : vector<16x16x1xf32> to vector<1x16x16x1xf32>
    tpu.vector_store %arg12[%c0_96, %c0_97, %c0_98, %c0_99], %72 {strides = array<i32>} : memref<1x16x16x1xf32, #tpu.memory_space<vmem>>, vector<1x16x16x1xf32>,
    return
  }
  func.func @transform_0(%arg0: i32) -> (i32, i32, i32, i32) {
    %c0_i32 = arith.constant 0 : i32
    %c0_i32_0 = arith.constant 0 : i32
    %c0_i32_1 = arith.constant 0 : i32
    %c0_i32_2 = arith.constant 0 : i32
    return %arg0, %c0_i32, %c0_i32_0, %c0_i32_1 : i32, i32, i32, i32
  }
  func.func @transform_1(%arg0: i32) -> (i32, i32, i32, i32) {
    %c0_i32 = arith.constant 0 : i32
    %c0_i32_0 = arith.constant 0 : i32
    %c0_i32_1 = arith.constant 0 : i32
    %c0_i32_2 = arith.constant 0 : i32
    return %arg0, %c0_i32, %c0_i32_0, %c0_i32_1 : i32, i32, i32, i32
  }
  func.func @transform_2(%arg0: i32) -> (i32, i32, i32, i32) {
    %c0_i32 = arith.constant 0 : i32
    %c0_i32_0 = arith.constant 0 : i32
    %c0_i32_1 = arith.constant 0 : i32
    %c0_i32_2 = arith.constant 0 : i32
    return %arg0, %c0_i32, %c0_i32_0, %c0_i32_1 : i32, i32, i32, i32
  }
  func.func @transform_3(%arg0: i32) -> (i32, i32, i32) {
    %c0_i32 = arith.constant 0 : i32
    %c0_i32_0 = arith.constant 0 : i32
    %c0_i32_1 = arith.constant 0 : i32
    %c0_i32_2 = arith.constant 0 : i32
    return %c0_i32, %c0_i32_0, %c0_i32_1 : i32, i32, i32
  }
  func.func @transform_4(%arg0: i32) -> (i32, i32) {
    %c0_i32 = arith.constant 0 : i32
    %c0_i32_0 = arith.constant 0 : i32
    %c0_i32_1 = arith.constant 0 : i32
    return %c0_i32, %c0_i32_0 : i32, i32
  }
  func.func @transform_5(%arg0: i32) -> (i32, i32, i32, i32) {
    %c0_i32 = arith.constant 0 : i32
    %c0_i32_0 = arith.constant 0 : i32
    %c0_i32_1 = arith.constant 0 : i32
    %c0_i32_2 = arith.constant 0 : i32
    %c0_i32_3 = arith.constant 0 : i32
    return %c0_i32, %c0_i32_0, %c0_i32_1, %c0_i32_2 : i32, i32, i32, i32
  }
  func.func @transform_6(%arg0: i32) -> (i32, i32, i32) {
    %c0_i32 = arith.constant 0 : i32
    %c0_i32_0 = arith.constant 0 : i32
    %c0_i32_1 = arith.constant 0 : i32
    %c0_i32_2 = arith.constant 0 : i32
    return %c0_i32, %c0_i32_0, %c0_i32_1 : i32, i32, i32
  }
  func.func @transform_7(%arg0: i32) -> (i32, i32, i32, i32) {
    %c0_i32 = arith.constant 0 : i32
    %c0_i32_0 = arith.constant 0 : i32
    %c0_i32_1 = arith.constant 0 : i32
    %c0_i32_2 = arith.constant 0 : i32
    %c0_i32_3 = arith.constant 0 : i32
    return %c0_i32, %c0_i32_0, %c0_i32_1, %c0_i32_2 : i32, i32, i32, i32
  }
  func.func @transform_8(%arg0: i32) -> (i32, i32, i32) {
    %c0_i32 = arith.constant 0 : i32
    %c0_i32_0 = arith.constant 0 : i32
    %c0_i32_1 = arith.constant 0 : i32
    %c0_i32_2 = arith.constant 0 : i32
    return %c0_i32, %c0_i32_0, %c0_i32_1 : i32, i32, i32
  }
  func.func @transform_9(%arg0: i32) -> (i32, i32, i32) {
    %c0_i32 = arith.constant 0 : i32
    %c0_i32_0 = arith.constant 0 : i32
    %c0_i32_1 = arith.constant 0 : i32
    %c0_i32_2 = arith.constant 0 : i32
    return %c0_i32, %c0_i32_0, %c0_i32_1 : i32, i32, i32
  }
  func.func @transform_10(%arg0: i32) -> (i32, i32) {
    %c0_i32 = arith.constant 0 : i32
    %c0_i32_0 = arith.constant 0 : i32
    %c0_i32_1 = arith.constant 0 : i32
    return %c0_i32, %c0_i32_0 : i32, i32
  }
  func.func @transform_11(%arg0: i32) -> (i32, i32, i32, i32) {
    %c0_i32 = arith.constant 0 : i32
    %c0_i32_0 = arith.constant 0 : i32
    %c0_i32_1 = arith.constant 0 : i32
    %c0_i32_2 = arith.constant 0 : i32
    return %arg0, %c0_i32, %c0_i32_0, %c0_i32_1 : i32, i32, i32, i32
  }
}

</mosaic_0001>

<llo_original>
// kernel: context_adjustment_forward.1
$region0: #{context_adjustment_forward.1}
  #allocation0 [shape = 'u32[]', space=smem, size = 0x4, offset = 0x4, fixed_abs, tag = 'smem constant byte address 0x4 - core index']
  #allocation1 [shape = 'u32[144,128]{1,0:T(1,128)}', space=vmem, size = 0x12000, scoped, tag = 'internal scratch']
  #allocation2 [shape = 'f32[16,18,48]{2,1,0:T(8,128)}', space=vmem, size = 0x30000, scoped, tag = 'scratch operand']
  #allocation3 [shape = 'f32[18,16,144]{2,1,0:T(8,128)}', space=vmem, size = 0x48000, scoped, tag = 'scratch operand']
  #allocation4 [shape = 'f32[1,1]{1,0:T(1,128)S(1)}', space=vmem, size = 0x200, scoped, tag = 'scoped memory for context_adjustment_forward.1']
  %s0 = inlined_call_operand.vmem [shape: f32[2,16,16,1], index: 0, kind: input, shape index: {}]
  %s1 = inlined_call_operand.vmem [shape: f32[2,16,16,3], index: 1, kind: input, shape index: {}]
  %s2 = inlined_call_operand.vmem [shape: f32[2,16,16,1], index: 2, kind: input, shape index: {}]
  %s3 = inlined_call_operand.vmem [shape: f32[3,12,16], index: 3, kind: input, shape index: {}]
  %s4 = inlined_call_operand.vmem [shape: f32[1,16], index: 4, kind: input, shape index: {}]
  %s5 = inlined_call_operand.vmem [shape: f32[8,3,51,48], index: 5, kind: input, shape index: {}]
  %s6 = inlined_call_operand.vmem [shape: f32[8,1,48], index: 6, kind: input, shape index: {}]
  %s7 = inlined_call_operand.vmem [shape: f32[8,3,144,16], index: 7, kind: input, shape index: {}]
  %s8 = inlined_call_operand.vmem [shape: f32[8,1,16], index: 8, kind: input, shape index: {}]
  %s9 = inlined_call_operand.vmem [shape: f32[3,48,1], index: 9, kind: input, shape index: {}]
  %s10 = inlined_call_operand.<no memory space> [shape: f32[1,1], index: 10, kind: input, shape index: {}]
  %s11 = inlined_call_operand.vmem [shape: f32[2,16,16,1], index: 11, kind: output, shape index: {}]
  %s12 = sld [smem:[#allocation0]]
  $region84: #{context_adjustment_forward.1} parent=0
    _
  %s14 = ssub.s32 1, %s12
  %s15 = scalar_select 0, %s14, %s12
  %v16 = vstv %s10
  %17 = vst [vmem:[#allocation4] sm:$0x1] %v16
  loop: start=0, step=1, limit=4
  $region2: #{context_adjustment_forward.1} parent=0 // loop_pre_header
    _
  $region3: #{context_adjustment_forward.1} parent=0 // loop_header
    %s19 = sphi 0, %s23
    %p20 = scmp.ge.s32.totalorder %s19, 4
    %s29 = sphi 0, %s31
    %s32 = sphi 0, %s29
    %s33 = sphi 0, %s32
    %s49 = sphi 0, %s33
    %s55 = sphi 0, %s57
    %s58 = sphi 0, %s55
    %s59 = sphi 0, %s58
    %s75 = sphi 0, %s59
    %s81 = sphi 0, %s83
    %s84 = sphi 0, %s81
    %s85 = sphi 0, %s84
    %s101 = sphi 0, %s85
    %s105 = sphi 0, %s105
    %s107 = sphi 0, %s105
    %s108 = sphi 0, %s107
    %s122 = sphi 0, %s108
    %s126 = sphi 0, %s126
    %s128 = sphi 0, %s126
    %s129 = sphi 0, %s128
    %s143 = sphi 0, %s129
    %s147 = sphi 0, %s147
    %s149 = sphi 0, %s147
    %s150 = sphi 0, %s149
    %s164 = sphi 0, %s150
    %s168 = sphi 0, %s168
    %s170 = sphi 0, %s168
    %s171 = sphi 0, %s170
    %s185 = sphi 0, %s171
    %s189 = sphi 0, %s189
    %s191 = sphi 0, %s189
    %s192 = sphi 0, %s191
    %s206 = sphi 0, %s192
    %s210 = sphi 0, %s210
    %s212 = sphi 0, %s210
    %s213 = sphi 0, %s212
    %s227 = sphi 0, %s213
    %s231 = sphi 0, %s231
    %s233 = sphi 0, %s231
    %s234 = sphi 0, %s233
    %s248 = sphi 0, %s234
    %s252 = sphi 0, %s252
    %s254 = sphi 0, %s252
    %s255 = sphi 0, %s254
    %s269 = sphi 0, %s255
    %s275 = sphi 0, %s277
    %s278 = sphi 0, %s275
    %s279 = sphi 0, %s278
    %s295 = sphi 0, %s279
  $region4: #{context_adjustment_forward.1} parent=0 // loop_header_branch
    %22 = sbr.rel (%p20) target = $region8
  $region5: #{context_adjustment_forward.1} parent=0 // loop_body
    %s24 = ssub.s32 %s19, 1
    %s25 = ssub.s32 %s19, 2
    %s26 = sadd.s32 %s19, 1
    %s27 = ssub.s32 %s19, %s26
    %p28 = scmp.eq.s32.totalorder %s27, 0
    %s30 = sadd.s32 %s29, 1
    %s31 = scalar_select %p28, %s29, %s30
    %p34 = pneg %p28
    %p35 = scmp.eq.s32.totalorder %s19, 1
    %p36 = por %p34, %p35
    %p37 = scmp.ne.s32.totalorder %s29, %s32
    %p38 = scmp.eq.s32.totalorder %s19, 0
    %p39 = por %p37, %p38
    %p40 = scmp.ne.s32.totalorder %s29, %s32
    %p41 = scmp.eq.s32.totalorder %s24, 1
    %p42 = por %p40, %p41
    %p43 = scmp.ne.s32.totalorder %s32, %s33
    %p44 = scmp.eq.s32.totalorder %s24, 0
    %p45 = por %p43, %p44
    %p46 = scmp.ne.s32.totalorder %s32, %s33
    %p47 = scmp.eq.s32.totalorder %s25, 1
    %p48 = por %p46, %p47
    %p50 = scmp.ne.s32.totalorder %s33, %s49
    %p51 = scmp.eq.s32.totalorder %s25, 0
    %p52 = por %p50, %p51
    %s53 = ssub.s32 %s19, %s26
    %p54 = scmp.eq.s32.totalorder %s53, 0
    %s56 = sadd.s32 %s55, 1
    %s57 = scalar_select %p54, %s55, %s56
    %p60 = pneg %p54
    %p61 = scmp.eq.s32.totalorder %s19, 1
    %p62 = por %p60, %p61
    %p63 = scmp.ne.s32.totalorder %s55, %s58
    %p64 = scmp.eq.s32.totalorder %s19, 0
    %p65 = por %p63, %p64
    %p66 = scmp.ne.s32.totalorder %s55, %s58
    %p67 = scmp.eq.s32.totalorder %s24, 1
    %p68 = por %p66, %p67
    %p69 = scmp.ne.s32.totalorder %s58, %s59
    %p70 = scmp.eq.s32.totalorder %s24, 0
    %p71 = por %p69, %p70
    %p72 = scmp.ne.s32.totalorder %s58, %s59
    %p73 = scmp.eq.s32.totalorder %s25, 1
    %p74 = por %p72, %p73
    %p76 = scmp.ne.s32.totalorder %s59, %s75
    %p77 = scmp.eq.s32.totalorder %s25, 0
    %p78 = por %p76, %p77
    %s79 = ssub.s32 %s19, %s26
    %p80 = scmp.eq.s32.totalorder %s79, 0
    %s82 = sadd.s32 %s81, 1
    %s83 = scalar_select %p80, %s81, %s82
    %p86 = pneg %p80
    %p87 = scmp.eq.s32.totalorder %s19, 1
    %p88 = por %p86, %p87
    %p89 = scmp.ne.s32.totalorder %s81, %s84
    %p90 = scmp.eq.s32.totalorder %s19, 0
    %p91 = por %p89, %p90
    %p92 = scmp.ne.s32.totalorder %s81, %s84
    %p93 = scmp.eq.s32.totalorder %s24, 1
    %p94 = por %p92, %p93
    %p95 = scmp.ne.s32.totalorder %s84, %s85
    %p96 = scmp.eq.s32.totalorder %s24, 0
    %p97 = por %p95, %p96
    %p98 = scmp.ne.s32.totalorder %s84, %s85
    %p99 = scmp.eq.s32.totalorder %s25, 1
    %p100 = por %p98, %p99
    %p102 = scmp.ne.s32.totalorder %s85, %s101
    %p103 = scmp.eq.s32.totalorder %s25, 0
    %p104 = por %p102, %p103
    %s106 = sadd.s32 %s105, 1
    %p109 = scmp.eq.s32.totalorder %s19, 1
    %p110 = scmp.ne.s32.totalorder %s105, %s107
    %p111 = scmp.eq.s32.totalorder %s19, 0
    %p112 = por %p110, %p111
    %p113 = scmp.ne.s32.totalorder %s105, %s107
    %p114 = scmp.eq.s32.totalorder %s24, 1
    %p115 = por %p113, %p114
    %p116 = scmp.ne.s32.totalorder %s107, %s108
    %p117 = scmp.eq.s32.totalorder %s24, 0
    %p118 = por %p116, %p117
    %p119 = scmp.ne.s32.totalorder %s107, %s108
    %p120 = scmp.eq.s32.totalorder %s25, 1
    %p121 = por %p119, %p120
    %p123 = scmp.ne.s32.totalorder %s108, %s122
    %p124 = scmp.eq.s32.totalorder %s25, 0
    %p125 = por %p123, %p124
    %s127 = sadd.s32 %s126, 1
    %p130 = scmp.eq.s32.totalorder %s19, 1
    %p131 = scmp.ne.s32.totalorder %s126, %s128
    %p132 = scmp.eq.s32.totalorder %s19, 0
    %p133 = por %p131, %p132
    %p134 = scmp.ne.s32.totalorder %s126, %s128
    %p135 = scmp.eq.s32.totalorder %s24, 1
    %p136 = por %p134, %p135
    %p137 = scmp.ne.s32.totalorder %s128, %s129
    %p138 = scmp.eq.s32.totalorder %s24, 0
    %p139 = por %p137, %p138
    %p140 = scmp.ne.s32.totalorder %s128, %s129
    %p141 = scmp.eq.s32.totalorder %s25, 1
    %p142 = por %p140, %p141
    %p144 = scmp.ne.s32.totalorder %s129, %s143
    %p145 = scmp.eq.s32.totalorder %s25, 0
    %p146 = por %p144, %p145
    %s148 = sadd.s32 %s147, 1
    %p151 = scmp.eq.s32.totalorder %s19, 1
    %p152 = scmp.ne.s32.totalorder %s147, %s149
    %p153 = scmp.eq.s32.totalorder %s19, 0
    %p154 = por %p152, %p153
    %p155 = scmp.ne.s32.totalorder %s147, %s149
    %p156 = scmp.eq.s32.totalorder %s24, 1
    %p157 = por %p155, %p156
    %p158 = scmp.ne.s32.totalorder %s149, %s150
    %p159 = scmp.eq.s32.totalorder %s24, 0
    %p160 = por %p158, %p159
    %p161 = scmp.ne.s32.totalorder %s149, %s150
    %p162 = scmp.eq.s32.totalorder %s25, 1
    %p163 = por %p161, %p162
    %p165 = scmp.ne.s32.totalorder %s150, %s164
    %p166 = scmp.eq.s32.totalorder %s25, 0
    %p167 = por %p165, %p166
    %s169 = sadd.s32 %s168, 1
    %p172 = scmp.eq.s32.totalorder %s19, 1
    %p173 = scmp.ne.s32.totalorder %s168, %s170
    %p174 = scmp.eq.s32.totalorder %s19, 0
    %p175 = por %p173, %p174
    %p176 = scmp.ne.s32.totalorder %s168, %s170
    %p177 = scmp.eq.s32.totalorder %s24, 1
    %p178 = por %p176, %p177
    %p179 = scmp.ne.s32.totalorder %s170, %s171
    %p180 = scmp.eq.s32.totalorder %s24, 0
    %p181 = por %p179, %p180
    %p182 = scmp.ne.s32.totalorder %s170, %s171
    %p183 = scmp.eq.s32.totalorder %s25, 1
    %p184 = por %p182, %p183
    %p186 = scmp.ne.s32.totalorder %s171, %s185
    %p187 = scmp.eq.s32.totalorder %s25, 0
    %p188 = por %p186, %p187
    %s190 = sadd.s32 %s189, 1
    %p193 = scmp.eq.s32.totalorder %s19, 1
    %p194 = scmp.ne.s32.totalorder %s189, %s191
    %p195 = scmp.eq.s32.totalorder %s19, 0
    %p196 = por %p194, %p195
    %p197 = scmp.ne.s32.totalorder %s189, %s191
    %p198 = scmp.eq.s32.totalorder %s24, 1
    %p199 = por %p197, %p198
    %p200 = scmp.ne.s32.totalorder %s191, %s192
    %p201 = scmp.eq.s32.totalorder %s24, 0
    %p202 = por %p200, %p201
    %p203 = scmp.ne.s32.totalorder %s191, %s192
    %p204 = scmp.eq.s32.totalorder %s25, 1
    %p205 = por %p203, %p204
    %p207 = scmp.ne.s32.totalorder %s192, %s206
    %p208 = scmp.eq.s32.totalorder %s25, 0
    %p209 = por %p207, %p208
    %s211 = sadd.s32 %s210, 1
    %p214 = scmp.eq.s32.totalorder %s19, 1
    %p215 = scmp.ne.s32.totalorder %s210, %s212
    %p216 = scmp.eq.s32.totalorder %s19, 0
    %p217 = por %p215, %p216
    %p218 = scmp.ne.s32.totalorder %s210, %s212
    %p219 = scmp.eq.s32.totalorder %s24, 1
    %p220 = por %p218, %p219
    %p221 = scmp.ne.s32.totalorder %s212, %s213
    %p222 = scmp.eq.s32.totalorder %s24, 0
    %p223 = por %p221, %p222
    %p224 = scmp.ne.s32.totalorder %s212, %s213
    %p225 = scmp.eq.s32.totalorder %s25, 1
    %p226 = por %p224, %p225
    %p228 = scmp.ne.s32.totalorder %s213, %s227
    %p229 = scmp.eq.s32.totalorder %s25, 0
    %p230 = por %p228, %p229
    %s232 = sadd.s32 %s231, 1
    %p235 = scmp.eq.s32.totalorder %s19, 1
    %p236 = scmp.ne.s32.totalorder %s231, %s233
    %p237 = scmp.eq.s32.totalorder %s19, 0
    %p238 = por %p236, %p237
    %p239 = scmp.ne.s32.totalorder %s231, %s233
    %p240 = scmp.eq.s32.totalorder %s24, 1
    %p241 = por %p239, %p240
    %p242 = scmp.ne.s32.totalorder %s233, %s234
    %p243 = scmp.eq.s32.totalorder %s24, 0
    %p244 = por %p242, %p243
    %p245 = scmp.ne.s32.totalorder %s233, %s234
    %p246 = scmp.eq.s32.totalorder %s25, 1
    %p247 = por %p245, %p246
    %p249 = scmp.ne.s32.totalorder %s234, %s248
    %p250 = scmp.eq.s32.totalorder %s25, 0
    %p251 = por %p249, %p250
    %s253 = sadd.s32 %s252, 1
    %p256 = scmp.eq.s32.totalorder %s19, 1
    %p257 = scmp.ne.s32.totalorder %s252, %s254
    %p258 = scmp.eq.s32.totalorder %s19, 0
    %p259 = por %p257, %p258
    %p260 = scmp.ne.s32.totalorder %s252, %s254
    %p261 = scmp.eq.s32.totalorder %s24, 1
    %p262 = por %p260, %p261
    %p263 = scmp.ne.s32.totalorder %s254, %s255
    %p264 = scmp.eq.s32.totalorder %s24, 0
    %p265 = por %p263, %p264
    %p266 = scmp.ne.s32.totalorder %s254, %s255
    %p267 = scmp.eq.s32.totalorder %s25, 1
    %p268 = por %p266, %p267
    %p270 = scmp.ne.s32.totalorder %s255, %s269
    %p271 = scmp.eq.s32.totalorder %s25, 0
    %p272 = por %p270, %p271
    %s273 = ssub.s32 %s19, %s26
    %p274 = scmp.eq.s32.totalorder %s273, 0
    %s276 = sadd.s32 %s275, 1
    %s277 = scalar_select %p274, %s275, %s276
    %p280 = pneg %p274
    %p281 = scmp.eq.s32.totalorder %s19, 1
    %p282 = por %p280, %p281
    %p283 = scmp.ne.s32.totalorder %s275, %s278
    %p284 = scmp.eq.s32.totalorder %s19, 0
    %p285 = por %p283, %p284
    %p286 = scmp.ne.s32.totalorder %s275, %s278
    %p287 = scmp.eq.s32.totalorder %s24, 1
    %p288 = por %p286, %p287
    %p289 = scmp.ne.s32.totalorder %s278, %s279
    %p290 = scmp.eq.s32.totalorder %s24, 0
    %p291 = por %p289, %p290
    %p292 = scmp.ne.s32.totalorder %s278, %s279
    %p293 = scmp.eq.s32.totalorder %s25, 1
    %p294 = por %p292, %p293
    %p296 = scmp.ne.s32.totalorder %s279, %s295
    %p297 = scmp.eq.s32.totalorder %s25, 0
    %p298 = por %p296, %p297
    %p299 = scmp.le.s32.totalorder 1, %s19
    %p300 = scmp.lt.s32.totalorder %s19, 3
    %p301 = pnand %p299, %p300
    %p302 = pneg %p301
    // Predicated region
    $region9: #{context_adjustment_forward.1} parent=5 // pred_check
      _
    $region10: #{context_adjustment_forward.1} parent=5 // pred_check_branch
      %304 = sbr.rel (%p301) target = $region12
    $region11: #{context_adjustment_forward.1} parent=5 // pred_region
      %s305 = ssub.s32 %s19, 1
      // Predicated region
      $region13: #{context_adjustment_forward.1} parent=11 // pred_check
        %p306 = pneg %p118
      $region14: #{context_adjustment_forward.1} parent=11 // pred_check_branch
        %308 = sbr.rel (%p306) target = $region16
      $region15: #{context_adjustment_forward.1} parent=11 // pred_region
        _
      $region16: #{context_adjustment_forward.1} parent=11 // pred_fallthru
        _
      // Predicated region
      $region17: #{context_adjustment_forward.1} parent=11 // pred_check
        %p309 = pneg %p139
      $region18: #{context_adjustment_forward.1} parent=11 // pred_check_branch
        %311 = sbr.rel (%p309) target = $region20
      $region19: #{context_adjustment_forward.1} parent=11 // pred_region
        _
      $region20: #{context_adjustment_forward.1} parent=11 // pred_fallthru
        _
      // Predicated region
      $region21: #{context_adjustment_forward.1} parent=11 // pred_check
        %p312 = pneg %p160
      $region22: #{context_adjustment_forward.1} parent=11 // pred_check_branch
        %314 = sbr.rel (%p312) target = $region24
      $region23: #{context_adjustment_forward.1} parent=11 // pred_region
        _
      $region24: #{context_adjustment_forward.1} parent=11 // pred_fallthru
        _
      // Predicated region
      $region25: #{context_adjustment_forward.1} parent=11 // pred_check
        %p315 = pneg %p181
      $region26: #{context_adjustment_forward.1} parent=11 // pred_check_branch
        %317 = sbr.rel (%p315) target = $region28
      $region27: #{context_adjustment_forward.1} parent=11 // pred_region
        _
      $region28: #{context_adjustment_forward.1} parent=11 // pred_fallthru
        _
      // Predicated region
      $region29: #{context_adjustment_forward.1} parent=11 // pred_check
        %p318 = pneg %p202
      $region30: #{context_adjustment_forward.1} parent=11 // pred_check_branch
        %320 = sbr.rel (%p318) target = $region32
      $region31: #{context_adjustment_forward.1} parent=11 // pred_region
        _
      $region32: #{context_adjustment_forward.1} parent=11 // pred_fallthru
        _
      // Predicated region
      $region33: #{context_adjustment_forward.1} parent=11 // pred_check
        %p321 = pneg %p223
      $region34: #{context_adjustment_forward.1} parent=11 // pred_check_branch
        %323 = sbr.rel (%p321) target = $region36
      $region35: #{context_adjustment_forward.1} parent=11 // pred_region
        _
      $region36: #{context_adjustment_forward.1} parent=11 // pred_fallthru
        _
      // Predicated region
      $region37: #{context_adjustment_forward.1} parent=11 // pred_check
        %p324 = pneg %p244
      $region38: #{context_adjustment_forward.1} parent=11 // pred_check_branch
        %326 = sbr.rel (%p324) target = $region40
      $region39: #{context_adjustment_forward.1} parent=11 // pred_region
        _
      $region40: #{context_adjustment_forward.1} parent=11 // pred_fallthru
        _
      // Predicated region
      $region41: #{context_adjustment_forward.1} parent=11 // pred_check
        %p327 = pneg %p265
      $region42: #{context_adjustment_forward.1} parent=11 // pred_check_branch
        %329 = sbr.rel (%p327) target = $region44
      $region43: #{context_adjustment_forward.1} parent=11 // pred_region
        _
      $region44: #{context_adjustment_forward.1} parent=11 // pred_fallthru
        _
    $region12: #{context_adjustment_forward.1} parent=5 // pred_fallthru
      _
    %p330 = scmp.lt.s32.totalorder %s19, 2
    // Predicated region
    $region45: #{context_adjustment_forward.1} parent=5 // pred_check
      %p331 = pneg %p330
    $region46: #{context_adjustment_forward.1} parent=5 // pred_check_branch
      %333 = sbr.rel (%p331) target = $region48
    $region47: #{context_adjustment_forward.1} parent=5 // pred_region
      // Predicated region
      $region49: #{context_adjustment_forward.1} parent=47 // pred_check
        %p334 = pneg %p39
      $region50: #{context_adjustment_forward.1} parent=47 // pred_check_branch
        %336 = sbr.rel (%p334) target = $region52
      $region51: #{context_adjustment_forward.1} parent=47 // pred_region
        %p337 = scmp.lt.s32.totalorder %s19, 1
        %s338 = scalar_select %p337, %s19, 1
        %s339 = smul.addr %s338, 32
        %s340 = smul.addr %s339, 8
        %s341 = scalar_lea.vmem %s0, %s340
      $region52: #{context_adjustment_forward.1} parent=47 // pred_fallthru
        _
      // Predicated region
      $region53: #{context_adjustment_forward.1} parent=47 // pred_check
        %p342 = pneg %p65
      $region54: #{context_adjustment_forward.1} parent=47 // pred_check_branch
        %344 = sbr.rel (%p342) target = $region56
      $region55: #{context_adjustment_forward.1} parent=47 // pred_region
        %p345 = scmp.lt.s32.totalorder %s19, 1
        %s346 = scalar_select %p345, %s19, 1
        %s347 = smul.addr %s346, 32
        %s348 = smul.addr %s347, 8
        %s349 = scalar_lea.vmem %s1, %s348
      $region56: #{context_adjustment_forward.1} parent=47 // pred_fallthru
        _
      // Predicated region
      $region57: #{context_adjustment_forward.1} parent=47 // pred_check
        %p350 = pneg %p91
      $region58: #{context_adjustment_forward.1} parent=47 // pred_check_branch
        %352 = sbr.rel (%p350) target = $region60
      $region59: #{context_adjustment_forward.1} parent=47 // pred_region
        %p353 = scmp.lt.s32.totalorder %s19, 1
        %s354 = scalar_select %p353, %s19, 1
        %s355 = smul.addr %s354, 32
        %s356 = smul.addr %s355, 8
        %s357 = scalar_lea.vmem %s2, %s356
      $region60: #{context_adjustment_forward.1} parent=47 // pred_fallthru
        _
    $region48: #{context_adjustment_forward.1} parent=5 // pred_fallthru
      _
    %p358 = scmp.le.s32.totalorder 1, %s19
    %p359 = scmp.lt.s32.totalorder %s19, 3
    %p360 = pnand %p358, %p359
    %p361 = pneg %p360
    // Predicated region
    $region61: #{context_adjustment_forward.1} parent=5 // pred_check
      _
    $region62: #{context_adjustment_forward.1} parent=5 // pred_check_branch
      %363 = sbr.rel (%p360) target = $region64
    $region63: #{context_adjustment_forward.1} parent=5 // pred_region
      %s364 = ssub.s32 %s19, 1
      %p365 = scmp.lt.s32.totalorder %s24, 1
      %s366 = scalar_select %p365, %s24, 1
      %s367 = smul.addr %s366, 32
      %s368 = smul.addr %s367, 8
      %s369 = scalar_lea.vmem %s0, %s368
      %p370 = pneg %p45
      %p371 = pneg %p42
      %p372 = scmp.lt.s32.totalorder %s24, 1
      %s373 = scalar_select %p372, %s24, 1
      %s374 = smul.addr %s373, 32
      %s375 = smul.addr %s374, 8
      %s376 = scalar_lea.vmem %s1, %s375
      %p377 = pneg %p71
      %p378 = pneg %p68
      %p379 = scmp.lt.s32.totalorder %s24, 1
      %s380 = scalar_select %p379, %s24, 1
      %s381 = smul.addr %s380, 32
      %s382 = smul.addr %s381, 8
      %s383 = scalar_lea.vmem %s2, %s382
      %p384 = pneg %p97
      %p385 = pneg %p94
      %p386 = pneg %p118
      %p387 = pneg %p115
      %p388 = pneg %p139
      %p389 = pneg %p136
      %p390 = pneg %p160
      %p391 = pneg %p157
      %p392 = pneg %p181
      %p393 = pneg %p178
      %p394 = pneg %p202
      %p395 = pneg %p199
      %p396 = pneg %p223
      %p397 = pneg %p220
      %p398 = pneg %p244
      %p399 = pneg %p241
      %p400 = pneg %p265
      %p401 = pneg %p262
      %p402 = pneg %p291
      %p403 = pneg %p288
      %p404 = scmp.lt.s32.totalorder %s24, 1
      %s405 = scalar_select %p404, %s24, 1
      %s406 = smul.addr %s405, 32
      %s407 = smul.addr %s406, 8
      %s408 = scalar_lea.vmem %s11, %s407
      %p409 = scmp.lt.s32.totalorder %s24, 1
      %s410 = scalar_select %p409, %s24, 1
      %s411 = smul.addr %s410, 32
      %s412 = smul.addr %s411, 8
      %s413 = scalar_lea.vmem %s0, %s412
      %p414 = scmp.lt.s32.totalorder %s24, 1
      %s415 = scalar_select %p414, %s24, 1
      %s416 = smul.addr %s415, 32
      %s417 = smul.addr %s416, 8
      %s418 = scalar_lea.vmem %s1, %s417
      %p419 = scmp.lt.s32.totalorder %s24, 1
      %s420 = scalar_select %p419, %s24, 1
      %s421 = smul.addr %s420, 32
      %s422 = smul.addr %s421, 8
      %s423 = scalar_lea.vmem %s2, %s422
      %p424 = scmp.lt.s32.totalorder %s24, 1
      %s425 = scalar_select %p424, %s24, 1
      %s426 = smul.addr %s425, 32
      %s427 = smul.addr %s426, 8
      %s428 = scalar_lea.vmem %s11, %s427
      %429 = vst [vmem:[#allocation3] sm:$0xff] 0.0
      %vm430 = vcmask 130048
      %431 = vst.msk [vmem:[#allocation3 + $0x8] sm:$0xff] %vm430, 0.0
      %432 = vst [vmem:[#allocation3 + $0x10] sm:$0xff] 0.0
      %433 = vst.msk [vmem:[#allocation3 + $0x18] sm:$0xff] %vm430, 0.0
      %s434 = scalar_lea.vmem [#allocation3], 544
      %435 = vst [vmem:[%s434] sm:$0xff] 0.0
      %436 = vst.msk [vmem:[%s434 + $0x8] sm:$0xff] %vm430, 0.0
      %437 = vst [vmem:[%s434 + $0x10] sm:$0xff] 0.0
      %438 = vst.msk [vmem:[%s434 + $0x18] sm:$0xff] %vm430, 0.0
      %vm439 = vcmask 385024
      %440 = vst.msk [vmem:[#allocation2] sm:$0x1] %vm439, 0.0
      %441 = vst.msk [vmem:[#allocation2 + $0x18] sm:$0x1] %vm439, 0.0
      %442 = vst.msk [vmem:[#allocation2 + $0x30] sm:$0x1] %vm439, 0.0
      %443 = vst.msk [vmem:[#allocation2 + $0x48] sm:$0x1] %vm439, 0.0
      %444 = vst.msk [vmem:[#allocation2 + $0x60] sm:$0x1] %vm439, 0.0
      %445 = vst.msk [vmem:[#allocation2 + $0x78] sm:$0x1] %vm439, 0.0
      %446 = vst.msk [vmem:[#allocation2 + $0x90] sm:$0x1] %vm439, 0.0
      %447 = vst.msk [vmem:[#allocation2 + $0xa8] sm:$0x1] %vm439, 0.0
      %448 = vst.msk [vmem:[#allocation2 + $0xc0] sm:$0x1] %vm439, 0.0
      %449 = vst.msk [vmem:[#allocation2 + $0xd8] sm:$0x1] %vm439, 0.0
      %450 = vst.msk [vmem:[#allocation2 + $0xf0] sm:$0x1] %vm439, 0.0
      %451 = vst.msk [vmem:[#allocation2 + $0x108] sm:$0x1] %vm439, 0.0
      %452 = vst.msk [vmem:[#allocation2 + $0x120] sm:$0x1] %vm439, 0.0
      %453 = vst.msk [vmem:[#allocation2 + $0x138] sm:$0x1] %vm439, 0.0
      %454 = vst.msk [vmem:[#allocation2 + $0x150] sm:$0x1] %vm439, 0.0
      %455 = vst.msk [vmem:[#allocation2 + $0x168] sm:$0x1] %vm439, 0.0
      %456 = vst.msk [vmem:[#allocation2 + $0x11] sm:$0x1] %vm439, 0.0
      %457 = vst.msk [vmem:[#allocation2 + $0x29] sm:$0x1] %vm439, 0.0
      %458 = vst.msk [vmem:[#allocation2 + $0x41] sm:$0x1] %vm439, 0.0
      %459 = vst.msk [vmem:[#allocation2 + $0x59] sm:$0x1] %vm439, 0.0
      %460 = vst.msk [vmem:[#allocation2 + $0x71] sm:$0x1] %vm439, 0.0
      %461 = vst.msk [vmem:[#allocation2 + $0x89] sm:$0x1] %vm439, 0.0
      %462 = vst.msk [vmem:[#allocation2 + $0xa1] sm:$0x1] %vm439, 0.0
      %463 = vst.msk [vmem:[#allocation2 + $0xb9] sm:$0x1] %vm439, 0.0
      %464 = vst.msk [vmem:[#allocation2 + $0xd1] sm:$0x1] %vm439, 0.0
      %465 = vst.msk [vmem:[#allocation2 + $0xe9] sm:$0x1] %vm439, 0.0
      %466 = vst.msk [vmem:[#allocation2 + $0x101] sm:$0x1] %vm439, 0.0
      %467 = vst.msk [vmem:[#allocation2 + $0x119] sm:$0x1] %vm439, 0.0
      %468 = vst.msk [vmem:[#allocation2 + $0x131] sm:$0x1] %vm439, 0.0
      %469 = vst.msk [vmem:[#allocation2 + $0x149] sm:$0x1] %vm439, 0.0
      %470 = vst.msk [vmem:[#allocation2 + $0x161] sm:$0x1] %vm439, 0.0
      %471 = vst.msk [vmem:[#allocation2 + $0x179] sm:$0x1] %vm439, 0.0
      %v472 = vld [vmem:[%s413] sm:$0xff]
      %v473 = vld [vmem:[%s413 + $0x8] sm:$0xff]
      %v474 = vld [vmem:[%s413 + $0x10] sm:$0xff]
      %v475 = vld [vmem:[%s413 + $0x18] sm:$0xff]
      %v476 = vld [vmem:[%s413 + $0x20] sm:$0xff]
      %v477 = vld [vmem:[%s413 + $0x28] sm:$0xff]
      %v478 = vld [vmem:[%s413 + $0x30] sm:$0xff]
      %v479 = vld [vmem:[%s413 + $0x38] sm:$0xff]
      %v480 = vld [vmem:[%s413 + $0x40] sm:$0xff]
      %v481 = vld [vmem:[%s413 + $0x48] sm:$0xff]
      %v482 = vld [vmem:[%s413 + $0x50] sm:$0xff]
      %v483 = vld [vmem:[%s413 + $0x58] sm:$0xff]
      %v484 = vld [vmem:[%s413 + $0x60] sm:$0xff]
      %v485 = vld [vmem:[%s413 + $0x68] sm:$0xff]
      %v486 = vld [vmem:[%s413 + $0x70] sm:$0xff]
      %v487 = vld [vmem:[%s413 + $0x78] sm:$0xff]
      %v488 = vld [vmem:[%s413 + $0x80] sm:$0xff]
      %v489 = vld [vmem:[%s413 + $0x88] sm:$0xff]
      %v490 = vld [vmem:[%s413 + $0x90] sm:$0xff]
      %v491 = vld [vmem:[%s413 + $0x98] sm:$0xff]
      %v492 = vld [vmem:[%s413 + $0xa0] sm:$0xff]
      %v493 = vld [vmem:[%s413 + $0xa8] sm:$0xff]
      %v494 = vld [vmem:[%s413 + $0xb0] sm:$0xff]
      %v495 = vld [vmem:[%s413 + $0xb8] sm:$0xff]
      %v496 = vld [vmem:[%s413 + $0xc0] sm:$0xff]
      %v497 = vld [vmem:[%s413 + $0xc8] sm:$0xff]
      %v498 = vld [vmem:[%s413 + $0xd0] sm:$0xff]
      %v499 = vld [vmem:[%s413 + $0xd8] sm:$0xff]
      %v500 = vld [vmem:[%s413 + $0xe0] sm:$0xff]
      %v501 = vld [vmem:[%s413 + $0xe8] sm:$0xff]
      %v502 = vld [vmem:[%s413 + $0xf0] sm:$0xff]
      %v503 = vld [vmem:[%s413 + $0xf8] sm:$0xff]
      %v504 = vld [vmem:[%s418] sm:$0xff]
      %v505 = vld [vmem:[%s418 + $0x8] sm:$0xff]
      %v506 = vld [vmem:[%s418 + $0x10] sm:$0xff]
      %v507 = vld [vmem:[%s418 + $0x18] sm:$0xff]
      %v508 = vld [vmem:[%s418 + $0x20] sm:$0xff]
      %v509 = vld [vmem:[%s418 + $0x28] sm:$0xff]
      %v510 = vld [vmem:[%s418 + $0x30] sm:$0xff]
      %v511 = vld [vmem:[%s418 + $0x38] sm:$0xff]
      %v512 = vld [vmem:[%s418 + $0x40] sm:$0xff]
      %v513 = vld [vmem:[%s418 + $0x48] sm:$0xff]
      %v514 = vld [vmem:[%s418 + $0x50] sm:$0xff]
      %v515 = vld [vmem:[%s418 + $0x58] sm:$0xff]
      %v516 = vld [vmem:[%s418 + $0x60] sm:$0xff]
      %v517 = vld [vmem:[%s418 + $0x68] sm:$0xff]
      %v518 = vld [vmem:[%s418 + $0x70] sm:$0xff]
      %v519 = vld [vmem:[%s418 + $0x78] sm:$0xff]
      %v520 = vld [vmem:[%s418 + $0x80] sm:$0xff]
      %v521 = vld [vmem:[%s418 + $0x88] sm:$0xff]
      %v522 = vld [vmem:[%s418 + $0x90] sm:$0xff]
      %v523 = vld [vmem:[%s418 + $0x98] sm:$0xff]
      %v524 = vld [vmem:[%s418 + $0xa0] sm:$0xff]
      %v525 = vld [vmem:[%s418 + $0xa8] sm:$0xff]
      %v526 = vld [vmem:[%s418 + $0xb0] sm:$0xff]
      %v527 = vld [vmem:[%s418 + $0xb8] sm:$0xff]
      %v528 = vld [vmem:[%s418 + $0xc0] sm:$0xff]
      %v529 = vld [vmem:[%s418 + $0xc8] sm:$0xff]
      %v530 = vld [vmem:[%s418 + $0xd0] sm:$0xff]
      %v531 = vld [vmem:[%s418 + $0xd8] sm:$0xff]
      %v532 = vld [vmem:[%s418 + $0xe0] sm:$0xff]
      %v533 = vld [vmem:[%s418 + $0xe8] sm:$0xff]
      %v534 = vld [vmem:[%s418 + $0xf0] sm:$0xff]
      %v535 = vld [vmem:[%s418 + $0xf8] sm:$0xff]
      %v536 = vld [vmem:[%s423] sm:$0xff]
      %v537 = vld [vmem:[%s423 + $0x8] sm:$0xff]
      %v538 = vld [vmem:[%s423 + $0x10] sm:$0xff]
      %v539 = vld [vmem:[%s423 + $0x18] sm:$0xff]
      %v540 = vld [vmem:[%s423 + $0x20] sm:$0xff]
      %v541 = vld [vmem:[%s423 + $0x28] sm:$0xff]
      %v542 = vld [vmem:[%s423 + $0x30] sm:$0xff]
      %v543 = vld [vmem:[%s423 + $0x38] sm:$0xff]
      %v544 = vld [vmem:[%s423 + $0x40] sm:$0xff]
      %v545 = vld [vmem:[%s423 + $0x48] sm:$0xff]
      %v546 = vld [vmem:[%s423 + $0x50] sm:$0xff]
      %v547 = vld [vmem:[%s423 + $0x58] sm:$0xff]
      %v548 = vld [vmem:[%s423 + $0x60] sm:$0xff]
      %v549 = vld [vmem:[%s423 + $0x68] sm:$0xff]
      %v550 = vld [vmem:[%s423 + $0x70] sm:$0xff]
      %v551 = vld [vmem:[%s423 + $0x78] sm:$0xff]
      %v552 = vld [vmem:[%s423 + $0x80] sm:$0xff]
      %v553 = vld [vmem:[%s423 + $0x88] sm:$0xff]
      %v554 = vld [vmem:[%s423 + $0x90] sm:$0xff]
      %v555 = vld [vmem:[%s423 + $0x98] sm:$0xff]
      %v556 = vld [vmem:[%s423 + $0xa0] sm:$0xff]
      %v557 = vld [vmem:[%s423 + $0xa8] sm:$0xff]
      %v558 = vld [vmem:[%s423 + $0xb0] sm:$0xff]
      %v559 = vld [vmem:[%s423 + $0xb8] sm:$0xff]
      %v560 = vld [vmem:[%s423 + $0xc0] sm:$0xff]
      %v561 = vld [vmem:[%s423 + $0xc8] sm:$0xff]
      %v562 = vld [vmem:[%s423 + $0xd0] sm:$0xff]
      %v563 = vld [vmem:[%s423 + $0xd8] sm:$0xff]
      %v564 = vld [vmem:[%s423 + $0xe0] sm:$0xff]
      %v565 = vld [vmem:[%s423 + $0xe8] sm:$0xff]
      %v566 = vld [vmem:[%s423 + $0xf0] sm:$0xff]
      %v567 = vld [vmem:[%s423 + $0xf8] sm:$0xff]
      %569 = vset.pattern.permute.xlu0 0
      %570 = vperm.xlu0 %569, %v536
      %v571 = vpop.permute.xlu0 %570
      %574 = vset.pattern.permute.xlu0 0
      %575 = vperm.xlu0 %574, %v537
      %v576 = vpop.permute.xlu0 %575
      %579 = vset.pattern.permute.xlu0 0
      %580 = vperm.xlu0 %579, %v538
      %v581 = vpop.permute.xlu0 %580
      %584 = vset.pattern.permute.xlu0 0
      %585 = vperm.xlu0 %584, %v539
      %v586 = vpop.permute.xlu0 %585
      %589 = vset.pattern.permute.xlu0 0
      %590 = vperm.xlu0 %589, %v540
      %v591 = vpop.permute.xlu0 %590
      %594 = vset.pattern.permute.xlu0 0
      %595 = vperm.xlu0 %594, %v541
      %v596 = vpop.permute.xlu0 %595
      %599 = vset.pattern.permute.xlu0 0
      %600 = vperm.xlu0 %599, %v542
      %v601 = vpop.permute.xlu0 %600
      %604 = vset.pattern.permute.xlu0 0
      %605 = vperm.xlu0 %604, %v543
      %v606 = vpop.permute.xlu0 %605
      %609 = vset.pattern.permute.xlu0 0
      %610 = vperm.xlu0 %609, %v544
      %v611 = vpop.permute.xlu0 %610
      %614 = vset.pattern.permute.xlu0 0
      %615 = vperm.xlu0 %614, %v545
      %v616 = vpop.permute.xlu0 %615
      %619 = vset.pattern.permute.xlu0 0
      %620 = vperm.xlu0 %619, %v546
      %v621 = vpop.permute.xlu0 %620
      %624 = vset.pattern.permute.xlu0 0
      %625 = vperm.xlu0 %624, %v547
      %v626 = vpop.permute.xlu0 %625
      %629 = vset.pattern.permute.xlu0 0
      %630 = vperm.xlu0 %629, %v548
      %v631 = vpop.permute.xlu0 %630
      %634 = vset.pattern.permute.xlu0 0
      %635 = vperm.xlu0 %634, %v549
      %v636 = vpop.permute.xlu0 %635
      %639 = vset.pattern.permute.xlu0 0
      %640 = vperm.xlu0 %639, %v550
      %v641 = vpop.permute.xlu0 %640
      %644 = vset.pattern.permute.xlu0 0
      %645 = vperm.xlu0 %644, %v551
      %v646 = vpop.permute.xlu0 %645
      %649 = vset.pattern.permute.xlu0 0
      %650 = vperm.xlu0 %649, %v552
      %v651 = vpop.permute.xlu0 %650
      %654 = vset.pattern.permute.xlu0 0
      %655 = vperm.xlu0 %654, %v553
      %v656 = vpop.permute.xlu0 %655
      %659 = vset.pattern.permute.xlu0 0
      %660 = vperm.xlu0 %659, %v554
      %v661 = vpop.permute.xlu0 %660
      %664 = vset.pattern.permute.xlu0 0
      %665 = vperm.xlu0 %664, %v555
      %v666 = vpop.permute.xlu0 %665
      %669 = vset.pattern.permute.xlu0 0
      %670 = vperm.xlu0 %669, %v556
      %v671 = vpop.permute.xlu0 %670
      %674 = vset.pattern.permute.xlu0 0
      %675 = vperm.xlu0 %674, %v557
      %v676 = vpop.permute.xlu0 %675
      %679 = vset.pattern.permute.xlu0 0
      %680 = vperm.xlu0 %679, %v558
      %v681 = vpop.permute.xlu0 %680
      %684 = vset.pattern.permute.xlu0 0
      %685 = vperm.xlu0 %684, %v559
      %v686 = vpop.permute.xlu0 %685
      %689 = vset.pattern.permute.xlu0 0
      %690 = vperm.xlu0 %689, %v560
      %v691 = vpop.permute.xlu0 %690
      %694 = vset.pattern.permute.xlu0 0
      %695 = vperm.xlu0 %694, %v561
      %v696 = vpop.permute.xlu0 %695
      %699 = vset.pattern.permute.xlu0 0
      %700 = vperm.xlu0 %699, %v562
      %v701 = vpop.permute.xlu0 %700
      %704 = vset.pattern.permute.xlu0 0
      %705 = vperm.xlu0 %704, %v563
      %v706 = vpop.permute.xlu0 %705
      %709 = vset.pattern.permute.xlu0 0
      %710 = vperm.xlu0 %709, %v564
      %v711 = vpop.permute.xlu0 %710
      %714 = vset.pattern.permute.xlu0 0
      %715 = vperm.xlu0 %714, %v565
      %v716 = vpop.permute.xlu0 %715
      %719 = vset.pattern.permute.xlu0 0
      %720 = vperm.xlu0 %719, %v566
      %v721 = vpop.permute.xlu0 %720
      %724 = vset.pattern.permute.xlu0 0
      %725 = vperm.xlu0 %724, %v567
      %v726 = vpop.permute.xlu0 %725
      %760 = vrot.lane.b32.xlu0 %v504, 1
      %v761 = vpop.permute.xlu0 %760
      %762 = vrot.lane.b32.xlu0 %v505, 1
      %v763 = vpop.permute.xlu0 %762
      %764 = vrot.lane.b32.xlu0 %v506, 1
      %v765 = vpop.permute.xlu0 %764
      %766 = vrot.lane.b32.xlu0 %v507, 1
      %v767 = vpop.permute.xlu0 %766
      %768 = vrot.lane.b32.xlu0 %v508, 1
      %v769 = vpop.permute.xlu0 %768
      %770 = vrot.lane.b32.xlu0 %v509, 1
      %v771 = vpop.permute.xlu0 %770
      %772 = vrot.lane.b32.xlu0 %v510, 1
      %v773 = vpop.permute.xlu0 %772
      %774 = vrot.lane.b32.xlu0 %v511, 1
      %v775 = vpop.permute.xlu0 %774
      %776 = vrot.lane.b32.xlu0 %v512, 1
      %v777 = vpop.permute.xlu0 %776
      %778 = vrot.lane.b32.xlu0 %v513, 1
      %v779 = vpop.permute.xlu0 %778
      %780 = vrot.lane.b32.xlu0 %v514, 1
      %v781 = vpop.permute.xlu0 %780
      %782 = vrot.lane.b32.xlu0 %v515, 1
      %v783 = vpop.permute.xlu0 %782
      %784 = vrot.lane.b32.xlu0 %v516, 1
      %v785 = vpop.permute.xlu0 %784
      %786 = vrot.lane.b32.xlu0 %v517, 1
      %v787 = vpop.permute.xlu0 %786
      %788 = vrot.lane.b32.xlu0 %v518, 1
      %v789 = vpop.permute.xlu0 %788
      %790 = vrot.lane.b32.xlu0 %v519, 1
      %v791 = vpop.permute.xlu0 %790
      %792 = vrot.lane.b32.xlu0 %v520, 1
      %v793 = vpop.permute.xlu0 %792
      %794 = vrot.lane.b32.xlu0 %v521, 1
      %v795 = vpop.permute.xlu0 %794
      %796 = vrot.lane.b32.xlu0 %v522, 1
      %v797 = vpop.permute.xlu0 %796
      %798 = vrot.lane.b32.xlu0 %v523, 1
      %v799 = vpop.permute.xlu0 %798
      %800 = vrot.lane.b32.xlu0 %v524, 1
      %v801 = vpop.permute.xlu0 %800
      %802 = vrot.lane.b32.xlu0 %v525, 1
      %v803 = vpop.permute.xlu0 %802
      %804 = vrot.lane.b32.xlu0 %v526, 1
      %v805 = vpop.permute.xlu0 %804
      %806 = vrot.lane.b32.xlu0 %v527, 1
      %v807 = vpop.permute.xlu0 %806
      %808 = vrot.lane.b32.xlu0 %v528, 1
      %v809 = vpop.permute.xlu0 %808
      %810 = vrot.lane.b32.xlu0 %v529, 1
      %v811 = vpop.permute.xlu0 %810
      %812 = vrot.lane.b32.xlu0 %v530, 1
      %v813 = vpop.permute.xlu0 %812
      %814 = vrot.lane.b32.xlu0 %v531, 1
      %v815 = vpop.permute.xlu0 %814
      %816 = vrot.lane.b32.xlu0 %v532, 1
      %v817 = vpop.permute.xlu0 %816
      %818 = vrot.lane.b32.xlu0 %v533, 1
      %v819 = vpop.permute.xlu0 %818
      %820 = vrot.lane.b32.xlu0 %v534, 1
      %v821 = vpop.permute.xlu0 %820
      %822 = vrot.lane.b32.xlu0 %v535, 1
      %v823 = vpop.permute.xlu0 %822
      %vm856 = vcmask 7168
      %v857 = vsel %vm856, %v472, %v761
      %v858 = vsel %vm856, %v473, %v763
      %v859 = vsel %vm856, %v474, %v765
      %v860 = vsel %vm856, %v475, %v767
      %v861 = vsel %vm856, %v476, %v769
      %v862 = vsel %vm856, %v477, %v771
      %v863 = vsel %vm856, %v478, %v773
      %v864 = vsel %vm856, %v479, %v775
      %v865 = vsel %vm856, %v480, %v777
      %v866 = vsel %vm856, %v481, %v779
      %v867 = vsel %vm856, %v482, %v781
      %v868 = vsel %vm856, %v483, %v783
      %v869 = vsel %vm856, %v484, %v785
      %v870 = vsel %vm856, %v485, %v787
      %v871 = vsel %vm856, %v486, %v789
      %v872 = vsel %vm856, %v487, %v791
      %v873 = vsel %vm856, %v488, %v793
      %v874 = vsel %vm856, %v489, %v795
      %v875 = vsel %vm856, %v490, %v797
      %v876 = vsel %vm856, %v491, %v799
      %v877 = vsel %vm856, %v492, %v801
      %v878 = vsel %vm856, %v493, %v803
      %v879 = vsel %vm856, %v494, %v805
      %v880 = vsel %vm856, %v495, %v807
      %v881 = vsel %vm856, %v496, %v809
      %v882 = vsel %vm856, %v497, %v811
      %v883 = vsel %vm856, %v498, %v813
      %v884 = vsel %vm856, %v499, %v815
      %v885 = vsel %vm856, %v500, %v817
      %v886 = vsel %vm856, %v501, %v819
      %v887 = vsel %vm856, %v502, %v821
      %v888 = vsel %vm856, %v503, %v823
      %vm889 = vcmask 31744
      %890 = vst.msk [vmem:[#allocation2 + $0x1] sm:$0xff] %vm889, %v857
      %891 = vst.msk [vmem:[#allocation2 + $0x9] sm:$0xff] %vm889, %v858
      %892 = vst.msk [vmem:[#allocation2 + $0x19] sm:$0xff] %vm889, %v859
      %893 = vst.msk [vmem:[#allocation2 + $0x21] sm:$0xff] %vm889, %v860
      %894 = vst.msk [vmem:[#allocation2 + $0x31] sm:$0xff] %vm889, %v861
      %895 = vst.msk [vmem:[#allocation2 + $0x39] sm:$0xff] %vm889, %v862
      %896 = vst.msk [vmem:[#allocation2 + $0x49] sm:$0xff] %vm889, %v863
      %897 = vst.msk [vmem:[#allocation2 + $0x51] sm:$0xff] %vm889, %v864
      %898 = vst.msk [vmem:[#allocation2 + $0x61] sm:$0xff] %vm889, %v865
      %899 = vst.msk [vmem:[#allocation2 + $0x69] sm:$0xff] %vm889, %v866
      %900 = vst.msk [vmem:[#allocation2 + $0x79] sm:$0xff] %vm889, %v867
      %901 = vst.msk [vmem:[#allocation2 + $0x81] sm:$0xff] %vm889, %v868
      %902 = vst.msk [vmem:[#allocation2 + $0x91] sm:$0xff] %vm889, %v869
      %903 = vst.msk [vmem:[#allocation2 + $0x99] sm:$0xff] %vm889, %v870
      %904 = vst.msk [vmem:[#allocation2 + $0xa9] sm:$0xff] %vm889, %v871
      %905 = vst.msk [vmem:[#allocation2 + $0xb1] sm:$0xff] %vm889, %v872
      %906 = vst.msk [vmem:[#allocation2 + $0xc1] sm:$0xff] %vm889, %v873
      %907 = vst.msk [vmem:[#allocation2 + $0xc9] sm:$0xff] %vm889, %v874
      %908 = vst.msk [vmem:[#allocation2 + $0xd9] sm:$0xff] %vm889, %v875
      %909 = vst.msk [vmem:[#allocation2 + $0xe1] sm:$0xff] %vm889, %v876
      %910 = vst.msk [vmem:[#allocation2 + $0xf1] sm:$0xff] %vm889, %v877
      %911 = vst.msk [vmem:[#allocation2 + $0xf9] sm:$0xff] %vm889, %v878
      %912 = vst.msk [vmem:[#allocation2 + $0x109] sm:$0xff] %vm889, %v879
      %913 = vst.msk [vmem:[#allocation2 + $0x111] sm:$0xff] %vm889, %v880
      %914 = vst.msk [vmem:[#allocation2 + $0x121] sm:$0xff] %vm889, %v881
      %915 = vst.msk [vmem:[#allocation2 + $0x129] sm:$0xff] %vm889, %v882
      %916 = vst.msk [vmem:[#allocation2 + $0x139] sm:$0xff] %vm889, %v883
      %917 = vst.msk [vmem:[#allocation2 + $0x141] sm:$0xff] %vm889, %v884
      %918 = vst.msk [vmem:[#allocation2 + $0x151] sm:$0xff] %vm889, %v885
      %919 = vst.msk [vmem:[#allocation2 + $0x159] sm:$0xff] %vm889, %v886
      %920 = vst.msk [vmem:[#allocation2 + $0x169] sm:$0xff] %vm889, %v887
      %921 = vst.msk [vmem:[#allocation2 + $0x171] sm:$0xff] %vm889, %v888
      %v922 = vld [vmem:[#allocation2] sm:$0xff]
      %v923 = vld [vmem:[#allocation2 + $0x8] sm:$0xff]
      %v924 = vld [vmem:[#allocation2 + $0x18] sm:$0xff]
      %v925 = vld [vmem:[#allocation2 + $0x20] sm:$0xff]
      %v926 = vld [vmem:[#allocation2 + $0x30] sm:$0xff]
      %v927 = vld [vmem:[#allocation2 + $0x38] sm:$0xff]
      %v928 = vld [vmem:[#allocation2 + $0x48] sm:$0xff]
      %v929 = vld [vmem:[#allocation2 + $0x50] sm:$0xff]
      %v930 = vld [vmem:[#allocation2 + $0x60] sm:$0xff]
      %v931 = vld [vmem:[#allocation2 + $0x68] sm:$0xff]
      %v932 = vld [vmem:[#allocation2 + $0x78] sm:$0xff]
      %v933 = vld [vmem:[#allocation2 + $0x80] sm:$0xff]
      %v934 = vld [vmem:[#allocation2 + $0x90] sm:$0xff]
      %v935 = vld [vmem:[#allocation2 + $0x98] sm:$0xff]
      %v936 = vld [vmem:[#allocation2 + $0xa8] sm:$0xff]
      %v937 = vld [vmem:[#allocation2 + $0xb0] sm:$0xff]
      %v938 = vld [vmem:[#allocation2 + $0xc0] sm:$0xff]
      %v939 = vld [vmem:[#allocation2 + $0xc8] sm:$0xff]
      %v940 = vld [vmem:[#allocation2 + $0xd8] sm:$0xff]
      %v941 = vld [vmem:[#allocation2 + $0xe0] sm:$0xff]
      %v942 = vld [vmem:[#allocation2 + $0xf0] sm:$0xff]
      %v943 = vld [vmem:[#allocation2 + $0xf8] sm:$0xff]
      %v944 = vld [vmem:[#allocation2 + $0x108] sm:$0xff]
      %v945 = vld [vmem:[#allocation2 + $0x110] sm:$0xff]
      %v946 = vld [vmem:[#allocation2 + $0x120] sm:$0xff]
      %v947 = vld [vmem:[#allocation2 + $0x128] sm:$0xff]
      %v948 = vld [vmem:[#allocation2 + $0x138] sm:$0xff]
      %v949 = vld [vmem:[#allocation2 + $0x140] sm:$0xff]
      %v950 = vld [vmem:[#allocation2 + $0x150] sm:$0xff]
      %v951 = vld [vmem:[#allocation2 + $0x158] sm:$0xff]
      %v952 = vld [vmem:[#allocation2 + $0x168] sm:$0xff]
      %v953 = vld [vmem:[#allocation2 + $0x170] sm:$0xff]
      %v954 = vld [vmem:[#allocation2 + $0x2] sm:$0xff]
      %v955 = vld [vmem:[#allocation2 + $0xa] sm:$0xff]
      %v956 = vld [vmem:[#allocation2 + $0x1a] sm:$0xff]
      %v957 = vld [vmem:[#allocation2 + $0x22] sm:$0xff]
      %v958 = vld [vmem:[#allocation2 + $0x32] sm:$0xff]
      %v959 = vld [vmem:[#allocation2 + $0x3a] sm:$0xff]
      %v960 = vld [vmem:[#allocation2 + $0x4a] sm:$0xff]
      %v961 = vld [vmem:[#allocation2 + $0x52] sm:$0xff]
      %v962 = vld [vmem:[#allocation2 + $0x62] sm:$0xff]
      %v963 = vld [vmem:[#allocation2 + $0x6a] sm:$0xff]
      %v964 = vld [vmem:[#allocation2 + $0x7a] sm:$0xff]
      %v965 = vld [vmem:[#allocation2 + $0x82] sm:$0xff]
      %v966 = vld [vmem:[#allocation2 + $0x92] sm:$0xff]
      %v967 = vld [vmem:[#allocation2 + $0x9a] sm:$0xff]
      %v968 = vld [vmem:[#allocation2 + $0xaa] sm:$0xff]
      %v969 = vld [vmem:[#allocation2 + $0xb2] sm:$0xff]
      %v970 = vld [vmem:[#allocation2 + $0xc2] sm:$0xff]
      %v971 = vld [vmem:[#allocation2 + $0xca] sm:$0xff]
      %v972 = vld [vmem:[#allocation2 + $0xda] sm:$0xff]
      %v973 = vld [vmem:[#allocation2 + $0xe2] sm:$0xff]
      %v974 = vld [vmem:[#allocation2 + $0xf2] sm:$0xff]
      %v975 = vld [vmem:[#allocation2 + $0xfa] sm:$0xff]
      %v976 = vld [vmem:[#allocation2 + $0x10a] sm:$0xff]
      %v977 = vld [vmem:[#allocation2 + $0x112] sm:$0xff]
      %v978 = vld [vmem:[#allocation2 + $0x122] sm:$0xff]
      %v979 = vld [vmem:[#allocation2 + $0x12a] sm:$0xff]
      %v980 = vld [vmem:[#allocation2 + $0x13a] sm:$0xff]
      %v981 = vld [vmem:[#allocation2 + $0x142] sm:$0xff]
      %v982 = vld [vmem:[#allocation2 + $0x152] sm:$0xff]
      %v983 = vld [vmem:[#allocation2 + $0x15a] sm:$0xff]
      %v984 = vld [vmem:[#allocation2 + $0x16a] sm:$0xff]
      %v985 = vld [vmem:[#allocation2 + $0x172] sm:$0xff]
      %1018 = vrot.lane.b32.xlu0 %v857, 4
      %v1019 = vpop.permute.xlu0 %1018
      %1020 = vrot.lane.b32.xlu0 %v858, 4
      %v1021 = vpop.permute.xlu0 %1020
      %1022 = vrot.lane.b32.xlu0 %v859, 4
      %v1023 = vpop.permute.xlu0 %1022
      %1024 = vrot.lane.b32.xlu0 %v860, 4
      %v1025 = vpop.permute.xlu0 %1024
      %1026 = vrot.lane.b32.xlu0 %v861, 4
      %v1027 = vpop.permute.xlu0 %1026
      %1028 = vrot.lane.b32.xlu0 %v862, 4
      %v1029 = vpop.permute.xlu0 %1028
      %1030 = vrot.lane.b32.xlu0 %v863, 4
      %v1031 = vpop.permute.xlu0 %1030
      %1032 = vrot.lane.b32.xlu0 %v864, 4
      %v1033 = vpop.permute.xlu0 %1032
      %1034 = vrot.lane.b32.xlu0 %v865, 4
      %v1035 = vpop.permute.xlu0 %1034
      %1036 = vrot.lane.b32.xlu0 %v866, 4
      %v1037 = vpop.permute.xlu0 %1036
      %1038 = vrot.lane.b32.xlu0 %v867, 4
      %v1039 = vpop.permute.xlu0 %1038
      %1040 = vrot.lane.b32.xlu0 %v868, 4
      %v1041 = vpop.permute.xlu0 %1040
      %1042 = vrot.lane.b32.xlu0 %v869, 4
      %v1043 = vpop.permute.xlu0 %1042
      %1044 = vrot.lane.b32.xlu0 %v870, 4
      %v1045 = vpop.permute.xlu0 %1044
      %1046 = vrot.lane.b32.xlu0 %v871, 4
      %v1047 = vpop.permute.xlu0 %1046
      %1048 = vrot.lane.b32.xlu0 %v872, 4
      %v1049 = vpop.permute.xlu0 %1048
      %1050 = vrot.lane.b32.xlu0 %v873, 4
      %v1051 = vpop.permute.xlu0 %1050
      %1052 = vrot.lane.b32.xlu0 %v874, 4
      %v1053 = vpop.permute.xlu0 %1052
      %1054 = vrot.lane.b32.xlu0 %v875, 4
      %v1055 = vpop.permute.xlu0 %1054
      %1056 = vrot.lane.b32.xlu0 %v876, 4
      %v1057 = vpop.permute.xlu0 %1056
      %1058 = vrot.lane.b32.xlu0 %v877, 4
      %v1059 = vpop.permute.xlu0 %1058
      %1060 = vrot.lane.b32.xlu0 %v878, 4
      %v1061 = vpop.permute.xlu0 %1060
      %1062 = vrot.lane.b32.xlu0 %v879, 4
      %v1063 = vpop.permute.xlu0 %1062
      %1064 = vrot.lane.b32.xlu0 %v880, 4
      %v1065 = vpop.permute.xlu0 %1064
      %1066 = vrot.lane.b32.xlu0 %v881, 4
      %v1067 = vpop.permute.xlu0 %1066
      %1068 = vrot.lane.b32.xlu0 %v882, 4
      %v1069 = vpop.permute.xlu0 %1068
      %1070 = vrot.lane.b32.xlu0 %v883, 4
      %v1071 = vpop.permute.xlu0 %1070
      %1072 = vrot.lane.b32.xlu0 %v884, 4
      %v1073 = vpop.permute.xlu0 %1072
      %1074 = vrot.lane.b32.xlu0 %v885, 4
      %v1075 = vpop.permute.xlu0 %1074
      %1076 = vrot.lane.b32.xlu0 %v886, 4
      %v1077 = vpop.permute.xlu0 %1076
      %1078 = vrot.lane.b32.xlu0 %v887, 4
      %v1079 = vpop.permute.xlu0 %1078
      %1080 = vrot.lane.b32.xlu0 %v888, 4
      %v1081 = vpop.permute.xlu0 %1080
      %1146 = vrot.lane.b32.xlu0 %v954, 8
      %v1147 = vpop.permute.xlu0 %1146
      %1148 = vrot.lane.b32.xlu0 %v955, 8
      %v1149 = vpop.permute.xlu0 %1148
      %1150 = vrot.lane.b32.xlu0 %v956, 8
      %v1151 = vpop.permute.xlu0 %1150
      %1152 = vrot.lane.b32.xlu0 %v957, 8
      %v1153 = vpop.permute.xlu0 %1152
      %1154 = vrot.lane.b32.xlu0 %v958, 8
      %v1155 = vpop.permute.xlu0 %1154
      %1156 = vrot.lane.b32.xlu0 %v959, 8
      %v1157 = vpop.permute.xlu0 %1156
      %1158 = vrot.lane.b32.xlu0 %v960, 8
      %v1159 = vpop.permute.xlu0 %1158
      %1160 = vrot.lane.b32.xlu0 %v961, 8
      %v1161 = vpop.permute.xlu0 %1160
      %1162 = vrot.lane.b32.xlu0 %v962, 8
      %v1163 = vpop.permute.xlu0 %1162
      %1164 = vrot.lane.b32.xlu0 %v963, 8
      %v1165 = vpop.permute.xlu0 %1164
      %1166 = vrot.lane.b32.xlu0 %v964, 8
      %v1167 = vpop.permute.xlu0 %1166
      %1168 = vrot.lane.b32.xlu0 %v965, 8
      %v1169 = vpop.permute.xlu0 %1168
      %1170 = vrot.lane.b32.xlu0 %v966, 8
      %v1171 = vpop.permute.xlu0 %1170
      %1172 = vrot.lane.b32.xlu0 %v967, 8
      %v1173 = vpop.permute.xlu0 %1172
      %1174 = vrot.lane.b32.xlu0 %v968, 8
      %v1175 = vpop.permute.xlu0 %1174
      %1176 = vrot.lane.b32.xlu0 %v969, 8
      %v1177 = vpop.permute.xlu0 %1176
      %1178 = vrot.lane.b32.xlu0 %v970, 8
      %v1179 = vpop.permute.xlu0 %1178
      %1180 = vrot.lane.b32.xlu0 %v971, 8
      %v1181 = vpop.permute.xlu0 %1180
      %1182 = vrot.lane.b32.xlu0 %v972, 8
      %v1183 = vpop.permute.xlu0 %1182
      %1184 = vrot.lane.b32.xlu0 %v973, 8
      %v1185 = vpop.permute.xlu0 %1184
      %1186 = vrot.lane.b32.xlu0 %v974, 8
      %v1187 = vpop.permute.xlu0 %1186
      %1188 = vrot.lane.b32.xlu0 %v975, 8
      %v1189 = vpop.permute.xlu0 %1188
      %1190 = vrot.lane.b32.xlu0 %v976, 8
      %v1191 = vpop.permute.xlu0 %1190
      %1192 = vrot.lane.b32.xlu0 %v977, 8
      %v1193 = vpop.permute.xlu0 %1192
      %1194 = vrot.lane.b32.xlu0 %v978, 8
      %v1195 = vpop.permute.xlu0 %1194
      %1196 = vrot.lane.b32.xlu0 %v979, 8
      %v1197 = vpop.permute.xlu0 %1196
      %1198 = vrot.lane.b32.xlu0 %v980, 8
      %v1199 = vpop.permute.xlu0 %1198
      %1200 = vrot.lane.b32.xlu0 %v981, 8
      %v1201 = vpop.permute.xlu0 %1200
      %1202 = vrot.lane.b32.xlu0 %v982, 8
      %v1203 = vpop.permute.xlu0 %1202
      %1204 = vrot.lane.b32.xlu0 %v983, 8
      %v1205 = vpop.permute.xlu0 %1204
      %1206 = vrot.lane.b32.xlu0 %v984, 8
      %v1207 = vpop.permute.xlu0 %1206
      %1208 = vrot.lane.b32.xlu0 %v985, 8
      %v1209 = vpop.permute.xlu0 %1208
      %v1242 = vsel %vm889, %v922, %v1019
      %v1243 = vsel %vm889, %v923, %v1021
      %v1244 = vsel %vm889, %v924, %v1023
      %v1245 = vsel %vm889, %v925, %v1025
      %v1246 = vsel %vm889, %v926, %v1027
      %v1247 = vsel %vm889, %v927, %v1029
      %v1248 = vsel %vm889, %v928, %v1031
      %v1249 = vsel %vm889, %v929, %v1033
      %v1250 = vsel %vm889, %v930, %v1035
      %v1251 = vsel %vm889, %v931, %v1037
      %v1252 = vsel %vm889, %v932, %v1039
      %v1253 = vsel %vm889, %v933, %v1041
      %v1254 = vsel %vm889, %v934, %v1043
      %v1255 = vsel %vm889, %v935, %v1045
      %v1256 = vsel %vm889, %v936, %v1047
      %v1257 = vsel %vm889, %v937, %v1049
      %v1258 = vsel %vm889, %v938, %v1051
      %v1259 = vsel %vm889, %v939, %v1053
      %v1260 = vsel %vm889, %v940, %v1055
      %v1261 = vsel %vm889, %v941, %v1057
      %v1262 = vsel %vm889, %v942, %v1059
      %v1263 = vsel %vm889, %v943, %v1061
      %v1264 = vsel %vm889, %v944, %v1063
      %v1265 = vsel %vm889, %v945, %v1065
      %v1266 = vsel %vm889, %v946, %v1067
      %v1267 = vsel %vm889, %v947, %v1069
      %v1268 = vsel %vm889, %v948, %v1071
      %v1269 = vsel %vm889, %v949, %v1073
      %v1270 = vsel %vm889, %v950, %v1075
      %v1271 = vsel %vm889, %v951, %v1077
      %v1272 = vsel %vm889, %v952, %v1079
      %v1273 = vsel %vm889, %v953, %v1081
      %vm1274 = vcmask 64512
      %v1275 = vsel %vm1274, %v1242, %v1147
      %v1276 = vsel %vm1274, %v1243, %v1149
      %v1277 = vsel %vm1274, %v1244, %v1151
      %v1278 = vsel %vm1274, %v1245, %v1153
      %v1279 = vsel %vm1274, %v1246, %v1155
      %v1280 = vsel %vm1274, %v1247, %v1157
      %v1281 = vsel %vm1274, %v1248, %v1159
      %v1282 = vsel %vm1274, %v1249, %v1161
      %v1283 = vsel %vm1274, %v1250, %v1163
      %v1284 = vsel %vm1274, %v1251, %v1165
      %v1285 = vsel %vm1274, %v1252, %v1167
      %v1286 = vsel %vm1274, %v1253, %v1169
      %v1287 = vsel %vm1274, %v1254, %v1171
      %v1288 = vsel %vm1274, %v1255, %v1173
      %v1289 = vsel %vm1274, %v1256, %v1175
      %v1290 = vsel %vm1274, %v1257, %v1177
      %v1291 = vsel %vm1274, %v1258, %v1179
      %v1292 = vsel %vm1274, %v1259, %v1181
      %v1293 = vsel %vm1274, %v1260, %v1183
      %v1294 = vsel %vm1274, %v1261, %v1185
      %v1295 = vsel %vm1274, %v1262, %v1187
      %v1296 = vsel %vm1274, %v1263, %v1189
      %v1297 = vsel %vm1274, %v1264, %v1191
      %v1298 = vsel %vm1274, %v1265, %v1193
      %v1299 = vsel %vm1274, %v1266, %v1195
      %v1300 = vsel %vm1274, %v1267, %v1197
      %v1301 = vsel %vm1274, %v1268, %v1199
      %v1302 = vsel %vm1274, %v1269, %v1201
      %v1303 = vsel %vm1274, %v1270, %v1203
      %v1304 = vsel %vm1274, %v1271, %v1205
      %v1305 = vsel %vm1274, %v1272, %v1207
      %v1306 = vsel %vm1274, %v1273, %v1209
      %s1307 = scalar_lea.vmem [#allocation3], 32
      %vm1308 = vcmask 97280
      %1309 = vst.msk [vmem:[%s1307] sm:$0xff] %vm1308, %v1275
      %1310 = vst.msk [vmem:[%s1307 + $0x10] sm:$0xff] %vm1308, %v1276
      %1311 = vst.msk [vmem:[%s1307 + $0x20] sm:$0xff] %vm1308, %v1277
      %1312 = vst.msk [vmem:[%s1307 + $0x30] sm:$0xff] %vm1308, %v1278
      %1313 = vst.msk [vmem:[%s1307 + $0x40] sm:$0xff] %vm1308, %v1279
      %1314 = vst.msk [vmem:[%s1307 + $0x50] sm:$0xff] %vm1308, %v1280
      %1315 = vst.msk [vmem:[%s1307 + $0x60] sm:$0xff] %vm1308, %v1281
      %1316 = vst.msk [vmem:[%s1307 + $0x70] sm:$0xff] %vm1308, %v1282
      %1317 = vst.msk [vmem:[%s1307 + $0x80] sm:$0xff] %vm1308, %v1283
      %1318 = vst.msk [vmem:[%s1307 + $0x90] sm:$0xff] %vm1308, %v1284
      %1319 = vst.msk [vmem:[%s1307 + $0xa0] sm:$0xff] %vm1308, %v1285
      %1320 = vst.msk [vmem:[%s1307 + $0xb0] sm:$0xff] %vm1308, %v1286
      %1321 = vst.msk [vmem:[%s1307 + $0xc0] sm:$0xff] %vm1308, %v1287
      %1322 = vst.msk [vmem:[%s1307 + $0xd0] sm:$0xff] %vm1308, %v1288
      %1323 = vst.msk [vmem:[%s1307 + $0xe0] sm:$0xff] %vm1308, %v1289
      %1324 = vst.msk [vmem:[%s1307 + $0xf0] sm:$0xff] %vm1308, %v1290
      %1325 = vst.msk [vmem:[%s1307 + $0x100] sm:$0xff] %vm1308, %v1291
      %1326 = vst.msk [vmem:[%s1307 + $0x110] sm:$0xff] %vm1308, %v1292
      %1327 = vst.msk [vmem:[%s1307 + $0x120] sm:$0xff] %vm1308, %v1293
      %1328 = vst.msk [vmem:[%s1307 + $0x130] sm:$0xff] %vm1308, %v1294
      %1329 = vst.msk [vmem:[%s1307 + $0x140] sm:$0xff] %vm1308, %v1295
      %1330 = vst.msk [vmem:[%s1307 + $0x150] sm:$0xff] %vm1308, %v1296
      %1331 = vst.msk [vmem:[%s1307 + $0x160] sm:$0xff] %vm1308, %v1297
      %1332 = vst.msk [vmem:[%s1307 + $0x170] sm:$0xff] %vm1308, %v1298
      %1333 = vst.msk [vmem:[%s1307 + $0x180] sm:$0xff] %vm1308, %v1299
      %1334 = vst.msk [vmem:[%s1307 + $0x190] sm:$0xff] %vm1308, %v1300
      %1335 = vst.msk [vmem:[%s1307 + $0x1a0] sm:$0xff] %vm1308, %v1301
      %1336 = vst.msk [vmem:[%s1307 + $0x1b0] sm:$0xff] %vm1308, %v1302
      %1337 = vst.msk [vmem:[%s1307 + $0x1c0] sm:$0xff] %vm1308, %v1303
      %1338 = vst.msk [vmem:[%s1307 + $0x1d0] sm:$0xff] %vm1308, %v1304
      %1339 = vst.msk [vmem:[%s1307 + $0x1e0] sm:$0xff] %vm1308, %v1305
      %1340 = vst.msk [vmem:[%s1307 + $0x1f0] sm:$0xff] %vm1308, %v1306
      %v1341 = vld [vmem:[#allocation3] sm:$0xff]
      %v1342 = vld [vmem:[#allocation3 + $0x10] sm:$0xff]
      %v1343 = vld [vmem:[#allocation3 + $0x20] sm:$0xff]
      %v1344 = vld [vmem:[#allocation3 + $0x30] sm:$0xff]
      %v1345 = vld [vmem:[#allocation3 + $0x40] sm:$0xff]
      %v1346 = vld [vmem:[#allocation3 + $0x50] sm:$0xff]
      %v1347 = vld [vmem:[#allocation3 + $0x60] sm:$0xff]
      %v1348 = vld [vmem:[#allocation3 + $0x70] sm:$0xff]
      %v1349 = vld [vmem:[#allocation3 + $0x80] sm:$0xff]
      %v1350 = vld [vmem:[#allocation3 + $0x90] sm:$0xff]
      %v1351 = vld [vmem:[#allocation3 + $0xa0] sm:$0xff]
      %v1352 = vld [vmem:[#allocation3 + $0xb0] sm:$0xff]
      %v1353 = vld [vmem:[#allocation3 + $0xc0] sm:$0xff]
      %v1354 = vld [vmem:[#allocation3 + $0xd0] sm:$0xff]
      %v1355 = vld [vmem:[#allocation3 + $0xe0] sm:$0xff]
      %v1356 = vld [vmem:[#allocation3 + $0xf0] sm:$0xff]
      %v1357 = vld [vmem:[#allocation3 + $0x100] sm:$0xff]
      %v1358 = vld [vmem:[#allocation3 + $0x110] sm:$0xff]
      %v1359 = vld [vmem:[#allocation3 + $0x120] sm:$0xff]
      %v1360 = vld [vmem:[#allocation3 + $0x130] sm:$0xff]
      %v1361 = vld [vmem:[#allocation3 + $0x140] sm:$0xff]
      %v1362 = vld [vmem:[#allocation3 + $0x150] sm:$0xff]
      %v1363 = vld [vmem:[#allocation3 + $0x160] sm:$0xff]
      %v1364 = vld [vmem:[#allocation3 + $0x170] sm:$0xff]
      %v1365 = vld [vmem:[#allocation3 + $0x180] sm:$0xff]
      %v1366 = vld [vmem:[#allocation3 + $0x190] sm:$0xff]
      %v1367 = vld [vmem:[#allocation3 + $0x1a0] sm:$0xff]
      %v1368 = vld [vmem:[#allocation3 + $0x1b0] sm:$0xff]
      %v1369 = vld [vmem:[#allocation3 + $0x1c0] sm:$0xff]
      %v1370 = vld [vmem:[#allocation3 + $0x1d0] sm:$0xff]
      %v1371 = vld [vmem:[#allocation3 + $0x1e0] sm:$0xff]
      %v1372 = vld [vmem:[#allocation3 + $0x1f0] sm:$0xff]
      %v1373 = vld [vmem:[%s3] sm:$0xff]
      %v1374 = vld [vmem:[%s3 + $0x8] sm:$0xf]
      %v1375 = vld [vmem:[%s1307] sm:$0xff]
      %v1376 = vld [vmem:[%s1307 + $0x10] sm:$0xff]
      %v1377 = vld [vmem:[%s1307 + $0x20] sm:$0xff]
      %v1378 = vld [vmem:[%s1307 + $0x30] sm:$0xff]
      %v1379 = vld [vmem:[%s1307 + $0x40] sm:$0xff]
      %v1380 = vld [vmem:[%s1307 + $0x50] sm:$0xff]
      %v1381 = vld [vmem:[%s1307 + $0x60] sm:$0xff]
      %v1382 = vld [vmem:[%s1307 + $0x70] sm:$0xff]
      %v1383 = vld [vmem:[%s1307 + $0x80] sm:$0xff]
      %v1384 = vld [vmem:[%s1307 + $0x90] sm:$0xff]
      %v1385 = vld [vmem:[%s1307 + $0xa0] sm:$0xff]
      %v1386 = vld [vmem:[%s1307 + $0xb0] sm:$0xff]
      %v1387 = vld [vmem:[%s1307 + $0xc0] sm:$0xff]
      %v1388 = vld [vmem:[%s1307 + $0xd0] sm:$0xff]
      %v1389 = vld [vmem:[%s1307 + $0xe0] sm:$0xff]
      %v1390 = vld [vmem:[%s1307 + $0xf0] sm:$0xff]
      %v1391 = vld [vmem:[%s1307 + $0x100] sm:$0xff]
      %v1392 = vld [vmem:[%s1307 + $0x110] sm:$0xff]
      %v1393 = vld [vmem:[%s1307 + $0x120] sm:$0xff]
      %v1394 = vld [vmem:[%s1307 + $0x130] sm:$0xff]
      %v1395 = vld [vmem:[%s1307 + $0x140] sm:$0xff]
      %v1396 = vld [vmem:[%s1307 + $0x150] sm:$0xff]
      %v1397 = vld [vmem:[%s1307 + $0x160] sm:$0xff]
      %v1398 = vld [vmem:[%s1307 + $0x170] sm:$0xff]
      %v1399 = vld [vmem:[%s1307 + $0x180] sm:$0xff]
      %v1400 = vld [vmem:[%s1307 + $0x190] sm:$0xff]
      %v1401 = vld [vmem:[%s1307 + $0x1a0] sm:$0xff]
      %v1402 = vld [vmem:[%s1307 + $0x1b0] sm:$0xff]
      %v1403 = vld [vmem:[%s1307 + $0x1c0] sm:$0xff]
      %v1404 = vld [vmem:[%s1307 + $0x1d0] sm:$0xff]
      %v1405 = vld [vmem:[%s1307 + $0x1e0] sm:$0xff]
      %v1406 = vld [vmem:[%s1307 + $0x1f0] sm:$0xff]
      %s1407 = scalar_lea.vmem %s3, 16
      %v1408 = vld [vmem:[%s1407] sm:$0xff]
      %v1409 = vld [vmem:[%s1407 + $0x8] sm:$0xf]
      %v1411 = vsel %vm1308, %v1375, 0
      %v1414 = vsel %vm1308, %v1376, 0
      %v1417 = vsel %vm1308, %v1377, 0
      %v1420 = vsel %vm1308, %v1378, 0
      %v1423 = vsel %vm1308, %v1379, 0
      %v1426 = vsel %vm1308, %v1380, 0
      %v1429 = vsel %vm1308, %v1381, 0
      %v1432 = vsel %vm1308, %v1382, 0
      %v1435 = vsel %vm1308, %v1383, 0
      %v1438 = vsel %vm1308, %v1384, 0
      %v1441 = vsel %vm1308, %v1385, 0
      %v1444 = vsel %vm1308, %v1386, 0
      %v1447 = vsel %vm1308, %v1387, 0
      %v1450 = vsel %vm1308, %v1388, 0
      %v1453 = vsel %vm1308, %v1389, 0
      %v1456 = vsel %vm1308, %v1390, 0
      %v1459 = vsel %vm1308, %v1391, 0
      %v1462 = vsel %vm1308, %v1392, 0
      %v1465 = vsel %vm1308, %v1393, 0
      %v1468 = vsel %vm1308, %v1394, 0
      %v1471 = vsel %vm1308, %v1395, 0
      %v1474 = vsel %vm1308, %v1396, 0
      %v1477 = vsel %vm1308, %v1397, 0
      %v1480 = vsel %vm1308, %v1398, 0
      %v1483 = vsel %vm1308, %v1399, 0
      %v1486 = vsel %vm1308, %v1400, 0
      %v1489 = vsel %vm1308, %v1401, 0
      %v1492 = vsel %vm1308, %v1402, 0
      %v1495 = vsel %vm1308, %v1403, 0
      %v1498 = vsel %vm1308, %v1404, 0
      %v1501 = vsel %vm1308, %v1405, 0
      %v1504 = vsel %vm1308, %v1406, 0
      %vm1506 = vcmask 1043456
      %v1508 = vsel %vm1506, %v1409, 0
      %1510 = vmatprep.subr.mxu0 0.0
      %1511 = vmatpush1.msra.mxu0 %v1408
      %1512 = vmatprep.subr.mxu0 0.0
      %1513 = vmatpush1.msra.mxu0 %v1508
      %1514 = vmatprep.subr.mxu0 0.0
      %1515 = vmatpush1.msra.mxu0 0.0
      %1516 = vmatprep.subr.mxu0 0.0
      %1517 = vmatpush1.msra.mxu0 0.0
      %1518 = vmatprep.subr.mxu0 0.0
      %1519 = vmatpush1.msra.mxu0 0.0
      %1520 = vmatprep.subr.mxu0 0.0
      %1521 = vmatpush1.msra.mxu0 0.0
      %1522 = vmatprep.subr.mxu0 0.0
      %1523 = vmatpush1.msra.mxu0 0.0
      %1524 = vmatprep.subr.mxu0 0.0
      %1525 = vmatpush1.msra.mxu0 0.0
      %1526 = vmatprep.subr.mxu0 0.0
      %1527 = vmatpush1.msra.mxu0 0.0
      %1528 = vmatprep.subr.mxu0 0.0
      %1529 = vmatpush1.msra.mxu0 0.0
      %1530 = vmatprep.subr.mxu0 0.0
      %1531 = vmatpush1.msra.mxu0 0.0
      %1532 = vmatprep.subr.mxu0 0.0
      %1533 = vmatpush1.msra.mxu0 0.0
      %1534 = vmatprep.subr.mxu0 0.0
      %1535 = vmatpush1.msra.mxu0 0.0
      %1536 = vmatprep.subr.mxu0 0.0
      %1537 = vmatpush1.msra.mxu0 0.0
      %1538 = vmatprep.subr.mxu0 0.0
      %1539 = vmatpush1.msra.mxu0 0.0
      %1540 = vmatprep.subr.mxu0 0.0
      %1541 = vmatpush1.msra.mxu0 0.0
      %1542 = vmatprep.subr.mxu0 0.0
      %1543 = vmatpush1.msra.mxu0 0.0
      %1544 = vmatprep.subr.mxu0 0.0
      %1545 = vmatpush1.msra.mxu0 0.0
      %1546 = vmatprep.subr.mxu0 0.0
      %1547 = vmatpush1.msra.mxu0 0.0
      %1548 = vmatprep.subr.mxu0 0.0
      %1549 = vmatpush1.msra.mxu0 0.0
      %1550 = vmatprep.subr.mxu0 0.0
      %1551 = vmatpush1.msra.mxu0 0.0
      %1552 = vmatprep.subr.mxu0 0.0
      %1553 = vmatpush1.msra.mxu0 0.0
      %1554 = vmatprep.subr.mxu0 0.0
      %1555 = vmatpush1.msra.mxu0 0.0
      %1556 = vmatprep.subr.mxu0 0.0
      %1557 = vmatpush1.msra.mxu0 0.0
      %1558 = vmatprep.subr.mxu0 0.0
      %1559 = vmatpush1.msra.mxu0 0.0
      %1560 = vmatprep.subr.mxu0 0.0
      %1561 = vmatpush1.msra.mxu0 0.0
      %1562 = vmatprep.subr.mxu0 0.0
      %1563 = vmatpush1.msra.mxu0 0.0
      %1564 = vmatprep.subr.mxu0 0.0
      %1565 = vmatpush1.msra.mxu0 0.0
      %1566 = vmatprep.subr.mxu0 0.0
      %1567 = vmatpush1.msra.mxu0 0.0
      %1568 = vmatprep.subr.mxu0 0.0
      %1569 = vmatpush1.msra.mxu0 0.0
      %1570 = vmatprep.subr.mxu0 0.0
      %1571 = vmatpush1.msra.mxu0 0.0
      %1572 = vmatprep.subr.mxu0 0.0
      %1573 = vmatpush1.msra.mxu0 0.0
      %1574 = vmatprep.mubr.f32.mxu0 0.0
      %1575 = vmatmul.mubr.f32.gmra.mrb[0].mxu0 %v1411
      %v1576 = vpop.f32.mrb[0].mxu0
      %v1577 = vadd.f32 0.0, %v1576
      %v1578 = vpop.f32.mrb[0].mxu0
      %1579 = vmatprep.mubr.f32.mxu0 0.0
      %1580 = vmatmul.mubr.f32.gmra.mrb[0].mxu0 %v1414
      %v1581 = vpop.f32.mrb[0].mxu0
      %v1582 = vadd.f32 0.0, %v1581
      %v1583 = vpop.f32.mrb[0].mxu0
      %1584 = vmatprep.mubr.f32.mxu0 0.0
      %1585 = vmatmul.mubr.f32.gmra.mrb[0].mxu0 %v1417
      %v1586 = vpop.f32.mrb[0].mxu0
      %v1587 = vadd.f32 0.0, %v1586
      %v1588 = vpop.f32.mrb[0].mxu0
      %1589 = vmatprep.mubr.f32.mxu0 0.0
      %1590 = vmatmul.mubr.f32.gmra.mrb[0].mxu0 %v1420
      %v1591 = vpop.f32.mrb[0].mxu0
      %v1592 = vadd.f32 0.0, %v1591
      %v1593 = vpop.f32.mrb[0].mxu0
      %1594 = vmatprep.mubr.f32.mxu0 0.0
      %1595 = vmatmul.mubr.f32.gmra.mrb[0].mxu0 %v1423
      %v1596 = vpop.f32.mrb[0].mxu0
      %v1597 = vadd.f32 0.0, %v1596
      %v1598 = vpop.f32.mrb[0].mxu0
      %1599 = vmatprep.mubr.f32.mxu0 0.0
      %1600 = vmatmul.mubr.f32.gmra.mrb[0].mxu0 %v1426
      %v1601 = vpop.f32.mrb[0].mxu0
      %v1602 = vadd.f32 0.0, %v1601
      %v1603 = vpop.f32.mrb[0].mxu0
      %1604 = vmatprep.mubr.f32.mxu0 0.0
      %1605 = vmatmul.mubr.f32.gmra.mrb[0].mxu0 %v1429
      %v1606 = vpop.f32.mrb[0].mxu0
      %v1607 = vadd.f32 0.0, %v1606
      %v1608 = vpop.f32.mrb[0].mxu0
      %1609 = vmatprep.mubr.f32.mxu0 0.0
      %1610 = vmatmul.mubr.f32.gmra.mrb[0].mxu0 %v1432
      %v1611 = vpop.f32.mrb[0].mxu0
      %v1612 = vadd.f32 0.0, %v1611
      %v1613 = vpop.f32.mrb[0].mxu0
      %1614 = vmatprep.mubr.f32.mxu0 0.0
      %1615 = vmatmul.mubr.f32.gmra.mrb[0].mxu0 %v1435
      %v1616 = vpop.f32.mrb[0].mxu0
      %v1617 = vadd.f32 0.0, %v1616
      %v1618 = vpop.f32.mrb[0].mxu0
      %1619 = vmatprep.mubr.f32.mxu0 0.0
      %1620 = vmatmul.mubr.f32.gmra.mrb[0].mxu0 %v1438
      %v1621 = vpop.f32.mrb[0].mxu0
      %v1622 = vadd.f32 0.0, %v1621
      %v1623 = vpop.f32.mrb[0].mxu0
      %1624 = vmatprep.mubr.f32.mxu0 0.0
      %1625 = vmatmul.mubr.f32.gmra.mrb[0].mxu0 %v1441
      %v1626 = vpop.f32.mrb[0].mxu0
      %v1627 = vadd.f32 0.0, %v1626
      %v1628 = vpop.f32.mrb[0].mxu0
      %1629 = vmatprep.mubr.f32.mxu0 0.0
      %1630 = vmatmul.mubr.f32.gmra.mrb[0].mxu0 %v1444
      %v1631 = vpop.f32.mrb[0].mxu0
      %v1632 = vadd.f32 0.0, %v1631
      %v1633 = vpop.f32.mrb[0].mxu0
      %1634 = vmatprep.mubr.f32.mxu0 0.0
      %1635 = vmatmul.mubr.f32.gmra.mrb[0].mxu0 %v1447
      %v1636 = vpop.f32.mrb[0].mxu0
      %v1637 = vadd.f32 0.0, %v1636
      %v1638 = vpop.f32.mrb[0].mxu0
      %1639 = vmatprep.mubr.f32.mxu0 0.0
      %1640 = vmatmul.mubr.f32.gmra.mrb[0].mxu0 %v1450
      %v1641 = vpop.f32.mrb[0].mxu0
      %v1642 = vadd.f32 0.0, %v1641
      %v1643 = vpop.f32.mrb[0].mxu0
      %1644 = vmatprep.mubr.f32.mxu0 0.0
      %1645 = vmatmul.mubr.f32.gmra.mrb[0].mxu0 %v1453
      %v1646 = vpop.f32.mrb[0].mxu0
      %v1647 = vadd.f32 0.0, %v1646
      %v1648 = vpop.f32.mrb[0].mxu0
      %1649 = vmatprep.mubr.f32.mxu0 0.0
      %1650 = vmatmul.mubr.f32.gmra.mrb[0].mxu0 %v1456
      %v1651 = vpop.f32.mrb[0].mxu0
      %v1652 = vadd.f32 0.0, %v1651
      %v1653 = vpop.f32.mrb[0].mxu0
      %1654 = vmatprep.mubr.f32.mxu0 0.0
      %1655 = vmatmul.mubr.f32.gmra.mrb[0].mxu0 %v1459
      %v1656 = vpop.f32.mrb[0].mxu0
      %v1657 = vadd.f32 0.0, %v1656
      %v1658 = vpop.f32.mrb[0].mxu0
      %1659 = vmatprep.mubr.f32.mxu0 0.0
      %1660 = vmatmul.mubr.f32.gmra.mrb[0].mxu0 %v1462
      %v1661 = vpop.f32.mrb[0].mxu0
      %v1662 = vadd.f32 0.0, %v1661
      %v1663 = vpop.f32.mrb[0].mxu0
      %1664 = vmatprep.mubr.f32.mxu0 0.0
      %1665 = vmatmul.mubr.f32.gmra.mrb[0].mxu0 %v1465
      %v1666 = vpop.f32.mrb[0].mxu0
      %v1667 = vadd.f32 0.0, %v1666
      %v1668 = vpop.f32.mrb[0].mxu0
      %1669 = vmatprep.mubr.f32.mxu0 0.0
      %1670 = vmatmul.mubr.f32.gmra.mrb[0].mxu0 %v1468
      %v1671 = vpop.f32.mrb[0].mxu0
      %v1672 = vadd.f32 0.0, %v1671
      %v1673 = vpop.f32.mrb[0].mxu0
      %1674 = vmatprep.mubr.f32.mxu0 0.0
      %1675 = vmatmul.mubr.f32.gmra.mrb[0].mxu0 %v1471
      %v1676 = vpop.f32.mrb[0].mxu0
      %v1677 = vadd.f32 0.0, %v1676
      %v1678 = vpop.f32.mrb[0].mxu0
      %1679 = vmatprep.mubr.f32.mxu0 0.0
      %1680 = vmatmul.mubr.f32.gmra.mrb[0].mxu0 %v1474
      %v1681 = vpop.f32.mrb[0].mxu0
      %v1682 = vadd.f32 0.0, %v1681
      %v1683 = vpop.f32.mrb[0].mxu0
      %1684 = vmatprep.mubr.f32.mxu0 0.0
      %1685 = vmatmul.mubr.f32.gmra.mrb[0].mxu0 %v1477
      %v1686 = vpop.f32.mrb[0].mxu0
      %v1687 = vadd.f32 0.0, %v1686
      %v1688 = vpop.f32.mrb[0].mxu0
      %1689 = vmatprep.mubr.f32.mxu0 0.0
      %1690 = vmatmul.mubr.f32.gmra.mrb[0].mxu0 %v1480
      %v1691 = vpop.f32.mrb[0].mxu0
      %v1692 = vadd.f32 0.0, %v1691
      %v1693 = vpop.f32.mrb[0].mxu0
      %1694 = vmatprep.mubr.f32.mxu0 0.0
      %1695 = vmatmul.mubr.f32.gmra.mrb[0].mxu0 %v1483
      %v1696 = vpop.f32.mrb[0].mxu0
      %v1697 = vadd.f32 0.0, %v1696
      %v1698 = vpop.f32.mrb[0].mxu0
      %1699 = vmatprep.mubr.f32.mxu0 0.0
      %1700 = vmatmul.mubr.f32.gmra.mrb[0].mxu0 %v1486
      %v1701 = vpop.f32.mrb[0].mxu0
      %v1702 = vadd.f32 0.0, %v1701
      %v1703 = vpop.f32.mrb[0].mxu0
      %1704 = vmatprep.mubr.f32.mxu0 0.0
      %1705 = vmatmul.mubr.f32.gmra.mrb[0].mxu0 %v1489
      %v1706 = vpop.f32.mrb[0].mxu0
      %v1707 = vadd.f32 0.0, %v1706
      %v1708 = vpop.f32.mrb[0].mxu0
      %1709 = vmatprep.mubr.f32.mxu0 0.0
      %1710 = vmatmul.mubr.f32.gmra.mrb[0].mxu0 %v1492
      %v1711 = vpop.f32.mrb[0].mxu0
      %v1712 = vadd.f32 0.0, %v1711
      %v1713 = vpop.f32.mrb[0].mxu0
      %1714 = vmatprep.mubr.f32.mxu0 0.0
      %1715 = vmatmul.mubr.f32.gmra.mrb[0].mxu0 %v1495
      %v1716 = vpop.f32.mrb[0].mxu0
      %v1717 = vadd.f32 0.0, %v1716
      %v1718 = vpop.f32.mrb[0].mxu0
      %1719 = vmatprep.mubr.f32.mxu0 0.0
      %1720 = vmatmul.mubr.f32.gmra.mrb[0].mxu0 %v1498
      %v1721 = vpop.f32.mrb[0].mxu0
      %v1722 = vadd.f32 0.0, %v1721
      %v1723 = vpop.f32.mrb[0].mxu0
      %1724 = vmatprep.mubr.f32.mxu0 0.0
      %1725 = vmatmul.mubr.f32.gmra.mrb[0].mxu0 %v1501
      %v1726 = vpop.f32.mrb[0].mxu0
      %v1727 = vadd.f32 0.0, %v1726
      %v1728 = vpop.f32.mrb[0].mxu0
      %1729 = vmatprep.mubr.f32.mxu0 0.0
      %1730 = vmatmul.mubr.f32.gmra.mrb[0].mxu0 %v1504
      %v1731 = vpop.f32.mrb[0].mxu0
      %v1732 = vadd.f32 0.0, %v1731
      %v1733 = vpop.f32.mrb[0].mxu0
      %1734 = vdwg.mxu0
      %v1736 = vsel %vm1308, %v1341, 0
      %v1739 = vsel %vm1308, %v1342, 0
      %v1742 = vsel %vm1308, %v1343, 0
      %v1745 = vsel %vm1308, %v1344, 0
      %v1748 = vsel %vm1308, %v1345, 0
      %v1751 = vsel %vm1308, %v1346, 0
      %v1754 = vsel %vm1308, %v1347, 0
      %v1757 = vsel %vm1308, %v1348, 0
      %v1760 = vsel %vm1308, %v1349, 0
      %v1763 = vsel %vm1308, %v1350, 0
      %v1766 = vsel %vm1308, %v1351, 0
      %v1769 = vsel %vm1308, %v1352, 0
      %v1772 = vsel %vm1308, %v1353, 0
      %v1775 = vsel %vm1308, %v1354, 0
      %v1778 = vsel %vm1308, %v1355, 0
      %v1781 = vsel %vm1308, %v1356, 0
      %v1784 = vsel %vm1308, %v1357, 0
      %v1787 = vsel %vm1308, %v1358, 0
      %v1790 = vsel %vm1308, %v1359, 0
      %v1793 = vsel %vm1308, %v1360, 0
      %v1796 = vsel %vm1308, %v1361, 0
      %v1799 = vsel %vm1308, %v1362, 0
      %v1802 = vsel %vm1308, %v1363, 0
      %v1805 = vsel %vm1308, %v1364, 0
      %v1808 = vsel %vm1308, %v1365, 0
      %v1811 = vsel %vm1308, %v1366, 0
      %v1814 = vsel %vm1308, %v1367, 0
      %v1817 = vsel %vm1308, %v1368, 0
      %v1820 = vsel %vm1308, %v1369, 0
      %v1823 = vsel %vm1308, %v1370, 0
      %v1826 = vsel %vm1308, %v1371, 0
      %v1829 = vsel %vm1308, %v1372, 0
      %v1832 = vsel %vm1506, %v1374, 0
      %1834 = vmatprep.subr.mxu0 0.0
      %1835 = vmatpush1.msra.mxu0 %v1373
      %1836 = vmatprep.subr.mxu0 0.0
      %1837 = vmatpush1.msra.mxu0 %v1832
      %1838 = vmatprep.subr.mxu0 0.0
      %1839 = vmatpush1.msra.mxu0 0.0
      %1840 = vmatprep.subr.mxu0 0.0
      %1841 = vmatpush1.msra.mxu0 0.0
      %1842 = vmatprep.subr.mxu0 0.0
      %1843 = vmatpush1.msra.mxu0 0.0
      %1844 = vmatprep.subr.mxu0 0.0
      %1845 = vmatpush1.msra.mxu0 0.0
      %1846 = vmatprep.subr.mxu0 0.0
      %1847 = vmatpush1.msra.mxu0 0.0
      %1848 = vmatprep.subr.mxu0 0.0
      %1849 = vmatpush1.msra.mxu0 0.0
      %1850 = vmatprep.subr.mxu0 0.0
      %1851 = vmatpush1.msra.mxu0 0.0
      %1852 = vmatprep.subr.mxu0 0.0
      %1853 = vmatpush1.msra.mxu0 0.0
      %1854 = vmatprep.subr.mxu0 0.0
      %1855 = vmatpush1.msra.mxu0 0.0
      %1856 = vmatprep.subr.mxu0 0.0
      %1857 = vmatpush1.msra.mxu0 0.0
      %1858 = vmatprep.subr.mxu0 0.0
      %1859 = vmatpush1.msra.mxu0 0.0
      %1860 = vmatprep.subr.mxu0 0.0
      %1861 = vmatpush1.msra.mxu0 0.0
      %1862 = vmatprep.subr.mxu0 0.0
      %1863 = vmatpush1.msra.mxu0 0.0
      %1864 = vmatprep.subr.mxu0 0.0
      %1865 = vmatpush1.msra.mxu0 0.0
      %1866 = vmatprep.subr.mxu0 0.0
      %1867 = vmatpush1.msra.mxu0 0.0
      %1868 = vmatprep.subr.mxu0 0.0
      %1869 = vmatpush1.msra.mxu0 0.0
      %1870 = vmatprep.subr.mxu0 0.0
      %1871 = vmatpush1.msra.mxu0 0.0
      %1872 = vmatprep.subr.mxu0 0.0
      %1873 = vmatpush1.msra.mxu0 0.0
      %1874 = vmatprep.subr.mxu0 0.0
      %1875 = vmatpush1.msra.mxu0 0.0
      %1876 = vmatprep.subr.mxu0 0.0
      %1877 = vmatpush1.msra.mxu0 0.0
      %1878 = vmatprep.subr.mxu0 0.0
      %1879 = vmatpush1.msra.mxu0 0.0
      %1880 = vmatprep.subr.mxu0 0.0
      %1881 = vmatpush1.msra.mxu0 0.0
      %1882 = vmatprep.subr.mxu0 0.0
      %1883 = vmatpush1.msra.mxu0 0.0
      %1884 = vmatprep.subr.mxu0 0.0
      %1885 = vmatpush1.msra.mxu0 0.0
      %1886 = vmatprep.subr.mxu0 0.0
      %1887 = vmatpush1.msra.mxu0 0.0
      %1888 = vmatprep.subr.mxu0 0.0
      %1889 = vmatpush1.msra.mxu0 0.0
      %1890 = vmatprep.subr.mxu0 0.0
      %1891 = vmatpush1.msra.mxu0 0.0
      %1892 = vmatprep.subr.mxu0 0.0
      %1893 = vmatpush1.msra.mxu0 0.0
      %1894 = vmatprep.subr.mxu0 0.0
      %1895 = vmatpush1.msra.mxu0 0.0
      %1896 = vmatprep.subr.mxu0 0.0
      %1897 = vmatpush1.msra.mxu0 0.0
      %1898 = vmatprep.mubr.f32.mxu0 0.0
      %1899 = vmatmul.mubr.f32.gmra.mrb[0].mxu0 %v1736
      %v1900 = vpop.f32.mrb[0].mxu0
      %v1901 = vadd.f32 %v1577, %v1900
      %v1902 = vpop.f32.mrb[0].mxu0
      %1903 = vmatprep.mubr.f32.mxu0 0.0
      %1904 = vmatmul.mubr.f32.gmra.mrb[0].mxu0 %v1739
      %v1905 = vpop.f32.mrb[0].mxu0
      %v1906 = vadd.f32 %v1582, %v1905
      %v1907 = vpop.f32.mrb[0].mxu0
      %1908 = vmatprep.mubr.f32.mxu0 0.0
      %1909 = vmatmul.mubr.f32.gmra.mrb[0].mxu0 %v1742
      %v1910 = vpop.f32.mrb[0].mxu0
      %v1911 = vadd.f32 %v1587, %v1910
      %v1912 = vpop.f32.mrb[0].mxu0
      %1913 = vmatprep.mubr.f32.mxu0 0.0
      %1914 = vmatmul.mubr.f32.gmra.mrb[0].mxu0 %v1745
      %v1915 = vpop.f32.mrb[0].mxu0
      %v1916 = vadd.f32 %v1592, %v1915
      %v1917 = vpop.f32.mrb[0].mxu0
      %1918 = vmatprep.mubr.f32.mxu0 0.0
      %1919 = vmatmul.mubr.f32.gmra.mrb[0].mxu0 %v1748
      %v1920 = vpop.f32.mrb[0].mxu0
      %v1921 = vadd.f32 %v1597, %v1920
      %v1922 = vpop.f32.mrb[0].mxu0
      %1923 = vmatprep.mubr.f32.mxu0 0.0
      %1924 = vmatmul.mubr.f32.gmra.mrb[0].mxu0 %v1751
      %v1925 = vpop.f32.mrb[0].mxu0
      %v1926 = vadd.f32 %v1602, %v1925
      %v1927 = vpop.f32.mrb[0].mxu0
      %1928 = vmatprep.mubr.f32.mxu0 0.0
      %1929 = vmatmul.mubr.f32.gmra.mrb[0].mxu0 %v1754
      %v1930 = vpop.f32.mrb[0].mxu0
      %v1931 = vadd.f32 %v1607, %v1930
      %v1932 = vpop.f32.mrb[0].mxu0
      %1933 = vmatprep.mubr.f32.mxu0 0.0
      %1934 = vmatmul.mubr.f32.gmra.mrb[0].mxu0 %v1757
      %v1935 = vpop.f32.mrb[0].mxu0
      %v1936 = vadd.f32 %v1612, %v1935
      %v1937 = vpop.f32.mrb[0].mxu0
      %1938 = vmatprep.mubr.f32.mxu0 0.0
      %1939 = vmatmul.mubr.f32.gmra.mrb[0].mxu0 %v1760
      %v1940 = vpop.f32.mrb[0].mxu0
      %v1941 = vadd.f32 %v1617, %v1940
      %v1942 = vpop.f32.mrb[0].mxu0
      %1943 = vmatprep.mubr.f32.mxu0 0.0
      %1944 = vmatmul.mubr.f32.gmra.mrb[0].mxu0 %v1763
      %v1945 = vpop.f32.mrb[0].mxu0
      %v1946 = vadd.f32 %v1622, %v1945
      %v1947 = vpop.f32.mrb[0].mxu0
      %1948 = vmatprep.mubr.f32.mxu0 0.0
      %1949 = vmatmul.mubr.f32.gmra.mrb[0].mxu0 %v1766
      %v1950 = vpop.f32.mrb[0].mxu0
      %v1951 = vadd.f32 %v1627, %v1950
      %v1952 = vpop.f32.mrb[0].mxu0
      %1953 = vmatprep.mubr.f32.mxu0 0.0
      %1954 = vmatmul.mubr.f32.gmra.mrb[0].mxu0 %v1769
      %v1955 = vpop.f32.mrb[0].mxu0
      %v1956 = vadd.f32 %v1632, %v1955
      %v1957 = vpop.f32.mrb[0].mxu0
      %1958 = vmatprep.mubr.f32.mxu0 0.0
      %1959 = vmatmul.mubr.f32.gmra.mrb[0].mxu0 %v1772
      %v1960 = vpop.f32.mrb[0].mxu0
      %v1961 = vadd.f32 %v1637, %v1960
      %v1962 = vpop.f32.mrb[0].mxu0
      %1963 = vmatprep.mubr.f32.mxu0 0.0
      %1964 = vmatmul.mubr.f32.gmra.mrb[0].mxu0 %v1775
      %v1965 = vpop.f32.mrb[0].mxu0
      %v1966 = vadd.f32 %v1642, %v1965
      %v1967 = vpop.f32.mrb[0].mxu0
      %1968 = vmatprep.mubr.f32.mxu0 0.0
      %1969 = vmatmul.mubr.f32.gmra.mrb[0].mxu0 %v1778
      %v1970 = vpop.f32.mrb[0].mxu0
      %v1971 = vadd.f32 %v1647, %v1970
      %v1972 = vpop.f32.mrb[0].mxu0
      %1973 = vmatprep.mubr.f32.mxu0 0.0
      %1974 = vmatmul.mubr.f32.gmra.mrb[0].mxu0 %v1781
      %v1975 = vpop.f32.mrb[0].mxu0
      %v1976 = vadd.f32 %v1652, %v1975
      %v1977 = vpop.f32.mrb[0].mxu0
      %1978 = vmatprep.mubr.f32.mxu0 0.0
      %1979 = vmatmul.mubr.f32.gmra.mrb[0].mxu0 %v1784
      %v1980 = vpop.f32.mrb[0].mxu0
      %v1981 = vadd.f32 %v1657, %v1980
      %v1982 = vpop.f32.mrb[0].mxu0
      %1983 = vmatprep.mubr.f32.mxu0 0.0
      %1984 = vmatmul.mubr.f32.gmra.mrb[0].mxu0 %v1787
      %v1985 = vpop.f32.mrb[0].mxu0
      %v1986 = vadd.f32 %v1662, %v1985
      %v1987 = vpop.f32.mrb[0].mxu0
      %1988 = vmatprep.mubr.f32.mxu0 0.0
      %1989 = vmatmul.mubr.f32.gmra.mrb[0].mxu0 %v1790
      %v1990 = vpop.f32.mrb[0].mxu0
      %v1991 = vadd.f32 %v1667, %v1990
      %v1992 = vpop.f32.mrb[0].mxu0
      %1993 = vmatprep.mubr.f32.mxu0 0.0
      %1994 = vmatmul.mubr.f32.gmra.mrb[0].mxu0 %v1793
      %v1995 = vpop.f32.mrb[0].mxu0
      %v1996 = vadd.f32 %v1672, %v1995
      %v1997 = vpop.f32.mrb[0].mxu0
      %1998 = vmatprep.mubr.f32.mxu0 0.0
      %1999 = vmatmul.mubr.f32.gmra.mrb[0].mxu0 %v1796
      %v2000 = vpop.f32.mrb[0].mxu0
      %v2001 = vadd.f32 %v1677, %v2000
      %v2002 = vpop.f32.mrb[0].mxu0
      %2003 = vmatprep.mubr.f32.mxu0 0.0
      %2004 = vmatmul.mubr.f32.gmra.mrb[0].mxu0 %v1799
      %v2005 = vpop.f32.mrb[0].mxu0
      %v2006 = vadd.f32 %v1682, %v2005
      %v2007 = vpop.f32.mrb[0].mxu0
      %2008 = vmatprep.mubr.f32.mxu0 0.0
      %2009 = vmatmul.mubr.f32.gmra.mrb[0].mxu0 %v1802
      %v2010 = vpop.f32.mrb[0].mxu0
      %v2011 = vadd.f32 %v1687, %v2010
      %v2012 = vpop.f32.mrb[0].mxu0
      %2013 = vmatprep.mubr.f32.mxu0 0.0
      %2014 = vmatmul.mubr.f32.gmra.mrb[0].mxu0 %v1805
      %v2015 = vpop.f32.mrb[0].mxu0
      %v2016 = vadd.f32 %v1692, %v2015
      %v2017 = vpop.f32.mrb[0].mxu0
      %2018 = vmatprep.mubr.f32.mxu0 0.0
      %2019 = vmatmul.mubr.f32.gmra.mrb[0].mxu0 %v1808
      %v2020 = vpop.f32.mrb[0].mxu0
      %v2021 = vadd.f32 %v1697, %v2020
      %v2022 = vpop.f32.mrb[0].mxu0
      %2023 = vmatprep.mubr.f32.mxu0 0.0
      %2024 = vmatmul.mubr.f32.gmra.mrb[0].mxu0 %v1811
      %v2025 = vpop.f32.mrb[0].mxu0
      %v2026 = vadd.f32 %v1702, %v2025
      %v2027 = vpop.f32.mrb[0].mxu0
      %2028 = vmatprep.mubr.f32.mxu0 0.0
      %2029 = vmatmul.mubr.f32.gmra.mrb[0].mxu0 %v1814
      %v2030 = vpop.f32.mrb[0].mxu0
      %v2031 = vadd.f32 %v1707, %v2030
      %v2032 = vpop.f32.mrb[0].mxu0
      %2033 = vmatprep.mubr.f32.mxu0 0.0
      %2034 = vmatmul.mubr.f32.gmra.mrb[0].mxu0 %v1817
      %v2035 = vpop.f32.mrb[0].mxu0
      %v2036 = vadd.f32 %v1712, %v2035
      %v2037 = vpop.f32.mrb[0].mxu0
      %2038 = vmatprep.mubr.f32.mxu0 0.0
      %2039 = vmatmul.mubr.f32.gmra.mrb[0].mxu0 %v1820
      %v2040 = vpop.f32.mrb[0].mxu0
      %v2041 = vadd.f32 %v1717, %v2040
      %v2042 = vpop.f32.mrb[0].mxu0
      %2043 = vmatprep.mubr.f32.mxu0 0.0
      %2044 = vmatmul.mubr.f32.gmra.mrb[0].mxu0 %v1823
      %v2045 = vpop.f32.mrb[0].mxu0
      %v2046 = vadd.f32 %v1722, %v2045
      %v2047 = vpop.f32.mrb[0].mxu0
      %2048 = vmatprep.mubr.f32.mxu0 0.0
      %2049 = vmatmul.mubr.f32.gmra.mrb[0].mxu0 %v1826
      %v2050 = vpop.f32.mrb[0].mxu0
      %v2051 = vadd.f32 %v1727, %v2050
      %v2052 = vpop.f32.mrb[0].mxu0
      %2053 = vmatprep.mubr.f32.mxu0 0.0
      %2054 = vmatmul.mubr.f32.gmra.mrb[0].mxu0 %v1829
      %v2055 = vpop.f32.mrb[0].mxu0
      %v2056 = vadd.f32 %v1732, %v2055
      %v2057 = vpop.f32.mrb[0].mxu0
      %2058 = vdwg.mxu0
      %s2059 = scalar_lea.vmem [#allocation3], 64
      %v2060 = vld [vmem:[%s2059] sm:$0xff]
      %v2061 = vld [vmem:[%s2059 + $0x10] sm:$0xff]
      %v2062 = vld [vmem:[%s2059 + $0x20] sm:$0xff]
      %v2063 = vld [vmem:[%s2059 + $0x30] sm:$0xff]
      %v2064 = vld [vmem:[%s2059 + $0x40] sm:$0xff]
      %v2065 = vld [vmem:[%s2059 + $0x50] sm:$0xff]
      %v2066 = vld [vmem:[%s2059 + $0x60] sm:$0xff]
      %v2067 = vld [vmem:[%s2059 + $0x70] sm:$0xff]
      %v2068 = vld [vmem:[%s2059 + $0x80] sm:$0xff]
      %v2069 = vld [vmem:[%s2059 + $0x90] sm:$0xff]
      %v2070 = vld [vmem:[%s2059 + $0xa0] sm:$0xff]
      %v2071 = vld [vmem:[%s2059 + $0xb0] sm:$0xff]
      %v2072 = vld [vmem:[%s2059 + $0xc0] sm:$0xff]
      %v2073 = vld [vmem:[%s2059 + $0xd0] sm:$0xff]
      %v2074 = vld [vmem:[%s2059 + $0xe0] sm:$0xff]
      %v2075 = vld [vmem:[%s2059 + $0xf0] sm:$0xff]
      %v2076 = vld [vmem:[%s2059 + $0x100] sm:$0xff]
      %v2077 = vld [vmem:[%s2059 + $0x110] sm:$0xff]
      %v2078 = vld [vmem:[%s2059 + $0x120] sm:$0xff]
      %v2079 = vld [vmem:[%s2059 + $0x130] sm:$0xff]
      %v2080 = vld [vmem:[%s2059 + $0x140] sm:$0xff]
      %v2081 = vld [vmem:[%s2059 + $0x150] sm:$0xff]
      %v2082 = vld [vmem:[%s2059 + $0x160] sm:$0xff]
      %v2083 = vld [vmem:[%s2059 + $0x170] sm:$0xff]
      %v2084 = vld [vmem:[%s2059 + $0x180] sm:$0xff]
      %v2085 = vld [vmem:[%s2059 + $0x190] sm:$0xff]
      %v2086 = vld [vmem:[%s2059 + $0x1a0] sm:$0xff]
      %v2087 = vld [vmem:[%s2059 + $0x1b0] sm:$0xff]
      %v2088 = vld [vmem:[%s2059 + $0x1c0] sm:$0xff]
      %v2089 = vld [vmem:[%s2059 + $0x1d0] sm:$0xff]
      %v2090 = vld [vmem:[%s2059 + $0x1e0] sm:$0xff]
      %v2091 = vld [vmem:[%s2059 + $0x1f0] sm:$0xff]
      %s2092 = scalar_lea.vmem %s3, 32
      %v2093 = vld [vmem:[%s2092] sm:$0xff]
      %v2094 = vld [vmem:[%s2092 + $0x8] sm:$0xf]
      %v2096 = vsel %vm1308, %v2060, 0
      %v2099 = vsel %vm1308, %v2061, 0
      %v2102 = vsel %vm1308, %v2062, 0
      %v2105 = vsel %vm1308, %v2063, 0
      %v2108 = vsel %vm1308, %v2064, 0
      %v2111 = vsel %vm1308, %v2065, 0
      %v2114 = vsel %vm1308, %v2066, 0
      %v2117 = vsel %vm1308, %v2067, 0
      %v2120 = vsel %vm1308, %v2068, 0
      %v2123 = vsel %vm1308, %v2069, 0
      %v2126 = vsel %vm1308, %v2070, 0
      %v2129 = vsel %vm1308, %v2071, 0
      %v2132 = vsel %vm1308, %v2072, 0
      %v2135 = vsel %vm1308, %v2073, 0
      %v2138 = vsel %vm1308, %v2074, 0
      %v2141 = vsel %vm1308, %v2075, 0
      %v2144 = vsel %vm1308, %v2076, 0
      %v2147 = vsel %vm1308, %v2077, 0
      %v2150 = vsel %vm1308, %v2078, 0
      %v2153 = vsel %vm1308, %v2079, 0
      %v2156 = vsel %vm1308, %v2080, 0
      %v2159 = vsel %vm1308, %v2081, 0
      %v2162 = vsel %vm1308, %v2082, 0
      %v2165 = vsel %vm1308, %v2083, 0
      %v2168 = vsel %vm1308, %v2084, 0
      %v2171 = vsel %vm1308, %v2085, 0
      %v2174 = vsel %vm1308, %v2086, 0
      %v2177 = vsel %vm1308, %v2087, 0
      %v2180 = vsel %vm1308, %v2088, 0
      %v2183 = vsel %vm1308, %v2089, 0
      %v2186 = vsel %vm1308, %v2090, 0
      %v2189 = vsel %vm1308, %v2091, 0
      %v2192 = vsel %vm1506, %v2094, 0
      %2194 = vmatprep.subr.mxu0 0.0
      %2195 = vmatpush1.msra.mxu0 %v2093
      %2196 = vmatprep.subr.mxu0 0.0
      %2197 = vmatpush1.msra.mxu0 %v2192
      %2198 = vmatprep.subr.mxu0 0.0
      %2199 = vmatpush1.msra.mxu0 0.0
      %2200 = vmatprep.subr.mxu0 0.0
      %2201 = vmatpush1.msra.mxu0 0.0
      %2202 = vmatprep.subr.mxu0 0.0
      %2203 = vmatpush1.msra.mxu0 0.0
      %2204 = vmatprep.subr.mxu0 0.0
      %2205 = vmatpush1.msra.mxu0 0.0
      %2206 = vmatprep.subr.mxu0 0.0
      %2207 = vmatpush1.msra.mxu0 0.0
      %2208 = vmatprep.subr.mxu0 0.0
      %2209 = vmatpush1.msra.mxu0 0.0
      %2210 = vmatprep.subr.mxu0 0.0
      %2211 = vmatpush1.msra.mxu0 0.0
      %2212 = vmatprep.subr.mxu0 0.0
      %2213 = vmatpush1.msra.mxu0 0.0
      %2214 = vmatprep.subr.mxu0 0.0
      %2215 = vmatpush1.msra.mxu0 0.0
      %2216 = vmatprep.subr.mxu0 0.0
      %2217 = vmatpush1.msra.mxu0 0.0
      %2218 = vmatprep.subr.mxu0 0.0
      %2219 = vmatpush1.msra.mxu0 0.0
      %2220 = vmatprep.subr.mxu0 0.0
      %2221 = vmatpush1.msra.mxu0 0.0
      %2222 = vmatprep.subr.mxu0 0.0
      %2223 = vmatpush1.msra.mxu0 0.0
      %2224 = vmatprep.subr.mxu0 0.0
      %2225 = vmatpush1.msra.mxu0 0.0
      %2226 = vmatprep.subr.mxu0 0.0
      %2227 = vmatpush1.msra.mxu0 0.0
      %2228 = vmatprep.subr.mxu0 0.0
      %2229 = vmatpush1.msra.mxu0 0.0
      %2230 = vmatprep.subr.mxu0 0.0
      %2231 = vmatpush1.msra.mxu0 0.0
      %2232 = vmatprep.subr.mxu0 0.0
      %2233 = vmatpush1.msra.mxu0 0.0
      %2234 = vmatprep.subr.mxu0 0.0
      %2235 = vmatpush1.msra.mxu0 0.0
      %2236 = vmatprep.subr.mxu0 0.0
      %2237 = vmatpush1.msra.mxu0 0.0
      %2238 = vmatprep.subr.mxu0 0.0
      %2239 = vmatpush1.msra.mxu0 0.0
      %2240 = vmatprep.subr.mxu0 0.0
      %2241 = vmatpush1.msra.mxu0 0.0
      %2242 = vmatprep.subr.mxu0 0.0
      %2243 = vmatpush1.msra.mxu0 0.0
      %2244 = vmatprep.subr.mxu0 0.0
      %2245 = vmatpush1.msra.mxu0 0.0
      %2246 = vmatprep.subr.mxu0 0.0
      %2247 = vmatpush1.msra.mxu0 0.0
      %2248 = vmatprep.subr.mxu0 0.0
      %2249 = vmatpush1.msra.mxu0 0.0
      %2250 = vmatprep.subr.mxu0 0.0
      %2251 = vmatpush1.msra.mxu0 0.0
      %2252 = vmatprep.subr.mxu0 0.0
      %2253 = vmatpush1.msra.mxu0 0.0
      %2254 = vmatprep.subr.mxu0 0.0
      %2255 = vmatpush1.msra.mxu0 0.0
      %2256 = vmatprep.subr.mxu0 0.0
      %2257 = vmatpush1.msra.mxu0 0.0
      %2258 = vmatprep.mubr.f32.mxu0 0.0
      %2259 = vmatmul.mubr.f32.gmra.mrb[0].mxu0 %v2096
      %v2260 = vpop.f32.mrb[0].mxu0
      %v2261 = vadd.f32 0.0, %v2260
      %v2262 = vpop.f32.mrb[0].mxu0
      %2263 = vmatprep.mubr.f32.mxu0 0.0
      %2264 = vmatmul.mubr.f32.gmra.mrb[0].mxu0 %v2099
      %v2265 = vpop.f32.mrb[0].mxu0
      %v2266 = vadd.f32 0.0, %v2265
      %v2267 = vpop.f32.mrb[0].mxu0
      %2268 = vmatprep.mubr.f32.mxu0 0.0
      %2269 = vmatmul.mubr.f32.gmra.mrb[0].mxu0 %v2102
      %v2270 = vpop.f32.mrb[0].mxu0
      %v2271 = vadd.f32 0.0, %v2270
      %v2272 = vpop.f32.mrb[0].mxu0
      %2273 = vmatprep.mubr.f32.mxu0 0.0
      %2274 = vmatmul.mubr.f32.gmra.mrb[0].mxu0 %v2105
      %v2275 = vpop.f32.mrb[0].mxu0
      %v2276 = vadd.f32 0.0, %v2275
      %v2277 = vpop.f32.mrb[0].mxu0
      %2278 = vmatprep.mubr.f32.mxu0 0.0
      %2279 = vmatmul.mubr.f32.gmra.mrb[0].mxu0 %v2108
      %v2280 = vpop.f32.mrb[0].mxu0
      %v2281 = vadd.f32 0.0, %v2280
      %v2282 = vpop.f32.mrb[0].mxu0
      %2283 = vmatprep.mubr.f32.mxu0 0.0
      %2284 = vmatmul.mubr.f32.gmra.mrb[0].mxu0 %v2111
      %v2285 = vpop.f32.mrb[0].mxu0
      %v2286 = vadd.f32 0.0, %v2285
      %v2287 = vpop.f32.mrb[0].mxu0
      %2288 = vmatprep.mubr.f32.mxu0 0.0
      %2289 = vmatmul.mubr.f32.gmra.mrb[0].mxu0 %v2114
      %v2290 = vpop.f32.mrb[0].mxu0
      %v2291 = vadd.f32 0.0, %v2290
      %v2292 = vpop.f32.mrb[0].mxu0
      %2293 = vmatprep.mubr.f32.mxu0 0.0
      %2294 = vmatmul.mubr.f32.gmra.mrb[0].mxu0 %v2117
      %v2295 = vpop.f32.mrb[0].mxu0
      %v2296 = vadd.f32 0.0, %v2295
      %v2297 = vpop.f32.mrb[0].mxu0
      %2298 = vmatprep.mubr.f32.mxu0 0.0
      %2299 = vmatmul.mubr.f32.gmra.mrb[0].mxu0 %v2120
      %v2300 = vpop.f32.mrb[0].mxu0
      %v2301 = vadd.f32 0.0, %v2300
      %v2302 = vpop.f32.mrb[0].mxu0
      %2303 = vmatprep.mubr.f32.mxu0 0.0
      %2304 = vmatmul.mubr.f32.gmra.mrb[0].mxu0 %v2123
      %v2305 = vpop.f32.mrb[0].mxu0
      %v2306 = vadd.f32 0.0, %v2305
      %v2307 = vpop.f32.mrb[0].mxu0
      %2308 = vmatprep.mubr.f32.mxu0 0.0
      %2309 = vmatmul.mubr.f32.gmra.mrb[0].mxu0 %v2126
      %v2310 = vpop.f32.mrb[0].mxu0
      %v2311 = vadd.f32 0.0, %v2310
      %v2312 = vpop.f32.mrb[0].mxu0
      %2313 = vmatprep.mubr.f32.mxu0 0.0
      %2314 = vmatmul.mubr.f32.gmra.mrb[0].mxu0 %v2129
      %v2315 = vpop.f32.mrb[0].mxu0
      %v2316 = vadd.f32 0.0, %v2315
      %v2317 = vpop.f32.mrb[0].mxu0
      %2318 = vmatprep.mubr.f32.mxu0 0.0
      %2319 = vmatmul.mubr.f32.gmra.mrb[0].mxu0 %v2132
      %v2320 = vpop.f32.mrb[0].mxu0
      %v2321 = vadd.f32 0.0, %v2320
      %v2322 = vpop.f32.mrb[0].mxu0
      %2323 = vmatprep.mubr.f32.mxu0 0.0
      %2324 = vmatmul.mubr.f32.gmra.mrb[0].mxu0 %v2135
      %v2325 = vpop.f32.mrb[0].mxu0
      %v2326 = vadd.f32 0.0, %v2325
      %v2327 = vpop.f32.mrb[0].mxu0
      %2328 = vmatprep.mubr.f32.mxu0 0.0
      %2329 = vmatmul.mubr.f32.gmra.mrb[0].mxu0 %v2138
      %v2330 = vpop.f32.mrb[0].mxu0
      %v2331 = vadd.f32 0.0, %v2330
      %v2332 = vpop.f32.mrb[0].mxu0
      %2333 = vmatprep.mubr.f32.mxu0 0.0
      %2334 = vmatmul.mubr.f32.gmra.mrb[0].mxu0 %v2141
      %v2335 = vpop.f32.mrb[0].mxu0
      %v2336 = vadd.f32 0.0, %v2335
      %v2337 = vpop.f32.mrb[0].mxu0
      %2338 = vmatprep.mubr.f32.mxu0 0.0
      %2339 = vmatmul.mubr.f32.gmra.mrb[0].mxu0 %v2144
      %v2340 = vpop.f32.mrb[0].mxu0
      %v2341 = vadd.f32 0.0, %v2340
      %v2342 = vpop.f32.mrb[0].mxu0
      %2343 = vmatprep.mubr.f32.mxu0 0.0
      %2344 = vmatmul.mubr.f32.gmra.mrb[0].mxu0 %v2147
      %v2345 = vpop.f32.mrb[0].mxu0
      %v2346 = vadd.f32 0.0, %v2345
      %v2347 = vpop.f32.mrb[0].mxu0
      %2348 = vmatprep.mubr.f32.mxu0 0.0
      %2349 = vmatmul.mubr.f32.gmra.mrb[0].mxu0 %v2150
      %v2350 = vpop.f32.mrb[0].mxu0
      %v2351 = vadd.f32 0.0, %v2350
      %v2352 = vpop.f32.mrb[0].mxu0
      %2353 = vmatprep.mubr.f32.mxu0 0.0
      %2354 = vmatmul.mubr.f32.gmra.mrb[0].mxu0 %v2153
      %v2355 = vpop.f32.mrb[0].mxu0
      %v2356 = vadd.f32 0.0, %v2355
      %v2357 = vpop.f32.mrb[0].mxu0
      %2358 = vmatprep.mubr.f32.mxu0 0.0
      %2359 = vmatmul.mubr.f32.gmra.mrb[0].mxu0 %v2156
      %v2360 = vpop.f32.mrb[0].mxu0
      %v2361 = vadd.f32 0.0, %v2360
      %v2362 = vpop.f32.mrb[0].mxu0
      %2363 = vmatprep.mubr.f32.mxu0 0.0
      %2364 = vmatmul.mubr.f32.gmra.mrb[0].mxu0 %v2159
      %v2365 = vpop.f32.mrb[0].mxu0
      %v2366 = vadd.f32 0.0, %v2365
      %v2367 = vpop.f32.mrb[0].mxu0
      %2368 = vmatprep.mubr.f32.mxu0 0.0
      %2369 = vmatmul.mubr.f32.gmra.mrb[0].mxu0 %v2162
      %v2370 = vpop.f32.mrb[0].mxu0
      %v2371 = vadd.f32 0.0, %v2370
      %v2372 = vpop.f32.mrb[0].mxu0
      %2373 = vmatprep.mubr.f32.mxu0 0.0
      %2374 = vmatmul.mubr.f32.gmra.mrb[0].mxu0 %v2165
      %v2375 = vpop.f32.mrb[0].mxu0
      %v2376 = vadd.f32 0.0, %v2375
      %v2377 = vpop.f32.mrb[0].mxu0
      %2378 = vmatprep.mubr.f32.mxu0 0.0
      %2379 = vmatmul.mubr.f32.gmra.mrb[0].mxu0 %v2168
      %v2380 = vpop.f32.mrb[0].mxu0
      %v2381 = vadd.f32 0.0, %v2380
      %v2382 = vpop.f32.mrb[0].mxu0
      %2383 = vmatprep.mubr.f32.mxu0 0.0
      %2384 = vmatmul.mubr.f32.gmra.mrb[0].mxu0 %v2171
      %v2385 = vpop.f32.mrb[0].mxu0
      %v2386 = vadd.f32 0.0, %v2385
      %v2387 = vpop.f32.mrb[0].mxu0
      %2388 = vmatprep.mubr.f32.mxu0 0.0
      %2389 = vmatmul.mubr.f32.gmra.mrb[0].mxu0 %v2174
      %v2390 = vpop.f32.mrb[0].mxu0
      %v2391 = vadd.f32 0.0, %v2390
      %v2392 = vpop.f32.mrb[0].mxu0
      %2393 = vmatprep.mubr.f32.mxu0 0.0
      %2394 = vmatmul.mubr.f32.gmra.mrb[0].mxu0 %v2177
      %v2395 = vpop.f32.mrb[0].mxu0
      %v2396 = vadd.f32 0.0, %v2395
      %v2397 = vpop.f32.mrb[0].mxu0
      %2398 = vmatprep.mubr.f32.mxu0 0.0
      %2399 = vmatmul.mubr.f32.gmra.mrb[0].mxu0 %v2180
      %v2400 = vpop.f32.mrb[0].mxu0
      %v2401 = vadd.f32 0.0, %v2400
      %v2402 = vpop.f32.mrb[0].mxu0
      %2403 = vmatprep.mubr.f32.mxu0 0.0
      %2404 = vmatmul.mubr.f32.gmra.mrb[0].mxu0 %v2183
      %v2405 = vpop.f32.mrb[0].mxu0
      %v2406 = vadd.f32 0.0, %v2405
      %v2407 = vpop.f32.mrb[0].mxu0
      %2408 = vmatprep.mubr.f32.mxu0 0.0
      %2409 = vmatmul.mubr.f32.gmra.mrb[0].mxu0 %v2186
      %v2410 = vpop.f32.mrb[0].mxu0
      %v2411 = vadd.f32 0.0, %v2410
      %v2412 = vpop.f32.mrb[0].mxu0
      %2413 = vmatprep.mubr.f32.mxu0 0.0
      %2414 = vmatmul.mubr.f32.gmra.mrb[0].mxu0 %v2189
      %v2415 = vpop.f32.mrb[0].mxu0
      %v2416 = vadd.f32 0.0, %v2415
      %v2417 = vpop.f32.mrb[0].mxu0
      %2418 = vdwg.mxu0
      %v2419 = vadd.f32 %v1901, %v2261
      %v2420 = vadd.f32 %v1906, %v2266
      %v2421 = vadd.f32 %v1911, %v2271
      %v2422 = vadd.f32 %v1916, %v2276
      %v2423 = vadd.f32 %v1921, %v2281
      %v2424 = vadd.f32 %v1926, %v2286
      %v2425 = vadd.f32 %v1931, %v2291
      %v2426 = vadd.f32 %v1936, %v2296
      %v2427 = vadd.f32 %v1941, %v2301
      %v2428 = vadd.f32 %v1946, %v2306
      %v2429 = vadd.f32 %v1951, %v2311
      %v2430 = vadd.f32 %v1956, %v2316
      %v2431 = vadd.f32 %v1961, %v2321
      %v2432 = vadd.f32 %v1966, %v2326
      %v2433 = vadd.f32 %v1971, %v2331
      %v2434 = vadd.f32 %v1976, %v2336
      %v2435 = vadd.f32 %v1981, %v2341
      %v2436 = vadd.f32 %v1986, %v2346
      %v2437 = vadd.f32 %v1991, %v2351
      %v2438 = vadd.f32 %v1996, %v2356
      %v2439 = vadd.f32 %v2001, %v2361
      %v2440 = vadd.f32 %v2006, %v2366
      %v2441 = vadd.f32 %v2011, %v2371
      %v2442 = vadd.f32 %v2016, %v2376
      %v2443 = vadd.f32 %v2021, %v2381
      %v2444 = vadd.f32 %v2026, %v2386
      %v2445 = vadd.f32 %v2031, %v2391
      %v2446 = vadd.f32 %v2036, %v2396
      %v2447 = vadd.f32 %v2041, %v2401
      %v2448 = vadd.f32 %v2046, %v2406
      %v2449 = vadd.f32 %v2051, %v2411
      %v2450 = vadd.f32 %v2056, %v2416
      %v2451 = vld [vmem:[%s4] sm:$0x1]
      %v2453 = vlaneseq
      %v2454 = vshrl.u32 %v2453, 7
      %v2455 = vsub.s32 0, %v2454
      %v2456 = vrot.slane %v2451, %v2455
      %v2458 = vadd.f32 %v2419, %v2456
      %v2459 = vadd.f32 %v2420, %v2456
      %v2460 = vadd.f32 %v2421, %v2456
      %v2461 = vadd.f32 %v2422, %v2456
      %v2462 = vadd.f32 %v2423, %v2456
      %v2463 = vadd.f32 %v2424, %v2456
      %v2464 = vadd.f32 %v2425, %v2456
      %v2465 = vadd.f32 %v2426, %v2456
      %v2466 = vadd.f32 %v2427, %v2456
      %v2467 = vadd.f32 %v2428, %v2456
      %v2468 = vadd.f32 %v2429, %v2456
      %v2469 = vadd.f32 %v2430, %v2456
      %v2470 = vadd.f32 %v2431, %v2456
      %v2471 = vadd.f32 %v2432, %v2456
      %v2472 = vadd.f32 %v2433, %v2456
      %v2473 = vadd.f32 %v2434, %v2456
      %v2474 = vadd.f32 %v2435, %v2456
      %v2475 = vadd.f32 %v2436, %v2456
      %v2476 = vadd.f32 %v2437, %v2456
      %v2477 = vadd.f32 %v2438, %v2456
      %v2478 = vadd.f32 %v2439, %v2456
      %v2479 = vadd.f32 %v2440, %v2456
      %v2480 = vadd.f32 %v2441, %v2456
      %v2481 = vadd.f32 %v2442, %v2456
      %v2482 = vadd.f32 %v2443, %v2456
      %v2483 = vadd.f32 %v2444, %v2456
      %v2484 = vadd.f32 %v2445, %v2456
      %v2485 = vadd.f32 %v2446, %v2456
      %v2486 = vadd.f32 %v2447, %v2456
      %v2487 = vadd.f32 %v2448, %v2456
      %v2488 = vadd.f32 %v2449, %v2456
      %v2489 = vadd.f32 %v2450, %v2456
      loop: start=0, step=1, limit=8
      $region65: #{context_adjustment_forward.1} parent=63 // loop_pre_header
        _
      $region66: #{context_adjustment_forward.1} parent=63 // loop_header
        %s2491 = sphi 0, %s2495
        %p2492 = scmp.ge.s32.totalorder %s2491, 8
        %v2496 = vphi %v2458, %v6140
        %v2497 = vphi %v2459, %v6141
        %v2498 = vphi %v2460, %v6142
        %v2499 = vphi %v2461, %v6143
        %v2500 = vphi %v2462, %v6144
        %v2501 = vphi %v2463, %v6145
        %v2502 = vphi %v2464, %v6146
        %v2503 = vphi %v2465, %v6147
        %v2504 = vphi %v2466, %v6148
        %v2505 = vphi %v2467, %v6149
        %v2506 = vphi %v2468, %v6150
        %v2507 = vphi %v2469, %v6151
        %v2508 = vphi %v2470, %v6152
        %v2509 = vphi %v2471, %v6153
        %v2510 = vphi %v2472, %v6154
        %v2511 = vphi %v2473, %v6155
        %v2512 = vphi %v2474, %v6156
        %v2513 = vphi %v2475, %v6157
        %v2514 = vphi %v2476, %v6158
        %v2515 = vphi %v2477, %v6159
        %v2516 = vphi %v2478, %v6160
        %v2517 = vphi %v2479, %v6161
        %v2518 = vphi %v2480, %v6162
        %v2519 = vphi %v2481, %v6163
        %v2520 = vphi %v2482, %v6164
        %v2521 = vphi %v2483, %v6165
        %v2522 = vphi %v2484, %v6166
        %v2523 = vphi %v2485, %v6167
        %v2524 = vphi %v2486, %v6168
        %v2525 = vphi %v2487, %v6169
        %v2526 = vphi %v2488, %v6170
        %v2527 = vphi %v2489, %v6171
      $region67: #{context_adjustment_forward.1} parent=63 // loop_header_branch
        %2494 = sbr.rel (%p2492) target = $region71
      $region68: #{context_adjustment_forward.1} parent=63 // loop_body
        %v2528 = vmul.f32 %v2496, %v571
        %v2529 = vmul.f32 %v2497, %v576
        %v2530 = vmul.f32 %v2498, %v581
        %v2531 = vmul.f32 %v2499, %v586
        %v2532 = vmul.f32 %v2500, %v591
        %v2533 = vmul.f32 %v2501, %v596
        %v2534 = vmul.f32 %v2502, %v601
        %v2535 = vmul.f32 %v2503, %v606
        %v2536 = vmul.f32 %v2504, %v611
        %v2537 = vmul.f32 %v2505, %v616
        %v2538 = vmul.f32 %v2506, %v621
        %v2539 = vmul.f32 %v2507, %v626
        %v2540 = vmul.f32 %v2508, %v631
        %v2541 = vmul.f32 %v2509, %v636
        %v2542 = vmul.f32 %v2510, %v641
        %v2543 = vmul.f32 %v2511, %v646
        %v2544 = vmul.f32 %v2512, %v651
        %v2545 = vmul.f32 %v2513, %v656
        %v2546 = vmul.f32 %v2514, %v661
        %v2547 = vmul.f32 %v2515, %v666
        %v2548 = vmul.f32 %v2516, %v671
        %v2549 = vmul.f32 %v2517, %v676
        %v2550 = vmul.f32 %v2518, %v681
        %v2551 = vmul.f32 %v2519, %v686
        %v2552 = vmul.f32 %v2520, %v691
        %v2553 = vmul.f32 %v2521, %v696
        %v2554 = vmul.f32 %v2522, %v701
        %v2555 = vmul.f32 %v2523, %v706
        %v2556 = vmul.f32 %v2524, %v711
        %v2557 = vmul.f32 %v2525, %v716
        %v2558 = vmul.f32 %v2526, %v721
        %v2559 = vmul.f32 %v2527, %v726
        %2592 = vrot.lane.b32.xlu0 %v2528, 1
        %v2593 = vpop.permute.xlu0 %2592
        %2594 = vrot.lane.b32.xlu0 %v2529, 1
        %v2595 = vpop.permute.xlu0 %2594
        %2596 = vrot.lane.b32.xlu0 %v2530, 1
        %v2597 = vpop.permute.xlu0 %2596
        %2598 = vrot.lane.b32.xlu0 %v2531, 1
        %v2599 = vpop.permute.xlu0 %2598
        %2600 = vrot.lane.b32.xlu0 %v2532, 1
        %v2601 = vpop.permute.xlu0 %2600
        %2602 = vrot.lane.b32.xlu0 %v2533, 1
        %v2603 = vpop.permute.xlu0 %2602
        %2604 = vrot.lane.b32.xlu0 %v2534, 1
        %v2605 = vpop.permute.xlu0 %2604
        %2606 = vrot.lane.b32.xlu0 %v2535, 1
        %v2607 = vpop.permute.xlu0 %2606
        %2608 = vrot.lane.b32.xlu0 %v2536, 1
        %v2609 = vpop.permute.xlu0 %2608
        %2610 = vrot.lane.b32.xlu0 %v2537, 1
        %v2611 = vpop.permute.xlu0 %2610
        %2612 = vrot.lane.b32.xlu0 %v2538, 1
        %v2613 = vpop.permute.xlu0 %2612
        %2614 = vrot.lane.b32.xlu0 %v2539, 1
        %v2615 = vpop.permute.xlu0 %2614
        %2616 = vrot.lane.b32.xlu0 %v2540, 1
        %v2617 = vpop.permute.xlu0 %2616
        %2618 = vrot.lane.b32.xlu0 %v2541, 1
        %v2619 = vpop.permute.xlu0 %2618
        %2620 = vrot.lane.b32.xlu0 %v2542, 1
        %v2621 = vpop.permute.xlu0 %2620
        %2622 = vrot.lane.b32.xlu0 %v2543, 1
        %v2623 = vpop.permute.xlu0 %2622
        %2624 = vrot.lane.b32.xlu0 %v2544, 1
        %v2625 = vpop.permute.xlu0 %2624
        %2626 = vrot.lane.b32.xlu0 %v2545, 1
        %v2627 = vpop.permute.xlu0 %2626
        %2628 = vrot.lane.b32.xlu0 %v2546, 1
        %v2629 = vpop.permute.xlu0 %2628
        %2630 = vrot.lane.b32.xlu0 %v2547, 1
        %v2631 = vpop.permute.xlu0 %2630
        %2632 = vrot.lane.b32.xlu0 %v2548, 1
        %v2633 = vpop.permute.xlu0 %2632
        %2634 = vrot.lane.b32.xlu0 %v2549, 1
        %v2635 = vpop.permute.xlu0 %2634
        %2636 = vrot.lane.b32.xlu0 %v2550, 1
        %v2637 = vpop.permute.xlu0 %2636
        %2638 = vrot.lane.b32.xlu0 %v2551, 1
        %v2639 = vpop.permute.xlu0 %2638
        %2640 = vrot.lane.b32.xlu0 %v2552, 1
        %v2641 = vpop.permute.xlu0 %2640
        %2642 = vrot.lane.b32.xlu0 %v2553, 1
        %v2643 = vpop.permute.xlu0 %2642
        %2644 = vrot.lane.b32.xlu0 %v2554, 1
        %v2645 = vpop.permute.xlu0 %2644
        %2646 = vrot.lane.b32.xlu0 %v2555, 1
        %v2647 = vpop.permute.xlu0 %2646
        %2648 = vrot.lane.b32.xlu0 %v2556, 1
        %v2649 = vpop.permute.xlu0 %2648
        %2650 = vrot.lane.b32.xlu0 %v2557, 1
        %v2651 = vpop.permute.xlu0 %2650
        %2652 = vrot.lane.b32.xlu0 %v2558, 1
        %v2653 = vpop.permute.xlu0 %2652
        %2654 = vrot.lane.b32.xlu0 %v2559, 1
        %v2655 = vpop.permute.xlu0 %2654
        %v2688 = vsel %vm856, %v472, %v2593
        %v2689 = vsel %vm856, %v473, %v2595
        %v2690 = vsel %vm856, %v474, %v2597
        %v2691 = vsel %vm856, %v475, %v2599
        %v2692 = vsel %vm856, %v476, %v2601
        %v2693 = vsel %vm856, %v477, %v2603
        %v2694 = vsel %vm856, %v478, %v2605
        %v2695 = vsel %vm856, %v479, %v2607
        %v2696 = vsel %vm856, %v480, %v2609
        %v2697 = vsel %vm856, %v481, %v2611
        %v2698 = vsel %vm856, %v482, %v2613
        %v2699 = vsel %vm856, %v483, %v2615
        %v2700 = vsel %vm856, %v484, %v2617
        %v2701 = vsel %vm856, %v485, %v2619
        %v2702 = vsel %vm856, %v486, %v2621
        %v2703 = vsel %vm856, %v487, %v2623
        %v2704 = vsel %vm856, %v488, %v2625
        %v2705 = vsel %vm856, %v489, %v2627
        %v2706 = vsel %vm856, %v490, %v2629
        %v2707 = vsel %vm856, %v491, %v2631
        %v2708 = vsel %vm856, %v492, %v2633
        %v2709 = vsel %vm856, %v493, %v2635
        %v2710 = vsel %vm856, %v494, %v2637
        %v2711 = vsel %vm856, %v495, %v2639
        %v2712 = vsel %vm856, %v496, %v2641
        %v2713 = vsel %vm856, %v497, %v2643
        %v2714 = vsel %vm856, %v498, %v2645
        %v2715 = vsel %vm856, %v499, %v2647
        %v2716 = vsel %vm856, %v500, %v2649
        %v2717 = vsel %vm856, %v501, %v2651
        %v2718 = vsel %vm856, %v502, %v2653
        %v2719 = vsel %vm856, %v503, %v2655
        %vm2720 = vcmask 138240
        %2721 = vst.msk [vmem:[#allocation2 + $0x1] sm:$0xff] %vm2720, %v2688
        %2722 = vst.msk [vmem:[#allocation2 + $0x9] sm:$0xff] %vm2720, %v2689
        %2723 = vst.msk [vmem:[#allocation2 + $0x19] sm:$0xff] %vm2720, %v2690
        %2724 = vst.msk [vmem:[#allocation2 + $0x21] sm:$0xff] %vm2720, %v2691
        %2725 = vst.msk [vmem:[#allocation2 + $0x31] sm:$0xff] %vm2720, %v2692
        %2726 = vst.msk [vmem:[#allocation2 + $0x39] sm:$0xff] %vm2720, %v2693
        %2727 = vst.msk [vmem:[#allocation2 + $0x49] sm:$0xff] %vm2720, %v2694
        %2728 = vst.msk [vmem:[#allocation2 + $0x51] sm:$0xff] %vm2720, %v2695
        %2729 = vst.msk [vmem:[#allocation2 + $0x61] sm:$0xff] %vm2720, %v2696
        %2730 = vst.msk [vmem:[#allocation2 + $0x69] sm:$0xff] %vm2720, %v2697
        %2731 = vst.msk [vmem:[#allocation2 + $0x79] sm:$0xff] %vm2720, %v2698
        %2732 = vst.msk [vmem:[#allocation2 + $0x81] sm:$0xff] %vm2720, %v2699
        %2733 = vst.msk [vmem:[#allocation2 + $0x91] sm:$0xff] %vm2720, %v2700
        %2734 = vst.msk [vmem:[#allocation2 + $0x99] sm:$0xff] %vm2720, %v2701
        %2735 = vst.msk [vmem:[#allocation2 + $0xa9] sm:$0xff] %vm2720, %v2702
        %2736 = vst.msk [vmem:[#allocation2 + $0xb1] sm:$0xff] %vm2720, %v2703
        %2737 = vst.msk [vmem:[#allocation2 + $0xc1] sm:$0xff] %vm2720, %v2704
        %2738 = vst.msk [vmem:[#allocation2 + $0xc9] sm:$0xff] %vm2720, %v2705
        %2739 = vst.msk [vmem:[#allocation2 + $0xd9] sm:$0xff] %vm2720, %v2706
        %2740 = vst.msk [vmem:[#allocation2 + $0xe1] sm:$0xff] %vm2720, %v2707
        %2741 = vst.msk [vmem:[#allocation2 + $0xf1] sm:$0xff] %vm2720, %v2708
        %2742 = vst.msk [vmem:[#allocation2 + $0xf9] sm:$0xff] %vm2720, %v2709
        %2743 = vst.msk [vmem:[#allocation2 + $0x109] sm:$0xff] %vm2720, %v2710
        %2744 = vst.msk [vmem:[#allocation2 + $0x111] sm:$0xff] %vm2720, %v2711
        %2745 = vst.msk [vmem:[#allocation2 + $0x121] sm:$0xff] %vm2720, %v2712
        %2746 = vst.msk [vmem:[#allocation2 + $0x129] sm:$0xff] %vm2720, %v2713
        %2747 = vst.msk [vmem:[#allocation2 + $0x139] sm:$0xff] %vm2720, %v2714
        %2748 = vst.msk [vmem:[#allocation2 + $0x141] sm:$0xff] %vm2720, %v2715
        %2749 = vst.msk [vmem:[#allocation2 + $0x151] sm:$0xff] %vm2720, %v2716
        %2750 = vst.msk [vmem:[#allocation2 + $0x159] sm:$0xff] %vm2720, %v2717
        %2751 = vst.msk [vmem:[#allocation2 + $0x169] sm:$0xff] %vm2720, %v2718
        %2752 = vst.msk [vmem:[#allocation2 + $0x171] sm:$0xff] %vm2720, %v2719
        %v2753 = vld [vmem:[#allocation2] sm:$0xff]
        %v2754 = vld [vmem:[#allocation2 + $0x8] sm:$0xff]
        %v2755 = vld [vmem:[#allocation2 + $0x18] sm:$0xff]
        %v2756 = vld [vmem:[#allocation2 + $0x20] sm:$0xff]
        %v2757 = vld [vmem:[#allocation2 + $0x30] sm:$0xff]
        %v2758 = vld [vmem:[#allocation2 + $0x38] sm:$0xff]
        %v2759 = vld [vmem:[#allocation2 + $0x48] sm:$0xff]
        %v2760 = vld [vmem:[#allocation2 + $0x50] sm:$0xff]
        %v2761 = vld [vmem:[#allocation2 + $0x60] sm:$0xff]
        %v2762 = vld [vmem:[#allocation2 + $0x68] sm:$0xff]
        %v2763 = vld [vmem:[#allocation2 + $0x78] sm:$0xff]
        %v2764 = vld [vmem:[#allocation2 + $0x80] sm:$0xff]
        %v2765 = vld [vmem:[#allocation2 + $0x90] sm:$0xff]
        %v2766 = vld [vmem:[#allocation2 + $0x98] sm:$0xff]
        %v2767 = vld [vmem:[#allocation2 + $0xa8] sm:$0xff]
        %v2768 = vld [vmem:[#allocation2 + $0xb0] sm:$0xff]
        %v2769 = vld [vmem:[#allocation2 + $0xc0] sm:$0xff]
        %v2770 = vld [vmem:[#allocation2 + $0xc8] sm:$0xff]
        %v2771 = vld [vmem:[#allocation2 + $0xd8] sm:$0xff]
        %v2772 = vld [vmem:[#allocation2 + $0xe0] sm:$0xff]
        %v2773 = vld [vmem:[#allocation2 + $0xf0] sm:$0xff]
        %v2774 = vld [vmem:[#allocation2 + $0xf8] sm:$0xff]
        %v2775 = vld [vmem:[#allocation2 + $0x108] sm:$0xff]
        %v2776 = vld [vmem:[#allocation2 + $0x110] sm:$0xff]
        %v2777 = vld [vmem:[#allocation2 + $0x120] sm:$0xff]
        %v2778 = vld [vmem:[#allocation2 + $0x128] sm:$0xff]
        %v2779 = vld [vmem:[#allocation2 + $0x138] sm:$0xff]
        %v2780 = vld [vmem:[#allocation2 + $0x140] sm:$0xff]
        %v2781 = vld [vmem:[#allocation2 + $0x150] sm:$0xff]
        %v2782 = vld [vmem:[#allocation2 + $0x158] sm:$0xff]
        %v2783 = vld [vmem:[#allocation2 + $0x168] sm:$0xff]
        %v2784 = vld [vmem:[#allocation2 + $0x170] sm:$0xff]
        %v2785 = vld [vmem:[#allocation2 + $0x2] sm:$0xff]
        %v2786 = vld [vmem:[#allocation2 + $0xa] sm:$0xff]
        %v2787 = vld [vmem:[#allocation2 + $0x1a] sm:$0xff]
        %v2788 = vld [vmem:[#allocation2 + $0x22] sm:$0xff]
        %v2789 = vld [vmem:[#allocation2 + $0x32] sm:$0xff]
        %v2790 = vld [vmem:[#allocation2 + $0x3a] sm:$0xff]
        %v2791 = vld [vmem:[#allocation2 + $0x4a] sm:$0xff]
        %v2792 = vld [vmem:[#allocation2 + $0x52] sm:$0xff]
        %v2793 = vld [vmem:[#allocation2 + $0x62] sm:$0xff]
        %v2794 = vld [vmem:[#allocation2 + $0x6a] sm:$0xff]
        %v2795 = vld [vmem:[#allocation2 + $0x7a] sm:$0xff]
        %v2796 = vld [vmem:[#allocation2 + $0x82] sm:$0xff]
        %v2797 = vld [vmem:[#allocation2 + $0x92] sm:$0xff]
        %v2798 = vld [vmem:[#allocation2 + $0x9a] sm:$0xff]
        %v2799 = vld [vmem:[#allocation2 + $0xaa] sm:$0xff]
        %v2800 = vld [vmem:[#allocation2 + $0xb2] sm:$0xff]
        %v2801 = vld [vmem:[#allocation2 + $0xc2] sm:$0xff]
        %v2802 = vld [vmem:[#allocation2 + $0xca] sm:$0xff]
        %v2803 = vld [vmem:[#allocation2 + $0xda] sm:$0xff]
        %v2804 = vld [vmem:[#allocation2 + $0xe2] sm:$0xff]
        %v2805 = vld [vmem:[#allocation2 + $0xf2] sm:$0xff]
        %v2806 = vld [vmem:[#allocation2 + $0xfa] sm:$0xff]
        %v2807 = vld [vmem:[#allocation2 + $0x10a] sm:$0xff]
        %v2808 = vld [vmem:[#allocation2 + $0x112] sm:$0xff]
        %v2809 = vld [vmem:[#allocation2 + $0x122] sm:$0xff]
        %v2810 = vld [vmem:[#allocation2 + $0x12a] sm:$0xff]
        %v2811 = vld [vmem:[#allocation2 + $0x13a] sm:$0xff]
        %v2812 = vld [vmem:[#allocation2 + $0x142] sm:$0xff]
        %v2813 = vld [vmem:[#allocation2 + $0x152] sm:$0xff]
        %v2814 = vld [vmem:[#allocation2 + $0x15a] sm:$0xff]
        %v2815 = vld [vmem:[#allocation2 + $0x16a] sm:$0xff]
        %v2816 = vld [vmem:[#allocation2 + $0x172] sm:$0xff]
        %2849 = vrot.lane.b32.xlu0 %v2688, 17
        %v2850 = vpop.permute.xlu0 %2849
        %2851 = vrot.lane.b32.xlu0 %v2689, 17
        %v2852 = vpop.permute.xlu0 %2851
        %2853 = vrot.lane.b32.xlu0 %v2690, 17
        %v2854 = vpop.permute.xlu0 %2853
        %2855 = vrot.lane.b32.xlu0 %v2691, 17
        %v2856 = vpop.permute.xlu0 %2855
        %2857 = vrot.lane.b32.xlu0 %v2692, 17
        %v2858 = vpop.permute.xlu0 %2857
        %2859 = vrot.lane.b32.xlu0 %v2693, 17
        %v2860 = vpop.permute.xlu0 %2859
        %2861 = vrot.lane.b32.xlu0 %v2694, 17
        %v2862 = vpop.permute.xlu0 %2861
        %2863 = vrot.lane.b32.xlu0 %v2695, 17
        %v2864 = vpop.permute.xlu0 %2863
        %2865 = vrot.lane.b32.xlu0 %v2696, 17
        %v2866 = vpop.permute.xlu0 %2865
        %2867 = vrot.lane.b32.xlu0 %v2697, 17
        %v2868 = vpop.permute.xlu0 %2867
        %2869 = vrot.lane.b32.xlu0 %v2698, 17
        %v2870 = vpop.permute.xlu0 %2869
        %2871 = vrot.lane.b32.xlu0 %v2699, 17
        %v2872 = vpop.permute.xlu0 %2871
        %2873 = vrot.lane.b32.xlu0 %v2700, 17
        %v2874 = vpop.permute.xlu0 %2873
        %2875 = vrot.lane.b32.xlu0 %v2701, 17
        %v2876 = vpop.permute.xlu0 %2875
        %2877 = vrot.lane.b32.xlu0 %v2702, 17
        %v2878 = vpop.permute.xlu0 %2877
        %2879 = vrot.lane.b32.xlu0 %v2703, 17
        %v2880 = vpop.permute.xlu0 %2879
        %2881 = vrot.lane.b32.xlu0 %v2704, 17
        %v2882 = vpop.permute.xlu0 %2881
        %2883 = vrot.lane.b32.xlu0 %v2705, 17
        %v2884 = vpop.permute.xlu0 %2883
        %2885 = vrot.lane.b32.xlu0 %v2706, 17
        %v2886 = vpop.permute.xlu0 %2885
        %2887 = vrot.lane.b32.xlu0 %v2707, 17
        %v2888 = vpop.permute.xlu0 %2887
        %2889 = vrot.lane.b32.xlu0 %v2708, 17
        %v2890 = vpop.permute.xlu0 %2889
        %2891 = vrot.lane.b32.xlu0 %v2709, 17
        %v2892 = vpop.permute.xlu0 %2891
        %2893 = vrot.lane.b32.xlu0 %v2710, 17
        %v2894 = vpop.permute.xlu0 %2893
        %2895 = vrot.lane.b32.xlu0 %v2711, 17
        %v2896 = vpop.permute.xlu0 %2895
        %2897 = vrot.lane.b32.xlu0 %v2712, 17
        %v2898 = vpop.permute.xlu0 %2897
        %2899 = vrot.lane.b32.xlu0 %v2713, 17
        %v2900 = vpop.permute.xlu0 %2899
        %2901 = vrot.lane.b32.xlu0 %v2714, 17
        %v2902 = vpop.permute.xlu0 %2901
        %2903 = vrot.lane.b32.xlu0 %v2715, 17
        %v2904 = vpop.permute.xlu0 %2903
        %2905 = vrot.lane.b32.xlu0 %v2716, 17
        %v2906 = vpop.permute.xlu0 %2905
        %2907 = vrot.lane.b32.xlu0 %v2717, 17
        %v2908 = vpop.permute.xlu0 %2907
        %2909 = vrot.lane.b32.xlu0 %v2718, 17
        %v2910 = vpop.permute.xlu0 %2909
        %2911 = vrot.lane.b32.xlu0 %v2719, 17
        %v2912 = vpop.permute.xlu0 %2911
        %2977 = vrot.lane.b32.xlu0 %v2785, 34
        %v2978 = vpop.permute.xlu0 %2977
        %2979 = vrot.lane.b32.xlu0 %v2786, 34
        %v2980 = vpop.permute.xlu0 %2979
        %2981 = vrot.lane.b32.xlu0 %v2787, 34
        %v2982 = vpop.permute.xlu0 %2981
        %2983 = vrot.lane.b32.xlu0 %v2788, 34
        %v2984 = vpop.permute.xlu0 %2983
        %2985 = vrot.lane.b32.xlu0 %v2789, 34
        %v2986 = vpop.permute.xlu0 %2985
        %2987 = vrot.lane.b32.xlu0 %v2790, 34
        %v2988 = vpop.permute.xlu0 %2987
        %2989 = vrot.lane.b32.xlu0 %v2791, 34
        %v2990 = vpop.permute.xlu0 %2989
        %2991 = vrot.lane.b32.xlu0 %v2792, 34
        %v2992 = vpop.permute.xlu0 %2991
        %2993 = vrot.lane.b32.xlu0 %v2793, 34
        %v2994 = vpop.permute.xlu0 %2993
        %2995 = vrot.lane.b32.xlu0 %v2794, 34
        %v2996 = vpop.permute.xlu0 %2995
        %2997 = vrot.lane.b32.xlu0 %v2795, 34
        %v2998 = vpop.permute.xlu0 %2997
        %2999 = vrot.lane.b32.xlu0 %v2796, 34
        %v3000 = vpop.permute.xlu0 %2999
        %3001 = vrot.lane.b32.xlu0 %v2797, 34
        %v3002 = vpop.permute.xlu0 %3001
        %3003 = vrot.lane.b32.xlu0 %v2798, 34
        %v3004 = vpop.permute.xlu0 %3003
        %3005 = vrot.lane.b32.xlu0 %v2799, 34
        %v3006 = vpop.permute.xlu0 %3005
        %3007 = vrot.lane.b32.xlu0 %v2800, 34
        %v3008 = vpop.permute.xlu0 %3007
        %3009 = vrot.lane.b32.xlu0 %v2801, 34
        %v3010 = vpop.permute.xlu0 %3009
        %3011 = vrot.lane.b32.xlu0 %v2802, 34
        %v3012 = vpop.permute.xlu0 %3011
        %3013 = vrot.lane.b32.xlu0 %v2803, 34
        %v3014 = vpop.permute.xlu0 %3013
        %3015 = vrot.lane.b32.xlu0 %v2804, 34
        %v3016 = vpop.permute.xlu0 %3015
        %3017 = vrot.lane.b32.xlu0 %v2805, 34
        %v3018 = vpop.permute.xlu0 %3017
        %3019 = vrot.lane.b32.xlu0 %v2806, 34
        %v3020 = vpop.permute.xlu0 %3019
        %3021 = vrot.lane.b32.xlu0 %v2807, 34
        %v3022 = vpop.permute.xlu0 %3021
        %3023 = vrot.lane.b32.xlu0 %v2808, 34
        %v3024 = vpop.permute.xlu0 %3023
        %3025 = vrot.lane.b32.xlu0 %v2809, 34
        %v3026 = vpop.permute.xlu0 %3025
        %3027 = vrot.lane.b32.xlu0 %v2810, 34
        %v3028 = vpop.permute.xlu0 %3027
        %3029 = vrot.lane.b32.xlu0 %v2811, 34
        %v3030 = vpop.permute.xlu0 %3029
        %3031 = vrot.lane.b32.xlu0 %v2812, 34
        %v3032 = vpop.permute.xlu0 %3031
        %3033 = vrot.lane.b32.xlu0 %v2813, 34
        %v3034 = vpop.permute.xlu0 %3033
        %3035 = vrot.lane.b32.xlu0 %v2814, 34
        %v3036 = vpop.permute.xlu0 %3035
        %3037 = vrot.lane.b32.xlu0 %v2815, 34
        %v3038 = vpop.permute.xlu0 %3037
        %3039 = vrot.lane.b32.xlu0 %v2816, 34
        %v3040 = vpop.permute.xlu0 %3039
        %v3073 = vsel %vm2720, %v2753, %v2850
        %v3074 = vsel %vm2720, %v2754, %v2852
        %v3075 = vsel %vm2720, %v2755, %v2854
        %v3076 = vsel %vm2720, %v2756, %v2856
        %v3077 = vsel %vm2720, %v2757, %v2858
        %v3078 = vsel %vm2720, %v2758, %v2860
        %v3079 = vsel %vm2720, %v2759, %v2862
        %v3080 = vsel %vm2720, %v2760, %v2864
        %v3081 = vsel %vm2720, %v2761, %v2866
        %v3082 = vsel %vm2720, %v2762, %v2868
        %v3083 = vsel %vm2720, %v2763, %v2870
        %v3084 = vsel %vm2720, %v2764, %v2872
        %v3085 = vsel %vm2720, %v2765, %v2874
        %v3086 = vsel %vm2720, %v2766, %v2876
        %v3087 = vsel %vm2720, %v2767, %v2878
        %v3088 = vsel %vm2720, %v2768, %v2880
        %v3089 = vsel %vm2720, %v2769, %v2882
        %v3090 = vsel %vm2720, %v2770, %v2884
        %v3091 = vsel %vm2720, %v2771, %v2886
        %v3092 = vsel %vm2720, %v2772, %v2888
        %v3093 = vsel %vm2720, %v2773, %v2890
        %v3094 = vsel %vm2720, %v2774, %v2892
        %v3095 = vsel %vm2720, %v2775, %v2894
        %v3096 = vsel %vm2720, %v2776, %v2896
        %v3097 = vsel %vm2720, %v2777, %v2898
        %v3098 = vsel %vm2720, %v2778, %v2900
        %v3099 = vsel %vm2720, %v2779, %v2902
        %v3100 = vsel %vm2720, %v2780, %v2904
        %v3101 = vsel %vm2720, %v2781, %v2906
        %v3102 = vsel %vm2720, %v2782, %v2908
        %v3103 = vsel %vm2720, %v2783, %v2910
        %v3104 = vsel %vm2720, %v2784, %v2912
        %vm3105 = vcmask 277504
        %v3106 = vsel %vm3105, %v3073, %v2978
        %v3107 = vsel %vm3105, %v3074, %v2980
        %v3108 = vsel %vm3105, %v3075, %v2982
        %v3109 = vsel %vm3105, %v3076, %v2984
        %v3110 = vsel %vm3105, %v3077, %v2986
        %v3111 = vsel %vm3105, %v3078, %v2988
        %v3112 = vsel %vm3105, %v3079, %v2990
        %v3113 = vsel %vm3105, %v3080, %v2992
        %v3114 = vsel %vm3105, %v3081, %v2994
        %v3115 = vsel %vm3105, %v3082, %v2996
        %v3116 = vsel %vm3105, %v3083, %v2998
        %v3117 = vsel %vm3105, %v3084, %v3000
        %v3118 = vsel %vm3105, %v3085, %v3002
        %v3119 = vsel %vm3105, %v3086, %v3004
        %v3120 = vsel %vm3105, %v3087, %v3006
        %v3121 = vsel %vm3105, %v3088, %v3008
        %v3122 = vsel %vm3105, %v3089, %v3010
        %v3123 = vsel %vm3105, %v3090, %v3012
        %v3124 = vsel %vm3105, %v3091, %v3014
        %v3125 = vsel %vm3105, %v3092, %v3016
        %v3126 = vsel %vm3105, %v3093, %v3018
        %v3127 = vsel %vm3105, %v3094, %v3020
        %v3128 = vsel %vm3105, %v3095, %v3022
        %v3129 = vsel %vm3105, %v3096, %v3024
        %v3130 = vsel %vm3105, %v3097, %v3026
        %v3131 = vsel %vm3105, %v3098, %v3028
        %v3132 = vsel %vm3105, %v3099, %v3030
        %v3133 = vsel %vm3105, %v3100, %v3032
        %v3134 = vsel %vm3105, %v3101, %v3034
        %v3135 = vsel %vm3105, %v3102, %v3036
        %v3136 = vsel %vm3105, %v3103, %v3038
        %v3137 = vsel %vm3105, %v3104, %v3040
        %vm3138 = vcmask 416768
        %3139 = vst.msk [vmem:[%s1307] sm:$0xff] %vm3138, %v3106
        %3140 = vst.msk [vmem:[%s1307 + $0x10] sm:$0xff] %vm3138, %v3107
        %3141 = vst.msk [vmem:[%s1307 + $0x20] sm:$0xff] %vm3138, %v3108
        %3142 = vst.msk [vmem:[%s1307 + $0x30] sm:$0xff] %vm3138, %v3109
        %3143 = vst.msk [vmem:[%s1307 + $0x40] sm:$0xff] %vm3138, %v3110
        %3144 = vst.msk [vmem:[%s1307 + $0x50] sm:$0xff] %vm3138, %v3111
        %3145 = vst.msk [vmem:[%s1307 + $0x60] sm:$0xff] %vm3138, %v3112
        %3146 = vst.msk [vmem:[%s1307 + $0x70] sm:$0xff] %vm3138, %v3113
        %3147 = vst.msk [vmem:[%s1307 + $0x80] sm:$0xff] %vm3138, %v3114
        %3148 = vst.msk [vmem:[%s1307 + $0x90] sm:$0xff] %vm3138, %v3115
        %3149 = vst.msk [vmem:[%s1307 + $0xa0] sm:$0xff] %vm3138, %v3116
        %3150 = vst.msk [vmem:[%s1307 + $0xb0] sm:$0xff] %vm3138, %v3117
        %3151 = vst.msk [vmem:[%s1307 + $0xc0] sm:$0xff] %vm3138, %v3118
        %3152 = vst.msk [vmem:[%s1307 + $0xd0] sm:$0xff] %vm3138, %v3119
        %3153 = vst.msk [vmem:[%s1307 + $0xe0] sm:$0xff] %vm3138, %v3120
        %3154 = vst.msk [vmem:[%s1307 + $0xf0] sm:$0xff] %vm3138, %v3121
        %3155 = vst.msk [vmem:[%s1307 + $0x100] sm:$0xff] %vm3138, %v3122
        %3156 = vst.msk [vmem:[%s1307 + $0x110] sm:$0xff] %vm3138, %v3123
        %3157 = vst.msk [vmem:[%s1307 + $0x120] sm:$0xff] %vm3138, %v3124
        %3158 = vst.msk [vmem:[%s1307 + $0x130] sm:$0xff] %vm3138, %v3125
        %3159 = vst.msk [vmem:[%s1307 + $0x140] sm:$0xff] %vm3138, %v3126
        %3160 = vst.msk [vmem:[%s1307 + $0x150] sm:$0xff] %vm3138, %v3127
        %3161 = vst.msk [vmem:[%s1307 + $0x160] sm:$0xff] %vm3138, %v3128
        %3162 = vst.msk [vmem:[%s1307 + $0x170] sm:$0xff] %vm3138, %v3129
        %3163 = vst.msk [vmem:[%s1307 + $0x180] sm:$0xff] %vm3138, %v3130
        %3164 = vst.msk [vmem:[%s1307 + $0x190] sm:$0xff] %vm3138, %v3131
        %3165 = vst.msk [vmem:[%s1307 + $0x1a0] sm:$0xff] %vm3138, %v3132
        %3166 = vst.msk [vmem:[%s1307 + $0x1b0] sm:$0xff] %vm3138, %v3133
        %3167 = vst.msk [vmem:[%s1307 + $0x1c0] sm:$0xff] %vm3138, %v3134
        %3168 = vst.msk [vmem:[%s1307 + $0x1d0] sm:$0xff] %vm3138, %v3135
        %3169 = vst.msk [vmem:[%s1307 + $0x1e0] sm:$0xff] %vm3138, %v3136
        %3170 = vst.msk [vmem:[%s1307 + $0x1f0] sm:$0xff] %vm3138, %v3137
        %v3171 = vld [vmem:[#allocation3] sm:$0xff]
        %v3172 = vld [vmem:[#allocation3 + $0x10] sm:$0xff]
        %v3173 = vld [vmem:[#allocation3 + $0x20] sm:$0xff]
        %v3174 = vld [vmem:[#allocation3 + $0x30] sm:$0xff]
        %v3175 = vld [vmem:[#allocation3 + $0x40] sm:$0xff]
        %v3176 = vld [vmem:[#allocation3 + $0x50] sm:$0xff]
        %v3177 = vld [vmem:[#allocation3 + $0x60] sm:$0xff]
        %v3178 = vld [vmem:[#allocation3 + $0x70] sm:$0xff]
        %v3179 = vld [vmem:[#allocation3 + $0x80] sm:$0xff]
        %v3180 = vld [vmem:[#allocation3 + $0x90] sm:$0xff]
        %v3181 = vld [vmem:[#allocation3 + $0xa0] sm:$0xff]
        %v3182 = vld [vmem:[#allocation3 + $0xb0] sm:$0xff]
        %v3183 = vld [vmem:[#allocation3 + $0xc0] sm:$0xff]
        %v3184 = vld [vmem:[#allocation3 + $0xd0] sm:$0xff]
        %v3185 = vld [vmem:[#allocation3 + $0xe0] sm:$0xff]
        %v3186 = vld [vmem:[#allocation3 + $0xf0] sm:$0xff]
        %v3187 = vld [vmem:[#allocation3 + $0x100] sm:$0xff]
        %v3188 = vld [vmem:[#allocation3 + $0x110] sm:$0xff]
        %v3189 = vld [vmem:[#allocation3 + $0x120] sm:$0xff]
        %v3190 = vld [vmem:[#allocation3 + $0x130] sm:$0xff]
        %v3191 = vld [vmem:[#allocation3 + $0x140] sm:$0xff]
        %v3192 = vld [vmem:[#allocation3 + $0x150] sm:$0xff]
        %v3193 = vld [vmem:[#allocation3 + $0x160] sm:$0xff]
        %v3194 = vld [vmem:[#allocation3 + $0x170] sm:$0xff]
        %v3195 = vld [vmem:[#allocation3 + $0x180] sm:$0xff]
        %v3196 = vld [vmem:[#allocation3 + $0x190] sm:$0xff]
        %v3197 = vld [vmem:[#allocation3 + $0x1a0] sm:$0xff]
        %v3198 = vld [vmem:[#allocation3 + $0x1b0] sm:$0xff]
        %v3199 = vld [vmem:[#allocation3 + $0x1c0] sm:$0xff]
        %v3200 = vld [vmem:[#allocation3 + $0x1d0] sm:$0xff]
        %v3201 = vld [vmem:[#allocation3 + $0x1e0] sm:$0xff]
        %v3202 = vld [vmem:[#allocation3 + $0x1f0] sm:$0xff]
        %s3203 = smul.u32 %s2491, 168
        %s3204 = scalar_lea.vmem %s5, %s3203
        %v3205 = vld [vmem:[%s3204] sm:$0xff]
        %v3206 = vld [vmem:[%s3204 + $0x8] sm:$0xff]
        %v3207 = vld [vmem:[%s3204 + $0x10] sm:$0xff]
        %v3208 = vld [vmem:[%s3204 + $0x18] sm:$0xff]
        %v3209 = vld [vmem:[%s3204 + $0x20] sm:$0xff]
        %v3210 = vld [vmem:[%s3204 + $0x28] sm:$0xff]
        %v3211 = vld [vmem:[%s3204 + $0x30] sm:$0x7]
        %v3212 = vld [vmem:[%s1307] sm:$0xff]
        %v3213 = vld [vmem:[%s1307 + $0x10] sm:$0xff]
        %v3214 = vld [vmem:[%s1307 + $0x20] sm:$0xff]
        %v3215 = vld [vmem:[%s1307 + $0x30] sm:$0xff]
        %v3216 = vld [vmem:[%s1307 + $0x40] sm:$0xff]
        %v3217 = vld [vmem:[%s1307 + $0x50] sm:$0xff]
        %v3218 = vld [vmem:[%s1307 + $0x60] sm:$0xff]
        %v3219 = vld [vmem:[%s1307 + $0x70] sm:$0xff]
        %v3220 = vld [vmem:[%s1307 + $0x80] sm:$0xff]
        %v3221 = vld [vmem:[%s1307 + $0x90] sm:$0xff]
        %v3222 = vld [vmem:[%s1307 + $0xa0] sm:$0xff]
        %v3223 = vld [vmem:[%s1307 + $0xb0] sm:$0xff]
        %v3224 = vld [vmem:[%s1307 + $0xc0] sm:$0xff]
        %v3225 = vld [vmem:[%s1307 + $0xd0] sm:$0xff]
        %v3226 = vld [vmem:[%s1307 + $0xe0] sm:$0xff]
        %v3227 = vld [vmem:[%s1307 + $0xf0] sm:$0xff]
        %v3228 = vld [vmem:[%s1307 + $0x100] sm:$0xff]
        %v3229 = vld [vmem:[%s1307 + $0x110] sm:$0xff]
        %v3230 = vld [vmem:[%s1307 + $0x120] sm:$0xff]
        %v3231 = vld [vmem:[%s1307 + $0x130] sm:$0xff]
        %v3232 = vld [vmem:[%s1307 + $0x140] sm:$0xff]
        %v3233 = vld [vmem:[%s1307 + $0x150] sm:$0xff]
        %v3234 = vld [vmem:[%s1307 + $0x160] sm:$0xff]
        %v3235 = vld [vmem:[%s1307 + $0x170] sm:$0xff]
        %v3236 = vld [vmem:[%s1307 + $0x180] sm:$0xff]
        %v3237 = vld [vmem:[%s1307 + $0x190] sm:$0xff]
        %v3238 = vld [vmem:[%s1307 + $0x1a0] sm:$0xff]
        %v3239 = vld [vmem:[%s1307 + $0x1b0] sm:$0xff]
        %v3240 = vld [vmem:[%s1307 + $0x1c0] sm:$0xff]
        %v3241 = vld [vmem:[%s1307 + $0x1d0] sm:$0xff]
        %v3242 = vld [vmem:[%s1307 + $0x1e0] sm:$0xff]
        %v3243 = vld [vmem:[%s1307 + $0x1f0] sm:$0xff]
        %s3244 = sadd.s32 56, %s3203
        %s3245 = scalar_lea.vmem %s5, %s3244
        %v3246 = vld [vmem:[%s3245] sm:$0xff]
        %v3247 = vld [vmem:[%s3245 + $0x8] sm:$0xff]
        %v3248 = vld [vmem:[%s3245 + $0x10] sm:$0xff]
        %v3249 = vld [vmem:[%s3245 + $0x18] sm:$0xff]
        %v3250 = vld [vmem:[%s3245 + $0x20] sm:$0xff]
        %v3251 = vld [vmem:[%s3245 + $0x28] sm:$0xff]
        %v3252 = vld [vmem:[%s3245 + $0x30] sm:$0x7]
        %v3254 = vsel %vm3138, %v3212, 0
        %v3257 = vsel %vm3138, %v3213, 0
        %v3260 = vsel %vm3138, %v3214, 0
        %v3263 = vsel %vm3138, %v3215, 0
        %v3266 = vsel %vm3138, %v3216, 0
        %v3269 = vsel %vm3138, %v3217, 0
        %v3272 = vsel %vm3138, %v3218, 0
        %v3275 = vsel %vm3138, %v3219, 0
        %v3278 = vsel %vm3138, %v3220, 0
        %v3281 = vsel %vm3138, %v3221, 0
        %v3284 = vsel %vm3138, %v3222, 0
        %v3287 = vsel %vm3138, %v3223, 0
        %v3290 = vsel %vm3138, %v3224, 0
        %v3293 = vsel %vm3138, %v3225, 0
        %v3296 = vsel %vm3138, %v3226, 0
        %v3299 = vsel %vm3138, %v3227, 0
        %v3302 = vsel %vm3138, %v3228, 0
        %v3305 = vsel %vm3138, %v3229, 0
        %v3308 = vsel %vm3138, %v3230, 0
        %v3311 = vsel %vm3138, %v3231, 0
        %v3314 = vsel %vm3138, %v3232, 0
        %v3317 = vsel %vm3138, %v3233, 0
        %v3320 = vsel %vm3138, %v3234, 0
        %v3323 = vsel %vm3138, %v3235, 0
        %v3326 = vsel %vm3138, %v3236, 0
        %v3329 = vsel %vm3138, %v3237, 0
        %v3332 = vsel %vm3138, %v3238, 0
        %v3335 = vsel %vm3138, %v3239, 0
        %v3338 = vsel %vm3138, %v3240, 0
        %v3341 = vsel %vm3138, %v3241, 0
        %v3344 = vsel %vm3138, %v3242, 0
        %v3347 = vsel %vm3138, %v3243, 0
        %vm3349 = vcmask 1042432
        %v3351 = vsel %vm3349, %v3252, 0
        %3353 = vmatprep.subr.mxu0 0.0
        %3354 = vmatpush1.msra.mxu0 %v3246
        %3355 = vmatprep.subr.mxu0 0.0
        %3356 = vmatpush1.msra.mxu0 %v3247
        %3357 = vmatprep.subr.mxu0 0.0
        %3358 = vmatpush1.msra.mxu0 %v3248
        %3359 = vmatprep.subr.mxu0 0.0
        %3360 = vmatpush1.msra.mxu0 %v3249
        %3361 = vmatprep.subr.mxu0 0.0
        %3362 = vmatpush1.msra.mxu0 %v3250
        %3363 = vmatprep.subr.mxu0 0.0
        %3364 = vmatpush1.msra.mxu0 %v3251
        %3365 = vmatprep.subr.mxu0 0.0
        %3366 = vmatpush1.msra.mxu0 %v3351
        %3367 = vmatprep.subr.mxu0 0.0
        %3368 = vmatpush1.msra.mxu0 0.0
        %3369 = vmatprep.subr.mxu0 0.0
        %3370 = vmatpush1.msra.mxu0 0.0
        %3371 = vmatprep.subr.mxu0 0.0
        %3372 = vmatpush1.msra.mxu0 0.0
        %3373 = vmatprep.subr.mxu0 0.0
        %3374 = vmatpush1.msra.mxu0 0.0
        %3375 = vmatprep.subr.mxu0 0.0
        %3376 = vmatpush1.msra.mxu0 0.0
        %3377 = vmatprep.subr.mxu0 0.0
        %3378 = vmatpush1.msra.mxu0 0.0
        %3379 = vmatprep.subr.mxu0 0.0
        %3380 = vmatpush1.msra.mxu0 0.0
        %3381 = vmatprep.subr.mxu0 0.0
        %3382 = vmatpush1.msra.mxu0 0.0
        %3383 = vmatprep.subr.mxu0 0.0
        %3384 = vmatpush1.msra.mxu0 0.0
        %3385 = vmatprep.subr.mxu0 0.0
        %3386 = vmatpush1.msra.mxu0 0.0
        %3387 = vmatprep.subr.mxu0 0.0
        %3388 = vmatpush1.msra.mxu0 0.0
        %3389 = vmatprep.subr.mxu0 0.0
        %3390 = vmatpush1.msra.mxu0 0.0
        %3391 = vmatprep.subr.mxu0 0.0
        %3392 = vmatpush1.msra.mxu0 0.0
        %3393 = vmatprep.subr.mxu0 0.0
        %3394 = vmatpush1.msra.mxu0 0.0
        %3395 = vmatprep.subr.mxu0 0.0
        %3396 = vmatpush1.msra.mxu0 0.0
        %3397 = vmatprep.subr.mxu0 0.0
        %3398 = vmatpush1.msra.mxu0 0.0
        %3399 = vmatprep.subr.mxu0 0.0
        %3400 = vmatpush1.msra.mxu0 0.0
        %3401 = vmatprep.subr.mxu0 0.0
        %3402 = vmatpush1.msra.mxu0 0.0
        %3403 = vmatprep.subr.mxu0 0.0
        %3404 = vmatpush1.msra.mxu0 0.0
        %3405 = vmatprep.subr.mxu0 0.0
        %3406 = vmatpush1.msra.mxu0 0.0
        %3407 = vmatprep.subr.mxu0 0.0
        %3408 = vmatpush1.msra.mxu0 0.0
        %3409 = vmatprep.subr.mxu0 0.0
        %3410 = vmatpush1.msra.mxu0 0.0
        %3411 = vmatprep.subr.mxu0 0.0
        %3412 = vmatpush1.msra.mxu0 0.0
        %3413 = vmatprep.subr.mxu0 0.0
        %3414 = vmatpush1.msra.mxu0 0.0
        %3415 = vmatprep.subr.mxu0 0.0
        %3416 = vmatpush1.msra.mxu0 0.0
        %3417 = vmatprep.mubr.f32.mxu0 0.0
        %3418 = vmatmul.mubr.f32.gmra.mrb[0].mxu0 %v3254
        %v3419 = vpop.f32.mrb[0].mxu0
        %v3420 = vadd.f32 0.0, %v3419
        %v3421 = vpop.f32.mrb[0].mxu0
        %3422 = vmatprep.mubr.f32.mxu0 0.0
        %3423 = vmatmul.mubr.f32.gmra.mrb[0].mxu0 %v3257
        %v3424 = vpop.f32.mrb[0].mxu0
        %v3425 = vadd.f32 0.0, %v3424
        %v3426 = vpop.f32.mrb[0].mxu0
        %3427 = vmatprep.mubr.f32.mxu0 0.0
        %3428 = vmatmul.mubr.f32.gmra.mrb[0].mxu0 %v3260
        %v3429 = vpop.f32.mrb[0].mxu0
        %v3430 = vadd.f32 0.0, %v3429
        %v3431 = vpop.f32.mrb[0].mxu0
        %3432 = vmatprep.mubr.f32.mxu0 0.0
        %3433 = vmatmul.mubr.f32.gmra.mrb[0].mxu0 %v3263
        %v3434 = vpop.f32.mrb[0].mxu0
        %v3435 = vadd.f32 0.0, %v3434
        %v3436 = vpop.f32.mrb[0].mxu0
        %3437 = vmatprep.mubr.f32.mxu0 0.0
        %3438 = vmatmul.mubr.f32.gmra.mrb[0].mxu0 %v3266
        %v3439 = vpop.f32.mrb[0].mxu0
        %v3440 = vadd.f32 0.0, %v3439
        %v3441 = vpop.f32.mrb[0].mxu0
        %3442 = vmatprep.mubr.f32.mxu0 0.0
        %3443 = vmatmul.mubr.f32.gmra.mrb[0].mxu0 %v3269
        %v3444 = vpop.f32.mrb[0].mxu0
        %v3445 = vadd.f32 0.0, %v3444
        %v3446 = vpop.f32.mrb[0].mxu0
        %3447 = vmatprep.mubr.f32.mxu0 0.0
        %3448 = vmatmul.mubr.f32.gmra.mrb[0].mxu0 %v3272
        %v3449 = vpop.f32.mrb[0].mxu0
        %v3450 = vadd.f32 0.0, %v3449
        %v3451 = vpop.f32.mrb[0].mxu0
        %3452 = vmatprep.mubr.f32.mxu0 0.0
        %3453 = vmatmul.mubr.f32.gmra.mrb[0].mxu0 %v3275
        %v3454 = vpop.f32.mrb[0].mxu0
        %v3455 = vadd.f32 0.0, %v3454
        %v3456 = vpop.f32.mrb[0].mxu0
        %3457 = vmatprep.mubr.f32.mxu0 0.0
        %3458 = vmatmul.mubr.f32.gmra.mrb[0].mxu0 %v3278
        %v3459 = vpop.f32.mrb[0].mxu0
        %v3460 = vadd.f32 0.0, %v3459
        %v3461 = vpop.f32.mrb[0].mxu0
        %3462 = vmatprep.mubr.f32.mxu0 0.0
        %3463 = vmatmul.mubr.f32.gmra.mrb[0].mxu0 %v3281
        %v3464 = vpop.f32.mrb[0].mxu0
        %v3465 = vadd.f32 0.0, %v3464
        %v3466 = vpop.f32.mrb[0].mxu0
        %3467 = vmatprep.mubr.f32.mxu0 0.0
        %3468 = vmatmul.mubr.f32.gmra.mrb[0].mxu0 %v3284
        %v3469 = vpop.f32.mrb[0].mxu0
        %v3470 = vadd.f32 0.0, %v3469
        %v3471 = vpop.f32.mrb[0].mxu0
        %3472 = vmatprep.mubr.f32.mxu0 0.0
        %3473 = vmatmul.mubr.f32.gmra.mrb[0].mxu0 %v3287
        %v3474 = vpop.f32.mrb[0].mxu0
        %v3475 = vadd.f32 0.0, %v3474
        %v3476 = vpop.f32.mrb[0].mxu0
        %3477 = vmatprep.mubr.f32.mxu0 0.0
        %3478 = vmatmul.mubr.f32.gmra.mrb[0].mxu0 %v3290
        %v3479 = vpop.f32.mrb[0].mxu0
        %v3480 = vadd.f32 0.0, %v3479
        %v3481 = vpop.f32.mrb[0].mxu0
        %3482 = vmatprep.mubr.f32.mxu0 0.0
        %3483 = vmatmul.mubr.f32.gmra.mrb[0].mxu0 %v3293
        %v3484 = vpop.f32.mrb[0].mxu0
        %v3485 = vadd.f32 0.0, %v3484
        %v3486 = vpop.f32.mrb[0].mxu0
        %3487 = vmatprep.mubr.f32.mxu0 0.0
        %3488 = vmatmul.mubr.f32.gmra.mrb[0].mxu0 %v3296
        %v3489 = vpop.f32.mrb[0].mxu0
        %v3490 = vadd.f32 0.0, %v3489
        %v3491 = vpop.f32.mrb[0].mxu0
        %3492 = vmatprep.mubr.f32.mxu0 0.0
        %3493 = vmatmul.mubr.f32.gmra.mrb[0].mxu0 %v3299
        %v3494 = vpop.f32.mrb[0].mxu0
        %v3495 = vadd.f32 0.0, %v3494
        %v3496 = vpop.f32.mrb[0].mxu0
        %3497 = vmatprep.mubr.f32.mxu0 0.0
        %3498 = vmatmul.mubr.f32.gmra.mrb[0].mxu0 %v3302
        %v3499 = vpop.f32.mrb[0].mxu0
        %v3500 = vadd.f32 0.0, %v3499
        %v3501 = vpop.f32.mrb[0].mxu0
        %3502 = vmatprep.mubr.f32.mxu0 0.0
        %3503 = vmatmul.mubr.f32.gmra.mrb[0].mxu0 %v3305
        %v3504 = vpop.f32.mrb[0].mxu0
        %v3505 = vadd.f32 0.0, %v3504
        %v3506 = vpop.f32.mrb[0].mxu0
        %3507 = vmatprep.mubr.f32.mxu0 0.0
        %3508 = vmatmul.mubr.f32.gmra.mrb[0].mxu0 %v3308
        %v3509 = vpop.f32.mrb[0].mxu0
        %v3510 = vadd.f32 0.0, %v3509
        %v3511 = vpop.f32.mrb[0].mxu0
        %3512 = vmatprep.mubr.f32.mxu0 0.0
        %3513 = vmatmul.mubr.f32.gmra.mrb[0].mxu0 %v3311
        %v3514 = vpop.f32.mrb[0].mxu0
        %v3515 = vadd.f32 0.0, %v3514
        %v3516 = vpop.f32.mrb[0].mxu0
        %3517 = vmatprep.mubr.f32.mxu0 0.0
        %3518 = vmatmul.mubr.f32.gmra.mrb[0].mxu0 %v3314
        %v3519 = vpop.f32.mrb[0].mxu0
        %v3520 = vadd.f32 0.0, %v3519
        %v3521 = vpop.f32.mrb[0].mxu0
        %3522 = vmatprep.mubr.f32.mxu0 0.0
        %3523 = vmatmul.mubr.f32.gmra.mrb[0].mxu0 %v3317
        %v3524 = vpop.f32.mrb[0].mxu0
        %v3525 = vadd.f32 0.0, %v3524
        %v3526 = vpop.f32.mrb[0].mxu0
        %3527 = vmatprep.mubr.f32.mxu0 0.0
        %3528 = vmatmul.mubr.f32.gmra.mrb[0].mxu0 %v3320
        %v3529 = vpop.f32.mrb[0].mxu0
        %v3530 = vadd.f32 0.0, %v3529
        %v3531 = vpop.f32.mrb[0].mxu0
        %3532 = vmatprep.mubr.f32.mxu0 0.0
        %3533 = vmatmul.mubr.f32.gmra.mrb[0].mxu0 %v3323
        %v3534 = vpop.f32.mrb[0].mxu0
        %v3535 = vadd.f32 0.0, %v3534
        %v3536 = vpop.f32.mrb[0].mxu0
        %3537 = vmatprep.mubr.f32.mxu0 0.0
        %3538 = vmatmul.mubr.f32.gmra.mrb[0].mxu0 %v3326
        %v3539 = vpop.f32.mrb[0].mxu0
        %v3540 = vadd.f32 0.0, %v3539
        %v3541 = vpop.f32.mrb[0].mxu0
        %3542 = vmatprep.mubr.f32.mxu0 0.0
        %3543 = vmatmul.mubr.f32.gmra.mrb[0].mxu0 %v3329
        %v3544 = vpop.f32.mrb[0].mxu0
        %v3545 = vadd.f32 0.0, %v3544
        %v3546 = vpop.f32.mrb[0].mxu0
        %3547 = vmatprep.mubr.f32.mxu0 0.0
        %3548 = vmatmul.mubr.f32.gmra.mrb[0].mxu0 %v3332
        %v3549 = vpop.f32.mrb[0].mxu0
        %v3550 = vadd.f32 0.0, %v3549
        %v3551 = vpop.f32.mrb[0].mxu0
        %3552 = vmatprep.mubr.f32.mxu0 0.0
        %3553 = vmatmul.mubr.f32.gmra.mrb[0].mxu0 %v3335
        %v3554 = vpop.f32.mrb[0].mxu0
        %v3555 = vadd.f32 0.0, %v3554
        %v3556 = vpop.f32.mrb[0].mxu0
        %3557 = vmatprep.mubr.f32.mxu0 0.0
        %3558 = vmatmul.mubr.f32.gmra.mrb[0].mxu0 %v3338
        %v3559 = vpop.f32.mrb[0].mxu0
        %v3560 = vadd.f32 0.0, %v3559
        %v3561 = vpop.f32.mrb[0].mxu0
        %3562 = vmatprep.mubr.f32.mxu0 0.0
        %3563 = vmatmul.mubr.f32.gmra.mrb[0].mxu0 %v3341
        %v3564 = vpop.f32.mrb[0].mxu0
        %v3565 = vadd.f32 0.0, %v3564
        %v3566 = vpop.f32.mrb[0].mxu0
        %3567 = vmatprep.mubr.f32.mxu0 0.0
        %3568 = vmatmul.mubr.f32.gmra.mrb[0].mxu0 %v3344
        %v3569 = vpop.f32.mrb[0].mxu0
        %v3570 = vadd.f32 0.0, %v3569
        %v3571 = vpop.f32.mrb[0].mxu0
        %3572 = vmatprep.mubr.f32.mxu0 0.0
        %3573 = vmatmul.mubr.f32.gmra.mrb[0].mxu0 %v3347
        %v3574 = vpop.f32.mrb[0].mxu0
        %v3575 = vadd.f32 0.0, %v3574
        %v3576 = vpop.f32.mrb[0].mxu0
        %3577 = vdwg.mxu0
        %v3579 = vsel %vm3138, %v3171, 0
        %v3582 = vsel %vm3138, %v3172, 0
        %v3585 = vsel %vm3138, %v3173, 0
        %v3588 = vsel %vm3138, %v3174, 0
        %v3591 = vsel %vm3138, %v3175, 0
        %v3594 = vsel %vm3138, %v3176, 0
        %v3597 = vsel %vm3138, %v3177, 0
        %v3600 = vsel %vm3138, %v3178, 0
        %v3603 = vsel %vm3138, %v3179, 0
        %v3606 = vsel %vm3138, %v3180, 0
        %v3609 = vsel %vm3138, %v3181, 0
        %v3612 = vsel %vm3138, %v3182, 0
        %v3615 = vsel %vm3138, %v3183, 0
        %v3618 = vsel %vm3138, %v3184, 0
        %v3621 = vsel %vm3138, %v3185, 0
        %v3624 = vsel %vm3138, %v3186, 0
        %v3627 = vsel %vm3138, %v3187, 0
        %v3630 = vsel %vm3138, %v3188, 0
        %v3633 = vsel %vm3138, %v3189, 0
        %v3636 = vsel %vm3138, %v3190, 0
        %v3639 = vsel %vm3138, %v3191, 0
        %v3642 = vsel %vm3138, %v3192, 0
        %v3645 = vsel %vm3138, %v3193, 0
        %v3648 = vsel %vm3138, %v3194, 0
        %v3651 = vsel %vm3138, %v3195, 0
        %v3654 = vsel %vm3138, %v3196, 0
        %v3657 = vsel %vm3138, %v3197, 0
        %v3660 = vsel %vm3138, %v3198, 0
        %v3663 = vsel %vm3138, %v3199, 0
        %v3666 = vsel %vm3138, %v3200, 0
        %v3669 = vsel %vm3138, %v3201, 0
        %v3672 = vsel %vm3138, %v3202, 0
        %v3675 = vsel %vm3349, %v3211, 0
        %3677 = vmatprep.subr.mxu0 0.0
        %3678 = vmatpush1.msra.mxu0 %v3205
        %3679 = vmatprep.subr.mxu0 0.0
        %3680 = vmatpush1.msra.mxu0 %v3206
        %3681 = vmatprep.subr.mxu0 0.0
        %3682 = vmatpush1.msra.mxu0 %v3207
        %3683 = vmatprep.subr.mxu0 0.0
        %3684 = vmatpush1.msra.mxu0 %v3208
        %3685 = vmatprep.subr.mxu0 0.0
        %3686 = vmatpush1.msra.mxu0 %v3209
        %3687 = vmatprep.subr.mxu0 0.0
        %3688 = vmatpush1.msra.mxu0 %v3210
        %3689 = vmatprep.subr.mxu0 0.0
        %3690 = vmatpush1.msra.mxu0 %v3675
        %3691 = vmatprep.subr.mxu0 0.0
        %3692 = vmatpush1.msra.mxu0 0.0
        %3693 = vmatprep.subr.mxu0 0.0
        %3694 = vmatpush1.msra.mxu0 0.0
        %3695 = vmatprep.subr.mxu0 0.0
        %3696 = vmatpush1.msra.mxu0 0.0
        %3697 = vmatprep.subr.mxu0 0.0
        %3698 = vmatpush1.msra.mxu0 0.0
        %3699 = vmatprep.subr.mxu0 0.0
        %3700 = vmatpush1.msra.mxu0 0.0
        %3701 = vmatprep.subr.mxu0 0.0
        %3702 = vmatpush1.msra.mxu0 0.0
        %3703 = vmatprep.subr.mxu0 0.0
        %3704 = vmatpush1.msra.mxu0 0.0
        %3705 = vmatprep.subr.mxu0 0.0
        %3706 = vmatpush1.msra.mxu0 0.0
        %3707 = vmatprep.subr.mxu0 0.0
        %3708 = vmatpush1.msra.mxu0 0.0
        %3709 = vmatprep.subr.mxu0 0.0
        %3710 = vmatpush1.msra.mxu0 0.0
        %3711 = vmatprep.subr.mxu0 0.0
        %3712 = vmatpush1.msra.mxu0 0.0
        %3713 = vmatprep.subr.mxu0 0.0
        %3714 = vmatpush1.msra.mxu0 0.0
        %3715 = vmatprep.subr.mxu0 0.0
        %3716 = vmatpush1.msra.mxu0 0.0
        %3717 = vmatprep.subr.mxu0 0.0
        %3718 = vmatpush1.msra.mxu0 0.0
        %3719 = vmatprep.subr.mxu0 0.0
        %3720 = vmatpush1.msra.mxu0 0.0
        %3721 = vmatprep.subr.mxu0 0.0
        %3722 = vmatpush1.msra.mxu0 0.0
        %3723 = vmatprep.subr.mxu0 0.0
        %3724 = vmatpush1.msra.mxu0 0.0
        %3725 = vmatprep.subr.mxu0 0.0
        %3726 = vmatpush1.msra.mxu0 0.0
        %3727 = vmatprep.subr.mxu0 0.0
        %3728 = vmatpush1.msra.mxu0 0.0
        %3729 = vmatprep.subr.mxu0 0.0
        %3730 = vmatpush1.msra.mxu0 0.0
        %3731 = vmatprep.subr.mxu0 0.0
        %3732 = vmatpush1.msra.mxu0 0.0
        %3733 = vmatprep.subr.mxu0 0.0
        %3734 = vmatpush1.msra.mxu0 0.0
        %3735 = vmatprep.subr.mxu0 0.0
        %3736 = vmatpush1.msra.mxu0 0.0
        %3737 = vmatprep.subr.mxu0 0.0
        %3738 = vmatpush1.msra.mxu0 0.0
        %3739 = vmatprep.subr.mxu0 0.0
        %3740 = vmatpush1.msra.mxu0 0.0
        %3741 = vmatprep.mubr.f32.mxu0 0.0
        %3742 = vmatmul.mubr.f32.gmra.mrb[0].mxu0 %v3579
        %v3743 = vpop.f32.mrb[0].mxu0
        %v3744 = vadd.f32 %v3420, %v3743
        %v3745 = vpop.f32.mrb[0].mxu0
        %3746 = vmatprep.mubr.f32.mxu0 0.0
        %3747 = vmatmul.mubr.f32.gmra.mrb[0].mxu0 %v3582
        %v3748 = vpop.f32.mrb[0].mxu0
        %v3749 = vadd.f32 %v3425, %v3748
        %v3750 = vpop.f32.mrb[0].mxu0
        %3751 = vmatprep.mubr.f32.mxu0 0.0
        %3752 = vmatmul.mubr.f32.gmra.mrb[0].mxu0 %v3585
        %v3753 = vpop.f32.mrb[0].mxu0
        %v3754 = vadd.f32 %v3430, %v3753
        %v3755 = vpop.f32.mrb[0].mxu0
        %3756 = vmatprep.mubr.f32.mxu0 0.0
        %3757 = vmatmul.mubr.f32.gmra.mrb[0].mxu0 %v3588
        %v3758 = vpop.f32.mrb[0].mxu0
        %v3759 = vadd.f32 %v3435, %v3758
        %v3760 = vpop.f32.mrb[0].mxu0
        %3761 = vmatprep.mubr.f32.mxu0 0.0
        %3762 = vmatmul.mubr.f32.gmra.mrb[0].mxu0 %v3591
        %v3763 = vpop.f32.mrb[0].mxu0
        %v3764 = vadd.f32 %v3440, %v3763
        %v3765 = vpop.f32.mrb[0].mxu0
        %3766 = vmatprep.mubr.f32.mxu0 0.0
        %3767 = vmatmul.mubr.f32.gmra.mrb[0].mxu0 %v3594
        %v3768 = vpop.f32.mrb[0].mxu0
        %v3769 = vadd.f32 %v3445, %v3768
        %v3770 = vpop.f32.mrb[0].mxu0
        %3771 = vmatprep.mubr.f32.mxu0 0.0
        %3772 = vmatmul.mubr.f32.gmra.mrb[0].mxu0 %v3597
        %v3773 = vpop.f32.mrb[0].mxu0
        %v3774 = vadd.f32 %v3450, %v3773
        %v3775 = vpop.f32.mrb[0].mxu0
        %3776 = vmatprep.mubr.f32.mxu0 0.0
        %3777 = vmatmul.mubr.f32.gmra.mrb[0].mxu0 %v3600
        %v3778 = vpop.f32.mrb[0].mxu0
        %v3779 = vadd.f32 %v3455, %v3778
        %v3780 = vpop.f32.mrb[0].mxu0
        %3781 = vmatprep.mubr.f32.mxu0 0.0
        %3782 = vmatmul.mubr.f32.gmra.mrb[0].mxu0 %v3603
        %v3783 = vpop.f32.mrb[0].mxu0
        %v3784 = vadd.f32 %v3460, %v3783
        %v3785 = vpop.f32.mrb[0].mxu0
        %3786 = vmatprep.mubr.f32.mxu0 0.0
        %3787 = vmatmul.mubr.f32.gmra.mrb[0].mxu0 %v3606
        %v3788 = vpop.f32.mrb[0].mxu0
        %v3789 = vadd.f32 %v3465, %v3788
        %v3790 = vpop.f32.mrb[0].mxu0
        %3791 = vmatprep.mubr.f32.mxu0 0.0
        %3792 = vmatmul.mubr.f32.gmra.mrb[0].mxu0 %v3609
        %v3793 = vpop.f32.mrb[0].mxu0
        %v3794 = vadd.f32 %v3470, %v3793
        %v3795 = vpop.f32.mrb[0].mxu0
        %3796 = vmatprep.mubr.f32.mxu0 0.0
        %3797 = vmatmul.mubr.f32.gmra.mrb[0].mxu0 %v3612
        %v3798 = vpop.f32.mrb[0].mxu0
        %v3799 = vadd.f32 %v3475, %v3798
        %v3800 = vpop.f32.mrb[0].mxu0
        %3801 = vmatprep.mubr.f32.mxu0 0.0
        %3802 = vmatmul.mubr.f32.gmra.mrb[0].mxu0 %v3615
        %v3803 = vpop.f32.mrb[0].mxu0
        %v3804 = vadd.f32 %v3480, %v3803
        %v3805 = vpop.f32.mrb[0].mxu0
        %3806 = vmatprep.mubr.f32.mxu0 0.0
        %3807 = vmatmul.mubr.f32.gmra.mrb[0].mxu0 %v3618
        %v3808 = vpop.f32.mrb[0].mxu0
        %v3809 = vadd.f32 %v3485, %v3808
        %v3810 = vpop.f32.mrb[0].mxu0
        %3811 = vmatprep.mubr.f32.mxu0 0.0
        %3812 = vmatmul.mubr.f32.gmra.mrb[0].mxu0 %v3621
        %v3813 = vpop.f32.mrb[0].mxu0
        %v3814 = vadd.f32 %v3490, %v3813
        %v3815 = vpop.f32.mrb[0].mxu0
        %3816 = vmatprep.mubr.f32.mxu0 0.0
        %3817 = vmatmul.mubr.f32.gmra.mrb[0].mxu0 %v3624
        %v3818 = vpop.f32.mrb[0].mxu0
        %v3819 = vadd.f32 %v3495, %v3818
        %v3820 = vpop.f32.mrb[0].mxu0
        %3821 = vmatprep.mubr.f32.mxu0 0.0
        %3822 = vmatmul.mubr.f32.gmra.mrb[0].mxu0 %v3627
        %v3823 = vpop.f32.mrb[0].mxu0
        %v3824 = vadd.f32 %v3500, %v3823
        %v3825 = vpop.f32.mrb[0].mxu0
        %3826 = vmatprep.mubr.f32.mxu0 0.0
        %3827 = vmatmul.mubr.f32.gmra.mrb[0].mxu0 %v3630
        %v3828 = vpop.f32.mrb[0].mxu0
        %v3829 = vadd.f32 %v3505, %v3828
        %v3830 = vpop.f32.mrb[0].mxu0
        %3831 = vmatprep.mubr.f32.mxu0 0.0
        %3832 = vmatmul.mubr.f32.gmra.mrb[0].mxu0 %v3633
        %v3833 = vpop.f32.mrb[0].mxu0
        %v3834 = vadd.f32 %v3510, %v3833
        %v3835 = vpop.f32.mrb[0].mxu0
        %3836 = vmatprep.mubr.f32.mxu0 0.0
        %3837 = vmatmul.mubr.f32.gmra.mrb[0].mxu0 %v3636
        %v3838 = vpop.f32.mrb[0].mxu0
        %v3839 = vadd.f32 %v3515, %v3838
        %v3840 = vpop.f32.mrb[0].mxu0
        %3841 = vmatprep.mubr.f32.mxu0 0.0
        %3842 = vmatmul.mubr.f32.gmra.mrb[0].mxu0 %v3639
        %v3843 = vpop.f32.mrb[0].mxu0
        %v3844 = vadd.f32 %v3520, %v3843
        %v3845 = vpop.f32.mrb[0].mxu0
        %3846 = vmatprep.mubr.f32.mxu0 0.0
        %3847 = vmatmul.mubr.f32.gmra.mrb[0].mxu0 %v3642
        %v3848 = vpop.f32.mrb[0].mxu0
        %v3849 = vadd.f32 %v3525, %v3848
        %v3850 = vpop.f32.mrb[0].mxu0
        %3851 = vmatprep.mubr.f32.mxu0 0.0
        %3852 = vmatmul.mubr.f32.gmra.mrb[0].mxu0 %v3645
        %v3853 = vpop.f32.mrb[0].mxu0
        %v3854 = vadd.f32 %v3530, %v3853
        %v3855 = vpop.f32.mrb[0].mxu0
        %3856 = vmatprep.mubr.f32.mxu0 0.0
        %3857 = vmatmul.mubr.f32.gmra.mrb[0].mxu0 %v3648
        %v3858 = vpop.f32.mrb[0].mxu0
        %v3859 = vadd.f32 %v3535, %v3858
        %v3860 = vpop.f32.mrb[0].mxu0
        %3861 = vmatprep.mubr.f32.mxu0 0.0
        %3862 = vmatmul.mubr.f32.gmra.mrb[0].mxu0 %v3651
        %v3863 = vpop.f32.mrb[0].mxu0
        %v3864 = vadd.f32 %v3540, %v3863
        %v3865 = vpop.f32.mrb[0].mxu0
        %3866 = vmatprep.mubr.f32.mxu0 0.0
        %3867 = vmatmul.mubr.f32.gmra.mrb[0].mxu0 %v3654
        %v3868 = vpop.f32.mrb[0].mxu0
        %v3869 = vadd.f32 %v3545, %v3868
        %v3870 = vpop.f32.mrb[0].mxu0
        %3871 = vmatprep.mubr.f32.mxu0 0.0
        %3872 = vmatmul.mubr.f32.gmra.mrb[0].mxu0 %v3657
        %v3873 = vpop.f32.mrb[0].mxu0
        %v3874 = vadd.f32 %v3550, %v3873
        %v3875 = vpop.f32.mrb[0].mxu0
        %3876 = vmatprep.mubr.f32.mxu0 0.0
        %3877 = vmatmul.mubr.f32.gmra.mrb[0].mxu0 %v3660
        %v3878 = vpop.f32.mrb[0].mxu0
        %v3879 = vadd.f32 %v3555, %v3878
        %v3880 = vpop.f32.mrb[0].mxu0
        %3881 = vmatprep.mubr.f32.mxu0 0.0
        %3882 = vmatmul.mubr.f32.gmra.mrb[0].mxu0 %v3663
        %v3883 = vpop.f32.mrb[0].mxu0
        %v3884 = vadd.f32 %v3560, %v3883
        %v3885 = vpop.f32.mrb[0].mxu0
        %3886 = vmatprep.mubr.f32.mxu0 0.0
        %3887 = vmatmul.mubr.f32.gmra.mrb[0].mxu0 %v3666
        %v3888 = vpop.f32.mrb[0].mxu0
        %v3889 = vadd.f32 %v3565, %v3888
        %v3890 = vpop.f32.mrb[0].mxu0
        %3891 = vmatprep.mubr.f32.mxu0 0.0
        %3892 = vmatmul.mubr.f32.gmra.mrb[0].mxu0 %v3669
        %v3893 = vpop.f32.mrb[0].mxu0
        %v3894 = vadd.f32 %v3570, %v3893
        %v3895 = vpop.f32.mrb[0].mxu0
        %3896 = vmatprep.mubr.f32.mxu0 0.0
        %3897 = vmatmul.mubr.f32.gmra.mrb[0].mxu0 %v3672
        %v3898 = vpop.f32.mrb[0].mxu0
        %v3899 = vadd.f32 %v3575, %v3898
        %v3900 = vpop.f32.mrb[0].mxu0
        %3901 = vdwg.mxu0
        %v3902 = vld [vmem:[%s2059] sm:$0xff]
        %v3903 = vld [vmem:[%s2059 + $0x10] sm:$0xff]
        %v3904 = vld [vmem:[%s2059 + $0x20] sm:$0xff]
        %v3905 = vld [vmem:[%s2059 + $0x30] sm:$0xff]
        %v3906 = vld [vmem:[%s2059 + $0x40] sm:$0xff]
        %v3907 = vld [vmem:[%s2059 + $0x50] sm:$0xff]
        %v3908 = vld [vmem:[%s2059 + $0x60] sm:$0xff]
        %v3909 = vld [vmem:[%s2059 + $0x70] sm:$0xff]
        %v3910 = vld [vmem:[%s2059 + $0x80] sm:$0xff]
        %v3911 = vld [vmem:[%s2059 + $0x90] sm:$0xff]
        %v3912 = vld [vmem:[%s2059 + $0xa0] sm:$0xff]
        %v3913 = vld [vmem:[%s2059 + $0xb0] sm:$0xff]
        %v3914 = vld [vmem:[%s2059 + $0xc0] sm:$0xff]
        %v3915 = vld [vmem:[%s2059 + $0xd0] sm:$0xff]
        %v3916 = vld [vmem:[%s2059 + $0xe0] sm:$0xff]
        %v3917 = vld [vmem:[%s2059 + $0xf0] sm:$0xff]
        %v3918 = vld [vmem:[%s2059 + $0x100] sm:$0xff]
        %v3919 = vld [vmem:[%s2059 + $0x110] sm:$0xff]
        %v3920 = vld [vmem:[%s2059 + $0x120] sm:$0xff]
        %v3921 = vld [vmem:[%s2059 + $0x130] sm:$0xff]
        %v3922 = vld [vmem:[%s2059 + $0x140] sm:$0xff]
        %v3923 = vld [vmem:[%s2059 + $0x150] sm:$0xff]
        %v3924 = vld [vmem:[%s2059 + $0x160] sm:$0xff]
        %v3925 = vld [vmem:[%s2059 + $0x170] sm:$0xff]
        %v3926 = vld [vmem:[%s2059 + $0x180] sm:$0xff]
        %v3927 = vld [vmem:[%s2059 + $0x190] sm:$0xff]
        %v3928 = vld [vmem:[%s2059 + $0x1a0] sm:$0xff]
        %v3929 = vld [vmem:[%s2059 + $0x1b0] sm:$0xff]
        %v3930 = vld [vmem:[%s2059 + $0x1c0] sm:$0xff]
        %v3931 = vld [vmem:[%s2059 + $0x1d0] sm:$0xff]
        %v3932 = vld [vmem:[%s2059 + $0x1e0] sm:$0xff]
        %v3933 = vld [vmem:[%s2059 + $0x1f0] sm:$0xff]
        %s3934 = sadd.s32 112, %s3203
        %s3935 = scalar_lea.vmem %s5, %s3934
        %v3936 = vld [vmem:[%s3935] sm:$0xff]
        %v3937 = vld [vmem:[%s3935 + $0x8] sm:$0xff]
        %v3938 = vld [vmem:[%s3935 + $0x10] sm:$0xff]
        %v3939 = vld [vmem:[%s3935 + $0x18] sm:$0xff]
        %v3940 = vld [vmem:[%s3935 + $0x20] sm:$0xff]
        %v3941 = vld [vmem:[%s3935 + $0x28] sm:$0xff]
        %v3942 = vld [vmem:[%s3935 + $0x30] sm:$0x7]
        %v3944 = vsel %vm3138, %v3902, 0
        %v3947 = vsel %vm3138, %v3903, 0
        %v3950 = vsel %vm3138, %v3904, 0
        %v3953 = vsel %vm3138, %v3905, 0
        %v3956 = vsel %vm3138, %v3906, 0
        %v3959 = vsel %vm3138, %v3907, 0
        %v3962 = vsel %vm3138, %v3908, 0
        %v3965 = vsel %vm3138, %v3909, 0
        %v3968 = vsel %vm3138, %v3910, 0
        %v3971 = vsel %vm3138, %v3911, 0
        %v3974 = vsel %vm3138, %v3912, 0
        %v3977 = vsel %vm3138, %v3913, 0
        %v3980 = vsel %vm3138, %v3914, 0
        %v3983 = vsel %vm3138, %v3915, 0
        %v3986 = vsel %vm3138, %v3916, 0
        %v3989 = vsel %vm3138, %v3917, 0
        %v3992 = vsel %vm3138, %v3918, 0
        %v3995 = vsel %vm3138, %v3919, 0
        %v3998 = vsel %vm3138, %v3920, 0
        %v4001 = vsel %vm3138, %v3921, 0
        %v4004 = vsel %vm3138, %v3922, 0
        %v4007 = vsel %vm3138, %v3923, 0
        %v4010 = vsel %vm3138, %v3924, 0
        %v4013 = vsel %vm3138, %v3925, 0
        %v4016 = vsel %vm3138, %v3926, 0
        %v4019 = vsel %vm3138, %v3927, 0
        %v4022 = vsel %vm3138, %v3928, 0
        %v4025 = vsel %vm3138, %v3929, 0
        %v4028 = vsel %vm3138, %v3930, 0
        %v4031 = vsel %vm3138, %v3931, 0
        %v4034 = vsel %vm3138, %v3932, 0
        %v4037 = vsel %vm3138, %v3933, 0
        %v4040 = vsel %vm3349, %v3942, 0
        %4042 = vmatprep.subr.mxu0 0.0
        %4043 = vmatpush1.msra.mxu0 %v3936
        %4044 = vmatprep.subr.mxu0 0.0
        %4045 = vmatpush1.msra.mxu0 %v3937
        %4046 = vmatprep.subr.mxu0 0.0
        %4047 = vmatpush1.msra.mxu0 %v3938
        %4048 = vmatprep.subr.mxu0 0.0
        %4049 = vmatpush1.msra.mxu0 %v3939
        %4050 = vmatprep.subr.mxu0 0.0
        %4051 = vmatpush1.msra.mxu0 %v3940
        %4052 = vmatprep.subr.mxu0 0.0
        %4053 = vmatpush1.msra.mxu0 %v3941
        %4054 = vmatprep.subr.mxu0 0.0
        %4055 = vmatpush1.msra.mxu0 %v4040
        %4056 = vmatprep.subr.mxu0 0.0
        %4057 = vmatpush1.msra.mxu0 0.0
        %4058 = vmatprep.subr.mxu0 0.0
        %4059 = vmatpush1.msra.mxu0 0.0
        %4060 = vmatprep.subr.mxu0 0.0
        %4061 = vmatpush1.msra.mxu0 0.0
        %4062 = vmatprep.subr.mxu0 0.0
        %4063 = vmatpush1.msra.mxu0 0.0
        %4064 = vmatprep.subr.mxu0 0.0
        %4065 = vmatpush1.msra.mxu0 0.0
        %4066 = vmatprep.subr.mxu0 0.0
        %4067 = vmatpush1.msra.mxu0 0.0
        %4068 = vmatprep.subr.mxu0 0.0
        %4069 = vmatpush1.msra.mxu0 0.0
        %4070 = vmatprep.subr.mxu0 0.0
        %4071 = vmatpush1.msra.mxu0 0.0
        %4072 = vmatprep.subr.mxu0 0.0
        %4073 = vmatpush1.msra.mxu0 0.0
        %4074 = vmatprep.subr.mxu0 0.0
        %4075 = vmatpush1.msra.mxu0 0.0
        %4076 = vmatprep.subr.mxu0 0.0
        %4077 = vmatpush1.msra.mxu0 0.0
        %4078 = vmatprep.subr.mxu0 0.0
        %4079 = vmatpush1.msra.mxu0 0.0
        %4080 = vmatprep.subr.mxu0 0.0
        %4081 = vmatpush1.msra.mxu0 0.0
        %4082 = vmatprep.subr.mxu0 0.0
        %4083 = vmatpush1.msra.mxu0 0.0
        %4084 = vmatprep.subr.mxu0 0.0
        %4085 = vmatpush1.msra.mxu0 0.0
        %4086 = vmatprep.subr.mxu0 0.0
        %4087 = vmatpush1.msra.mxu0 0.0
        %4088 = vmatprep.subr.mxu0 0.0
        %4089 = vmatpush1.msra.mxu0 0.0
        %4090 = vmatprep.subr.mxu0 0.0
        %4091 = vmatpush1.msra.mxu0 0.0
        %4092 = vmatprep.subr.mxu0 0.0
        %4093 = vmatpush1.msra.mxu0 0.0
        %4094 = vmatprep.subr.mxu0 0.0
        %4095 = vmatpush1.msra.mxu0 0.0
        %4096 = vmatprep.subr.mxu0 0.0
        %4097 = vmatpush1.msra.mxu0 0.0
        %4098 = vmatprep.subr.mxu0 0.0
        %4099 = vmatpush1.msra.mxu0 0.0
        %4100 = vmatprep.subr.mxu0 0.0
        %4101 = vmatpush1.msra.mxu0 0.0
        %4102 = vmatprep.subr.mxu0 0.0
        %4103 = vmatpush1.msra.mxu0 0.0
        %4104 = vmatprep.subr.mxu0 0.0
        %4105 = vmatpush1.msra.mxu0 0.0
        %4106 = vmatprep.mubr.f32.mxu0 0.0
        %4107 = vmatmul.mubr.f32.gmra.mrb[0].mxu0 %v3944
        %v4108 = vpop.f32.mrb[0].mxu0
        %v4109 = vadd.f32 0.0, %v4108
        %v4110 = vpop.f32.mrb[0].mxu0
        %4111 = vmatprep.mubr.f32.mxu0 0.0
        %4112 = vmatmul.mubr.f32.gmra.mrb[0].mxu0 %v3947
        %v4113 = vpop.f32.mrb[0].mxu0
        %v4114 = vadd.f32 0.0, %v4113
        %v4115 = vpop.f32.mrb[0].mxu0
        %4116 = vmatprep.mubr.f32.mxu0 0.0
        %4117 = vmatmul.mubr.f32.gmra.mrb[0].mxu0 %v3950
        %v4118 = vpop.f32.mrb[0].mxu0
        %v4119 = vadd.f32 0.0, %v4118
        %v4120 = vpop.f32.mrb[0].mxu0
        %4121 = vmatprep.mubr.f32.mxu0 0.0
        %4122 = vmatmul.mubr.f32.gmra.mrb[0].mxu0 %v3953
        %v4123 = vpop.f32.mrb[0].mxu0
        %v4124 = vadd.f32 0.0, %v4123
        %v4125 = vpop.f32.mrb[0].mxu0
        %4126 = vmatprep.mubr.f32.mxu0 0.0
        %4127 = vmatmul.mubr.f32.gmra.mrb[0].mxu0 %v3956
        %v4128 = vpop.f32.mrb[0].mxu0
        %v4129 = vadd.f32 0.0, %v4128
        %v4130 = vpop.f32.mrb[0].mxu0
        %4131 = vmatprep.mubr.f32.mxu0 0.0
        %4132 = vmatmul.mubr.f32.gmra.mrb[0].mxu0 %v3959
        %v4133 = vpop.f32.mrb[0].mxu0
        %v4134 = vadd.f32 0.0, %v4133
        %v4135 = vpop.f32.mrb[0].mxu0
        %4136 = vmatprep.mubr.f32.mxu0 0.0
        %4137 = vmatmul.mubr.f32.gmra.mrb[0].mxu0 %v3962
        %v4138 = vpop.f32.mrb[0].mxu0
        %v4139 = vadd.f32 0.0, %v4138
        %v4140 = vpop.f32.mrb[0].mxu0
        %4141 = vmatprep.mubr.f32.mxu0 0.0
        %4142 = vmatmul.mubr.f32.gmra.mrb[0].mxu0 %v3965
        %v4143 = vpop.f32.mrb[0].mxu0
        %v4144 = vadd.f32 0.0, %v4143
        %v4145 = vpop.f32.mrb[0].mxu0
        %4146 = vmatprep.mubr.f32.mxu0 0.0
        %4147 = vmatmul.mubr.f32.gmra.mrb[0].mxu0 %v3968
        %v4148 = vpop.f32.mrb[0].mxu0
        %v4149 = vadd.f32 0.0, %v4148
        %v4150 = vpop.f32.mrb[0].mxu0
        %4151 = vmatprep.mubr.f32.mxu0 0.0
        %4152 = vmatmul.mubr.f32.gmra.mrb[0].mxu0 %v3971
        %v4153 = vpop.f32.mrb[0].mxu0
        %v4154 = vadd.f32 0.0, %v4153
        %v4155 = vpop.f32.mrb[0].mxu0
        %4156 = vmatprep.mubr.f32.mxu0 0.0
        %4157 = vmatmul.mubr.f32.gmra.mrb[0].mxu0 %v3974
        %v4158 = vpop.f32.mrb[0].mxu0
        %v4159 = vadd.f32 0.0, %v4158
        %v4160 = vpop.f32.mrb[0].mxu0
        %4161 = vmatprep.mubr.f32.mxu0 0.0
        %4162 = vmatmul.mubr.f32.gmra.mrb[0].mxu0 %v3977
        %v4163 = vpop.f32.mrb[0].mxu0
        %v4164 = vadd.f32 0.0, %v4163
        %v4165 = vpop.f32.mrb[0].mxu0
        %4166 = vmatprep.mubr.f32.mxu0 0.0
        %4167 = vmatmul.mubr.f32.gmra.mrb[0].mxu0 %v3980
        %v4168 = vpop.f32.mrb[0].mxu0
        %v4169 = vadd.f32 0.0, %v4168
        %v4170 = vpop.f32.mrb[0].mxu0
        %4171 = vmatprep.mubr.f32.mxu0 0.0
        %4172 = vmatmul.mubr.f32.gmra.mrb[0].mxu0 %v3983
        %v4173 = vpop.f32.mrb[0].mxu0
        %v4174 = vadd.f32 0.0, %v4173
        %v4175 = vpop.f32.mrb[0].mxu0
        %4176 = vmatprep.mubr.f32.mxu0 0.0
        %4177 = vmatmul.mubr.f32.gmra.mrb[0].mxu0 %v3986
        %v4178 = vpop.f32.mrb[0].mxu0
        %v4179 = vadd.f32 0.0, %v4178
        %v4180 = vpop.f32.mrb[0].mxu0
        %4181 = vmatprep.mubr.f32.mxu0 0.0
        %4182 = vmatmul.mubr.f32.gmra.mrb[0].mxu0 %v3989
        %v4183 = vpop.f32.mrb[0].mxu0
        %v4184 = vadd.f32 0.0, %v4183
        %v4185 = vpop.f32.mrb[0].mxu0
        %4186 = vmatprep.mubr.f32.mxu0 0.0
        %4187 = vmatmul.mubr.f32.gmra.mrb[0].mxu0 %v3992
        %v4188 = vpop.f32.mrb[0].mxu0
        %v4189 = vadd.f32 0.0, %v4188
        %v4190 = vpop.f32.mrb[0].mxu0
        %4191 = vmatprep.mubr.f32.mxu0 0.0
        %4192 = vmatmul.mubr.f32.gmra.mrb[0].mxu0 %v3995
        %v4193 = vpop.f32.mrb[0].mxu0
        %v4194 = vadd.f32 0.0, %v4193
        %v4195 = vpop.f32.mrb[0].mxu0
        %4196 = vmatprep.mubr.f32.mxu0 0.0
        %4197 = vmatmul.mubr.f32.gmra.mrb[0].mxu0 %v3998
        %v4198 = vpop.f32.mrb[0].mxu0
        %v4199 = vadd.f32 0.0, %v4198
        %v4200 = vpop.f32.mrb[0].mxu0
        %4201 = vmatprep.mubr.f32.mxu0 0.0
        %4202 = vmatmul.mubr.f32.gmra.mrb[0].mxu0 %v4001
        %v4203 = vpop.f32.mrb[0].mxu0
        %v4204 = vadd.f32 0.0, %v4203
        %v4205 = vpop.f32.mrb[0].mxu0
        %4206 = vmatprep.mubr.f32.mxu0 0.0
        %4207 = vmatmul.mubr.f32.gmra.mrb[0].mxu0 %v4004
        %v4208 = vpop.f32.mrb[0].mxu0
        %v4209 = vadd.f32 0.0, %v4208
        %v4210 = vpop.f32.mrb[0].mxu0
        %4211 = vmatprep.mubr.f32.mxu0 0.0
        %4212 = vmatmul.mubr.f32.gmra.mrb[0].mxu0 %v4007
        %v4213 = vpop.f32.mrb[0].mxu0
        %v4214 = vadd.f32 0.0, %v4213
        %v4215 = vpop.f32.mrb[0].mxu0
        %4216 = vmatprep.mubr.f32.mxu0 0.0
        %4217 = vmatmul.mubr.f32.gmra.mrb[0].mxu0 %v4010
        %v4218 = vpop.f32.mrb[0].mxu0
        %v4219 = vadd.f32 0.0, %v4218
        %v4220 = vpop.f32.mrb[0].mxu0
        %4221 = vmatprep.mubr.f32.mxu0 0.0
        %4222 = vmatmul.mubr.f32.gmra.mrb[0].mxu0 %v4013
        %v4223 = vpop.f32.mrb[0].mxu0
        %v4224 = vadd.f32 0.0, %v4223
        %v4225 = vpop.f32.mrb[0].mxu0
        %4226 = vmatprep.mubr.f32.mxu0 0.0
        %4227 = vmatmul.mubr.f32.gmra.mrb[0].mxu0 %v4016
        %v4228 = vpop.f32.mrb[0].mxu0
        %v4229 = vadd.f32 0.0, %v4228
        %v4230 = vpop.f32.mrb[0].mxu0
        %4231 = vmatprep.mubr.f32.mxu0 0.0
        %4232 = vmatmul.mubr.f32.gmra.mrb[0].mxu0 %v4019
        %v4233 = vpop.f32.mrb[0].mxu0
        %v4234 = vadd.f32 0.0, %v4233
        %v4235 = vpop.f32.mrb[0].mxu0
        %4236 = vmatprep.mubr.f32.mxu0 0.0
        %4237 = vmatmul.mubr.f32.gmra.mrb[0].mxu0 %v4022
        %v4238 = vpop.f32.mrb[0].mxu0
        %v4239 = vadd.f32 0.0, %v4238
        %v4240 = vpop.f32.mrb[0].mxu0
        %4241 = vmatprep.mubr.f32.mxu0 0.0
        %4242 = vmatmul.mubr.f32.gmra.mrb[0].mxu0 %v4025
        %v4243 = vpop.f32.mrb[0].mxu0
        %v4244 = vadd.f32 0.0, %v4243
        %v4245 = vpop.f32.mrb[0].mxu0
        %4246 = vmatprep.mubr.f32.mxu0 0.0
        %4247 = vmatmul.mubr.f32.gmra.mrb[0].mxu0 %v4028
        %v4248 = vpop.f32.mrb[0].mxu0
        %v4249 = vadd.f32 0.0, %v4248
        %v4250 = vpop.f32.mrb[0].mxu0
        %4251 = vmatprep.mubr.f32.mxu0 0.0
        %4252 = vmatmul.mubr.f32.gmra.mrb[0].mxu0 %v4031
        %v4253 = vpop.f32.mrb[0].mxu0
        %v4254 = vadd.f32 0.0, %v4253
        %v4255 = vpop.f32.mrb[0].mxu0
        %4256 = vmatprep.mubr.f32.mxu0 0.0
        %4257 = vmatmul.mubr.f32.gmra.mrb[0].mxu0 %v4034
        %v4258 = vpop.f32.mrb[0].mxu0
        %v4259 = vadd.f32 0.0, %v4258
        %v4260 = vpop.f32.mrb[0].mxu0
        %4261 = vmatprep.mubr.f32.mxu0 0.0
        %4262 = vmatmul.mubr.f32.gmra.mrb[0].mxu0 %v4037
        %v4263 = vpop.f32.mrb[0].mxu0
        %v4264 = vadd.f32 0.0, %v4263
        %v4265 = vpop.f32.mrb[0].mxu0
        %4266 = vdwg.mxu0
        %v4267 = vadd.f32 %v3744, %v4109
        %v4268 = vadd.f32 %v3749, %v4114
        %v4269 = vadd.f32 %v3754, %v4119
        %v4270 = vadd.f32 %v3759, %v4124
        %v4271 = vadd.f32 %v3764, %v4129
        %v4272 = vadd.f32 %v3769, %v4134
        %v4273 = vadd.f32 %v3774, %v4139
        %v4274 = vadd.f32 %v3779, %v4144
        %v4275 = vadd.f32 %v3784, %v4149
        %v4276 = vadd.f32 %v3789, %v4154
        %v4277 = vadd.f32 %v3794, %v4159
        %v4278 = vadd.f32 %v3799, %v4164
        %v4279 = vadd.f32 %v3804, %v4169
        %v4280 = vadd.f32 %v3809, %v4174
        %v4281 = vadd.f32 %v3814, %v4179
        %v4282 = vadd.f32 %v3819, %v4184
        %v4283 = vadd.f32 %v3824, %v4189
        %v4284 = vadd.f32 %v3829, %v4194
        %v4285 = vadd.f32 %v3834, %v4199
        %v4286 = vadd.f32 %v3839, %v4204
        %v4287 = vadd.f32 %v3844, %v4209
        %v4288 = vadd.f32 %v3849, %v4214
        %v4289 = vadd.f32 %v3854, %v4219
        %v4290 = vadd.f32 %v3859, %v4224
        %v4291 = vadd.f32 %v3864, %v4229
        %v4292 = vadd.f32 %v3869, %v4234
        %v4293 = vadd.f32 %v3874, %v4239
        %v4294 = vadd.f32 %v3879, %v4244
        %v4295 = vadd.f32 %v3884, %v4249
        %v4296 = vadd.f32 %v3889, %v4254
        %v4297 = vadd.f32 %v3894, %v4259
        %v4298 = vadd.f32 %v3899, %v4264
        %s4299 = scalar_lea.vmem %s6, %s2491
        %v4300 = vld [vmem:[%s4299] sm:$0x1]
        %v4302 = vlaneseq
        %v4303 = vshrl.u32 %v4302, 7
        %v4304 = vsub.s32 0, %v4303
        %v4305 = vrot.slane %v4300, %v4304
        %v4307 = vadd.f32 %v4267, %v4305
        %v4308 = vadd.f32 %v4268, %v4305
        %v4309 = vadd.f32 %v4269, %v4305
        %v4310 = vadd.f32 %v4270, %v4305
        %v4311 = vadd.f32 %v4271, %v4305
        %v4312 = vadd.f32 %v4272, %v4305
        %v4313 = vadd.f32 %v4273, %v4305
        %v4314 = vadd.f32 %v4274, %v4305
        %v4315 = vadd.f32 %v4275, %v4305
        %v4316 = vadd.f32 %v4276, %v4305
        %v4317 = vadd.f32 %v4277, %v4305
        %v4318 = vadd.f32 %v4278, %v4305
        %v4319 = vadd.f32 %v4279, %v4305
        %v4320 = vadd.f32 %v4280, %v4305
        %v4321 = vadd.f32 %v4281, %v4305
        %v4322 = vadd.f32 %v4282, %v4305
        %v4323 = vadd.f32 %v4283, %v4305
        %v4324 = vadd.f32 %v4284, %v4305
        %v4325 = vadd.f32 %v4285, %v4305
        %v4326 = vadd.f32 %v4286, %v4305
        %v4327 = vadd.f32 %v4287, %v4305
        %v4328 = vadd.f32 %v4288, %v4305
        %v4329 = vadd.f32 %v4289, %v4305
        %v4330 = vadd.f32 %v4290, %v4305
        %v4331 = vadd.f32 %v4291, %v4305
        %v4332 = vadd.f32 %v4292, %v4305
        %v4333 = vadd.f32 %v4293, %v4305
        %v4334 = vadd.f32 %v4294, %v4305
        %v4335 = vadd.f32 %v4295, %v4305
        %v4336 = vadd.f32 %v4296, %v4305
        %v4337 = vadd.f32 %v4297, %v4305
        %v4338 = vadd.f32 %v4298, %v4305
        %v4339 = vmax.f32 %v4307, 0.0
        %v4340 = vmax.f32 %v4308, 0.0
        %v4341 = vmax.f32 %v4309, 0.0
        %v4342 = vmax.f32 %v4310, 0.0
        %v4343 = vmax.f32 %v4311, 0.0
        %v4344 = vmax.f32 %v4312, 0.0
        %v4345 = vmax.f32 %v4313, 0.0
        %v4346 = vmax.f32 %v4314, 0.0
        %v4347 = vmax.f32 %v4315, 0.0
        %v4348 = vmax.f32 %v4316, 0.0
        %v4349 = vmax.f32 %v4317, 0.0
        %v4350 = vmax.f32 %v4318, 0.0
        %v4351 = vmax.f32 %v4319, 0.0
        %v4352 = vmax.f32 %v4320, 0.0
        %v4353 = vmax.f32 %v4321, 0.0
        %v4354 = vmax.f32 %v4322, 0.0
        %v4355 = vmax.f32 %v4323, 0.0
        %v4356 = vmax.f32 %v4324, 0.0
        %v4357 = vmax.f32 %v4325, 0.0
        %v4358 = vmax.f32 %v4326, 0.0
        %v4359 = vmax.f32 %v4327, 0.0
        %v4360 = vmax.f32 %v4328, 0.0
        %v4361 = vmax.f32 %v4329, 0.0
        %v4362 = vmax.f32 %v4330, 0.0
        %v4363 = vmax.f32 %v4331, 0.0
        %v4364 = vmax.f32 %v4332, 0.0
        %v4365 = vmax.f32 %v4333, 0.0
        %v4366 = vmax.f32 %v4334, 0.0
        %v4367 = vmax.f32 %v4335, 0.0
        %v4368 = vmax.f32 %v4336, 0.0
        %v4369 = vmax.f32 %v4337, 0.0
        %v4370 = vmax.f32 %v4338, 0.0
        %vm4371 = vcmask 392192
        %4372 = vst.msk [vmem:[#allocation2 + $0x1] sm:$0xff] %vm4371, %v4339
        %4373 = vst.msk [vmem:[#allocation2 + $0x9] sm:$0xff] %vm4371, %v4340
        %4374 = vst.msk [vmem:[#allocation2 + $0x19] sm:$0xff] %vm4371, %v4341
        %4375 = vst.msk [vmem:[#allocation2 + $0x21] sm:$0xff] %vm4371, %v4342
        %4376 = vst.msk [vmem:[#allocation2 + $0x31] sm:$0xff] %vm4371, %v4343
        %4377 = vst.msk [vmem:[#allocation2 + $0x39] sm:$0xff] %vm4371, %v4344
        %4378 = vst.msk [vmem:[#allocation2 + $0x49] sm:$0xff] %vm4371, %v4345
        %4379 = vst.msk [vmem:[#allocation2 + $0x51] sm:$0xff] %vm4371, %v4346
        %4380 = vst.msk [vmem:[#allocation2 + $0x61] sm:$0xff] %vm4371, %v4347
        %4381 = vst.msk [vmem:[#allocation2 + $0x69] sm:$0xff] %vm4371, %v4348
        %4382 = vst.msk [vmem:[#allocation2 + $0x79] sm:$0xff] %vm4371, %v4349
        %4383 = vst.msk [vmem:[#allocation2 + $0x81] sm:$0xff] %vm4371, %v4350
        %4384 = vst.msk [vmem:[#allocation2 + $0x91] sm:$0xff] %vm4371, %v4351
        %4385 = vst.msk [vmem:[#allocation2 + $0x99] sm:$0xff] %vm4371, %v4352
        %4386 = vst.msk [vmem:[#allocation2 + $0xa9] sm:$0xff] %vm4371, %v4353
        %4387 = vst.msk [vmem:[#allocation2 + $0xb1] sm:$0xff] %vm4371, %v4354
        %4388 = vst.msk [vmem:[#allocation2 + $0xc1] sm:$0xff] %vm4371, %v4355
        %4389 = vst.msk [vmem:[#allocation2 + $0xc9] sm:$0xff] %vm4371, %v4356
        %4390 = vst.msk [vmem:[#allocation2 + $0xd9] sm:$0xff] %vm4371, %v4357
        %4391 = vst.msk [vmem:[#allocation2 + $0xe1] sm:$0xff] %vm4371, %v4358
        %4392 = vst.msk [vmem:[#allocation2 + $0xf1] sm:$0xff] %vm4371, %v4359
        %4393 = vst.msk [vmem:[#allocation2 + $0xf9] sm:$0xff] %vm4371, %v4360
        %4394 = vst.msk [vmem:[#allocation2 + $0x109] sm:$0xff] %vm4371, %v4361
        %4395 = vst.msk [vmem:[#allocation2 + $0x111] sm:$0xff] %vm4371, %v4362
        %4396 = vst.msk [vmem:[#allocation2 + $0x121] sm:$0xff] %vm4371, %v4363
        %4397 = vst.msk [vmem:[#allocation2 + $0x129] sm:$0xff] %vm4371, %v4364
        %4398 = vst.msk [vmem:[#allocation2 + $0x139] sm:$0xff] %vm4371, %v4365
        %4399 = vst.msk [vmem:[#allocation2 + $0x141] sm:$0xff] %vm4371, %v4366
        %4400 = vst.msk [vmem:[#allocation2 + $0x151] sm:$0xff] %vm4371, %v4367
        %4401 = vst.msk [vmem:[#allocation2 + $0x159] sm:$0xff] %vm4371, %v4368
        %4402 = vst.msk [vmem:[#allocation2 + $0x169] sm:$0xff] %vm4371, %v4369
        %4403 = vst.msk [vmem:[#allocation2 + $0x171] sm:$0xff] %vm4371, %v4370
        %v4404 = vld [vmem:[#allocation2] sm:$0xff]
        %v4405 = vld [vmem:[#allocation2 + $0x8] sm:$0xff]
        %v4406 = vld [vmem:[#allocation2 + $0x18] sm:$0xff]
        %v4407 = vld [vmem:[#allocation2 + $0x20] sm:$0xff]
        %v4408 = vld [vmem:[#allocation2 + $0x30] sm:$0xff]
        %v4409 = vld [vmem:[#allocation2 + $0x38] sm:$0xff]
        %v4410 = vld [vmem:[#allocation2 + $0x48] sm:$0xff]
        %v4411 = vld [vmem:[#allocation2 + $0x50] sm:$0xff]
        %v4412 = vld [vmem:[#allocation2 + $0x60] sm:$0xff]
        %v4413 = vld [vmem:[#allocation2 + $0x68] sm:$0xff]
        %v4414 = vld [vmem:[#allocation2 + $0x78] sm:$0xff]
        %v4415 = vld [vmem:[#allocation2 + $0x80] sm:$0xff]
        %v4416 = vld [vmem:[#allocation2 + $0x90] sm:$0xff]
        %v4417 = vld [vmem:[#allocation2 + $0x98] sm:$0xff]
        %v4418 = vld [vmem:[#allocation2 + $0xa8] sm:$0xff]
        %v4419 = vld [vmem:[#allocation2 + $0xb0] sm:$0xff]
        %v4420 = vld [vmem:[#allocation2 + $0xc0] sm:$0xff]
        %v4421 = vld [vmem:[#allocation2 + $0xc8] sm:$0xff]
        %v4422 = vld [vmem:[#allocation2 + $0xd8] sm:$0xff]
        %v4423 = vld [vmem:[#allocation2 + $0xe0] sm:$0xff]
        %v4424 = vld [vmem:[#allocation2 + $0xf0] sm:$0xff]
        %v4425 = vld [vmem:[#allocation2 + $0xf8] sm:$0xff]
        %v4426 = vld [vmem:[#allocation2 + $0x108] sm:$0xff]
        %v4427 = vld [vmem:[#allocation2 + $0x110] sm:$0xff]
        %v4428 = vld [vmem:[#allocation2 + $0x120] sm:$0xff]
        %v4429 = vld [vmem:[#allocation2 + $0x128] sm:$0xff]
        %v4430 = vld [vmem:[#allocation2 + $0x138] sm:$0xff]
        %v4431 = vld [vmem:[#allocation2 + $0x140] sm:$0xff]
        %v4432 = vld [vmem:[#allocation2 + $0x150] sm:$0xff]
        %v4433 = vld [vmem:[#allocation2 + $0x158] sm:$0xff]
        %v4434 = vld [vmem:[#allocation2 + $0x168] sm:$0xff]
        %v4435 = vld [vmem:[#allocation2 + $0x170] sm:$0xff]
        %v4436 = vld [vmem:[#allocation2 + $0x2] sm:$0xff]
        %v4437 = vld [vmem:[#allocation2 + $0xa] sm:$0xff]
        %v4438 = vld [vmem:[#allocation2 + $0x1a] sm:$0xff]
        %v4439 = vld [vmem:[#allocation2 + $0x22] sm:$0xff]
        %v4440 = vld [vmem:[#allocation2 + $0x32] sm:$0xff]
        %v4441 = vld [vmem:[#allocation2 + $0x3a] sm:$0xff]
        %v4442 = vld [vmem:[#allocation2 + $0x4a] sm:$0xff]
        %v4443 = vld [vmem:[#allocation2 + $0x52] sm:$0xff]
        %v4444 = vld [vmem:[#allocation2 + $0x62] sm:$0xff]
        %v4445 = vld [vmem:[#allocation2 + $0x6a] sm:$0xff]
        %v4446 = vld [vmem:[#allocation2 + $0x7a] sm:$0xff]
        %v4447 = vld [vmem:[#allocation2 + $0x82] sm:$0xff]
        %v4448 = vld [vmem:[#allocation2 + $0x92] sm:$0xff]
        %v4449 = vld [vmem:[#allocation2 + $0x9a] sm:$0xff]
        %v4450 = vld [vmem:[#allocation2 + $0xaa] sm:$0xff]
        %v4451 = vld [vmem:[#allocation2 + $0xb2] sm:$0xff]
        %v4452 = vld [vmem:[#allocation2 + $0xc2] sm:$0xff]
        %v4453 = vld [vmem:[#allocation2 + $0xca] sm:$0xff]
        %v4454 = vld [vmem:[#allocation2 + $0xda] sm:$0xff]
        %v4455 = vld [vmem:[#allocation2 + $0xe2] sm:$0xff]
        %v4456 = vld [vmem:[#allocation2 + $0xf2] sm:$0xff]
        %v4457 = vld [vmem:[#allocation2 + $0xfa] sm:$0xff]
        %v4458 = vld [vmem:[#allocation2 + $0x10a] sm:$0xff]
        %v4459 = vld [vmem:[#allocation2 + $0x112] sm:$0xff]
        %v4460 = vld [vmem:[#allocation2 + $0x122] sm:$0xff]
        %v4461 = vld [vmem:[#allocation2 + $0x12a] sm:$0xff]
        %v4462 = vld [vmem:[#allocation2 + $0x13a] sm:$0xff]
        %v4463 = vld [vmem:[#allocation2 + $0x142] sm:$0xff]
        %v4464 = vld [vmem:[#allocation2 + $0x152] sm:$0xff]
        %v4465 = vld [vmem:[#allocation2 + $0x15a] sm:$0xff]
        %v4466 = vld [vmem:[#allocation2 + $0x16a] sm:$0xff]
        %v4467 = vld [vmem:[#allocation2 + $0x172] sm:$0xff]
        %4500 = vrot.lane.b32.xlu0 %v4339, 48
        %v4501 = vpop.permute.xlu0 %4500
        %4502 = vrot.lane.b32.xlu0 %v4340, 48
        %v4503 = vpop.permute.xlu0 %4502
        %4504 = vrot.lane.b32.xlu0 %v4341, 48
        %v4505 = vpop.permute.xlu0 %4504
        %4506 = vrot.lane.b32.xlu0 %v4342, 48
        %v4507 = vpop.permute.xlu0 %4506
        %4508 = vrot.lane.b32.xlu0 %v4343, 48
        %v4509 = vpop.permute.xlu0 %4508
        %4510 = vrot.lane.b32.xlu0 %v4344, 48
        %v4511 = vpop.permute.xlu0 %4510
        %4512 = vrot.lane.b32.xlu0 %v4345, 48
        %v4513 = vpop.permute.xlu0 %4512
        %4514 = vrot.lane.b32.xlu0 %v4346, 48
        %v4515 = vpop.permute.xlu0 %4514
        %4516 = vrot.lane.b32.xlu0 %v4347, 48
        %v4517 = vpop.permute.xlu0 %4516
        %4518 = vrot.lane.b32.xlu0 %v4348, 48
        %v4519 = vpop.permute.xlu0 %4518
        %4520 = vrot.lane.b32.xlu0 %v4349, 48
        %v4521 = vpop.permute.xlu0 %4520
        %4522 = vrot.lane.b32.xlu0 %v4350, 48
        %v4523 = vpop.permute.xlu0 %4522
        %4524 = vrot.lane.b32.xlu0 %v4351, 48
        %v4525 = vpop.permute.xlu0 %4524
        %4526 = vrot.lane.b32.xlu0 %v4352, 48
        %v4527 = vpop.permute.xlu0 %4526
        %4528 = vrot.lane.b32.xlu0 %v4353, 48
        %v4529 = vpop.permute.xlu0 %4528
        %4530 = vrot.lane.b32.xlu0 %v4354, 48
        %v4531 = vpop.permute.xlu0 %4530
        %4532 = vrot.lane.b32.xlu0 %v4355, 48
        %v4533 = vpop.permute.xlu0 %4532
        %4534 = vrot.lane.b32.xlu0 %v4356, 48
        %v4535 = vpop.permute.xlu0 %4534
        %4536 = vrot.lane.b32.xlu0 %v4357, 48
        %v4537 = vpop.permute.xlu0 %4536
        %4538 = vrot.lane.b32.xlu0 %v4358, 48
        %v4539 = vpop.permute.xlu0 %4538
        %4540 = vrot.lane.b32.xlu0 %v4359, 48
        %v4541 = vpop.permute.xlu0 %4540
        %4542 = vrot.lane.b32.xlu0 %v4360, 48
        %v4543 = vpop.permute.xlu0 %4542
        %4544 = vrot.lane.b32.xlu0 %v4361, 48
        %v4545 = vpop.permute.xlu0 %4544
        %4546 = vrot.lane.b32.xlu0 %v4362, 48
        %v4547 = vpop.permute.xlu0 %4546
        %4548 = vrot.lane.b32.xlu0 %v4363, 48
        %v4549 = vpop.permute.xlu0 %4548
        %4550 = vrot.lane.b32.xlu0 %v4364, 48
        %v4551 = vpop.permute.xlu0 %4550
        %4552 = vrot.lane.b32.xlu0 %v4365, 48
        %v4553 = vpop.permute.xlu0 %4552
        %4554 = vrot.lane.b32.xlu0 %v4366, 48
        %v4555 = vpop.permute.xlu0 %4554
        %4556 = vrot.lane.b32.xlu0 %v4367, 48
        %v4557 = vpop.permute.xlu0 %4556
        %4558 = vrot.lane.b32.xlu0 %v4368, 48
        %v4559 = vpop.permute.xlu0 %4558
        %4560 = vrot.lane.b32.xlu0 %v4369, 48
        %v4561 = vpop.permute.xlu0 %4560
        %4562 = vrot.lane.b32.xlu0 %v4370, 48
        %v4563 = vpop.permute.xlu0 %4562
        %4628 = vrot.lane.b32.xlu0 %v4436, 96
        %v4629 = vpop.permute.xlu0 %4628
        %4630 = vrot.lane.b32.xlu0 %v4437, 96
        %v4631 = vpop.permute.xlu0 %4630
        %4632 = vrot.lane.b32.xlu0 %v4438, 96
        %v4633 = vpop.permute.xlu0 %4632
        %4634 = vrot.lane.b32.xlu0 %v4439, 96
        %v4635 = vpop.permute.xlu0 %4634
        %4636 = vrot.lane.b32.xlu0 %v4440, 96
        %v4637 = vpop.permute.xlu0 %4636
        %4638 = vrot.lane.b32.xlu0 %v4441, 96
        %v4639 = vpop.permute.xlu0 %4638
        %4640 = vrot.lane.b32.xlu0 %v4442, 96
        %v4641 = vpop.permute.xlu0 %4640
        %4642 = vrot.lane.b32.xlu0 %v4443, 96
        %v4643 = vpop.permute.xlu0 %4642
        %4644 = vrot.lane.b32.xlu0 %v4444, 96
        %v4645 = vpop.permute.xlu0 %4644
        %4646 = vrot.lane.b32.xlu0 %v4445, 96
        %v4647 = vpop.permute.xlu0 %4646
        %4648 = vrot.lane.b32.xlu0 %v4446, 96
        %v4649 = vpop.permute.xlu0 %4648
        %4650 = vrot.lane.b32.xlu0 %v4447, 96
        %v4651 = vpop.permute.xlu0 %4650
        %4652 = vrot.lane.b32.xlu0 %v4448, 96
        %v4653 = vpop.permute.xlu0 %4652
        %4654 = vrot.lane.b32.xlu0 %v4449, 96
        %v4655 = vpop.permute.xlu0 %4654
        %4656 = vrot.lane.b32.xlu0 %v4450, 96
        %v4657 = vpop.permute.xlu0 %4656
        %4658 = vrot.lane.b32.xlu0 %v4451, 96
        %v4659 = vpop.permute.xlu0 %4658
        %4660 = vrot.lane.b32.xlu0 %v4452, 96
        %v4661 = vpop.permute.xlu0 %4660
        %4662 = vrot.lane.b32.xlu0 %v4453, 96
        %v4663 = vpop.permute.xlu0 %4662
        %4664 = vrot.lane.b32.xlu0 %v4454, 96
        %v4665 = vpop.permute.xlu0 %4664
        %4666 = vrot.lane.b32.xlu0 %v4455, 96
        %v4667 = vpop.permute.xlu0 %4666
        %4668 = vrot.lane.b32.xlu0 %v4456, 96
        %v4669 = vpop.permute.xlu0 %4668
        %4670 = vrot.lane.b32.xlu0 %v4457, 96
        %v4671 = vpop.permute.xlu0 %4670
        %4672 = vrot.lane.b32.xlu0 %v4458, 96
        %v4673 = vpop.permute.xlu0 %4672
        %4674 = vrot.lane.b32.xlu0 %v4459, 96
        %v4675 = vpop.permute.xlu0 %4674
        %4676 = vrot.lane.b32.xlu0 %v4460, 96
        %v4677 = vpop.permute.xlu0 %4676
        %4678 = vrot.lane.b32.xlu0 %v4461, 96
        %v4679 = vpop.permute.xlu0 %4678
        %4680 = vrot.lane.b32.xlu0 %v4462, 96
        %v4681 = vpop.permute.xlu0 %4680
        %4682 = vrot.lane.b32.xlu0 %v4463, 96
        %v4683 = vpop.permute.xlu0 %4682
        %4684 = vrot.lane.b32.xlu0 %v4464, 96
        %v4685 = vpop.permute.xlu0 %4684
        %4686 = vrot.lane.b32.xlu0 %v4465, 96
        %v4687 = vpop.permute.xlu0 %4686
        %4688 = vrot.lane.b32.xlu0 %v4466, 96
        %v4689 = vpop.permute.xlu0 %4688
        %4690 = vrot.lane.b32.xlu0 %v4467, 96
        %v4691 = vpop.permute.xlu0 %4690
        %v4724 = vsel %vm4371, %v4404, %v4501
        %v4725 = vsel %vm4371, %v4405, %v4503
        %v4726 = vsel %vm4371, %v4406, %v4505
        %v4727 = vsel %vm4371, %v4407, %v4507
        %v4728 = vsel %vm4371, %v4408, %v4509
        %v4729 = vsel %vm4371, %v4409, %v4511
        %v4730 = vsel %vm4371, %v4410, %v4513
        %v4731 = vsel %vm4371, %v4411, %v4515
        %v4732 = vsel %vm4371, %v4412, %v4517
        %v4733 = vsel %vm4371, %v4413, %v4519
        %v4734 = vsel %vm4371, %v4414, %v4521
        %v4735 = vsel %vm4371, %v4415, %v4523
        %v4736 = vsel %vm4371, %v4416, %v4525
        %v4737 = vsel %vm4371, %v4417, %v4527
        %v4738 = vsel %vm4371, %v4418, %v4529
        %v4739 = vsel %vm4371, %v4419, %v4531
        %v4740 = vsel %vm4371, %v4420, %v4533
        %v4741 = vsel %vm4371, %v4421, %v4535
        %v4742 = vsel %vm4371, %v4422, %v4537
        %v4743 = vsel %vm4371, %v4423, %v4539
        %v4744 = vsel %vm4371, %v4424, %v4541
        %v4745 = vsel %vm4371, %v4425, %v4543
        %v4746 = vsel %vm4371, %v4426, %v4545
        %v4747 = vsel %vm4371, %v4427, %v4547
        %v4748 = vsel %vm4371, %v4428, %v4549
        %v4749 = vsel %vm4371, %v4429, %v4551
        %v4750 = vsel %vm4371, %v4430, %v4553
        %v4751 = vsel %vm4371, %v4431, %v4555
        %v4752 = vsel %vm4371, %v4432, %v4557
        %v4753 = vsel %vm4371, %v4433, %v4559
        %v4754 = vsel %vm4371, %v4434, %v4561
        %v4755 = vsel %vm4371, %v4435, %v4563
        %vm4756 = vcmask 785408
        %v4757 = vsel %vm4756, %v4724, %v4629
        %v4758 = vsel %vm4756, %v4725, %v4631
        %v4759 = vsel %vm4756, %v4726, %v4633
        %v4760 = vsel %vm4756, %v4727, %v4635
        %v4761 = vsel %vm4756, %v4728, %v4637
        %v4762 = vsel %vm4756, %v4729, %v4639
        %v4763 = vsel %vm4756, %v4730, %v4641
        %v4764 = vsel %vm4756, %v4731, %v4643
        %v4765 = vsel %vm4756, %v4732, %v4645
        %v4766 = vsel %vm4756, %v4733, %v4647
        %v4767 = vsel %vm4756, %v4734, %v4649
        %v4768 = vsel %vm4756, %v4735, %v4651
        %v4769 = vsel %vm4756, %v4736, %v4653
        %v4770 = vsel %vm4756, %v4737, %v4655
        %v4771 = vsel %vm4756, %v4738, %v4657
        %v4772 = vsel %vm4756, %v4739, %v4659
        %v4773 = vsel %vm4756, %v4740, %v4661
        %v4774 = vsel %vm4756, %v4741, %v4663
        %v4775 = vsel %vm4756, %v4742, %v4665
        %v4776 = vsel %vm4756, %v4743, %v4667
        %v4777 = vsel %vm4756, %v4744, %v4669
        %v4778 = vsel %vm4756, %v4745, %v4671
        %v4779 = vsel %vm4756, %v4746, %v4673
        %v4780 = vsel %vm4756, %v4747, %v4675
        %v4781 = vsel %vm4756, %v4748, %v4677
        %v4782 = vsel %vm4756, %v4749, %v4679
        %v4783 = vsel %vm4756, %v4750, %v4681
        %v4784 = vsel %vm4756, %v4751, %v4683
        %v4785 = vsel %vm4756, %v4752, %v4685
        %v4786 = vsel %vm4756, %v4753, %v4687
        %v4787 = vsel %vm4756, %v4754, %v4689
        %v4788 = vsel %vm4756, %v4755, %v4691
        %4789 = vst [vmem:[%s1307] sm:$0xff] %v4757
        %4790 = vst.msk [vmem:[%s1307 + $0x8] sm:$0xff] %vm430, %v4629
        %4791 = vst [vmem:[%s1307 + $0x10] sm:$0xff] %v4758
        %4792 = vst.msk [vmem:[%s1307 + $0x18] sm:$0xff] %vm430, %v4631
        %4793 = vst [vmem:[%s1307 + $0x20] sm:$0xff] %v4759
        %4794 = vst.msk [vmem:[%s1307 + $0x28] sm:$0xff] %vm430, %v4633
        %4795 = vst [vmem:[%s1307 + $0x30] sm:$0xff] %v4760
        %4796 = vst.msk [vmem:[%s1307 + $0x38] sm:$0xff] %vm430, %v4635
        %4797 = vst [vmem:[%s1307 + $0x40] sm:$0xff] %v4761
        %4798 = vst.msk [vmem:[%s1307 + $0x48] sm:$0xff] %vm430, %v4637
        %4799 = vst [vmem:[%s1307 + $0x50] sm:$0xff] %v4762
        %4800 = vst.msk [vmem:[%s1307 + $0x58] sm:$0xff] %vm430, %v4639
        %4801 = vst [vmem:[%s1307 + $0x60] sm:$0xff] %v4763
        %4802 = vst.msk [vmem:[%s1307 + $0x68] sm:$0xff] %vm430, %v4641
        %4803 = vst [vmem:[%s1307 + $0x70] sm:$0xff] %v4764
        %4804 = vst.msk [vmem:[%s1307 + $0x78] sm:$0xff] %vm430, %v4643
        %4805 = vst [vmem:[%s1307 + $0x80] sm:$0xff] %v4765
        %4806 = vst.msk [vmem:[%s1307 + $0x88] sm:$0xff] %vm430, %v4645
        %4807 = vst [vmem:[%s1307 + $0x90] sm:$0xff] %v4766
        %4808 = vst.msk [vmem:[%s1307 + $0x98] sm:$0xff] %vm430, %v4647
        %4809 = vst [vmem:[%s1307 + $0xa0] sm:$0xff] %v4767
        %4810 = vst.msk [vmem:[%s1307 + $0xa8] sm:$0xff] %vm430, %v4649
        %4811 = vst [vmem:[%s1307 + $0xb0] sm:$0xff] %v4768
        %4812 = vst.msk [vmem:[%s1307 + $0xb8] sm:$0xff] %vm430, %v4651
        %4813 = vst [vmem:[%s1307 + $0xc0] sm:$0xff] %v4769
        %4814 = vst.msk [vmem:[%s1307 + $0xc8] sm:$0xff] %vm430, %v4653
        %4815 = vst [vmem:[%s1307 + $0xd0] sm:$0xff] %v4770
        %4816 = vst.msk [vmem:[%s1307 + $0xd8] sm:$0xff] %vm430, %v4655
        %4817 = vst [vmem:[%s1307 + $0xe0] sm:$0xff] %v4771
        %4818 = vst.msk [vmem:[%s1307 + $0xe8] sm:$0xff] %vm430, %v4657
        %4819 = vst [vmem:[%s1307 + $0xf0] sm:$0xff] %v4772
        %4820 = vst.msk [vmem:[%s1307 + $0xf8] sm:$0xff] %vm430, %v4659
        %4821 = vst [vmem:[%s1307 + $0x100] sm:$0xff] %v4773
        %4822 = vst.msk [vmem:[%s1307 + $0x108] sm:$0xff] %vm430, %v4661
        %4823 = vst [vmem:[%s1307 + $0x110] sm:$0xff] %v4774
        %4824 = vst.msk [vmem:[%s1307 + $0x118] sm:$0xff] %vm430, %v4663
        %4825 = vst [vmem:[%s1307 + $0x120] sm:$0xff] %v4775
        %4826 = vst.msk [vmem:[%s1307 + $0x128] sm:$0xff] %vm430, %v4665
        %4827 = vst [vmem:[%s1307 + $0x130] sm:$0xff] %v4776
        %4828 = vst.msk [vmem:[%s1307 + $0x138] sm:$0xff] %vm430, %v4667
        %4829 = vst [vmem:[%s1307 + $0x140] sm:$0xff] %v4777
        %4830 = vst.msk [vmem:[%s1307 + $0x148] sm:$0xff] %vm430, %v4669
        %4831 = vst [vmem:[%s1307 + $0x150] sm:$0xff] %v4778
        %4832 = vst.msk [vmem:[%s1307 + $0x158] sm:$0xff] %vm430, %v4671
        %4833 = vst [vmem:[%s1307 + $0x160] sm:$0xff] %v4779
        %4834 = vst.msk [vmem:[%s1307 + $0x168] sm:$0xff] %vm430, %v4673
        %4835 = vst [vmem:[%s1307 + $0x170] sm:$0xff] %v4780
        %4836 = vst.msk [vmem:[%s1307 + $0x178] sm:$0xff] %vm430, %v4675
        %4837 = vst [vmem:[%s1307 + $0x180] sm:$0xff] %v4781
        %4838 = vst.msk [vmem:[%s1307 + $0x188] sm:$0xff] %vm430, %v4677
        %4839 = vst [vmem:[%s1307 + $0x190] sm:$0xff] %v4782
        %4840 = vst.msk [vmem:[%s1307 + $0x198] sm:$0xff] %vm430, %v4679
        %4841 = vst [vmem:[%s1307 + $0x1a0] sm:$0xff] %v4783
        %4842 = vst.msk [vmem:[%s1307 + $0x1a8] sm:$0xff] %vm430, %v4681
        %4843 = vst [vmem:[%s1307 + $0x1b0] sm:$0xff] %v4784
        %4844 = vst.msk [vmem:[%s1307 + $0x1b8] sm:$0xff] %vm430, %v4683
        %4845 = vst [vmem:[%s1307 + $0x1c0] sm:$0xff] %v4785
        %4846 = vst.msk [vmem:[%s1307 + $0x1c8] sm:$0xff] %vm430, %v4685
        %4847 = vst [vmem:[%s1307 + $0x1d0] sm:$0xff] %v4786
        %4848 = vst.msk [vmem:[%s1307 + $0x1d8] sm:$0xff] %vm430, %v4687
        %4849 = vst [vmem:[%s1307 + $0x1e0] sm:$0xff] %v4787
        %4850 = vst.msk [vmem:[%s1307 + $0x1e8] sm:$0xff] %vm430, %v4689
        %4851 = vst [vmem:[%s1307 + $0x1f0] sm:$0xff] %v4788
        %4852 = vst.msk [vmem:[%s1307 + $0x1f8] sm:$0xff] %vm430, %v4691
        %v4853 = vld [vmem:[#allocation3] sm:$0xff]
        %v4854 = vld [vmem:[#allocation3 + $0x8] sm:$0xff]
        %v4855 = vld [vmem:[#allocation3 + $0x10] sm:$0xff]
        %v4856 = vld [vmem:[#allocation3 + $0x18] sm:$0xff]
        %v4857 = vld [vmem:[#allocation3 + $0x20] sm:$0xff]
        %v4858 = vld [vmem:[#allocation3 + $0x28] sm:$0xff]
        %v4859 = vld [vmem:[#allocation3 + $0x30] sm:$0xff]
        %v4860 = vld [vmem:[#allocation3 + $0x38] sm:$0xff]
        %v4861 = vld [vmem:[#allocation3 + $0x40] sm:$0xff]
        %v4862 = vld [vmem:[#allocation3 + $0x48] sm:$0xff]
        %v4863 = vld [vmem:[#allocation3 + $0x50] sm:$0xff]
        %v4864 = vld [vmem:[#allocation3 + $0x58] sm:$0xff]
        %v4865 = vld [vmem:[#allocation3 + $0x60] sm:$0xff]
        %v4866 = vld [vmem:[#allocation3 + $0x68] sm:$0xff]
        %v4867 = vld [vmem:[#allocation3 + $0x70] sm:$0xff]
        %v4868 = vld [vmem:[#allocation3 + $0x78] sm:$0xff]
        %v4869 = vld [vmem:[#allocation3 + $0x80] sm:$0xff]
        %v4870 = vld [vmem:[#allocation3 + $0x88] sm:$0xff]
        %v4871 = vld [vmem:[#allocation3 + $0x90] sm:$0xff]
        %v4872 = vld [vmem:[#allocation3 + $0x98] sm:$0xff]
        %v4873 = vld [vmem:[#allocation3 + $0xa0] sm:$0xff]
        %v4874 = vld [vmem:[#allocation3 + $0xa8] sm:$0xff]
        %v4875 = vld [vmem:[#allocation3 + $0xb0] sm:$0xff]
        %v4876 = vld [vmem:[#allocation3 + $0xb8] sm:$0xff]
        %v4877 = vld [vmem:[#allocation3 + $0xc0] sm:$0xff]
        %v4878 = vld [vmem:[#allocation3 + $0xc8] sm:$0xff]
        %v4879 = vld [vmem:[#allocation3 + $0xd0] sm:$0xff]
        %v4880 = vld [vmem:[#allocation3 + $0xd8] sm:$0xff]
        %v4881 = vld [vmem:[#allocation3 + $0xe0] sm:$0xff]
        %v4882 = vld [vmem:[#allocation3 + $0xe8] sm:$0xff]
        %v4883 = vld [vmem:[#allocation3 + $0xf0] sm:$0xff]
        %v4884 = vld [vmem:[#allocation3 + $0xf8] sm:$0xff]
        %v4885 = vld [vmem:[#allocation3 + $0x100] sm:$0xff]
        %v4886 = vld [vmem:[#allocation3 + $0x108] sm:$0xff]
        %v4887 = vld [vmem:[#allocation3 + $0x110] sm:$0xff]
        %v4888 = vld [vmem:[#allocation3 + $0x118] sm:$0xff]
        %v4889 = vld [vmem:[#allocation3 + $0x120] sm:$0xff]
        %v4890 = vld [vmem:[#allocation3 + $0x128] sm:$0xff]
        %v4891 = vld [vmem:[#allocation3 + $0x130] sm:$0xff]
        %v4892 = vld [vmem:[#allocation3 + $0x138] sm:$0xff]
        %v4893 = vld [vmem:[#allocation3 + $0x140] sm:$0xff]
        %v4894 = vld [vmem:[#allocation3 + $0x148] sm:$0xff]
        %v4895 = vld [vmem:[#allocation3 + $0x150] sm:$0xff]
        %v4896 = vld [vmem:[#allocation3 + $0x158] sm:$0xff]
        %v4897 = vld [vmem:[#allocation3 + $0x160] sm:$0xff]
        %v4898 = vld [vmem:[#allocation3 + $0x168] sm:$0xff]
        %v4899 = vld [vmem:[#allocation3 + $0x170] sm:$0xff]
        %v4900 = vld [vmem:[#allocation3 + $0x178] sm:$0xff]
        %v4901 = vld [vmem:[#allocation3 + $0x180] sm:$0xff]
        %v4902 = vld [vmem:[#allocation3 + $0x188] sm:$0xff]
        %v4903 = vld [vmem:[#allocation3 + $0x190] sm:$0xff]
        %v4904 = vld [vmem:[#allocation3 + $0x198] sm:$0xff]
        %v4905 = vld [vmem:[#allocation3 + $0x1a0] sm:$0xff]
        %v4906 = vld [vmem:[#allocation3 + $0x1a8] sm:$0xff]
        %v4907 = vld [vmem:[#allocation3 + $0x1b0] sm:$0xff]
        %v4908 = vld [vmem:[#allocation3 + $0x1b8] sm:$0xff]
        %v4909 = vld [vmem:[#allocation3 + $0x1c0] sm:$0xff]
        %v4910 = vld [vmem:[#allocation3 + $0x1c8] sm:$0xff]
        %v4911 = vld [vmem:[#allocation3 + $0x1d0] sm:$0xff]
        %v4912 = vld [vmem:[#allocation3 + $0x1d8] sm:$0xff]
        %v4913 = vld [vmem:[#allocation3 + $0x1e0] sm:$0xff]
        %v4914 = vld [vmem:[#allocation3 + $0x1e8] sm:$0xff]
        %v4915 = vld [vmem:[#allocation3 + $0x1f0] sm:$0xff]
        %v4916 = vld [vmem:[#allocation3 + $0x1f8] sm:$0xff]
        %s4917 = smul.u32 %s2491, 432
        %s4918 = scalar_lea.vmem %s7, %s4917
        %v4919 = vld [vmem:[%s4918] sm:$0xff]
        %v4920 = vld [vmem:[%s4918 + $0x8] sm:$0xff]
        %v4921 = vld [vmem:[%s4918 + $0x10] sm:$0xff]
        %v4922 = vld [vmem:[%s4918 + $0x18] sm:$0xff]
        %v4923 = vld [vmem:[%s4918 + $0x20] sm:$0xff]
        %v4924 = vld [vmem:[%s4918 + $0x28] sm:$0xff]
        %v4925 = vld [vmem:[%s4918 + $0x30] sm:$0xff]
        %v4926 = vld [vmem:[%s4918 + $0x38] sm:$0xff]
        %v4927 = vld [vmem:[%s4918 + $0x40] sm:$0xff]
        %v4928 = vld [vmem:[%s4918 + $0x48] sm:$0xff]
        %v4929 = vld [vmem:[%s4918 + $0x50] sm:$0xff]
        %v4930 = vld [vmem:[%s4918 + $0x58] sm:$0xff]
        %v4931 = vld [vmem:[%s4918 + $0x60] sm:$0xff]
        %v4932 = vld [vmem:[%s4918 + $0x68] sm:$0xff]
        %v4933 = vld [vmem:[%s4918 + $0x70] sm:$0xff]
        %v4934 = vld [vmem:[%s4918 + $0x78] sm:$0xff]
        %v4935 = vld [vmem:[%s4918 + $0x80] sm:$0xff]
        %v4936 = vld [vmem:[%s4918 + $0x88] sm:$0xff]
        %v4937 = vld [vmem:[%s1307] sm:$0xff]
        %v4938 = vld [vmem:[%s1307 + $0x8] sm:$0xff]
        %v4939 = vld [vmem:[%s1307 + $0x10] sm:$0xff]
        %v4940 = vld [vmem:[%s1307 + $0x18] sm:$0xff]
        %v4941 = vld [vmem:[%s1307 + $0x20] sm:$0xff]
        %v4942 = vld [vmem:[%s1307 + $0x28] sm:$0xff]
        %v4943 = vld [vmem:[%s1307 + $0x30] sm:$0xff]
        %v4944 = vld [vmem:[%s1307 + $0x38] sm:$0xff]
        %v4945 = vld [vmem:[%s1307 + $0x40] sm:$0xff]
        %v4946 = vld [vmem:[%s1307 + $0x48] sm:$0xff]
        %v4947 = vld [vmem:[%s1307 + $0x50] sm:$0xff]
        %v4948 = vld [vmem:[%s1307 + $0x58] sm:$0xff]
        %v4949 = vld [vmem:[%s1307 + $0x60] sm:$0xff]
        %v4950 = vld [vmem:[%s1307 + $0x68] sm:$0xff]
        %v4951 = vld [vmem:[%s1307 + $0x70] sm:$0xff]
        %v4952 = vld [vmem:[%s1307 + $0x78] sm:$0xff]
        %v4953 = vld [vmem:[%s1307 + $0x80] sm:$0xff]
        %v4954 = vld [vmem:[%s1307 + $0x88] sm:$0xff]
        %v4955 = vld [vmem:[%s1307 + $0x90] sm:$0xff]
        %v4956 = vld [vmem:[%s1307 + $0x98] sm:$0xff]
        %v4957 = vld [vmem:[%s1307 + $0xa0] sm:$0xff]
        %v4958 = vld [vmem:[%s1307 + $0xa8] sm:$0xff]
        %v4959 = vld [vmem:[%s1307 + $0xb0] sm:$0xff]
        %v4960 = vld [vmem:[%s1307 + $0xb8] sm:$0xff]
        %v4961 = vld [vmem:[%s1307 + $0xc0] sm:$0xff]
        %v4962 = vld [vmem:[%s1307 + $0xc8] sm:$0xff]
        %v4963 = vld [vmem:[%s1307 + $0xd0] sm:$0xff]
        %v4964 = vld [vmem:[%s1307 + $0xd8] sm:$0xff]
        %v4965 = vld [vmem:[%s1307 + $0xe0] sm:$0xff]
        %v4966 = vld [vmem:[%s1307 + $0xe8] sm:$0xff]
        %v4967 = vld [vmem:[%s1307 + $0xf0] sm:$0xff]
        %v4968 = vld [vmem:[%s1307 + $0xf8] sm:$0xff]
        %v4969 = vld [vmem:[%s1307 + $0x100] sm:$0xff]
        %v4970 = vld [vmem:[%s1307 + $0x108] sm:$0xff]
        %v4971 = vld [vmem:[%s1307 + $0x110] sm:$0xff]
        %v4972 = vld [vmem:[%s1307 + $0x118] sm:$0xff]
        %v4973 = vld [vmem:[%s1307 + $0x120] sm:$0xff]
        %v4974 = vld [vmem:[%s1307 + $0x128] sm:$0xff]
        %v4975 = vld [vmem:[%s1307 + $0x130] sm:$0xff]
        %v4976 = vld [vmem:[%s1307 + $0x138] sm:$0xff]
        %v4977 = vld [vmem:[%s1307 + $0x140] sm:$0xff]
        %v4978 = vld [vmem:[%s1307 + $0x148] sm:$0xff]
        %v4979 = vld [vmem:[%s1307 + $0x150] sm:$0xff]
        %v4980 = vld [vmem:[%s1307 + $0x158] sm:$0xff]
        %v4981 = vld [vmem:[%s1307 + $0x160] sm:$0xff]
        %v4982 = vld [vmem:[%s1307 + $0x168] sm:$0xff]
        %v4983 = vld [vmem:[%s1307 + $0x170] sm:$0xff]
        %v4984 = vld [vmem:[%s1307 + $0x178] sm:$0xff]
        %v4985 = vld [vmem:[%s1307 + $0x180] sm:$0xff]
        %v4986 = vld [vmem:[%s1307 + $0x188] sm:$0xff]
        %v4987 = vld [vmem:[%s1307 + $0x190] sm:$0xff]
        %v4988 = vld [vmem:[%s1307 + $0x198] sm:$0xff]
        %v4989 = vld [vmem:[%s1307 + $0x1a0] sm:$0xff]
        %v4990 = vld [vmem:[%s1307 + $0x1a8] sm:$0xff]
        %v4991 = vld [vmem:[%s1307 + $0x1b0] sm:$0xff]
        %v4992 = vld [vmem:[%s1307 + $0x1b8] sm:$0xff]
        %v4993 = vld [vmem:[%s1307 + $0x1c0] sm:$0xff]
        %v4994 = vld [vmem:[%s1307 + $0x1c8] sm:$0xff]
        %v4995 = vld [vmem:[%s1307 + $0x1d0] sm:$0xff]
        %v4996 = vld [vmem:[%s1307 + $0x1d8] sm:$0xff]
        %v4997 = vld [vmem:[%s1307 + $0x1e0] sm:$0xff]
        %v4998 = vld [vmem:[%s1307 + $0x1e8] sm:$0xff]
        %v4999 = vld [vmem:[%s1307 + $0x1f0] sm:$0xff]
        %v5000 = vld [vmem:[%s1307 + $0x1f8] sm:$0xff]
        %s5001 = sadd.s32 144, %s4917
        %s5002 = scalar_lea.vmem %s7, %s5001
        %v5003 = vld [vmem:[%s5002] sm:$0xff]
        %v5004 = vld [vmem:[%s5002 + $0x8] sm:$0xff]
        %v5005 = vld [vmem:[%s5002 + $0x10] sm:$0xff]
        %v5006 = vld [vmem:[%s5002 + $0x18] sm:$0xff]
        %v5007 = vld [vmem:[%s5002 + $0x20] sm:$0xff]
        %v5008 = vld [vmem:[%s5002 + $0x28] sm:$0xff]
        %v5009 = vld [vmem:[%s5002 + $0x30] sm:$0xff]
        %v5010 = vld [vmem:[%s5002 + $0x38] sm:$0xff]
        %v5011 = vld [vmem:[%s5002 + $0x40] sm:$0xff]
        %v5012 = vld [vmem:[%s5002 + $0x48] sm:$0xff]
        %v5013 = vld [vmem:[%s5002 + $0x50] sm:$0xff]
        %v5014 = vld [vmem:[%s5002 + $0x58] sm:$0xff]
        %v5015 = vld [vmem:[%s5002 + $0x60] sm:$0xff]
        %v5016 = vld [vmem:[%s5002 + $0x68] sm:$0xff]
        %v5017 = vld [vmem:[%s5002 + $0x70] sm:$0xff]
        %v5018 = vld [vmem:[%s5002 + $0x78] sm:$0xff]
        %v5019 = vld [vmem:[%s5002 + $0x80] sm:$0xff]
        %v5020 = vld [vmem:[%s5002 + $0x88] sm:$0xff]
        %v5022 = vsel %vm430, %v4938, 0
        %v5025 = vsel %vm430, %v4940, 0
        %v5028 = vsel %vm430, %v4942, 0
        %v5031 = vsel %vm430, %v4944, 0
        %v5034 = vsel %vm430, %v4946, 0
        %v5037 = vsel %vm430, %v4948, 0
        %v5040 = vsel %vm430, %v4950, 0
        %v5043 = vsel %vm430, %v4952, 0
        %v5046 = vsel %vm430, %v4954, 0
        %v5049 = vsel %vm430, %v4956, 0
        %v5052 = vsel %vm430, %v4958, 0
        %v5055 = vsel %vm430, %v4960, 0
        %v5058 = vsel %vm430, %v4962, 0
        %v5061 = vsel %vm430, %v4964, 0
        %v5064 = vsel %vm430, %v4966, 0
        %v5067 = vsel %vm430, %v4968, 0
        %v5070 = vsel %vm430, %v4970, 0
        %v5073 = vsel %vm430, %v4972, 0
        %v5076 = vsel %vm430, %v4974, 0
        %v5079 = vsel %vm430, %v4976, 0
        %v5082 = vsel %vm430, %v4978, 0
        %v5085 = vsel %vm430, %v4980, 0
        %v5088 = vsel %vm430, %v4982, 0
        %v5091 = vsel %vm430, %v4984, 0
        %v5094 = vsel %vm430, %v4986, 0
        %v5097 = vsel %vm430, %v4988, 0
        %v5100 = vsel %vm430, %v4990, 0
        %v5103 = vsel %vm430, %v4992, 0
        %v5106 = vsel %vm430, %v4994, 0
        %v5109 = vsel %vm430, %v4996, 0
        %v5112 = vsel %vm430, %v4998, 0
        %v5115 = vsel %vm430, %v5000, 0
        %5117 = vmatprep.subr.mxu0 0.0
        %5118 = vmatpush1.msra.mxu0 %v5003
        %5119 = vmatprep.subr.mxu0 0.0
        %5120 = vmatpush1.msra.mxu0 %v5004
        %5121 = vmatprep.subr.mxu0 0.0
        %5122 = vmatpush1.msra.mxu0 %v5005
        %5123 = vmatprep.subr.mxu0 0.0
        %5124 = vmatpush1.msra.mxu0 %v5006
        %5125 = vmatprep.subr.mxu0 0.0
        %5126 = vmatpush1.msra.mxu0 %v5007
        %5127 = vmatprep.subr.mxu0 0.0
        %5128 = vmatpush1.msra.mxu0 %v5008
        %5129 = vmatprep.subr.mxu0 0.0
        %5130 = vmatpush1.msra.mxu0 %v5009
        %5131 = vmatprep.subr.mxu0 0.0
        %5132 = vmatpush1.msra.mxu0 %v5010
        %5133 = vmatprep.subr.mxu0 0.0
        %5134 = vmatpush1.msra.mxu0 %v5011
        %5135 = vmatprep.subr.mxu0 0.0
        %5136 = vmatpush1.msra.mxu0 %v5012
        %5137 = vmatprep.subr.mxu0 0.0
        %5138 = vmatpush1.msra.mxu0 %v5013
        %5139 = vmatprep.subr.mxu0 0.0
        %5140 = vmatpush1.msra.mxu0 %v5014
        %5141 = vmatprep.subr.mxu0 0.0
        %5142 = vmatpush1.msra.mxu0 %v5015
        %5143 = vmatprep.subr.mxu0 0.0
        %5144 = vmatpush1.msra.mxu0 %v5016
        %5145 = vmatprep.subr.mxu0 0.0
        %5146 = vmatpush1.msra.mxu0 %v5017
        %5147 = vmatprep.subr.mxu0 0.0
        %5148 = vmatpush1.msra.mxu0 %v5018
        %5149 = vmatprep.subr.mxu0 0.0
        %5150 = vmatpush1.msra.mxu0 %v5019
        %5151 = vmatprep.subr.mxu0 0.0
        %5152 = vmatpush1.msra.mxu0 %v5020
        %5153 = vmatprep.subr.mxu0 0.0
        %5154 = vmatpush1.msra.mxu0 0.0
        %5155 = vmatprep.subr.mxu0 0.0
        %5156 = vmatpush1.msra.mxu0 0.0
        %5157 = vmatprep.subr.mxu0 0.0
        %5158 = vmatpush1.msra.mxu0 0.0
        %5159 = vmatprep.subr.mxu0 0.0
        %5160 = vmatpush1.msra.mxu0 0.0
        %5161 = vmatprep.subr.mxu0 0.0
        %5162 = vmatpush1.msra.mxu0 0.0
        %5163 = vmatprep.subr.mxu0 0.0
        %5164 = vmatpush1.msra.mxu0 0.0
        %5165 = vmatprep.subr.mxu0 0.0
        %5166 = vmatpush1.msra.mxu0 0.0
        %5167 = vmatprep.subr.mxu0 0.0
        %5168 = vmatpush1.msra.mxu0 0.0
        %5169 = vmatprep.subr.mxu0 0.0
        %5170 = vmatpush1.msra.mxu0 0.0
        %5171 = vmatprep.subr.mxu0 0.0
        %5172 = vmatpush1.msra.mxu0 0.0
        %5173 = vmatprep.subr.mxu0 0.0
        %5174 = vmatpush1.msra.mxu0 0.0
        %5175 = vmatprep.subr.mxu0 0.0
        %5176 = vmatpush1.msra.mxu0 0.0
        %5177 = vmatprep.subr.mxu0 0.0
        %5178 = vmatpush1.msra.mxu0 0.0
        %5179 = vmatprep.subr.mxu0 0.0
        %5180 = vmatpush1.msra.mxu0 0.0
        %5181 = vmatprep.mubr.f32.mxu0 %v5022
        %5182 = vmatmul.mubr.f32.gmra.mrb[0].mxu0 %v4937
        %v5183 = vpop.f32.mrb[0].mxu0
        %v5184 = vadd.f32 0.0, %v5183
        %v5185 = vpop.f32.mrb[0].mxu0
        %5186 = vmatprep.mubr.f32.mxu0 %v5025
        %5187 = vmatmul.mubr.f32.gmra.mrb[0].mxu0 %v4939
        %v5188 = vpop.f32.mrb[0].mxu0
        %v5189 = vadd.f32 0.0, %v5188
        %v5190 = vpop.f32.mrb[0].mxu0
        %5191 = vmatprep.mubr.f32.mxu0 %v5028
        %5192 = vmatmul.mubr.f32.gmra.mrb[0].mxu0 %v4941
        %v5193 = vpop.f32.mrb[0].mxu0
        %v5194 = vadd.f32 0.0, %v5193
        %v5195 = vpop.f32.mrb[0].mxu0
        %5196 = vmatprep.mubr.f32.mxu0 %v5031
        %5197 = vmatmul.mubr.f32.gmra.mrb[0].mxu0 %v4943
        %v5198 = vpop.f32.mrb[0].mxu0
        %v5199 = vadd.f32 0.0, %v5198
        %v5200 = vpop.f32.mrb[0].mxu0
        %5201 = vmatprep.mubr.f32.mxu0 %v5034
        %5202 = vmatmul.mubr.f32.gmra.mrb[0].mxu0 %v4945
        %v5203 = vpop.f32.mrb[0].mxu0
        %v5204 = vadd.f32 0.0, %v5203
        %v5205 = vpop.f32.mrb[0].mxu0
        %5206 = vmatprep.mubr.f32.mxu0 %v5037
        %5207 = vmatmul.mubr.f32.gmra.mrb[0].mxu0 %v4947
        %v5208 = vpop.f32.mrb[0].mxu0
        %v5209 = vadd.f32 0.0, %v5208
        %v5210 = vpop.f32.mrb[0].mxu0
        %5211 = vmatprep.mubr.f32.mxu0 %v5040
        %5212 = vmatmul.mubr.f32.gmra.mrb[0].mxu0 %v4949
        %v5213 = vpop.f32.mrb[0].mxu0
        %v5214 = vadd.f32 0.0, %v5213
        %v5215 = vpop.f32.mrb[0].mxu0
        %5216 = vmatprep.mubr.f32.mxu0 %v5043
        %5217 = vmatmul.mubr.f32.gmra.mrb[0].mxu0 %v4951
        %v5218 = vpop.f32.mrb[0].mxu0
        %v5219 = vadd.f32 0.0, %v5218
        %v5220 = vpop.f32.mrb[0].mxu0
        %5221 = vmatprep.mubr.f32.mxu0 %v5046
        %5222 = vmatmul.mubr.f32.gmra.mrb[0].mxu0 %v4953
        %v5223 = vpop.f32.mrb[0].mxu0
        %v5224 = vadd.f32 0.0, %v5223
        %v5225 = vpop.f32.mrb[0].mxu0
        %5226 = vmatprep.mubr.f32.mxu0 %v5049
        %5227 = vmatmul.mubr.f32.gmra.mrb[0].mxu0 %v4955
        %v5228 = vpop.f32.mrb[0].mxu0
        %v5229 = vadd.f32 0.0, %v5228
        %v5230 = vpop.f32.mrb[0].mxu0
        %5231 = vmatprep.mubr.f32.mxu0 %v5052
        %5232 = vmatmul.mubr.f32.gmra.mrb[0].mxu0 %v4957
        %v5233 = vpop.f32.mrb[0].mxu0
        %v5234 = vadd.f32 0.0, %v5233
        %v5235 = vpop.f32.mrb[0].mxu0
        %5236 = vmatprep.mubr.f32.mxu0 %v5055
        %5237 = vmatmul.mubr.f32.gmra.mrb[0].mxu0 %v4959
        %v5238 = vpop.f32.mrb[0].mxu0
        %v5239 = vadd.f32 0.0, %v5238
        %v5240 = vpop.f32.mrb[0].mxu0
        %5241 = vmatprep.mubr.f32.mxu0 %v5058
        %5242 = vmatmul.mubr.f32.gmra.mrb[0].mxu0 %v4961
        %v5243 = vpop.f32.mrb[0].mxu0
        %v5244 = vadd.f32 0.0, %v5243
        %v5245 = vpop.f32.mrb[0].mxu0
        %5246 = vmatprep.mubr.f32.mxu0 %v5061
        %5247 = vmatmul.mubr.f32.gmra.mrb[0].mxu0 %v4963
        %v5248 = vpop.f32.mrb[0].mxu0
        %v5249 = vadd.f32 0.0, %v5248
        %v5250 = vpop.f32.mrb[0].mxu0
        %5251 = vmatprep.mubr.f32.mxu0 %v5064
        %5252 = vmatmul.mubr.f32.gmra.mrb[0].mxu0 %v4965
        %v5253 = vpop.f32.mrb[0].mxu0
        %v5254 = vadd.f32 0.0, %v5253
        %v5255 = vpop.f32.mrb[0].mxu0
        %5256 = vmatprep.mubr.f32.mxu0 %v5067
        %5257 = vmatmul.mubr.f32.gmra.mrb[0].mxu0 %v4967
        %v5258 = vpop.f32.mrb[0].mxu0
        %v5259 = vadd.f32 0.0, %v5258
        %v5260 = vpop.f32.mrb[0].mxu0
        %5261 = vmatprep.mubr.f32.mxu0 %v5070
        %5262 = vmatmul.mubr.f32.gmra.mrb[0].mxu0 %v4969
        %v5263 = vpop.f32.mrb[0].mxu0
        %v5264 = vadd.f32 0.0, %v5263
        %v5265 = vpop.f32.mrb[0].mxu0
        %5266 = vmatprep.mubr.f32.mxu0 %v5073
        %5267 = vmatmul.mubr.f32.gmra.mrb[0].mxu0 %v4971
        %v5268 = vpop.f32.mrb[0].mxu0
        %v5269 = vadd.f32 0.0, %v5268
        %v5270 = vpop.f32.mrb[0].mxu0
        %5271 = vmatprep.mubr.f32.mxu0 %v5076
        %5272 = vmatmul.mubr.f32.gmra.mrb[0].mxu0 %v4973
        %v5273 = vpop.f32.mrb[0].mxu0
        %v5274 = vadd.f32 0.0, %v5273
        %v5275 = vpop.f32.mrb[0].mxu0
        %5276 = vmatprep.mubr.f32.mxu0 %v5079
        %5277 = vmatmul.mubr.f32.gmra.mrb[0].mxu0 %v4975
        %v5278 = vpop.f32.mrb[0].mxu0
        %v5279 = vadd.f32 0.0, %v5278
        %v5280 = vpop.f32.mrb[0].mxu0
        %5281 = vmatprep.mubr.f32.mxu0 %v5082
        %5282 = vmatmul.mubr.f32.gmra.mrb[0].mxu0 %v4977
        %v5283 = vpop.f32.mrb[0].mxu0
        %v5284 = vadd.f32 0.0, %v5283
        %v5285 = vpop.f32.mrb[0].mxu0
        %5286 = vmatprep.mubr.f32.mxu0 %v5085
        %5287 = vmatmul.mubr.f32.gmra.mrb[0].mxu0 %v4979
        %v5288 = vpop.f32.mrb[0].mxu0
        %v5289 = vadd.f32 0.0, %v5288
        %v5290 = vpop.f32.mrb[0].mxu0
        %5291 = vmatprep.mubr.f32.mxu0 %v5088
        %5292 = vmatmul.mubr.f32.gmra.mrb[0].mxu0 %v4981
        %v5293 = vpop.f32.mrb[0].mxu0
        %v5294 = vadd.f32 0.0, %v5293
        %v5295 = vpop.f32.mrb[0].mxu0
        %5296 = vmatprep.mubr.f32.mxu0 %v5091
        %5297 = vmatmul.mubr.f32.gmra.mrb[0].mxu0 %v4983
        %v5298 = vpop.f32.mrb[0].mxu0
        %v5299 = vadd.f32 0.0, %v5298
        %v5300 = vpop.f32.mrb[0].mxu0
        %5301 = vmatprep.mubr.f32.mxu0 %v5094
        %5302 = vmatmul.mubr.f32.gmra.mrb[0].mxu0 %v4985
        %v5303 = vpop.f32.mrb[0].mxu0
        %v5304 = vadd.f32 0.0, %v5303
        %v5305 = vpop.f32.mrb[0].mxu0
        %5306 = vmatprep.mubr.f32.mxu0 %v5097
        %5307 = vmatmul.mubr.f32.gmra.mrb[0].mxu0 %v4987
        %v5308 = vpop.f32.mrb[0].mxu0
        %v5309 = vadd.f32 0.0, %v5308
        %v5310 = vpop.f32.mrb[0].mxu0
        %5311 = vmatprep.mubr.f32.mxu0 %v5100
        %5312 = vmatmul.mubr.f32.gmra.mrb[0].mxu0 %v4989
        %v5313 = vpop.f32.mrb[0].mxu0
        %v5314 = vadd.f32 0.0, %v5313
        %v5315 = vpop.f32.mrb[0].mxu0
        %5316 = vmatprep.mubr.f32.mxu0 %v5103
        %5317 = vmatmul.mubr.f32.gmra.mrb[0].mxu0 %v4991
        %v5318 = vpop.f32.mrb[0].mxu0
        %v5319 = vadd.f32 0.0, %v5318
        %v5320 = vpop.f32.mrb[0].mxu0
        %5321 = vmatprep.mubr.f32.mxu0 %v5106
        %5322 = vmatmul.mubr.f32.gmra.mrb[0].mxu0 %v4993
        %v5323 = vpop.f32.mrb[0].mxu0
        %v5324 = vadd.f32 0.0, %v5323
        %v5325 = vpop.f32.mrb[0].mxu0
        %5326 = vmatprep.mubr.f32.mxu0 %v5109
        %5327 = vmatmul.mubr.f32.gmra.mrb[0].mxu0 %v4995
        %v5328 = vpop.f32.mrb[0].mxu0
        %v5329 = vadd.f32 0.0, %v5328
        %v5330 = vpop.f32.mrb[0].mxu0
        %5331 = vmatprep.mubr.f32.mxu0 %v5112
        %5332 = vmatmul.mubr.f32.gmra.mrb[0].mxu0 %v4997
        %v5333 = vpop.f32.mrb[0].mxu0
        %v5334 = vadd.f32 0.0, %v5333
        %v5335 = vpop.f32.mrb[0].mxu0
        %5336 = vmatprep.mubr.f32.mxu0 %v5115
        %5337 = vmatmul.mubr.f32.gmra.mrb[0].mxu0 %v4999
        %v5338 = vpop.f32.mrb[0].mxu0
        %v5339 = vadd.f32 0.0, %v5338
        %v5340 = vpop.f32.mrb[0].mxu0
        %5341 = vdwg.mxu0
        %v5343 = vsel %vm430, %v4854, 0
        %v5346 = vsel %vm430, %v4856, 0
        %v5349 = vsel %vm430, %v4858, 0
        %v5352 = vsel %vm430, %v4860, 0
        %v5355 = vsel %vm430, %v4862, 0
        %v5358 = vsel %vm430, %v4864, 0
        %v5361 = vsel %vm430, %v4866, 0
        %v5364 = vsel %vm430, %v4868, 0
        %v5367 = vsel %vm430, %v4870, 0
        %v5370 = vsel %vm430, %v4872, 0
        %v5373 = vsel %vm430, %v4874, 0
        %v5376 = vsel %vm430, %v4876, 0
        %v5379 = vsel %vm430, %v4878, 0
        %v5382 = vsel %vm430, %v4880, 0
        %v5385 = vsel %vm430, %v4882, 0
        %v5388 = vsel %vm430, %v4884, 0
        %v5391 = vsel %vm430, %v4886, 0
        %v5394 = vsel %vm430, %v4888, 0
        %v5397 = vsel %vm430, %v4890, 0
        %v5400 = vsel %vm430, %v4892, 0
        %v5403 = vsel %vm430, %v4894, 0
        %v5406 = vsel %vm430, %v4896, 0
        %v5409 = vsel %vm430, %v4898, 0
        %v5412 = vsel %vm430, %v4900, 0
        %v5415 = vsel %vm430, %v4902, 0
        %v5418 = vsel %vm430, %v4904, 0
        %v5421 = vsel %vm430, %v4906, 0
        %v5424 = vsel %vm430, %v4908, 0
        %v5427 = vsel %vm430, %v4910, 0
        %v5430 = vsel %vm430, %v4912, 0
        %v5433 = vsel %vm430, %v4914, 0
        %v5436 = vsel %vm430, %v4916, 0
        %5438 = vmatprep.subr.mxu0 0.0
        %5439 = vmatpush1.msra.mxu0 %v4919
        %5440 = vmatprep.subr.mxu0 0.0
        %5441 = vmatpush1.msra.mxu0 %v4920
        %5442 = vmatprep.subr.mxu0 0.0
        %5443 = vmatpush1.msra.mxu0 %v4921
        %5444 = vmatprep.subr.mxu0 0.0
        %5445 = vmatpush1.msra.mxu0 %v4922
        %5446 = vmatprep.subr.mxu0 0.0
        %5447 = vmatpush1.msra.mxu0 %v4923
        %5448 = vmatprep.subr.mxu0 0.0
        %5449 = vmatpush1.msra.mxu0 %v4924
        %5450 = vmatprep.subr.mxu0 0.0
        %5451 = vmatpush1.msra.mxu0 %v4925
        %5452 = vmatprep.subr.mxu0 0.0
        %5453 = vmatpush1.msra.mxu0 %v4926
        %5454 = vmatprep.subr.mxu0 0.0
        %5455 = vmatpush1.msra.mxu0 %v4927
        %5456 = vmatprep.subr.mxu0 0.0
        %5457 = vmatpush1.msra.mxu0 %v4928
        %5458 = vmatprep.subr.mxu0 0.0
        %5459 = vmatpush1.msra.mxu0 %v4929
        %5460 = vmatprep.subr.mxu0 0.0
        %5461 = vmatpush1.msra.mxu0 %v4930
        %5462 = vmatprep.subr.mxu0 0.0
        %5463 = vmatpush1.msra.mxu0 %v4931
        %5464 = vmatprep.subr.mxu0 0.0
        %5465 = vmatpush1.msra.mxu0 %v4932
        %5466 = vmatprep.subr.mxu0 0.0
        %5467 = vmatpush1.msra.mxu0 %v4933
        %5468 = vmatprep.subr.mxu0 0.0
        %5469 = vmatpush1.msra.mxu0 %v4934
        %5470 = vmatprep.subr.mxu0 0.0
        %5471 = vmatpush1.msra.mxu0 %v4935
        %5472 = vmatprep.subr.mxu0 0.0
        %5473 = vmatpush1.msra.mxu0 %v4936
        %5474 = vmatprep.subr.mxu0 0.0
        %5475 = vmatpush1.msra.mxu0 0.0
        %5476 = vmatprep.subr.mxu0 0.0
        %5477 = vmatpush1.msra.mxu0 0.0
        %5478 = vmatprep.subr.mxu0 0.0
        %5479 = vmatpush1.msra.mxu0 0.0
        %5480 = vmatprep.subr.mxu0 0.0
        %5481 = vmatpush1.msra.mxu0 0.0
        %5482 = vmatprep.subr.mxu0 0.0
        %5483 = vmatpush1.msra.mxu0 0.0
        %5484 = vmatprep.subr.mxu0 0.0
        %5485 = vmatpush1.msra.mxu0 0.0
        %5486 = vmatprep.subr.mxu0 0.0
        %5487 = vmatpush1.msra.mxu0 0.0
        %5488 = vmatprep.subr.mxu0 0.0
        %5489 = vmatpush1.msra.mxu0 0.0
        %5490 = vmatprep.subr.mxu0 0.0
        %5491 = vmatpush1.msra.mxu0 0.0
        %5492 = vmatprep.subr.mxu0 0.0
        %5493 = vmatpush1.msra.mxu0 0.0
        %5494 = vmatprep.subr.mxu0 0.0
        %5495 = vmatpush1.msra.mxu0 0.0
        %5496 = vmatprep.subr.mxu0 0.0
        %5497 = vmatpush1.msra.mxu0 0.0
        %5498 = vmatprep.subr.mxu0 0.0
        %5499 = vmatpush1.msra.mxu0 0.0
        %5500 = vmatprep.subr.mxu0 0.0
        %5501 = vmatpush1.msra.mxu0 0.0
        %5502 = vmatprep.mubr.f32.mxu0 %v5343
        %5503 = vmatmul.mubr.f32.gmra.mrb[0].mxu0 %v4853
        %v5504 = vpop.f32.mrb[0].mxu0
        %v5505 = vadd.f32 %v5184, %v5504
        %v5506 = vpop.f32.mrb[0].mxu0
        %5507 = vmatprep.mubr.f32.mxu0 %v5346
        %5508 = vmatmul.mubr.f32.gmra.mrb[0].mxu0 %v4855
        %v5509 = vpop.f32.mrb[0].mxu0
        %v5510 = vadd.f32 %v5189, %v5509
        %v5511 = vpop.f32.mrb[0].mxu0
        %5512 = vmatprep.mubr.f32.mxu0 %v5349
        %5513 = vmatmul.mubr.f32.gmra.mrb[0].mxu0 %v4857
        %v5514 = vpop.f32.mrb[0].mxu0
        %v5515 = vadd.f32 %v5194, %v5514
        %v5516 = vpop.f32.mrb[0].mxu0
        %5517 = vmatprep.mubr.f32.mxu0 %v5352
        %5518 = vmatmul.mubr.f32.gmra.mrb[0].mxu0 %v4859
        %v5519 = vpop.f32.mrb[0].mxu0
        %v5520 = vadd.f32 %v5199, %v5519
        %v5521 = vpop.f32.mrb[0].mxu0
        %5522 = vmatprep.mubr.f32.mxu0 %v5355
        %5523 = vmatmul.mubr.f32.gmra.mrb[0].mxu0 %v4861
        %v5524 = vpop.f32.mrb[0].mxu0
        %v5525 = vadd.f32 %v5204, %v5524
        %v5526 = vpop.f32.mrb[0].mxu0
        %5527 = vmatprep.mubr.f32.mxu0 %v5358
        %5528 = vmatmul.mubr.f32.gmra.mrb[0].mxu0 %v4863
        %v5529 = vpop.f32.mrb[0].mxu0
        %v5530 = vadd.f32 %v5209, %v5529
        %v5531 = vpop.f32.mrb[0].mxu0
        %5532 = vmatprep.mubr.f32.mxu0 %v5361
        %5533 = vmatmul.mubr.f32.gmra.mrb[0].mxu0 %v4865
        %v5534 = vpop.f32.mrb[0].mxu0
        %v5535 = vadd.f32 %v5214, %v5534
        %v5536 = vpop.f32.mrb[0].mxu0
        %5537 = vmatprep.mubr.f32.mxu0 %v5364
        %5538 = vmatmul.mubr.f32.gmra.mrb[0].mxu0 %v4867
        %v5539 = vpop.f32.mrb[0].mxu0
        %v5540 = vadd.f32 %v5219, %v5539
        %v5541 = vpop.f32.mrb[0].mxu0
        %5542 = vmatprep.mubr.f32.mxu0 %v5367
        %5543 = vmatmul.mubr.f32.gmra.mrb[0].mxu0 %v4869
        %v5544 = vpop.f32.mrb[0].mxu0
        %v5545 = vadd.f32 %v5224, %v5544
        %v5546 = vpop.f32.mrb[0].mxu0
        %5547 = vmatprep.mubr.f32.mxu0 %v5370
        %5548 = vmatmul.mubr.f32.gmra.mrb[0].mxu0 %v4871
        %v5549 = vpop.f32.mrb[0].mxu0
        %v5550 = vadd.f32 %v5229, %v5549
        %v5551 = vpop.f32.mrb[0].mxu0
        %5552 = vmatprep.mubr.f32.mxu0 %v5373
        %5553 = vmatmul.mubr.f32.gmra.mrb[0].mxu0 %v4873
        %v5554 = vpop.f32.mrb[0].mxu0
        %v5555 = vadd.f32 %v5234, %v5554
        %v5556 = vpop.f32.mrb[0].mxu0
        %5557 = vmatprep.mubr.f32.mxu0 %v5376
        %5558 = vmatmul.mubr.f32.gmra.mrb[0].mxu0 %v4875
        %v5559 = vpop.f32.mrb[0].mxu0
        %v5560 = vadd.f32 %v5239, %v5559
        %v5561 = vpop.f32.mrb[0].mxu0
        %5562 = vmatprep.mubr.f32.mxu0 %v5379
        %5563 = vmatmul.mubr.f32.gmra.mrb[0].mxu0 %v4877
        %v5564 = vpop.f32.mrb[0].mxu0
        %v5565 = vadd.f32 %v5244, %v5564
        %v5566 = vpop.f32.mrb[0].mxu0
        %5567 = vmatprep.mubr.f32.mxu0 %v5382
        %5568 = vmatmul.mubr.f32.gmra.mrb[0].mxu0 %v4879
        %v5569 = vpop.f32.mrb[0].mxu0
        %v5570 = vadd.f32 %v5249, %v5569
        %v5571 = vpop.f32.mrb[0].mxu0
        %5572 = vmatprep.mubr.f32.mxu0 %v5385
        %5573 = vmatmul.mubr.f32.gmra.mrb[0].mxu0 %v4881
        %v5574 = vpop.f32.mrb[0].mxu0
        %v5575 = vadd.f32 %v5254, %v5574
        %v5576 = vpop.f32.mrb[0].mxu0
        %5577 = vmatprep.mubr.f32.mxu0 %v5388
        %5578 = vmatmul.mubr.f32.gmra.mrb[0].mxu0 %v4883
        %v5579 = vpop.f32.mrb[0].mxu0
        %v5580 = vadd.f32 %v5259, %v5579
        %v5581 = vpop.f32.mrb[0].mxu0
        %5582 = vmatprep.mubr.f32.mxu0 %v5391
        %5583 = vmatmul.mubr.f32.gmra.mrb[0].mxu0 %v4885
        %v5584 = vpop.f32.mrb[0].mxu0
        %v5585 = vadd.f32 %v5264, %v5584
        %v5586 = vpop.f32.mrb[0].mxu0
        %5587 = vmatprep.mubr.f32.mxu0 %v5394
        %5588 = vmatmul.mubr.f32.gmra.mrb[0].mxu0 %v4887
        %v5589 = vpop.f32.mrb[0].mxu0
        %v5590 = vadd.f32 %v5269, %v5589
        %v5591 = vpop.f32.mrb[0].mxu0
        %5592 = vmatprep.mubr.f32.mxu0 %v5397
        %5593 = vmatmul.mubr.f32.gmra.mrb[0].mxu0 %v4889
        %v5594 = vpop.f32.mrb[0].mxu0
        %v5595 = vadd.f32 %v5274, %v5594
        %v5596 = vpop.f32.mrb[0].mxu0
        %5597 = vmatprep.mubr.f32.mxu0 %v5400
        %5598 = vmatmul.mubr.f32.gmra.mrb[0].mxu0 %v4891
        %v5599 = vpop.f32.mrb[0].mxu0
        %v5600 = vadd.f32 %v5279, %v5599
        %v5601 = vpop.f32.mrb[0].mxu0
        %5602 = vmatprep.mubr.f32.mxu0 %v5403
        %5603 = vmatmul.mubr.f32.gmra.mrb[0].mxu0 %v4893
        %v5604 = vpop.f32.mrb[0].mxu0
        %v5605 = vadd.f32 %v5284, %v5604
        %v5606 = vpop.f32.mrb[0].mxu0
        %5607 = vmatprep.mubr.f32.mxu0 %v5406
        %5608 = vmatmul.mubr.f32.gmra.mrb[0].mxu0 %v4895
        %v5609 = vpop.f32.mrb[0].mxu0
        %v5610 = vadd.f32 %v5289, %v5609
        %v5611 = vpop.f32.mrb[0].mxu0
        %5612 = vmatprep.mubr.f32.mxu0 %v5409
        %5613 = vmatmul.mubr.f32.gmra.mrb[0].mxu0 %v4897
        %v5614 = vpop.f32.mrb[0].mxu0
        %v5615 = vadd.f32 %v5294, %v5614
        %v5616 = vpop.f32.mrb[0].mxu0
        %5617 = vmatprep.mubr.f32.mxu0 %v5412
        %5618 = vmatmul.mubr.f32.gmra.mrb[0].mxu0 %v4899
        %v5619 = vpop.f32.mrb[0].mxu0
        %v5620 = vadd.f32 %v5299, %v5619
        %v5621 = vpop.f32.mrb[0].mxu0
        %5622 = vmatprep.mubr.f32.mxu0 %v5415
        %5623 = vmatmul.mubr.f32.gmra.mrb[0].mxu0 %v4901
        %v5624 = vpop.f32.mrb[0].mxu0
        %v5625 = vadd.f32 %v5304, %v5624
        %v5626 = vpop.f32.mrb[0].mxu0
        %5627 = vmatprep.mubr.f32.mxu0 %v5418
        %5628 = vmatmul.mubr.f32.gmra.mrb[0].mxu0 %v4903
        %v5629 = vpop.f32.mrb[0].mxu0
        %v5630 = vadd.f32 %v5309, %v5629
        %v5631 = vpop.f32.mrb[0].mxu0
        %5632 = vmatprep.mubr.f32.mxu0 %v5421
        %5633 = vmatmul.mubr.f32.gmra.mrb[0].mxu0 %v4905
        %v5634 = vpop.f32.mrb[0].mxu0
        %v5635 = vadd.f32 %v5314, %v5634
        %v5636 = vpop.f32.mrb[0].mxu0
        %5637 = vmatprep.mubr.f32.mxu0 %v5424
        %5638 = vmatmul.mubr.f32.gmra.mrb[0].mxu0 %v4907
        %v5639 = vpop.f32.mrb[0].mxu0
        %v5640 = vadd.f32 %v5319, %v5639
        %v5641 = vpop.f32.mrb[0].mxu0
        %5642 = vmatprep.mubr.f32.mxu0 %v5427
        %5643 = vmatmul.mubr.f32.gmra.mrb[0].mxu0 %v4909
        %v5644 = vpop.f32.mrb[0].mxu0
        %v5645 = vadd.f32 %v5324, %v5644
        %v5646 = vpop.f32.mrb[0].mxu0
        %5647 = vmatprep.mubr.f32.mxu0 %v5430
        %5648 = vmatmul.mubr.f32.gmra.mrb[0].mxu0 %v4911
        %v5649 = vpop.f32.mrb[0].mxu0
        %v5650 = vadd.f32 %v5329, %v5649
        %v5651 = vpop.f32.mrb[0].mxu0
        %5652 = vmatprep.mubr.f32.mxu0 %v5433
        %5653 = vmatmul.mubr.f32.gmra.mrb[0].mxu0 %v4913
        %v5654 = vpop.f32.mrb[0].mxu0
        %v5655 = vadd.f32 %v5334, %v5654
        %v5656 = vpop.f32.mrb[0].mxu0
        %5657 = vmatprep.mubr.f32.mxu0 %v5436
        %5658 = vmatmul.mubr.f32.gmra.mrb[0].mxu0 %v4915
        %v5659 = vpop.f32.mrb[0].mxu0
        %v5660 = vadd.f32 %v5339, %v5659
        %v5661 = vpop.f32.mrb[0].mxu0
        %5662 = vdwg.mxu0
        %v5663 = vld [vmem:[%s2059] sm:$0xff]
        %v5664 = vld [vmem:[%s2059 + $0x8] sm:$0xff]
        %v5665 = vld [vmem:[%s2059 + $0x10] sm:$0xff]
        %v5666 = vld [vmem:[%s2059 + $0x18] sm:$0xff]
        %v5667 = vld [vmem:[%s2059 + $0x20] sm:$0xff]
        %v5668 = vld [vmem:[%s2059 + $0x28] sm:$0xff]
        %v5669 = vld [vmem:[%s2059 + $0x30] sm:$0xff]
        %v5670 = vld [vmem:[%s2059 + $0x38] sm:$0xff]
        %v5671 = vld [vmem:[%s2059 + $0x40] sm:$0xff]
        %v5672 = vld [vmem:[%s2059 + $0x48] sm:$0xff]
        %v5673 = vld [vmem:[%s2059 + $0x50] sm:$0xff]
        %v5674 = vld [vmem:[%s2059 + $0x58] sm:$0xff]
        %v5675 = vld [vmem:[%s2059 + $0x60] sm:$0xff]
        %v5676 = vld [vmem:[%s2059 + $0x68] sm:$0xff]
        %v5677 = vld [vmem:[%s2059 + $0x70] sm:$0xff]
        %v5678 = vld [vmem:[%s2059 + $0x78] sm:$0xff]
        %v5679 = vld [vmem:[%s2059 + $0x80] sm:$0xff]
        %v5680 = vld [vmem:[%s2059 + $0x88] sm:$0xff]
        %v5681 = vld [vmem:[%s2059 + $0x90] sm:$0xff]
        %v5682 = vld [vmem:[%s2059 + $0x98] sm:$0xff]
        %v5683 = vld [vmem:[%s2059 + $0xa0] sm:$0xff]
        %v5684 = vld [vmem:[%s2059 + $0xa8] sm:$0xff]
        %v5685 = vld [vmem:[%s2059 + $0xb0] sm:$0xff]
        %v5686 = vld [vmem:[%s2059 + $0xb8] sm:$0xff]
        %v5687 = vld [vmem:[%s2059 + $0xc0] sm:$0xff]
        %v5688 = vld [vmem:[%s2059 + $0xc8] sm:$0xff]
        %v5689 = vld [vmem:[%s2059 + $0xd0] sm:$0xff]
        %v5690 = vld [vmem:[%s2059 + $0xd8] sm:$0xff]
        %v5691 = vld [vmem:[%s2059 + $0xe0] sm:$0xff]
        %v5692 = vld [vmem:[%s2059 + $0xe8] sm:$0xff]
        %v5693 = vld [vmem:[%s2059 + $0xf0] sm:$0xff]
        %v5694 = vld [vmem:[%s2059 + $0xf8] sm:$0xff]
        %v5695 = vld [vmem:[%s2059 + $0x100] sm:$0xff]
        %v5696 = vld [vmem:[%s2059 + $0x108] sm:$0xff]
        %v5697 = vld [vmem:[%s2059 + $0x110] sm:$0xff]
        %v5698 = vld [vmem:[%s2059 + $0x118] sm:$0xff]
        %v5699 = vld [vmem:[%s2059 + $0x120] sm:$0xff]
        %v5700 = vld [vmem:[%s2059 + $0x128] sm:$0xff]
        %v5701 = vld [vmem:[%s2059 + $0x130] sm:$0xff]
        %v5702 = vld [vmem:[%s2059 + $0x138] sm:$0xff]
        %v5703 = vld [vmem:[%s2059 + $0x140] sm:$0xff]
        %v5704 = vld [vmem:[%s2059 + $0x148] sm:$0xff]
        %v5705 = vld [vmem:[%s2059 + $0x150] sm:$0xff]
        %v5706 = vld [vmem:[%s2059 + $0x158] sm:$0xff]
        %v5707 = vld [vmem:[%s2059 + $0x160] sm:$0xff]
        %v5708 = vld [vmem:[%s2059 + $0x168] sm:$0xff]
        %v5709 = vld [vmem:[%s2059 + $0x170] sm:$0xff]
        %v5710 = vld [vmem:[%s2059 + $0x178] sm:$0xff]
        %v5711 = vld [vmem:[%s2059 + $0x180] sm:$0xff]
        %v5712 = vld [vmem:[%s2059 + $0x188] sm:$0xff]
        %v5713 = vld [vmem:[%s2059 + $0x190] sm:$0xff]
        %v5714 = vld [vmem:[%s2059 + $0x198] sm:$0xff]
        %v5715 = vld [vmem:[%s2059 + $0x1a0] sm:$0xff]
        %v5716 = vld [vmem:[%s2059 + $0x1a8] sm:$0xff]
        %v5717 = vld [vmem:[%s2059 + $0x1b0] sm:$0xff]
        %v5718 = vld [vmem:[%s2059 + $0x1b8] sm:$0xff]
        %v5719 = vld [vmem:[%s2059 + $0x1c0] sm:$0xff]
        %v5720 = vld [vmem:[%s2059 + $0x1c8] sm:$0xff]
        %v5721 = vld [vmem:[%s2059 + $0x1d0] sm:$0xff]
        %v5722 = vld [vmem:[%s2059 + $0x1d8] sm:$0xff]
        %v5723 = vld [vmem:[%s2059 + $0x1e0] sm:$0xff]
        %v5724 = vld [vmem:[%s2059 + $0x1e8] sm:$0xff]
        %v5725 = vld [vmem:[%s2059 + $0x1f0] sm:$0xff]
        %v5726 = vld [vmem:[%s2059 + $0x1f8] sm:$0xff]
        %s5727 = sadd.s32 288, %s4917
        %s5728 = scalar_lea.vmem %s7, %s5727
        %v5729 = vld [vmem:[%s5728] sm:$0xff]
        %v5730 = vld [vmem:[%s5728 + $0x8] sm:$0xff]
        %v5731 = vld [vmem:[%s5728 + $0x10] sm:$0xff]
        %v5732 = vld [vmem:[%s5728 + $0x18] sm:$0xff]
        %v5733 = vld [vmem:[%s5728 + $0x20] sm:$0xff]
        %v5734 = vld [vmem:[%s5728 + $0x28] sm:$0xff]
        %v5735 = vld [vmem:[%s5728 + $0x30] sm:$0xff]
        %v5736 = vld [vmem:[%s5728 + $0x38] sm:$0xff]
        %v5737 = vld [vmem:[%s5728 + $0x40] sm:$0xff]
        %v5738 = vld [vmem:[%s5728 + $0x48] sm:$0xff]
        %v5739 = vld [vmem:[%s5728 + $0x50] sm:$0xff]
        %v5740 = vld [vmem:[%s5728 + $0x58] sm:$0xff]
        %v5741 = vld [vmem:[%s5728 + $0x60] sm:$0xff]
        %v5742 = vld [vmem:[%s5728 + $0x68] sm:$0xff]
        %v5743 = vld [vmem:[%s5728 + $0x70] sm:$0xff]
        %v5744 = vld [vmem:[%s5728 + $0x78] sm:$0xff]
        %v5745 = vld [vmem:[%s5728 + $0x80] sm:$0xff]
        %v5746 = vld [vmem:[%s5728 + $0x88] sm:$0xff]
        %v5748 = vsel %vm430, %v5664, 0
        %v5751 = vsel %vm430, %v5666, 0
        %v5754 = vsel %vm430, %v5668, 0
        %v5757 = vsel %vm430, %v5670, 0
        %v5760 = vsel %vm430, %v5672, 0
        %v5763 = vsel %vm430, %v5674, 0
        %v5766 = vsel %vm430, %v5676, 0
        %v5769 = vsel %vm430, %v5678, 0
        %v5772 = vsel %vm430, %v5680, 0
        %v5775 = vsel %vm430, %v5682, 0
        %v5778 = vsel %vm430, %v5684, 0
        %v5781 = vsel %vm430, %v5686, 0
        %v5784 = vsel %vm430, %v5688, 0
        %v5787 = vsel %vm430, %v5690, 0
        %v5790 = vsel %vm430, %v5692, 0
        %v5793 = vsel %vm430, %v5694, 0
        %v5796 = vsel %vm430, %v5696, 0
        %v5799 = vsel %vm430, %v5698, 0
        %v5802 = vsel %vm430, %v5700, 0
        %v5805 = vsel %vm430, %v5702, 0
        %v5808 = vsel %vm430, %v5704, 0
        %v5811 = vsel %vm430, %v5706, 0
        %v5814 = vsel %vm430, %v5708, 0
        %v5817 = vsel %vm430, %v5710, 0
        %v5820 = vsel %vm430, %v5712, 0
        %v5823 = vsel %vm430, %v5714, 0
        %v5826 = vsel %vm430, %v5716, 0
        %v5829 = vsel %vm430, %v5718, 0
        %v5832 = vsel %vm430, %v5720, 0
        %v5835 = vsel %vm430, %v5722, 0
        %v5838 = vsel %vm430, %v5724, 0
        %v5841 = vsel %vm430, %v5726, 0
        %5843 = vmatprep.subr.mxu0 0.0
        %5844 = vmatpush1.msra.mxu0 %v5729
        %5845 = vmatprep.subr.mxu0 0.0
        %5846 = vmatpush1.msra.mxu0 %v5730
        %5847 = vmatprep.subr.mxu0 0.0
        %5848 = vmatpush1.msra.mxu0 %v5731
        %5849 = vmatprep.subr.mxu0 0.0
        %5850 = vmatpush1.msra.mxu0 %v5732
        %5851 = vmatprep.subr.mxu0 0.0
        %5852 = vmatpush1.msra.mxu0 %v5733
        %5853 = vmatprep.subr.mxu0 0.0
        %5854 = vmatpush1.msra.mxu0 %v5734
        %5855 = vmatprep.subr.mxu0 0.0
        %5856 = vmatpush1.msra.mxu0 %v5735
        %5857 = vmatprep.subr.mxu0 0.0
        %5858 = vmatpush1.msra.mxu0 %v5736
        %5859 = vmatprep.subr.mxu0 0.0
        %5860 = vmatpush1.msra.mxu0 %v5737
        %5861 = vmatprep.subr.mxu0 0.0
        %5862 = vmatpush1.msra.mxu0 %v5738
        %5863 = vmatprep.subr.mxu0 0.0
        %5864 = vmatpush1.msra.mxu0 %v5739
        %5865 = vmatprep.subr.mxu0 0.0
        %5866 = vmatpush1.msra.mxu0 %v5740
        %5867 = vmatprep.subr.mxu0 0.0
        %5868 = vmatpush1.msra.mxu0 %v5741
        %5869 = vmatprep.subr.mxu0 0.0
        %5870 = vmatpush1.msra.mxu0 %v5742
        %5871 = vmatprep.subr.mxu0 0.0
        %5872 = vmatpush1.msra.mxu0 %v5743
        %5873 = vmatprep.subr.mxu0 0.0
        %5874 = vmatpush1.msra.mxu0 %v5744
        %5875 = vmatprep.subr.mxu0 0.0
        %5876 = vmatpush1.msra.mxu0 %v5745
        %5877 = vmatprep.subr.mxu0 0.0
        %5878 = vmatpush1.msra.mxu0 %v5746
        %5879 = vmatprep.subr.mxu0 0.0
        %5880 = vmatpush1.msra.mxu0 0.0
        %5881 = vmatprep.subr.mxu0 0.0
        %5882 = vmatpush1.msra.mxu0 0.0
        %5883 = vmatprep.subr.mxu0 0.0
        %5884 = vmatpush1.msra.mxu0 0.0
        %5885 = vmatprep.subr.mxu0 0.0
        %5886 = vmatpush1.msra.mxu0 0.0
        %5887 = vmatprep.subr.mxu0 0.0
        %5888 = vmatpush1.msra.mxu0 0.0
        %5889 = vmatprep.subr.mxu0 0.0
        %5890 = vmatpush1.msra.mxu0 0.0
        %5891 = vmatprep.subr.mxu0 0.0
        %5892 = vmatpush1.msra.mxu0 0.0
        %5893 = vmatprep.subr.mxu0 0.0
        %5894 = vmatpush1.msra.mxu0 0.0
        %5895 = vmatprep.subr.mxu0 0.0
        %5896 = vmatpush1.msra.mxu0 0.0
        %5897 = vmatprep.subr.mxu0 0.0
        %5898 = vmatpush1.msra.mxu0 0.0
        %5899 = vmatprep.subr.mxu0 0.0
        %5900 = vmatpush1.msra.mxu0 0.0
        %5901 = vmatprep.subr.mxu0 0.0
        %5902 = vmatpush1.msra.mxu0 0.0
        %5903 = vmatprep.subr.mxu0 0.0
        %5904 = vmatpush1.msra.mxu0 0.0
        %5905 = vmatprep.subr.mxu0 0.0
        %5906 = vmatpush1.msra.mxu0 0.0
        %5907 = vmatprep.mubr.f32.mxu0 %v5748
        %5908 = vmatmul.mubr.f32.gmra.mrb[0].mxu0 %v5663
        %v5909 = vpop.f32.mrb[0].mxu0
        %v5910 = vadd.f32 0.0, %v5909
        %v5911 = vpop.f32.mrb[0].mxu0
        %5912 = vmatprep.mubr.f32.mxu0 %v5751
        %5913 = vmatmul.mubr.f32.gmra.mrb[0].mxu0 %v5665
        %v5914 = vpop.f32.mrb[0].mxu0
        %v5915 = vadd.f32 0.0, %v5914
        %v5916 = vpop.f32.mrb[0].mxu0
        %5917 = vmatprep.mubr.f32.mxu0 %v5754
        %5918 = vmatmul.mubr.f32.gmra.mrb[0].mxu0 %v5667
        %v5919 = vpop.f32.mrb[0].mxu0
        %v5920 = vadd.f32 0.0, %v5919
        %v5921 = vpop.f32.mrb[0].mxu0
        %5922 = vmatprep.mubr.f32.mxu0 %v5757
        %5923 = vmatmul.mubr.f32.gmra.mrb[0].mxu0 %v5669
        %v5924 = vpop.f32.mrb[0].mxu0
        %v5925 = vadd.f32 0.0, %v5924
        %v5926 = vpop.f32.mrb[0].mxu0
        %5927 = vmatprep.mubr.f32.mxu0 %v5760
        %5928 = vmatmul.mubr.f32.gmra.mrb[0].mxu0 %v5671
        %v5929 = vpop.f32.mrb[0].mxu0
        %v5930 = vadd.f32 0.0, %v5929
        %v5931 = vpop.f32.mrb[0].mxu0
        %5932 = vmatprep.mubr.f32.mxu0 %v5763
        %5933 = vmatmul.mubr.f32.gmra.mrb[0].mxu0 %v5673
        %v5934 = vpop.f32.mrb[0].mxu0
        %v5935 = vadd.f32 0.0, %v5934
        %v5936 = vpop.f32.mrb[0].mxu0
        %5937 = vmatprep.mubr.f32.mxu0 %v5766
        %5938 = vmatmul.mubr.f32.gmra.mrb[0].mxu0 %v5675
        %v5939 = vpop.f32.mrb[0].mxu0
        %v5940 = vadd.f32 0.0, %v5939
        %v5941 = vpop.f32.mrb[0].mxu0
        %5942 = vmatprep.mubr.f32.mxu0 %v5769
        %5943 = vmatmul.mubr.f32.gmra.mrb[0].mxu0 %v5677
        %v5944 = vpop.f32.mrb[0].mxu0
        %v5945 = vadd.f32 0.0, %v5944
        %v5946 = vpop.f32.mrb[0].mxu0
        %5947 = vmatprep.mubr.f32.mxu0 %v5772
        %5948 = vmatmul.mubr.f32.gmra.mrb[0].mxu0 %v5679
        %v5949 = vpop.f32.mrb[0].mxu0
        %v5950 = vadd.f32 0.0, %v5949
        %v5951 = vpop.f32.mrb[0].mxu0
        %5952 = vmatprep.mubr.f32.mxu0 %v5775
        %5953 = vmatmul.mubr.f32.gmra.mrb[0].mxu0 %v5681
        %v5954 = vpop.f32.mrb[0].mxu0
        %v5955 = vadd.f32 0.0, %v5954
        %v5956 = vpop.f32.mrb[0].mxu0
        %5957 = vmatprep.mubr.f32.mxu0 %v5778
        %5958 = vmatmul.mubr.f32.gmra.mrb[0].mxu0 %v5683
        %v5959 = vpop.f32.mrb[0].mxu0
        %v5960 = vadd.f32 0.0, %v5959
        %v5961 = vpop.f32.mrb[0].mxu0
        %5962 = vmatprep.mubr.f32.mxu0 %v5781
        %5963 = vmatmul.mubr.f32.gmra.mrb[0].mxu0 %v5685
        %v5964 = vpop.f32.mrb[0].mxu0
        %v5965 = vadd.f32 0.0, %v5964
        %v5966 = vpop.f32.mrb[0].mxu0
        %5967 = vmatprep.mubr.f32.mxu0 %v5784
        %5968 = vmatmul.mubr.f32.gmra.mrb[0].mxu0 %v5687
        %v5969 = vpop.f32.mrb[0].mxu0
        %v5970 = vadd.f32 0.0, %v5969
        %v5971 = vpop.f32.mrb[0].mxu0
        %5972 = vmatprep.mubr.f32.mxu0 %v5787
        %5973 = vmatmul.mubr.f32.gmra.mrb[0].mxu0 %v5689
        %v5974 = vpop.f32.mrb[0].mxu0
        %v5975 = vadd.f32 0.0, %v5974
        %v5976 = vpop.f32.mrb[0].mxu0
        %5977 = vmatprep.mubr.f32.mxu0 %v5790
        %5978 = vmatmul.mubr.f32.gmra.mrb[0].mxu0 %v5691
        %v5979 = vpop.f32.mrb[0].mxu0
        %v5980 = vadd.f32 0.0, %v5979
        %v5981 = vpop.f32.mrb[0].mxu0
        %5982 = vmatprep.mubr.f32.mxu0 %v5793
        %5983 = vmatmul.mubr.f32.gmra.mrb[0].mxu0 %v5693
        %v5984 = vpop.f32.mrb[0].mxu0
        %v5985 = vadd.f32 0.0, %v5984
        %v5986 = vpop.f32.mrb[0].mxu0
        %5987 = vmatprep.mubr.f32.mxu0 %v5796
        %5988 = vmatmul.mubr.f32.gmra.mrb[0].mxu0 %v5695
        %v5989 = vpop.f32.mrb[0].mxu0
        %v5990 = vadd.f32 0.0, %v5989
        %v5991 = vpop.f32.mrb[0].mxu0
        %5992 = vmatprep.mubr.f32.mxu0 %v5799
        %5993 = vmatmul.mubr.f32.gmra.mrb[0].mxu0 %v5697
        %v5994 = vpop.f32.mrb[0].mxu0
        %v5995 = vadd.f32 0.0, %v5994
        %v5996 = vpop.f32.mrb[0].mxu0
        %5997 = vmatprep.mubr.f32.mxu0 %v5802
        %5998 = vmatmul.mubr.f32.gmra.mrb[0].mxu0 %v5699
        %v5999 = vpop.f32.mrb[0].mxu0
        %v6000 = vadd.f32 0.0, %v5999
        %v6001 = vpop.f32.mrb[0].mxu0
        %6002 = vmatprep.mubr.f32.mxu0 %v5805
        %6003 = vmatmul.mubr.f32.gmra.mrb[0].mxu0 %v5701
        %v6004 = vpop.f32.mrb[0].mxu0
        %v6005 = vadd.f32 0.0, %v6004
        %v6006 = vpop.f32.mrb[0].mxu0
        %6007 = vmatprep.mubr.f32.mxu0 %v5808
        %6008 = vmatmul.mubr.f32.gmra.mrb[0].mxu0 %v5703
        %v6009 = vpop.f32.mrb[0].mxu0
        %v6010 = vadd.f32 0.0, %v6009
        %v6011 = vpop.f32.mrb[0].mxu0
        %6012 = vmatprep.mubr.f32.mxu0 %v5811
        %6013 = vmatmul.mubr.f32.gmra.mrb[0].mxu0 %v5705
        %v6014 = vpop.f32.mrb[0].mxu0
        %v6015 = vadd.f32 0.0, %v6014
        %v6016 = vpop.f32.mrb[0].mxu0
        %6017 = vmatprep.mubr.f32.mxu0 %v5814
        %6018 = vmatmul.mubr.f32.gmra.mrb[0].mxu0 %v5707
        %v6019 = vpop.f32.mrb[0].mxu0
        %v6020 = vadd.f32 0.0, %v6019
        %v6021 = vpop.f32.mrb[0].mxu0
        %6022 = vmatprep.mubr.f32.mxu0 %v5817
        %6023 = vmatmul.mubr.f32.gmra.mrb[0].mxu0 %v5709
        %v6024 = vpop.f32.mrb[0].mxu0
        %v6025 = vadd.f32 0.0, %v6024
        %v6026 = vpop.f32.mrb[0].mxu0
        %6027 = vmatprep.mubr.f32.mxu0 %v5820
        %6028 = vmatmul.mubr.f32.gmra.mrb[0].mxu0 %v5711
        %v6029 = vpop.f32.mrb[0].mxu0
        %v6030 = vadd.f32 0.0, %v6029
        %v6031 = vpop.f32.mrb[0].mxu0
        %6032 = vmatprep.mubr.f32.mxu0 %v5823
        %6033 = vmatmul.mubr.f32.gmra.mrb[0].mxu0 %v5713
        %v6034 = vpop.f32.mrb[0].mxu0
        %v6035 = vadd.f32 0.0, %v6034
        %v6036 = vpop.f32.mrb[0].mxu0
        %6037 = vmatprep.mubr.f32.mxu0 %v5826
        %6038 = vmatmul.mubr.f32.gmra.mrb[0].mxu0 %v5715
        %v6039 = vpop.f32.mrb[0].mxu0
        %v6040 = vadd.f32 0.0, %v6039
        %v6041 = vpop.f32.mrb[0].mxu0
        %6042 = vmatprep.mubr.f32.mxu0 %v5829
        %6043 = vmatmul.mubr.f32.gmra.mrb[0].mxu0 %v5717
        %v6044 = vpop.f32.mrb[0].mxu0
        %v6045 = vadd.f32 0.0, %v6044
        %v6046 = vpop.f32.mrb[0].mxu0
        %6047 = vmatprep.mubr.f32.mxu0 %v5832
        %6048 = vmatmul.mubr.f32.gmra.mrb[0].mxu0 %v5719
        %v6049 = vpop.f32.mrb[0].mxu0
        %v6050 = vadd.f32 0.0, %v6049
        %v6051 = vpop.f32.mrb[0].mxu0
        %6052 = vmatprep.mubr.f32.mxu0 %v5835
        %6053 = vmatmul.mubr.f32.gmra.mrb[0].mxu0 %v5721
        %v6054 = vpop.f32.mrb[0].mxu0
        %v6055 = vadd.f32 0.0, %v6054
        %v6056 = vpop.f32.mrb[0].mxu0
        %6057 = vmatprep.mubr.f32.mxu0 %v5838
        %6058 = vmatmul.mubr.f32.gmra.mrb[0].mxu0 %v5723
        %v6059 = vpop.f32.mrb[0].mxu0
        %v6060 = vadd.f32 0.0, %v6059
        %v6061 = vpop.f32.mrb[0].mxu0
        %6062 = vmatprep.mubr.f32.mxu0 %v5841
        %6063 = vmatmul.mubr.f32.gmra.mrb[0].mxu0 %v5725
        %v6064 = vpop.f32.mrb[0].mxu0
        %v6065 = vadd.f32 0.0, %v6064
        %v6066 = vpop.f32.mrb[0].mxu0
        %6067 = vdwg.mxu0
        %v6068 = vadd.f32 %v5505, %v5910
        %v6069 = vadd.f32 %v5510, %v5915
        %v6070 = vadd.f32 %v5515, %v5920
        %v6071 = vadd.f32 %v5520, %v5925
        %v6072 = vadd.f32 %v5525, %v5930
        %v6073 = vadd.f32 %v5530, %v5935
        %v6074 = vadd.f32 %v5535, %v5940
        %v6075 = vadd.f32 %v5540, %v5945
        %v6076 = vadd.f32 %v5545, %v5950
        %v6077 = vadd.f32 %v5550, %v5955
        %v6078 = vadd.f32 %v5555, %v5960
        %v6079 = vadd.f32 %v5560, %v5965
        %v6080 = vadd.f32 %v5565, %v5970
        %v6081 = vadd.f32 %v5570, %v5975
        %v6082 = vadd.f32 %v5575, %v5980
        %v6083 = vadd.f32 %v5580, %v5985
        %v6084 = vadd.f32 %v5585, %v5990
        %v6085 = vadd.f32 %v5590, %v5995
        %v6086 = vadd.f32 %v5595, %v6000
        %v6087 = vadd.f32 %v5600, %v6005
        %v6088 = vadd.f32 %v5605, %v6010
        %v6089 = vadd.f32 %v5610, %v6015
        %v6090 = vadd.f32 %v5615, %v6020
        %v6091 = vadd.f32 %v5620, %v6025
        %v6092 = vadd.f32 %v5625, %v6030
        %v6093 = vadd.f32 %v5630, %v6035
        %v6094 = vadd.f32 %v5635, %v6040
        %v6095 = vadd.f32 %v5640, %v6045
        %v6096 = vadd.f32 %v5645, %v6050
        %v6097 = vadd.f32 %v5650, %v6055
        %v6098 = vadd.f32 %v5655, %v6060
        %v6099 = vadd.f32 %v5660, %v6065
        %s6100 = scalar_lea.vmem %s8, %s2491
        %v6101 = vld [vmem:[%s6100] sm:$0x1]
        %v6103 = vlaneseq
        %v6104 = vshrl.u32 %v6103, 7
        %v6105 = vsub.s32 0, %v6104
        %v6106 = vrot.slane %v6101, %v6105
        %v6108 = vadd.f32 %v6068, %v6106
        %v6109 = vadd.f32 %v6069, %v6106
        %v6110 = vadd.f32 %v6070, %v6106
        %v6111 = vadd.f32 %v6071, %v6106
        %v6112 = vadd.f32 %v6072, %v6106
        %v6113 = vadd.f32 %v6073, %v6106
        %v6114 = vadd.f32 %v6074, %v6106
        %v6115 = vadd.f32 %v6075, %v6106
        %v6116 = vadd.f32 %v6076, %v6106
        %v6117 = vadd.f32 %v6077, %v6106
        %v6118 = vadd.f32 %v6078, %v6106
        %v6119 = vadd.f32 %v6079, %v6106
        %v6120 = vadd.f32 %v6080, %v6106
        %v6121 = vadd.f32 %v6081, %v6106
        %v6122 = vadd.f32 %v6082, %v6106
        %v6123 = vadd.f32 %v6083, %v6106
        %v6124 = vadd.f32 %v6084, %v6106
        %v6125 = vadd.f32 %v6085, %v6106
        %v6126 = vadd.f32 %v6086, %v6106
        %v6127 = vadd.f32 %v6087, %v6106
        %v6128 = vadd.f32 %v6088, %v6106
        %v6129 = vadd.f32 %v6089, %v6106
        %v6130 = vadd.f32 %v6090, %v6106
        %v6131 = vadd.f32 %v6091, %v6106
        %v6132 = vadd.f32 %v6092, %v6106
        %v6133 = vadd.f32 %v6093, %v6106
        %v6134 = vadd.f32 %v6094, %v6106
        %v6135 = vadd.f32 %v6095, %v6106
        %v6136 = vadd.f32 %v6096, %v6106
        %v6137 = vadd.f32 %v6097, %v6106
        %v6138 = vadd.f32 %v6098, %v6106
        %v6139 = vadd.f32 %v6099, %v6106
        %v6140 = vadd.f32 %v2528, %v6108
        %v6141 = vadd.f32 %v2529, %v6109
        %v6142 = vadd.f32 %v2530, %v6110
        %v6143 = vadd.f32 %v2531, %v6111
        %v6144 = vadd.f32 %v2532, %v6112
        %v6145 = vadd.f32 %v2533, %v6113
        %v6146 = vadd.f32 %v2534, %v6114
        %v6147 = vadd.f32 %v2535, %v6115
        %v6148 = vadd.f32 %v2536, %v6116
        %v6149 = vadd.f32 %v2537, %v6117
        %v6150 = vadd.f32 %v2538, %v6118
        %v6151 = vadd.f32 %v2539, %v6119
        %v6152 = vadd.f32 %v2540, %v6120
        %v6153 = vadd.f32 %v2541, %v6121
        %v6154 = vadd.f32 %v2542, %v6122
        %v6155 = vadd.f32 %v2543, %v6123
        %v6156 = vadd.f32 %v2544, %v6124
        %v6157 = vadd.f32 %v2545, %v6125
        %v6158 = vadd.f32 %v2546, %v6126
        %v6159 = vadd.f32 %v2547, %v6127
        %v6160 = vadd.f32 %v2548, %v6128
        %v6161 = vadd.f32 %v2549, %v6129
        %v6162 = vadd.f32 %v2550, %v6130
        %v6163 = vadd.f32 %v2551, %v6131
        %v6164 = vadd.f32 %v2552, %v6132
        %v6165 = vadd.f32 %v2553, %v6133
        %v6166 = vadd.f32 %v2554, %v6134
        %v6167 = vadd.f32 %v2555, %v6135
        %v6168 = vadd.f32 %v2556, %v6136
        %v6169 = vadd.f32 %v2557, %v6137
        %v6170 = vadd.f32 %v2558, %v6138
        %v6171 = vadd.f32 %v2559, %v6139
      $region69: #{context_adjustment_forward.1} parent=63 // loop_footer
        %s2495 = sadd.s32 1, %s2491
      $region70: #{context_adjustment_forward.1} parent=63 // loop_footer_branch
        %2490 = sbr.rel target = $region66
      $region71: #{context_adjustment_forward.1} parent=63 // loop_exit
        _
      %6172 = vst.msk [vmem:[#allocation2 + $0x1] sm:$0xff] %vm430, %v2496
      %6173 = vst.msk [vmem:[#allocation2 + $0x9] sm:$0xff] %vm430, %v2497
      %6174 = vst.msk [vmem:[#allocation2 + $0x19] sm:$0xff] %vm430, %v2498
      %6175 = vst.msk [vmem:[#allocation2 + $0x21] sm:$0xff] %vm430, %v2499
      %6176 = vst.msk [vmem:[#allocation2 + $0x31] sm:$0xff] %vm430, %v2500
      %6177 = vst.msk [vmem:[#allocation2 + $0x39] sm:$0xff] %vm430, %v2501
      %6178 = vst.msk [vmem:[#allocation2 + $0x49] sm:$0xff] %vm430, %v2502
      %6179 = vst.msk [vmem:[#allocation2 + $0x51] sm:$0xff] %vm430, %v2503
      %6180 = vst.msk [vmem:[#allocation2 + $0x61] sm:$0xff] %vm430, %v2504
      %6181 = vst.msk [vmem:[#allocation2 + $0x69] sm:$0xff] %vm430, %v2505
      %6182 = vst.msk [vmem:[#allocation2 + $0x79] sm:$0xff] %vm430, %v2506
      %6183 = vst.msk [vmem:[#allocation2 + $0x81] sm:$0xff] %vm430, %v2507
      %6184 = vst.msk [vmem:[#allocation2 + $0x91] sm:$0xff] %vm430, %v2508
      %6185 = vst.msk [vmem:[#allocation2 + $0x99] sm:$0xff] %vm430, %v2509
      %6186 = vst.msk [vmem:[#allocation2 + $0xa9] sm:$0xff] %vm430, %v2510
      %6187 = vst.msk [vmem:[#allocation2 + $0xb1] sm:$0xff] %vm430, %v2511
      %6188 = vst.msk [vmem:[#allocation2 + $0xc1] sm:$0xff] %vm430, %v2512
      %6189 = vst.msk [vmem:[#allocation2 + $0xc9] sm:$0xff] %vm430, %v2513
      %6190 = vst.msk [vmem:[#allocation2 + $0xd9] sm:$0xff] %vm430, %v2514
      %6191 = vst.msk [vmem:[#allocation2 + $0xe1] sm:$0xff] %vm430, %v2515
      %6192 = vst.msk [vmem:[#allocation2 + $0xf1] sm:$0xff] %vm430, %v2516
      %6193 = vst.msk [vmem:[#allocation2 + $0xf9] sm:$0xff] %vm430, %v2517
      %6194 = vst.msk [vmem:[#allocation2 + $0x109] sm:$0xff] %vm430, %v2518
      %6195 = vst.msk [vmem:[#allocation2 + $0x111] sm:$0xff] %vm430, %v2519
      %6196 = vst.msk [vmem:[#allocation2 + $0x121] sm:$0xff] %vm430, %v2520
      %6197 = vst.msk [vmem:[#allocation2 + $0x129] sm:$0xff] %vm430, %v2521
      %6198 = vst.msk [vmem:[#allocation2 + $0x139] sm:$0xff] %vm430, %v2522
      %6199 = vst.msk [vmem:[#allocation2 + $0x141] sm:$0xff] %vm430, %v2523
      %6200 = vst.msk [vmem:[#allocation2 + $0x151] sm:$0xff] %vm430, %v2524
      %6201 = vst.msk [vmem:[#allocation2 + $0x159] sm:$0xff] %vm430, %v2525
      %6202 = vst.msk [vmem:[#allocation2 + $0x169] sm:$0xff] %vm430, %v2526
      %6203 = vst.msk [vmem:[#allocation2 + $0x171] sm:$0xff] %vm430, %v2527
      %v6204 = vld [vmem:[#allocation2] sm:$0xff]
      %v6205 = vld [vmem:[#allocation2 + $0x8] sm:$0xff]
      %v6206 = vld [vmem:[#allocation2 + $0x18] sm:$0xff]
      %v6207 = vld [vmem:[#allocation2 + $0x20] sm:$0xff]
      %v6208 = vld [vmem:[#allocation2 + $0x30] sm:$0xff]
      %v6209 = vld [vmem:[#allocation2 + $0x38] sm:$0xff]
      %v6210 = vld [vmem:[#allocation2 + $0x48] sm:$0xff]
      %v6211 = vld [vmem:[#allocation2 + $0x50] sm:$0xff]
      %v6212 = vld [vmem:[#allocation2 + $0x60] sm:$0xff]
      %v6213 = vld [vmem:[#allocation2 + $0x68] sm:$0xff]
      %v6214 = vld [vmem:[#allocation2 + $0x78] sm:$0xff]
      %v6215 = vld [vmem:[#allocation2 + $0x80] sm:$0xff]
      %v6216 = vld [vmem:[#allocation2 + $0x90] sm:$0xff]
      %v6217 = vld [vmem:[#allocation2 + $0x98] sm:$0xff]
      %v6218 = vld [vmem:[#allocation2 + $0xa8] sm:$0xff]
      %v6219 = vld [vmem:[#allocation2 + $0xb0] sm:$0xff]
      %v6220 = vld [vmem:[#allocation2 + $0xc0] sm:$0xff]
      %v6221 = vld [vmem:[#allocation2 + $0xc8] sm:$0xff]
      %v6222 = vld [vmem:[#allocation2 + $0xd8] sm:$0xff]
      %v6223 = vld [vmem:[#allocation2 + $0xe0] sm:$0xff]
      %v6224 = vld [vmem:[#allocation2 + $0xf0] sm:$0xff]
      %v6225 = vld [vmem:[#allocation2 + $0xf8] sm:$0xff]
      %v6226 = vld [vmem:[#allocation2 + $0x108] sm:$0xff]
      %v6227 = vld [vmem:[#allocation2 + $0x110] sm:$0xff]
      %v6228 = vld [vmem:[#allocation2 + $0x120] sm:$0xff]
      %v6229 = vld [vmem:[#allocation2 + $0x128] sm:$0xff]
      %v6230 = vld [vmem:[#allocation2 + $0x138] sm:$0xff]
      %v6231 = vld [vmem:[#allocation2 + $0x140] sm:$0xff]
      %v6232 = vld [vmem:[#allocation2 + $0x150] sm:$0xff]
      %v6233 = vld [vmem:[#allocation2 + $0x158] sm:$0xff]
      %v6234 = vld [vmem:[#allocation2 + $0x168] sm:$0xff]
      %v6235 = vld [vmem:[#allocation2 + $0x170] sm:$0xff]
      %v6236 = vld [vmem:[#allocation2 + $0x2] sm:$0xff]
      %v6237 = vld [vmem:[#allocation2 + $0xa] sm:$0xff]
      %v6238 = vld [vmem:[#allocation2 + $0x1a] sm:$0xff]
      %v6239 = vld [vmem:[#allocation2 + $0x22] sm:$0xff]
      %v6240 = vld [vmem:[#allocation2 + $0x32] sm:$0xff]
      %v6241 = vld [vmem:[#allocation2 + $0x3a] sm:$0xff]
      %v6242 = vld [vmem:[#allocation2 + $0x4a] sm:$0xff]
      %v6243 = vld [vmem:[#allocation2 + $0x52] sm:$0xff]
      %v6244 = vld [vmem:[#allocation2 + $0x62] sm:$0xff]
      %v6245 = vld [vmem:[#allocation2 + $0x6a] sm:$0xff]
      %v6246 = vld [vmem:[#allocation2 + $0x7a] sm:$0xff]
      %v6247 = vld [vmem:[#allocation2 + $0x82] sm:$0xff]
      %v6248 = vld [vmem:[#allocation2 + $0x92] sm:$0xff]
      %v6249 = vld [vmem:[#allocation2 + $0x9a] sm:$0xff]
      %v6250 = vld [vmem:[#allocation2 + $0xaa] sm:$0xff]
      %v6251 = vld [vmem:[#allocation2 + $0xb2] sm:$0xff]
      %v6252 = vld [vmem:[#allocation2 + $0xc2] sm:$0xff]
      %v6253 = vld [vmem:[#allocation2 + $0xca] sm:$0xff]
      %v6254 = vld [vmem:[#allocation2 + $0xda] sm:$0xff]
      %v6255 = vld [vmem:[#allocation2 + $0xe2] sm:$0xff]
      %v6256 = vld [vmem:[#allocation2 + $0xf2] sm:$0xff]
      %v6257 = vld [vmem:[#allocation2 + $0xfa] sm:$0xff]
      %v6258 = vld [vmem:[#allocation2 + $0x10a] sm:$0xff]
      %v6259 = vld [vmem:[#allocation2 + $0x112] sm:$0xff]
      %v6260 = vld [vmem:[#allocation2 + $0x122] sm:$0xff]
      %v6261 = vld [vmem:[#allocation2 + $0x12a] sm:$0xff]
      %v6262 = vld [vmem:[#allocation2 + $0x13a] sm:$0xff]
      %v6263 = vld [vmem:[#allocation2 + $0x142] sm:$0xff]
      %v6264 = vld [vmem:[#allocation2 + $0x152] sm:$0xff]
      %v6265 = vld [vmem:[#allocation2 + $0x15a] sm:$0xff]
      %v6266 = vld [vmem:[#allocation2 + $0x16a] sm:$0xff]
      %v6267 = vld [vmem:[#allocation2 + $0x172] sm:$0xff]
      %6300 = vrot.lane.b32.xlu0 %v2496, 16
      %v6301 = vpop.permute.xlu0 %6300
      %6302 = vrot.lane.b32.xlu0 %v2497, 16
      %v6303 = vpop.permute.xlu0 %6302
      %6304 = vrot.lane.b32.xlu0 %v2498, 16
      %v6305 = vpop.permute.xlu0 %6304
      %6306 = vrot.lane.b32.xlu0 %v2499, 16
      %v6307 = vpop.permute.xlu0 %6306
      %6308 = vrot.lane.b32.xlu0 %v2500, 16
      %v6309 = vpop.permute.xlu0 %6308
      %6310 = vrot.lane.b32.xlu0 %v2501, 16
      %v6311 = vpop.permute.xlu0 %6310
      %6312 = vrot.lane.b32.xlu0 %v2502, 16
      %v6313 = vpop.permute.xlu0 %6312
      %6314 = vrot.lane.b32.xlu0 %v2503, 16
      %v6315 = vpop.permute.xlu0 %6314
      %6316 = vrot.lane.b32.xlu0 %v2504, 16
      %v6317 = vpop.permute.xlu0 %6316
      %6318 = vrot.lane.b32.xlu0 %v2505, 16
      %v6319 = vpop.permute.xlu0 %6318
      %6320 = vrot.lane.b32.xlu0 %v2506, 16
      %v6321 = vpop.permute.xlu0 %6320
      %6322 = vrot.lane.b32.xlu0 %v2507, 16
      %v6323 = vpop.permute.xlu0 %6322
      %6324 = vrot.lane.b32.xlu0 %v2508, 16
      %v6325 = vpop.permute.xlu0 %6324
      %6326 = vrot.lane.b32.xlu0 %v2509, 16
      %v6327 = vpop.permute.xlu0 %6326
      %6328 = vrot.lane.b32.xlu0 %v2510, 16
      %v6329 = vpop.permute.xlu0 %6328
      %6330 = vrot.lane.b32.xlu0 %v2511, 16
      %v6331 = vpop.permute.xlu0 %6330
      %6332 = vrot.lane.b32.xlu0 %v2512, 16
      %v6333 = vpop.permute.xlu0 %6332
      %6334 = vrot.lane.b32.xlu0 %v2513, 16
      %v6335 = vpop.permute.xlu0 %6334
      %6336 = vrot.lane.b32.xlu0 %v2514, 16
      %v6337 = vpop.permute.xlu0 %6336
      %6338 = vrot.lane.b32.xlu0 %v2515, 16
      %v6339 = vpop.permute.xlu0 %6338
      %6340 = vrot.lane.b32.xlu0 %v2516, 16
      %v6341 = vpop.permute.xlu0 %6340
      %6342 = vrot.lane.b32.xlu0 %v2517, 16
      %v6343 = vpop.permute.xlu0 %6342
      %6344 = vrot.lane.b32.xlu0 %v2518, 16
      %v6345 = vpop.permute.xlu0 %6344
      %6346 = vrot.lane.b32.xlu0 %v2519, 16
      %v6347 = vpop.permute.xlu0 %6346
      %6348 = vrot.lane.b32.xlu0 %v2520, 16
      %v6349 = vpop.permute.xlu0 %6348
      %6350 = vrot.lane.b32.xlu0 %v2521, 16
      %v6351 = vpop.permute.xlu0 %6350
      %6352 = vrot.lane.b32.xlu0 %v2522, 16
      %v6353 = vpop.permute.xlu0 %6352
      %6354 = vrot.lane.b32.xlu0 %v2523, 16
      %v6355 = vpop.permute.xlu0 %6354
      %6356 = vrot.lane.b32.xlu0 %v2524, 16
      %v6357 = vpop.permute.xlu0 %6356
      %6358 = vrot.lane.b32.xlu0 %v2525, 16
      %v6359 = vpop.permute.xlu0 %6358
      %6360 = vrot.lane.b32.xlu0 %v2526, 16
      %v6361 = vpop.permute.xlu0 %6360
      %6362 = vrot.lane.b32.xlu0 %v2527, 16
      %v6363 = vpop.permute.xlu0 %6362
      %6428 = vrot.lane.b32.xlu0 %v6236, 32
      %v6429 = vpop.permute.xlu0 %6428
      %6430 = vrot.lane.b32.xlu0 %v6237, 32
      %v6431 = vpop.permute.xlu0 %6430
      %6432 = vrot.lane.b32.xlu0 %v6238, 32
      %v6433 = vpop.permute.xlu0 %6432
      %6434 = vrot.lane.b32.xlu0 %v6239, 32
      %v6435 = vpop.permute.xlu0 %6434
      %6436 = vrot.lane.b32.xlu0 %v6240, 32
      %v6437 = vpop.permute.xlu0 %6436
      %6438 = vrot.lane.b32.xlu0 %v6241, 32
      %v6439 = vpop.permute.xlu0 %6438
      %6440 = vrot.lane.b32.xlu0 %v6242, 32
      %v6441 = vpop.permute.xlu0 %6440
      %6442 = vrot.lane.b32.xlu0 %v6243, 32
      %v6443 = vpop.permute.xlu0 %6442
      %6444 = vrot.lane.b32.xlu0 %v6244, 32
      %v6445 = vpop.permute.xlu0 %6444
      %6446 = vrot.lane.b32.xlu0 %v6245, 32
      %v6447 = vpop.permute.xlu0 %6446
      %6448 = vrot.lane.b32.xlu0 %v6246, 32
      %v6449 = vpop.permute.xlu0 %6448
      %6450 = vrot.lane.b32.xlu0 %v6247, 32
      %v6451 = vpop.permute.xlu0 %6450
      %6452 = vrot.lane.b32.xlu0 %v6248, 32
      %v6453 = vpop.permute.xlu0 %6452
      %6454 = vrot.lane.b32.xlu0 %v6249, 32
      %v6455 = vpop.permute.xlu0 %6454
      %6456 = vrot.lane.b32.xlu0 %v6250, 32
      %v6457 = vpop.permute.xlu0 %6456
      %6458 = vrot.lane.b32.xlu0 %v6251, 32
      %v6459 = vpop.permute.xlu0 %6458
      %6460 = vrot.lane.b32.xlu0 %v6252, 32
      %v6461 = vpop.permute.xlu0 %6460
      %6462 = vrot.lane.b32.xlu0 %v6253, 32
      %v6463 = vpop.permute.xlu0 %6462
      %6464 = vrot.lane.b32.xlu0 %v6254, 32
      %v6465 = vpop.permute.xlu0 %6464
      %6466 = vrot.lane.b32.xlu0 %v6255, 32
      %v6467 = vpop.permute.xlu0 %6466
      %6468 = vrot.lane.b32.xlu0 %v6256, 32
      %v6469 = vpop.permute.xlu0 %6468
      %6470 = vrot.lane.b32.xlu0 %v6257, 32
      %v6471 = vpop.permute.xlu0 %6470
      %6472 = vrot.lane.b32.xlu0 %v6258, 32
      %v6473 = vpop.permute.xlu0 %6472
      %6474 = vrot.lane.b32.xlu0 %v6259, 32
      %v6475 = vpop.permute.xlu0 %6474
      %6476 = vrot.lane.b32.xlu0 %v6260, 32
      %v6477 = vpop.permute.xlu0 %6476
      %6478 = vrot.lane.b32.xlu0 %v6261, 32
      %v6479 = vpop.permute.xlu0 %6478
      %6480 = vrot.lane.b32.xlu0 %v6262, 32
      %v6481 = vpop.permute.xlu0 %6480
      %6482 = vrot.lane.b32.xlu0 %v6263, 32
      %v6483 = vpop.permute.xlu0 %6482
      %6484 = vrot.lane.b32.xlu0 %v6264, 32
      %v6485 = vpop.permute.xlu0 %6484
      %6486 = vrot.lane.b32.xlu0 %v6265, 32
      %v6487 = vpop.permute.xlu0 %6486
      %6488 = vrot.lane.b32.xlu0 %v6266, 32
      %v6489 = vpop.permute.xlu0 %6488
      %6490 = vrot.lane.b32.xlu0 %v6267, 32
      %v6491 = vpop.permute.xlu0 %6490
      %v6524 = vsel %vm430, %v6204, %v6301
      %v6525 = vsel %vm430, %v6205, %v6303
      %v6526 = vsel %vm430, %v6206, %v6305
      %v6527 = vsel %vm430, %v6207, %v6307
      %v6528 = vsel %vm430, %v6208, %v6309
      %v6529 = vsel %vm430, %v6209, %v6311
      %v6530 = vsel %vm430, %v6210, %v6313
      %v6531 = vsel %vm430, %v6211, %v6315
      %v6532 = vsel %vm430, %v6212, %v6317
      %v6533 = vsel %vm430, %v6213, %v6319
      %v6534 = vsel %vm430, %v6214, %v6321
      %v6535 = vsel %vm430, %v6215, %v6323
      %v6536 = vsel %vm430, %v6216, %v6325
      %v6537 = vsel %vm430, %v6217, %v6327
      %v6538 = vsel %vm430, %v6218, %v6329
      %v6539 = vsel %vm430, %v6219, %v6331
      %v6540 = vsel %vm430, %v6220, %v6333
      %v6541 = vsel %vm430, %v6221, %v6335
      %v6542 = vsel %vm430, %v6222, %v6337
      %v6543 = vsel %vm430, %v6223, %v6339
      %v6544 = vsel %vm430, %v6224, %v6341
      %v6545 = vsel %vm430, %v6225, %v6343
      %v6546 = vsel %vm430, %v6226, %v6345
      %v6547 = vsel %vm430, %v6227, %v6347
      %v6548 = vsel %vm430, %v6228, %v6349
      %v6549 = vsel %vm430, %v6229, %v6351
      %v6550 = vsel %vm430, %v6230, %v6353
      %v6551 = vsel %vm430, %v6231, %v6355
      %v6552 = vsel %vm430, %v6232, %v6357
      %v6553 = vsel %vm430, %v6233, %v6359
      %v6554 = vsel %vm430, %v6234, %v6361
      %v6555 = vsel %vm430, %v6235, %v6363
      %vm6556 = vcmask 261120
      %v6557 = vsel %vm6556, %v6524, %v6429
      %v6558 = vsel %vm6556, %v6525, %v6431
      %v6559 = vsel %vm6556, %v6526, %v6433
      %v6560 = vsel %vm6556, %v6527, %v6435
      %v6561 = vsel %vm6556, %v6528, %v6437
      %v6562 = vsel %vm6556, %v6529, %v6439
      %v6563 = vsel %vm6556, %v6530, %v6441
      %v6564 = vsel %vm6556, %v6531, %v6443
      %v6565 = vsel %vm6556, %v6532, %v6445
      %v6566 = vsel %vm6556, %v6533, %v6447
      %v6567 = vsel %vm6556, %v6534, %v6449
      %v6568 = vsel %vm6556, %v6535, %v6451
      %v6569 = vsel %vm6556, %v6536, %v6453
      %v6570 = vsel %vm6556, %v6537, %v6455
      %v6571 = vsel %vm6556, %v6538, %v6457
      %v6572 = vsel %vm6556, %v6539, %v6459
      %v6573 = vsel %vm6556, %v6540, %v6461
      %v6574 = vsel %vm6556, %v6541, %v6463
      %v6575 = vsel %vm6556, %v6542, %v6465
      %v6576 = vsel %vm6556, %v6543, %v6467
      %v6577 = vsel %vm6556, %v6544, %v6469
      %v6578 = vsel %vm6556, %v6545, %v6471
      %v6579 = vsel %vm6556, %v6546, %v6473
      %v6580 = vsel %vm6556, %v6547, %v6475
      %v6581 = vsel %vm6556, %v6548, %v6477
      %v6582 = vsel %vm6556, %v6549, %v6479
      %v6583 = vsel %vm6556, %v6550, %v6481
      %v6584 = vsel %vm6556, %v6551, %v6483
      %v6585 = vsel %vm6556, %v6552, %v6485
      %v6586 = vsel %vm6556, %v6553, %v6487
      %v6587 = vsel %vm6556, %v6554, %v6489
      %v6588 = vsel %vm6556, %v6555, %v6491
      %vm6589 = vcmask 392192
      %6590 = vst.msk [vmem:[%s1307] sm:$0xff] %vm6589, %v6557
      %6591 = vst.msk [vmem:[%s1307 + $0x10] sm:$0xff] %vm6589, %v6558
      %6592 = vst.msk [vmem:[%s1307 + $0x20] sm:$0xff] %vm6589, %v6559
      %6593 = vst.msk [vmem:[%s1307 + $0x30] sm:$0xff] %vm6589, %v6560
      %6594 = vst.msk [vmem:[%s1307 + $0x40] sm:$0xff] %vm6589, %v6561
      %6595 = vst.msk [vmem:[%s1307 + $0x50] sm:$0xff] %vm6589, %v6562
      %6596 = vst.msk [vmem:[%s1307 + $0x60] sm:$0xff] %vm6589, %v6563
      %6597 = vst.msk [vmem:[%s1307 + $0x70] sm:$0xff] %vm6589, %v6564
      %6598 = vst.msk [vmem:[%s1307 + $0x80] sm:$0xff] %vm6589, %v6565
      %6599 = vst.msk [vmem:[%s1307 + $0x90] sm:$0xff] %vm6589, %v6566
      %6600 = vst.msk [vmem:[%s1307 + $0xa0] sm:$0xff] %vm6589, %v6567
      %6601 = vst.msk [vmem:[%s1307 + $0xb0] sm:$0xff] %vm6589, %v6568
      %6602 = vst.msk [vmem:[%s1307 + $0xc0] sm:$0xff] %vm6589, %v6569
      %6603 = vst.msk [vmem:[%s1307 + $0xd0] sm:$0xff] %vm6589, %v6570
      %6604 = vst.msk [vmem:[%s1307 + $0xe0] sm:$0xff] %vm6589, %v6571
      %6605 = vst.msk [vmem:[%s1307 + $0xf0] sm:$0xff] %vm6589, %v6572
      %6606 = vst.msk [vmem:[%s1307 + $0x100] sm:$0xff] %vm6589, %v6573
      %6607 = vst.msk [vmem:[%s1307 + $0x110] sm:$0xff] %vm6589, %v6574
      %6608 = vst.msk [vmem:[%s1307 + $0x120] sm:$0xff] %vm6589, %v6575
      %6609 = vst.msk [vmem:[%s1307 + $0x130] sm:$0xff] %vm6589, %v6576
      %6610 = vst.msk [vmem:[%s1307 + $0x140] sm:$0xff] %vm6589, %v6577
      %6611 = vst.msk [vmem:[%s1307 + $0x150] sm:$0xff] %vm6589, %v6578
      %6612 = vst.msk [vmem:[%s1307 + $0x160] sm:$0xff] %vm6589, %v6579
      %6613 = vst.msk [vmem:[%s1307 + $0x170] sm:$0xff] %vm6589, %v6580
      %6614 = vst.msk [vmem:[%s1307 + $0x180] sm:$0xff] %vm6589, %v6581
      %6615 = vst.msk [vmem:[%s1307 + $0x190] sm:$0xff] %vm6589, %v6582
      %6616 = vst.msk [vmem:[%s1307 + $0x1a0] sm:$0xff] %vm6589, %v6583
      %6617 = vst.msk [vmem:[%s1307 + $0x1b0] sm:$0xff] %vm6589, %v6584
      %6618 = vst.msk [vmem:[%s1307 + $0x1c0] sm:$0xff] %vm6589, %v6585
      %6619 = vst.msk [vmem:[%s1307 + $0x1d0] sm:$0xff] %vm6589, %v6586
      %6620 = vst.msk [vmem:[%s1307 + $0x1e0] sm:$0xff] %vm6589, %v6587
      %6621 = vst.msk [vmem:[%s1307 + $0x1f0] sm:$0xff] %vm6589, %v6588
      %v6622 = vld [vmem:[#allocation3] sm:$0xff]
      %v6623 = vld [vmem:[#allocation3 + $0x10] sm:$0xff]
      %v6624 = vld [vmem:[#allocation3 + $0x20] sm:$0xff]
      %v6625 = vld [vmem:[#allocation3 + $0x30] sm:$0xff]
      %v6626 = vld [vmem:[#allocation3 + $0x40] sm:$0xff]
      %v6627 = vld [vmem:[#allocation3 + $0x50] sm:$0xff]
      %v6628 = vld [vmem:[#allocation3 + $0x60] sm:$0xff]
      %v6629 = vld [vmem:[#allocation3 + $0x70] sm:$0xff]
      %v6630 = vld [vmem:[#allocation3 + $0x80] sm:$0xff]
      %v6631 = vld [vmem:[#allocation3 + $0x90] sm:$0xff]
      %v6632 = vld [vmem:[#allocation3 + $0xa0] sm:$0xff]
      %v6633 = vld [vmem:[#allocation3 + $0xb0] sm:$0xff]
      %v6634 = vld [vmem:[#allocation3 + $0xc0] sm:$0xff]
      %v6635 = vld [vmem:[#allocation3 + $0xd0] sm:$0xff]
      %v6636 = vld [vmem:[#allocation3 + $0xe0] sm:$0xff]
      %v6637 = vld [vmem:[#allocation3 + $0xf0] sm:$0xff]
      %v6638 = vld [vmem:[#allocation3 + $0x100] sm:$0xff]
      %v6639 = vld [vmem:[#allocation3 + $0x110] sm:$0xff]
      %v6640 = vld [vmem:[#allocation3 + $0x120] sm:$0xff]
      %v6641 = vld [vmem:[#allocation3 + $0x130] sm:$0xff]
      %v6642 = vld [vmem:[#allocation3 + $0x140] sm:$0xff]
      %v6643 = vld [vmem:[#allocation3 + $0x150] sm:$0xff]
      %v6644 = vld [vmem:[#allocation3 + $0x160] sm:$0xff]
      %v6645 = vld [vmem:[#allocation3 + $0x170] sm:$0xff]
      %v6646 = vld [vmem:[#allocation3 + $0x180] sm:$0xff]
      %v6647 = vld [vmem:[#allocation3 + $0x190] sm:$0xff]
      %v6648 = vld [vmem:[#allocation3 + $0x1a0] sm:$0xff]
      %v6649 = vld [vmem:[#allocation3 + $0x1b0] sm:$0xff]
      %v6650 = vld [vmem:[#allocation3 + $0x1c0] sm:$0xff]
      %v6651 = vld [vmem:[#allocation3 + $0x1d0] sm:$0xff]
      %v6652 = vld [vmem:[#allocation3 + $0x1e0] sm:$0xff]
      %v6653 = vld [vmem:[#allocation3 + $0x1f0] sm:$0xff]
      %v6654 = vld [vmem:[%s9] sm:$0xff]
      %v6655 = vld [vmem:[%s9 + $0x8] sm:$0xff]
      %v6656 = vld [vmem:[%s9 + $0x10] sm:$0xff]
      %v6657 = vld [vmem:[%s9 + $0x18] sm:$0xff]
      %v6658 = vld [vmem:[%s9 + $0x20] sm:$0xff]
      %v6659 = vld [vmem:[%s9 + $0x28] sm:$0xff]
      %v6660 = vld [vmem:[%s1307] sm:$0xff]
      %v6661 = vld [vmem:[%s1307 + $0x10] sm:$0xff]
      %v6662 = vld [vmem:[%s1307 + $0x20] sm:$0xff]
      %v6663 = vld [vmem:[%s1307 + $0x30] sm:$0xff]
      %v6664 = vld [vmem:[%s1307 + $0x40] sm:$0xff]
      %v6665 = vld [vmem:[%s1307 + $0x50] sm:$0xff]
      %v6666 = vld [vmem:[%s1307 + $0x60] sm:$0xff]
      %v6667 = vld [vmem:[%s1307 + $0x70] sm:$0xff]
      %v6668 = vld [vmem:[%s1307 + $0x80] sm:$0xff]
      %v6669 = vld [vmem:[%s1307 + $0x90] sm:$0xff]
      %v6670 = vld [vmem:[%s1307 + $0xa0] sm:$0xff]
      %v6671 = vld [vmem:[%s1307 + $0xb0] sm:$0xff]
      %v6672 = vld [vmem:[%s1307 + $0xc0] sm:$0xff]
      %v6673 = vld [vmem:[%s1307 + $0xd0] sm:$0xff]
      %v6674 = vld [vmem:[%s1307 + $0xe0] sm:$0xff]
      %v6675 = vld [vmem:[%s1307 + $0xf0] sm:$0xff]
      %v6676 = vld [vmem:[%s1307 + $0x100] sm:$0xff]
      %v6677 = vld [vmem:[%s1307 + $0x110] sm:$0xff]
      %v6678 = vld [vmem:[%s1307 + $0x120] sm:$0xff]
      %v6679 = vld [vmem:[%s1307 + $0x130] sm:$0xff]
      %v6680 = vld [vmem:[%s1307 + $0x140] sm:$0xff]
      %v6681 = vld [vmem:[%s1307 + $0x150] sm:$0xff]
      %v6682 = vld [vmem:[%s1307 + $0x160] sm:$0xff]
      %v6683 = vld [vmem:[%s1307 + $0x170] sm:$0xff]
      %v6684 = vld [vmem:[%s1307 + $0x180] sm:$0xff]
      %v6685 = vld [vmem:[%s1307 + $0x190] sm:$0xff]
      %v6686 = vld [vmem:[%s1307 + $0x1a0] sm:$0xff]
      %v6687 = vld [vmem:[%s1307 + $0x1b0] sm:$0xff]
      %v6688 = vld [vmem:[%s1307 + $0x1c0] sm:$0xff]
      %v6689 = vld [vmem:[%s1307 + $0x1d0] sm:$0xff]
      %v6690 = vld [vmem:[%s1307 + $0x1e0] sm:$0xff]
      %v6691 = vld [vmem:[%s1307 + $0x1f0] sm:$0xff]
      %s6692 = scalar_lea.vmem %s9, 48
      %v6693 = vld [vmem:[%s6692] sm:$0xff]
      %v6694 = vld [vmem:[%s6692 + $0x8] sm:$0xff]
      %v6695 = vld [vmem:[%s6692 + $0x10] sm:$0xff]
      %v6696 = vld [vmem:[%s6692 + $0x18] sm:$0xff]
      %v6697 = vld [vmem:[%s6692 + $0x20] sm:$0xff]
      %v6698 = vld [vmem:[%s6692 + $0x28] sm:$0xff]
      %v6700 = vsel %vm6589, %v6660, 0
      %v6703 = vsel %vm6589, %v6661, 0
      %v6706 = vsel %vm6589, %v6662, 0
      %v6709 = vsel %vm6589, %v6663, 0
      %v6712 = vsel %vm6589, %v6664, 0
      %v6715 = vsel %vm6589, %v6665, 0
      %v6718 = vsel %vm6589, %v6666, 0
      %v6721 = vsel %vm6589, %v6667, 0
      %v6724 = vsel %vm6589, %v6668, 0
      %v6727 = vsel %vm6589, %v6669, 0
      %v6730 = vsel %vm6589, %v6670, 0
      %v6733 = vsel %vm6589, %v6671, 0
      %v6736 = vsel %vm6589, %v6672, 0
      %v6739 = vsel %vm6589, %v6673, 0
      %v6742 = vsel %vm6589, %v6674, 0
      %v6745 = vsel %vm6589, %v6675, 0
      %v6748 = vsel %vm6589, %v6676, 0
      %v6751 = vsel %vm6589, %v6677, 0
      %v6754 = vsel %vm6589, %v6678, 0
      %v6757 = vsel %vm6589, %v6679, 0
      %v6760 = vsel %vm6589, %v6680, 0
      %v6763 = vsel %vm6589, %v6681, 0
      %v6766 = vsel %vm6589, %v6682, 0
      %v6769 = vsel %vm6589, %v6683, 0
      %v6772 = vsel %vm6589, %v6684, 0
      %v6775 = vsel %vm6589, %v6685, 0
      %v6778 = vsel %vm6589, %v6686, 0
      %v6781 = vsel %vm6589, %v6687, 0
      %v6784 = vsel %vm6589, %v6688, 0
      %v6787 = vsel %vm6589, %v6689, 0
      %v6790 = vsel %vm6589, %v6690, 0
      %v6793 = vsel %vm6589, %v6691, 0
      %6795 = vmatprep.subr.mxu0 0.0
      %6796 = vmatpush1.msra.mxu0 %v6693
      %6797 = vmatprep.subr.mxu0 0.0
      %6798 = vmatpush1.msra.mxu0 %v6694
      %6799 = vmatprep.subr.mxu0 0.0
      %6800 = vmatpush1.msra.mxu0 %v6695
      %6801 = vmatprep.subr.mxu0 0.0
      %6802 = vmatpush1.msra.mxu0 %v6696
      %6803 = vmatprep.subr.mxu0 0.0
      %6804 = vmatpush1.msra.mxu0 %v6697
      %6805 = vmatprep.subr.mxu0 0.0
      %6806 = vmatpush1.msra.mxu0 %v6698
      %6807 = vmatprep.subr.mxu0 0.0
      %6808 = vmatpush1.msra.mxu0 0.0
      %6809 = vmatprep.subr.mxu0 0.0
      %6810 = vmatpush1.msra.mxu0 0.0
      %6811 = vmatprep.subr.mxu0 0.0
      %6812 = vmatpush1.msra.mxu0 0.0
      %6813 = vmatprep.subr.mxu0 0.0
      %6814 = vmatpush1.msra.mxu0 0.0
      %6815 = vmatprep.subr.mxu0 0.0
      %6816 = vmatpush1.msra.mxu0 0.0
      %6817 = vmatprep.subr.mxu0 0.0
      %6818 = vmatpush1.msra.mxu0 0.0
      %6819 = vmatprep.subr.mxu0 0.0
      %6820 = vmatpush1.msra.mxu0 0.0
      %6821 = vmatprep.subr.mxu0 0.0
      %6822 = vmatpush1.msra.mxu0 0.0
      %6823 = vmatprep.subr.mxu0 0.0
      %6824 = vmatpush1.msra.mxu0 0.0
      %6825 = vmatprep.subr.mxu0 0.0
      %6826 = vmatpush1.msra.mxu0 0.0
      %6827 = vmatprep.subr.mxu0 0.0
      %6828 = vmatpush1.msra.mxu0 0.0
      %6829 = vmatprep.subr.mxu0 0.0
      %6830 = vmatpush1.msra.mxu0 0.0
      %6831 = vmatprep.subr.mxu0 0.0
      %6832 = vmatpush1.msra.mxu0 0.0
      %6833 = vmatprep.subr.mxu0 0.0
      %6834 = vmatpush1.msra.mxu0 0.0
      %6835 = vmatprep.subr.mxu0 0.0
      %6836 = vmatpush1.msra.mxu0 0.0
      %6837 = vmatprep.subr.mxu0 0.0
      %6838 = vmatpush1.msra.mxu0 0.0
      %6839 = vmatprep.subr.mxu0 0.0
      %6840 = vmatpush1.msra.mxu0 0.0
      %6841 = vmatprep.subr.mxu0 0.0
      %6842 = vmatpush1.msra.mxu0 0.0
      %6843 = vmatprep.subr.mxu0 0.0
      %6844 = vmatpush1.msra.mxu0 0.0
      %6845 = vmatprep.subr.mxu0 0.0
      %6846 = vmatpush1.msra.mxu0 0.0
      %6847 = vmatprep.subr.mxu0 0.0
      %6848 = vmatpush1.msra.mxu0 0.0
      %6849 = vmatprep.subr.mxu0 0.0
      %6850 = vmatpush1.msra.mxu0 0.0
      %6851 = vmatprep.subr.mxu0 0.0
      %6852 = vmatpush1.msra.mxu0 0.0
      %6853 = vmatprep.subr.mxu0 0.0
      %6854 = vmatpush1.msra.mxu0 0.0
      %6855 = vmatprep.subr.mxu0 0.0
      %6856 = vmatpush1.msra.mxu0 0.0
      %6857 = vmatprep.subr.mxu0 0.0
      %6858 = vmatpush1.msra.mxu0 0.0
      %6859 = vmatprep.mubr.f32.mxu0 0.0
      %6860 = vmatmul.mubr.f32.gmra.mrb[0].mxu0 %v6700
      %v6861 = vpop.f32.mrb[0].mxu0
      %v6862 = vadd.f32 0.0, %v6861
      %v6863 = vpop.f32.mrb[0].mxu0
      %6864 = vmatprep.mubr.f32.mxu0 0.0
      %6865 = vmatmul.mubr.f32.gmra.mrb[0].mxu0 %v6703
      %v6866 = vpop.f32.mrb[0].mxu0
      %v6867 = vadd.f32 0.0, %v6866
      %v6868 = vpop.f32.mrb[0].mxu0
      %6869 = vmatprep.mubr.f32.mxu0 0.0
      %6870 = vmatmul.mubr.f32.gmra.mrb[0].mxu0 %v6706
      %v6871 = vpop.f32.mrb[0].mxu0
      %v6872 = vadd.f32 0.0, %v6871
      %v6873 = vpop.f32.mrb[0].mxu0
      %6874 = vmatprep.mubr.f32.mxu0 0.0
      %6875 = vmatmul.mubr.f32.gmra.mrb[0].mxu0 %v6709
      %v6876 = vpop.f32.mrb[0].mxu0
      %v6877 = vadd.f32 0.0, %v6876
      %v6878 = vpop.f32.mrb[0].mxu0
      %6879 = vmatprep.mubr.f32.mxu0 0.0
      %6880 = vmatmul.mubr.f32.gmra.mrb[0].mxu0 %v6712
      %v6881 = vpop.f32.mrb[0].mxu0
      %v6882 = vadd.f32 0.0, %v6881
      %v6883 = vpop.f32.mrb[0].mxu0
      %6884 = vmatprep.mubr.f32.mxu0 0.0
      %6885 = vmatmul.mubr.f32.gmra.mrb[0].mxu0 %v6715
      %v6886 = vpop.f32.mrb[0].mxu0
      %v6887 = vadd.f32 0.0, %v6886
      %v6888 = vpop.f32.mrb[0].mxu0
      %6889 = vmatprep.mubr.f32.mxu0 0.0
      %6890 = vmatmul.mubr.f32.gmra.mrb[0].mxu0 %v6718
      %v6891 = vpop.f32.mrb[0].mxu0
      %v6892 = vadd.f32 0.0, %v6891
      %v6893 = vpop.f32.mrb[0].mxu0
      %6894 = vmatprep.mubr.f32.mxu0 0.0
      %6895 = vmatmul.mubr.f32.gmra.mrb[0].mxu0 %v6721
      %v6896 = vpop.f32.mrb[0].mxu0
      %v6897 = vadd.f32 0.0, %v6896
      %v6898 = vpop.f32.mrb[0].mxu0
      %6899 = vmatprep.mubr.f32.mxu0 0.0
      %6900 = vmatmul.mubr.f32.gmra.mrb[0].mxu0 %v6724
      %v6901 = vpop.f32.mrb[0].mxu0
      %v6902 = vadd.f32 0.0, %v6901
      %v6903 = vpop.f32.mrb[0].mxu0
      %6904 = vmatprep.mubr.f32.mxu0 0.0
      %6905 = vmatmul.mubr.f32.gmra.mrb[0].mxu0 %v6727
      %v6906 = vpop.f32.mrb[0].mxu0
      %v6907 = vadd.f32 0.0, %v6906
      %v6908 = vpop.f32.mrb[0].mxu0
      %6909 = vmatprep.mubr.f32.mxu0 0.0
      %6910 = vmatmul.mubr.f32.gmra.mrb[0].mxu0 %v6730
      %v6911 = vpop.f32.mrb[0].mxu0
      %v6912 = vadd.f32 0.0, %v6911
      %v6913 = vpop.f32.mrb[0].mxu0
      %6914 = vmatprep.mubr.f32.mxu0 0.0
      %6915 = vmatmul.mubr.f32.gmra.mrb[0].mxu0 %v6733
      %v6916 = vpop.f32.mrb[0].mxu0
      %v6917 = vadd.f32 0.0, %v6916
      %v6918 = vpop.f32.mrb[0].mxu0
      %6919 = vmatprep.mubr.f32.mxu0 0.0
      %6920 = vmatmul.mubr.f32.gmra.mrb[0].mxu0 %v6736
      %v6921 = vpop.f32.mrb[0].mxu0
      %v6922 = vadd.f32 0.0, %v6921
      %v6923 = vpop.f32.mrb[0].mxu0
      %6924 = vmatprep.mubr.f32.mxu0 0.0
      %6925 = vmatmul.mubr.f32.gmra.mrb[0].mxu0 %v6739
      %v6926 = vpop.f32.mrb[0].mxu0
      %v6927 = vadd.f32 0.0, %v6926
      %v6928 = vpop.f32.mrb[0].mxu0
      %6929 = vmatprep.mubr.f32.mxu0 0.0
      %6930 = vmatmul.mubr.f32.gmra.mrb[0].mxu0 %v6742
      %v6931 = vpop.f32.mrb[0].mxu0
      %v6932 = vadd.f32 0.0, %v6931
      %v6933 = vpop.f32.mrb[0].mxu0
      %6934 = vmatprep.mubr.f32.mxu0 0.0
      %6935 = vmatmul.mubr.f32.gmra.mrb[0].mxu0 %v6745
      %v6936 = vpop.f32.mrb[0].mxu0
      %v6937 = vadd.f32 0.0, %v6936
      %v6938 = vpop.f32.mrb[0].mxu0
      %6939 = vmatprep.mubr.f32.mxu0 0.0
      %6940 = vmatmul.mubr.f32.gmra.mrb[0].mxu0 %v6748
      %v6941 = vpop.f32.mrb[0].mxu0
      %v6942 = vadd.f32 0.0, %v6941
      %v6943 = vpop.f32.mrb[0].mxu0
      %6944 = vmatprep.mubr.f32.mxu0 0.0
      %6945 = vmatmul.mubr.f32.gmra.mrb[0].mxu0 %v6751
      %v6946 = vpop.f32.mrb[0].mxu0
      %v6947 = vadd.f32 0.0, %v6946
      %v6948 = vpop.f32.mrb[0].mxu0
      %6949 = vmatprep.mubr.f32.mxu0 0.0
      %6950 = vmatmul.mubr.f32.gmra.mrb[0].mxu0 %v6754
      %v6951 = vpop.f32.mrb[0].mxu0
      %v6952 = vadd.f32 0.0, %v6951
      %v6953 = vpop.f32.mrb[0].mxu0
      %6954 = vmatprep.mubr.f32.mxu0 0.0
      %6955 = vmatmul.mubr.f32.gmra.mrb[0].mxu0 %v6757
      %v6956 = vpop.f32.mrb[0].mxu0
      %v6957 = vadd.f32 0.0, %v6956
      %v6958 = vpop.f32.mrb[0].mxu0
      %6959 = vmatprep.mubr.f32.mxu0 0.0
      %6960 = vmatmul.mubr.f32.gmra.mrb[0].mxu0 %v6760
      %v6961 = vpop.f32.mrb[0].mxu0
      %v6962 = vadd.f32 0.0, %v6961
      %v6963 = vpop.f32.mrb[0].mxu0
      %6964 = vmatprep.mubr.f32.mxu0 0.0
      %6965 = vmatmul.mubr.f32.gmra.mrb[0].mxu0 %v6763
      %v6966 = vpop.f32.mrb[0].mxu0
      %v6967 = vadd.f32 0.0, %v6966
      %v6968 = vpop.f32.mrb[0].mxu0
      %6969 = vmatprep.mubr.f32.mxu0 0.0
      %6970 = vmatmul.mubr.f32.gmra.mrb[0].mxu0 %v6766
      %v6971 = vpop.f32.mrb[0].mxu0
      %v6972 = vadd.f32 0.0, %v6971
      %v6973 = vpop.f32.mrb[0].mxu0
      %6974 = vmatprep.mubr.f32.mxu0 0.0
      %6975 = vmatmul.mubr.f32.gmra.mrb[0].mxu0 %v6769
      %v6976 = vpop.f32.mrb[0].mxu0
      %v6977 = vadd.f32 0.0, %v6976
      %v6978 = vpop.f32.mrb[0].mxu0
      %6979 = vmatprep.mubr.f32.mxu0 0.0
      %6980 = vmatmul.mubr.f32.gmra.mrb[0].mxu0 %v6772
      %v6981 = vpop.f32.mrb[0].mxu0
      %v6982 = vadd.f32 0.0, %v6981
      %v6983 = vpop.f32.mrb[0].mxu0
      %6984 = vmatprep.mubr.f32.mxu0 0.0
      %6985 = vmatmul.mubr.f32.gmra.mrb[0].mxu0 %v6775
      %v6986 = vpop.f32.mrb[0].mxu0
      %v6987 = vadd.f32 0.0, %v6986
      %v6988 = vpop.f32.mrb[0].mxu0
      %6989 = vmatprep.mubr.f32.mxu0 0.0
      %6990 = vmatmul.mubr.f32.gmra.mrb[0].mxu0 %v6778
      %v6991 = vpop.f32.mrb[0].mxu0
      %v6992 = vadd.f32 0.0, %v6991
      %v6993 = vpop.f32.mrb[0].mxu0
      %6994 = vmatprep.mubr.f32.mxu0 0.0
      %6995 = vmatmul.mubr.f32.gmra.mrb[0].mxu0 %v6781
      %v6996 = vpop.f32.mrb[0].mxu0
      %v6997 = vadd.f32 0.0, %v6996
      %v6998 = vpop.f32.mrb[0].mxu0
      %6999 = vmatprep.mubr.f32.mxu0 0.0
      %7000 = vmatmul.mubr.f32.gmra.mrb[0].mxu0 %v6784
      %v7001 = vpop.f32.mrb[0].mxu0
      %v7002 = vadd.f32 0.0, %v7001
      %v7003 = vpop.f32.mrb[0].mxu0
      %7004 = vmatprep.mubr.f32.mxu0 0.0
      %7005 = vmatmul.mubr.f32.gmra.mrb[0].mxu0 %v6787
      %v7006 = vpop.f32.mrb[0].mxu0
      %v7007 = vadd.f32 0.0, %v7006
      %v7008 = vpop.f32.mrb[0].mxu0
      %7009 = vmatprep.mubr.f32.mxu0 0.0
      %7010 = vmatmul.mubr.f32.gmra.mrb[0].mxu0 %v6790
      %v7011 = vpop.f32.mrb[0].mxu0
      %v7012 = vadd.f32 0.0, %v7011
      %v7013 = vpop.f32.mrb[0].mxu0
      %7014 = vmatprep.mubr.f32.mxu0 0.0
      %7015 = vmatmul.mubr.f32.gmra.mrb[0].mxu0 %v6793
      %v7016 = vpop.f32.mrb[0].mxu0
      %v7017 = vadd.f32 0.0, %v7016
      %v7018 = vpop.f32.mrb[0].mxu0
      %7019 = vdwg.mxu0
      %v7021 = vsel %vm6589, %v6622, 0
      %v7024 = vsel %vm6589, %v6623, 0
      %v7027 = vsel %vm6589, %v6624, 0
      %v7030 = vsel %vm6589, %v6625, 0
      %v7033 = vsel %vm6589, %v6626, 0
      %v7036 = vsel %vm6589, %v6627, 0
      %v7039 = vsel %vm6589, %v6628, 0
      %v7042 = vsel %vm6589, %v6629, 0
      %v7045 = vsel %vm6589, %v6630, 0
      %v7048 = vsel %vm6589, %v6631, 0
      %v7051 = vsel %vm6589, %v6632, 0
      %v7054 = vsel %vm6589, %v6633, 0
      %v7057 = vsel %vm6589, %v6634, 0
      %v7060 = vsel %vm6589, %v6635, 0
      %v7063 = vsel %vm6589, %v6636, 0
      %v7066 = vsel %vm6589, %v6637, 0
      %v7069 = vsel %vm6589, %v6638, 0
      %v7072 = vsel %vm6589, %v6639, 0
      %v7075 = vsel %vm6589, %v6640, 0
      %v7078 = vsel %vm6589, %v6641, 0
      %v7081 = vsel %vm6589, %v6642, 0
      %v7084 = vsel %vm6589, %v6643, 0
      %v7087 = vsel %vm6589, %v6644, 0
      %v7090 = vsel %vm6589, %v6645, 0
      %v7093 = vsel %vm6589, %v6646, 0
      %v7096 = vsel %vm6589, %v6647, 0
      %v7099 = vsel %vm6589, %v6648, 0
      %v7102 = vsel %vm6589, %v6649, 0
      %v7105 = vsel %vm6589, %v6650, 0
      %v7108 = vsel %vm6589, %v6651, 0
      %v7111 = vsel %vm6589, %v6652, 0
      %v7114 = vsel %vm6589, %v6653, 0
      %7116 = vmatprep.subr.mxu0 0.0
      %7117 = vmatpush1.msra.mxu0 %v6654
      %7118 = vmatprep.subr.mxu0 0.0
      %7119 = vmatpush1.msra.mxu0 %v6655
      %7120 = vmatprep.subr.mxu0 0.0
      %7121 = vmatpush1.msra.mxu0 %v6656
      %7122 = vmatprep.subr.mxu0 0.0
      %7123 = vmatpush1.msra.mxu0 %v6657
      %7124 = vmatprep.subr.mxu0 0.0
      %7125 = vmatpush1.msra.mxu0 %v6658
      %7126 = vmatprep.subr.mxu0 0.0
      %7127 = vmatpush1.msra.mxu0 %v6659
      %7128 = vmatprep.subr.mxu0 0.0
      %7129 = vmatpush1.msra.mxu0 0.0
      %7130 = vmatprep.subr.mxu0 0.0
      %7131 = vmatpush1.msra.mxu0 0.0
      %7132 = vmatprep.subr.mxu0 0.0
      %7133 = vmatpush1.msra.mxu0 0.0
      %7134 = vmatprep.subr.mxu0 0.0
      %7135 = vmatpush1.msra.mxu0 0.0
      %7136 = vmatprep.subr.mxu0 0.0
      %7137 = vmatpush1.msra.mxu0 0.0
      %7138 = vmatprep.subr.mxu0 0.0
      %7139 = vmatpush1.msra.mxu0 0.0
      %7140 = vmatprep.subr.mxu0 0.0
      %7141 = vmatpush1.msra.mxu0 0.0
      %7142 = vmatprep.subr.mxu0 0.0
      %7143 = vmatpush1.msra.mxu0 0.0
      %7144 = vmatprep.subr.mxu0 0.0
      %7145 = vmatpush1.msra.mxu0 0.0
      %7146 = vmatprep.subr.mxu0 0.0
      %7147 = vmatpush1.msra.mxu0 0.0
      %7148 = vmatprep.subr.mxu0 0.0
      %7149 = vmatpush1.msra.mxu0 0.0
      %7150 = vmatprep.subr.mxu0 0.0
      %7151 = vmatpush1.msra.mxu0 0.0
      %7152 = vmatprep.subr.mxu0 0.0
      %7153 = vmatpush1.msra.mxu0 0.0
      %7154 = vmatprep.subr.mxu0 0.0
      %7155 = vmatpush1.msra.mxu0 0.0
      %7156 = vmatprep.subr.mxu0 0.0
      %7157 = vmatpush1.msra.mxu0 0.0
      %7158 = vmatprep.subr.mxu0 0.0
      %7159 = vmatpush1.msra.mxu0 0.0
      %7160 = vmatprep.subr.mxu0 0.0
      %7161 = vmatpush1.msra.mxu0 0.0
      %7162 = vmatprep.subr.mxu0 0.0
      %7163 = vmatpush1.msra.mxu0 0.0
      %7164 = vmatprep.subr.mxu0 0.0
      %7165 = vmatpush1.msra.mxu0 0.0
      %7166 = vmatprep.subr.mxu0 0.0
      %7167 = vmatpush1.msra.mxu0 0.0
      %7168 = vmatprep.subr.mxu0 0.0
      %7169 = vmatpush1.msra.mxu0 0.0
      %7170 = vmatprep.subr.mxu0 0.0
      %7171 = vmatpush1.msra.mxu0 0.0
      %7172 = vmatprep.subr.mxu0 0.0
      %7173 = vmatpush1.msra.mxu0 0.0
      %7174 = vmatprep.subr.mxu0 0.0
      %7175 = vmatpush1.msra.mxu0 0.0
      %7176 = vmatprep.subr.mxu0 0.0
      %7177 = vmatpush1.msra.mxu0 0.0
      %7178 = vmatprep.subr.mxu0 0.0
      %7179 = vmatpush1.msra.mxu0 0.0
      %7180 = vmatprep.mubr.f32.mxu0 0.0
      %7181 = vmatmul.mubr.f32.gmra.mrb[0].mxu0 %v7021
      %v7182 = vpop.f32.mrb[0].mxu0
      %v7183 = vadd.f32 %v6862, %v7182
      %v7184 = vpop.f32.mrb[0].mxu0
      %7185 = vmatprep.mubr.f32.mxu0 0.0
      %7186 = vmatmul.mubr.f32.gmra.mrb[0].mxu0 %v7024
      %v7187 = vpop.f32.mrb[0].mxu0
      %v7188 = vadd.f32 %v6867, %v7187
      %v7189 = vpop.f32.mrb[0].mxu0
      %7190 = vmatprep.mubr.f32.mxu0 0.0
      %7191 = vmatmul.mubr.f32.gmra.mrb[0].mxu0 %v7027
      %v7192 = vpop.f32.mrb[0].mxu0
      %v7193 = vadd.f32 %v6872, %v7192
      %v7194 = vpop.f32.mrb[0].mxu0
      %7195 = vmatprep.mubr.f32.mxu0 0.0
      %7196 = vmatmul.mubr.f32.gmra.mrb[0].mxu0 %v7030
      %v7197 = vpop.f32.mrb[0].mxu0
      %v7198 = vadd.f32 %v6877, %v7197
      %v7199 = vpop.f32.mrb[0].mxu0
      %7200 = vmatprep.mubr.f32.mxu0 0.0
      %7201 = vmatmul.mubr.f32.gmra.mrb[0].mxu0 %v7033
      %v7202 = vpop.f32.mrb[0].mxu0
      %v7203 = vadd.f32 %v6882, %v7202
      %v7204 = vpop.f32.mrb[0].mxu0
      %7205 = vmatprep.mubr.f32.mxu0 0.0
      %7206 = vmatmul.mubr.f32.gmra.mrb[0].mxu0 %v7036
      %v7207 = vpop.f32.mrb[0].mxu0
      %v7208 = vadd.f32 %v6887, %v7207
      %v7209 = vpop.f32.mrb[0].mxu0
      %7210 = vmatprep.mubr.f32.mxu0 0.0
      %7211 = vmatmul.mubr.f32.gmra.mrb[0].mxu0 %v7039
      %v7212 = vpop.f32.mrb[0].mxu0
      %v7213 = vadd.f32 %v6892, %v7212
      %v7214 = vpop.f32.mrb[0].mxu0
      %7215 = vmatprep.mubr.f32.mxu0 0.0
      %7216 = vmatmul.mubr.f32.gmra.mrb[0].mxu0 %v7042
      %v7217 = vpop.f32.mrb[0].mxu0
      %v7218 = vadd.f32 %v6897, %v7217
      %v7219 = vpop.f32.mrb[0].mxu0
      %7220 = vmatprep.mubr.f32.mxu0 0.0
      %7221 = vmatmul.mubr.f32.gmra.mrb[0].mxu0 %v7045
      %v7222 = vpop.f32.mrb[0].mxu0
      %v7223 = vadd.f32 %v6902, %v7222
      %v7224 = vpop.f32.mrb[0].mxu0
      %7225 = vmatprep.mubr.f32.mxu0 0.0
      %7226 = vmatmul.mubr.f32.gmra.mrb[0].mxu0 %v7048
      %v7227 = vpop.f32.mrb[0].mxu0
      %v7228 = vadd.f32 %v6907, %v7227
      %v7229 = vpop.f32.mrb[0].mxu0
      %7230 = vmatprep.mubr.f32.mxu0 0.0
      %7231 = vmatmul.mubr.f32.gmra.mrb[0].mxu0 %v7051
      %v7232 = vpop.f32.mrb[0].mxu0
      %v7233 = vadd.f32 %v6912, %v7232
      %v7234 = vpop.f32.mrb[0].mxu0
      %7235 = vmatprep.mubr.f32.mxu0 0.0
      %7236 = vmatmul.mubr.f32.gmra.mrb[0].mxu0 %v7054
      %v7237 = vpop.f32.mrb[0].mxu0
      %v7238 = vadd.f32 %v6917, %v7237
      %v7239 = vpop.f32.mrb[0].mxu0
      %7240 = vmatprep.mubr.f32.mxu0 0.0
      %7241 = vmatmul.mubr.f32.gmra.mrb[0].mxu0 %v7057
      %v7242 = vpop.f32.mrb[0].mxu0
      %v7243 = vadd.f32 %v6922, %v7242
      %v7244 = vpop.f32.mrb[0].mxu0
      %7245 = vmatprep.mubr.f32.mxu0 0.0
      %7246 = vmatmul.mubr.f32.gmra.mrb[0].mxu0 %v7060
      %v7247 = vpop.f32.mrb[0].mxu0
      %v7248 = vadd.f32 %v6927, %v7247
      %v7249 = vpop.f32.mrb[0].mxu0
      %7250 = vmatprep.mubr.f32.mxu0 0.0
      %7251 = vmatmul.mubr.f32.gmra.mrb[0].mxu0 %v7063
      %v7252 = vpop.f32.mrb[0].mxu0
      %v7253 = vadd.f32 %v6932, %v7252
      %v7254 = vpop.f32.mrb[0].mxu0
      %7255 = vmatprep.mubr.f32.mxu0 0.0
      %7256 = vmatmul.mubr.f32.gmra.mrb[0].mxu0 %v7066
      %v7257 = vpop.f32.mrb[0].mxu0
      %v7258 = vadd.f32 %v6937, %v7257
      %v7259 = vpop.f32.mrb[0].mxu0
      %7260 = vmatprep.mubr.f32.mxu0 0.0
      %7261 = vmatmul.mubr.f32.gmra.mrb[0].mxu0 %v7069
      %v7262 = vpop.f32.mrb[0].mxu0
      %v7263 = vadd.f32 %v6942, %v7262
      %v7264 = vpop.f32.mrb[0].mxu0
      %7265 = vmatprep.mubr.f32.mxu0 0.0
      %7266 = vmatmul.mubr.f32.gmra.mrb[0].mxu0 %v7072
      %v7267 = vpop.f32.mrb[0].mxu0
      %v7268 = vadd.f32 %v6947, %v7267
      %v7269 = vpop.f32.mrb[0].mxu0
      %7270 = vmatprep.mubr.f32.mxu0 0.0
      %7271 = vmatmul.mubr.f32.gmra.mrb[0].mxu0 %v7075
      %v7272 = vpop.f32.mrb[0].mxu0
      %v7273 = vadd.f32 %v6952, %v7272
      %v7274 = vpop.f32.mrb[0].mxu0
      %7275 = vmatprep.mubr.f32.mxu0 0.0
      %7276 = vmatmul.mubr.f32.gmra.mrb[0].mxu0 %v7078
      %v7277 = vpop.f32.mrb[0].mxu0
      %v7278 = vadd.f32 %v6957, %v7277
      %v7279 = vpop.f32.mrb[0].mxu0
      %7280 = vmatprep.mubr.f32.mxu0 0.0
      %7281 = vmatmul.mubr.f32.gmra.mrb[0].mxu0 %v7081
      %v7282 = vpop.f32.mrb[0].mxu0
      %v7283 = vadd.f32 %v6962, %v7282
      %v7284 = vpop.f32.mrb[0].mxu0
      %7285 = vmatprep.mubr.f32.mxu0 0.0
      %7286 = vmatmul.mubr.f32.gmra.mrb[0].mxu0 %v7084
      %v7287 = vpop.f32.mrb[0].mxu0
      %v7288 = vadd.f32 %v6967, %v7287
      %v7289 = vpop.f32.mrb[0].mxu0
      %7290 = vmatprep.mubr.f32.mxu0 0.0
      %7291 = vmatmul.mubr.f32.gmra.mrb[0].mxu0 %v7087
      %v7292 = vpop.f32.mrb[0].mxu0
      %v7293 = vadd.f32 %v6972, %v7292
      %v7294 = vpop.f32.mrb[0].mxu0
      %7295 = vmatprep.mubr.f32.mxu0 0.0
      %7296 = vmatmul.mubr.f32.gmra.mrb[0].mxu0 %v7090
      %v7297 = vpop.f32.mrb[0].mxu0
      %v7298 = vadd.f32 %v6977, %v7297
      %v7299 = vpop.f32.mrb[0].mxu0
      %7300 = vmatprep.mubr.f32.mxu0 0.0
      %7301 = vmatmul.mubr.f32.gmra.mrb[0].mxu0 %v7093
      %v7302 = vpop.f32.mrb[0].mxu0
      %v7303 = vadd.f32 %v6982, %v7302
      %v7304 = vpop.f32.mrb[0].mxu0
      %7305 = vmatprep.mubr.f32.mxu0 0.0
      %7306 = vmatmul.mubr.f32.gmra.mrb[0].mxu0 %v7096
      %v7307 = vpop.f32.mrb[0].mxu0
      %v7308 = vadd.f32 %v6987, %v7307
      %v7309 = vpop.f32.mrb[0].mxu0
      %7310 = vmatprep.mubr.f32.mxu0 0.0
      %7311 = vmatmul.mubr.f32.gmra.mrb[0].mxu0 %v7099
      %v7312 = vpop.f32.mrb[0].mxu0
      %v7313 = vadd.f32 %v6992, %v7312
      %v7314 = vpop.f32.mrb[0].mxu0
      %7315 = vmatprep.mubr.f32.mxu0 0.0
      %7316 = vmatmul.mubr.f32.gmra.mrb[0].mxu0 %v7102
      %v7317 = vpop.f32.mrb[0].mxu0
      %v7318 = vadd.f32 %v6997, %v7317
      %v7319 = vpop.f32.mrb[0].mxu0
      %7320 = vmatprep.mubr.f32.mxu0 0.0
      %7321 = vmatmul.mubr.f32.gmra.mrb[0].mxu0 %v7105
      %v7322 = vpop.f32.mrb[0].mxu0
      %v7323 = vadd.f32 %v7002, %v7322
      %v7324 = vpop.f32.mrb[0].mxu0
      %7325 = vmatprep.mubr.f32.mxu0 0.0
      %7326 = vmatmul.mubr.f32.gmra.mrb[0].mxu0 %v7108
      %v7327 = vpop.f32.mrb[0].mxu0
      %v7328 = vadd.f32 %v7007, %v7327
      %v7329 = vpop.f32.mrb[0].mxu0
      %7330 = vmatprep.mubr.f32.mxu0 0.0
      %7331 = vmatmul.mubr.f32.gmra.mrb[0].mxu0 %v7111
      %v7332 = vpop.f32.mrb[0].mxu0
      %v7333 = vadd.f32 %v7012, %v7332
      %v7334 = vpop.f32.mrb[0].mxu0
      %7335 = vmatprep.mubr.f32.mxu0 0.0
      %7336 = vmatmul.mubr.f32.gmra.mrb[0].mxu0 %v7114
      %v7337 = vpop.f32.mrb[0].mxu0
      %v7338 = vadd.f32 %v7017, %v7337
      %v7339 = vpop.f32.mrb[0].mxu0
      %7340 = vdwg.mxu0
      %v7341 = vld [vmem:[%s2059] sm:$0xff]
      %v7342 = vld [vmem:[%s2059 + $0x10] sm:$0xff]
      %v7343 = vld [vmem:[%s2059 + $0x20] sm:$0xff]
      %v7344 = vld [vmem:[%s2059 + $0x30] sm:$0xff]
      %v7345 = vld [vmem:[%s2059 + $0x40] sm:$0xff]
      %v7346 = vld [vmem:[%s2059 + $0x50] sm:$0xff]
      %v7347 = vld [vmem:[%s2059 + $0x60] sm:$0xff]
      %v7348 = vld [vmem:[%s2059 + $0x70] sm:$0xff]
      %v7349 = vld [vmem:[%s2059 + $0x80] sm:$0xff]
      %v7350 = vld [vmem:[%s2059 + $0x90] sm:$0xff]
      %v7351 = vld [vmem:[%s2059 + $0xa0] sm:$0xff]
      %v7352 = vld [vmem:[%s2059 + $0xb0] sm:$0xff]
      %v7353 = vld [vmem:[%s2059 + $0xc0] sm:$0xff]
      %v7354 = vld [vmem:[%s2059 + $0xd0] sm:$0xff]
      %v7355 = vld [vmem:[%s2059 + $0xe0] sm:$0xff]
      %v7356 = vld [vmem:[%s2059 + $0xf0] sm:$0xff]
      %v7357 = vld [vmem:[%s2059 + $0x100] sm:$0xff]
      %v7358 = vld [vmem:[%s2059 + $0x110] sm:$0xff]
      %v7359 = vld [vmem:[%s2059 + $0x120] sm:$0xff]
      %v7360 = vld [vmem:[%s2059 + $0x130] sm:$0xff]
      %v7361 = vld [vmem:[%s2059 + $0x140] sm:$0xff]
      %v7362 = vld [vmem:[%s2059 + $0x150] sm:$0xff]
      %v7363 = vld [vmem:[%s2059 + $0x160] sm:$0xff]
      %v7364 = vld [vmem:[%s2059 + $0x170] sm:$0xff]
      %v7365 = vld [vmem:[%s2059 + $0x180] sm:$0xff]
      %v7366 = vld [vmem:[%s2059 + $0x190] sm:$0xff]
      %v7367 = vld [vmem:[%s2059 + $0x1a0] sm:$0xff]
      %v7368 = vld [vmem:[%s2059 + $0x1b0] sm:$0xff]
      %v7369 = vld [vmem:[%s2059 + $0x1c0] sm:$0xff]
      %v7370 = vld [vmem:[%s2059 + $0x1d0] sm:$0xff]
      %v7371 = vld [vmem:[%s2059 + $0x1e0] sm:$0xff]
      %v7372 = vld [vmem:[%s2059 + $0x1f0] sm:$0xff]
      %s7373 = scalar_lea.vmem %s9, 96
      %v7374 = vld [vmem:[%s7373] sm:$0xff]
      %v7375 = vld [vmem:[%s7373 + $0x8] sm:$0xff]
      %v7376 = vld [vmem:[%s7373 + $0x10] sm:$0xff]
      %v7377 = vld [vmem:[%s7373 + $0x18] sm:$0xff]
      %v7378 = vld [vmem:[%s7373 + $0x20] sm:$0xff]
      %v7379 = vld [vmem:[%s7373 + $0x28] sm:$0xff]
      %v7381 = vsel %vm6589, %v7341, 0
      %v7384 = vsel %vm6589, %v7342, 0
      %v7387 = vsel %vm6589, %v7343, 0
      %v7390 = vsel %vm6589, %v7344, 0
      %v7393 = vsel %vm6589, %v7345, 0
      %v7396 = vsel %vm6589, %v7346, 0
      %v7399 = vsel %vm6589, %v7347, 0
      %v7402 = vsel %vm6589, %v7348, 0
      %v7405 = vsel %vm6589, %v7349, 0
      %v7408 = vsel %vm6589, %v7350, 0
      %v7411 = vsel %vm6589, %v7351, 0
      %v7414 = vsel %vm6589, %v7352, 0
      %v7417 = vsel %vm6589, %v7353, 0
      %v7420 = vsel %vm6589, %v7354, 0
      %v7423 = vsel %vm6589, %v7355, 0
      %v7426 = vsel %vm6589, %v7356, 0
      %v7429 = vsel %vm6589, %v7357, 0
      %v7432 = vsel %vm6589, %v7358, 0
      %v7435 = vsel %vm6589, %v7359, 0
      %v7438 = vsel %vm6589, %v7360, 0
      %v7441 = vsel %vm6589, %v7361, 0
      %v7444 = vsel %vm6589, %v7362, 0
      %v7447 = vsel %vm6589, %v7363, 0
      %v7450 = vsel %vm6589, %v7364, 0
      %v7453 = vsel %vm6589, %v7365, 0
      %v7456 = vsel %vm6589, %v7366, 0
      %v7459 = vsel %vm6589, %v7367, 0
      %v7462 = vsel %vm6589, %v7368, 0
      %v7465 = vsel %vm6589, %v7369, 0
      %v7468 = vsel %vm6589, %v7370, 0
      %v7471 = vsel %vm6589, %v7371, 0
      %v7474 = vsel %vm6589, %v7372, 0
      %7476 = vmatprep.subr.mxu0 0.0
      %7477 = vmatpush1.msra.mxu0 %v7374
      %7478 = vmatprep.subr.mxu0 0.0
      %7479 = vmatpush1.msra.mxu0 %v7375
      %7480 = vmatprep.subr.mxu0 0.0
      %7481 = vmatpush1.msra.mxu0 %v7376
      %7482 = vmatprep.subr.mxu0 0.0
      %7483 = vmatpush1.msra.mxu0 %v7377
      %7484 = vmatprep.subr.mxu0 0.0
      %7485 = vmatpush1.msra.mxu0 %v7378
      %7486 = vmatprep.subr.mxu0 0.0
      %7487 = vmatpush1.msra.mxu0 %v7379
      %7488 = vmatprep.subr.mxu0 0.0
      %7489 = vmatpush1.msra.mxu0 0.0
      %7490 = vmatprep.subr.mxu0 0.0
      %7491 = vmatpush1.msra.mxu0 0.0
      %7492 = vmatprep.subr.mxu0 0.0
      %7493 = vmatpush1.msra.mxu0 0.0
      %7494 = vmatprep.subr.mxu0 0.0
      %7495 = vmatpush1.msra.mxu0 0.0
      %7496 = vmatprep.subr.mxu0 0.0
      %7497 = vmatpush1.msra.mxu0 0.0
      %7498 = vmatprep.subr.mxu0 0.0
      %7499 = vmatpush1.msra.mxu0 0.0
      %7500 = vmatprep.subr.mxu0 0.0
      %7501 = vmatpush1.msra.mxu0 0.0
      %7502 = vmatprep.subr.mxu0 0.0
      %7503 = vmatpush1.msra.mxu0 0.0
      %7504 = vmatprep.subr.mxu0 0.0
      %7505 = vmatpush1.msra.mxu0 0.0
      %7506 = vmatprep.subr.mxu0 0.0
      %7507 = vmatpush1.msra.mxu0 0.0
      %7508 = vmatprep.subr.mxu0 0.0
      %7509 = vmatpush1.msra.mxu0 0.0
      %7510 = vmatprep.subr.mxu0 0.0
      %7511 = vmatpush1.msra.mxu0 0.0
      %7512 = vmatprep.subr.mxu0 0.0
      %7513 = vmatpush1.msra.mxu0 0.0
      %7514 = vmatprep.subr.mxu0 0.0
      %7515 = vmatpush1.msra.mxu0 0.0
      %7516 = vmatprep.subr.mxu0 0.0
      %7517 = vmatpush1.msra.mxu0 0.0
      %7518 = vmatprep.subr.mxu0 0.0
      %7519 = vmatpush1.msra.mxu0 0.0
      %7520 = vmatprep.subr.mxu0 0.0
      %7521 = vmatpush1.msra.mxu0 0.0
      %7522 = vmatprep.subr.mxu0 0.0
      %7523 = vmatpush1.msra.mxu0 0.0
      %7524 = vmatprep.subr.mxu0 0.0
      %7525 = vmatpush1.msra.mxu0 0.0
      %7526 = vmatprep.subr.mxu0 0.0
      %7527 = vmatpush1.msra.mxu0 0.0
      %7528 = vmatprep.subr.mxu0 0.0
      %7529 = vmatpush1.msra.mxu0 0.0
      %7530 = vmatprep.subr.mxu0 0.0
      %7531 = vmatpush1.msra.mxu0 0.0
      %7532 = vmatprep.subr.mxu0 0.0
      %7533 = vmatpush1.msra.mxu0 0.0
      %7534 = vmatprep.subr.mxu0 0.0
      %7535 = vmatpush1.msra.mxu0 0.0
      %7536 = vmatprep.subr.mxu0 0.0
      %7537 = vmatpush1.msra.mxu0 0.0
      %7538 = vmatprep.subr.mxu0 0.0
      %7539 = vmatpush1.msra.mxu0 0.0
      %7540 = vmatprep.mubr.f32.mxu0 0.0
      %7541 = vmatmul.mubr.f32.gmra.mrb[0].mxu0 %v7381
      %v7542 = vpop.f32.mrb[0].mxu0
      %v7543 = vadd.f32 0.0, %v7542
      %v7544 = vpop.f32.mrb[0].mxu0
      %7545 = vmatprep.mubr.f32.mxu0 0.0
      %7546 = vmatmul.mubr.f32.gmra.mrb[0].mxu0 %v7384
      %v7547 = vpop.f32.mrb[0].mxu0
      %v7548 = vadd.f32 0.0, %v7547
      %v7549 = vpop.f32.mrb[0].mxu0
      %7550 = vmatprep.mubr.f32.mxu0 0.0
      %7551 = vmatmul.mubr.f32.gmra.mrb[0].mxu0 %v7387
      %v7552 = vpop.f32.mrb[0].mxu0
      %v7553 = vadd.f32 0.0, %v7552
      %v7554 = vpop.f32.mrb[0].mxu0
      %7555 = vmatprep.mubr.f32.mxu0 0.0
      %7556 = vmatmul.mubr.f32.gmra.mrb[0].mxu0 %v7390
      %v7557 = vpop.f32.mrb[0].mxu0
      %v7558 = vadd.f32 0.0, %v7557
      %v7559 = vpop.f32.mrb[0].mxu0
      %7560 = vmatprep.mubr.f32.mxu0 0.0
      %7561 = vmatmul.mubr.f32.gmra.mrb[0].mxu0 %v7393
      %v7562 = vpop.f32.mrb[0].mxu0
      %v7563 = vadd.f32 0.0, %v7562
      %v7564 = vpop.f32.mrb[0].mxu0
      %7565 = vmatprep.mubr.f32.mxu0 0.0
      %7566 = vmatmul.mubr.f32.gmra.mrb[0].mxu0 %v7396
      %v7567 = vpop.f32.mrb[0].mxu0
      %v7568 = vadd.f32 0.0, %v7567
      %v7569 = vpop.f32.mrb[0].mxu0
      %7570 = vmatprep.mubr.f32.mxu0 0.0
      %7571 = vmatmul.mubr.f32.gmra.mrb[0].mxu0 %v7399
      %v7572 = vpop.f32.mrb[0].mxu0
      %v7573 = vadd.f32 0.0, %v7572
      %v7574 = vpop.f32.mrb[0].mxu0
      %7575 = vmatprep.mubr.f32.mxu0 0.0
      %7576 = vmatmul.mubr.f32.gmra.mrb[0].mxu0 %v7402
      %v7577 = vpop.f32.mrb[0].mxu0
      %v7578 = vadd.f32 0.0, %v7577
      %v7579 = vpop.f32.mrb[0].mxu0
      %7580 = vmatprep.mubr.f32.mxu0 0.0
      %7581 = vmatmul.mubr.f32.gmra.mrb[0].mxu0 %v7405
      %v7582 = vpop.f32.mrb[0].mxu0
      %v7583 = vadd.f32 0.0, %v7582
      %v7584 = vpop.f32.mrb[0].mxu0
      %7585 = vmatprep.mubr.f32.mxu0 0.0
      %7586 = vmatmul.mubr.f32.gmra.mrb[0].mxu0 %v7408
      %v7587 = vpop.f32.mrb[0].mxu0
      %v7588 = vadd.f32 0.0, %v7587
      %v7589 = vpop.f32.mrb[0].mxu0
      %7590 = vmatprep.mubr.f32.mxu0 0.0
      %7591 = vmatmul.mubr.f32.gmra.mrb[0].mxu0 %v7411
      %v7592 = vpop.f32.mrb[0].mxu0
      %v7593 = vadd.f32 0.0, %v7592
      %v7594 = vpop.f32.mrb[0].mxu0
      %7595 = vmatprep.mubr.f32.mxu0 0.0
      %7596 = vmatmul.mubr.f32.gmra.mrb[0].mxu0 %v7414
      %v7597 = vpop.f32.mrb[0].mxu0
      %v7598 = vadd.f32 0.0, %v7597
      %v7599 = vpop.f32.mrb[0].mxu0
      %7600 = vmatprep.mubr.f32.mxu0 0.0
      %7601 = vmatmul.mubr.f32.gmra.mrb[0].mxu0 %v7417
      %v7602 = vpop.f32.mrb[0].mxu0
      %v7603 = vadd.f32 0.0, %v7602
      %v7604 = vpop.f32.mrb[0].mxu0
      %7605 = vmatprep.mubr.f32.mxu0 0.0
      %7606 = vmatmul.mubr.f32.gmra.mrb[0].mxu0 %v7420
      %v7607 = vpop.f32.mrb[0].mxu0
      %v7608 = vadd.f32 0.0, %v7607
      %v7609 = vpop.f32.mrb[0].mxu0
      %7610 = vmatprep.mubr.f32.mxu0 0.0
      %7611 = vmatmul.mubr.f32.gmra.mrb[0].mxu0 %v7423
      %v7612 = vpop.f32.mrb[0].mxu0
      %v7613 = vadd.f32 0.0, %v7612
      %v7614 = vpop.f32.mrb[0].mxu0
      %7615 = vmatprep.mubr.f32.mxu0 0.0
      %7616 = vmatmul.mubr.f32.gmra.mrb[0].mxu0 %v7426
      %v7617 = vpop.f32.mrb[0].mxu0
      %v7618 = vadd.f32 0.0, %v7617
      %v7619 = vpop.f32.mrb[0].mxu0
      %7620 = vmatprep.mubr.f32.mxu0 0.0
      %7621 = vmatmul.mubr.f32.gmra.mrb[0].mxu0 %v7429
      %v7622 = vpop.f32.mrb[0].mxu0
      %v7623 = vadd.f32 0.0, %v7622
      %v7624 = vpop.f32.mrb[0].mxu0
      %7625 = vmatprep.mubr.f32.mxu0 0.0
      %7626 = vmatmul.mubr.f32.gmra.mrb[0].mxu0 %v7432
      %v7627 = vpop.f32.mrb[0].mxu0
      %v7628 = vadd.f32 0.0, %v7627
      %v7629 = vpop.f32.mrb[0].mxu0
      %7630 = vmatprep.mubr.f32.mxu0 0.0
      %7631 = vmatmul.mubr.f32.gmra.mrb[0].mxu0 %v7435
      %v7632 = vpop.f32.mrb[0].mxu0
      %v7633 = vadd.f32 0.0, %v7632
      %v7634 = vpop.f32.mrb[0].mxu0
      %7635 = vmatprep.mubr.f32.mxu0 0.0
      %7636 = vmatmul.mubr.f32.gmra.mrb[0].mxu0 %v7438
      %v7637 = vpop.f32.mrb[0].mxu0
      %v7638 = vadd.f32 0.0, %v7637
      %v7639 = vpop.f32.mrb[0].mxu0
      %7640 = vmatprep.mubr.f32.mxu0 0.0
      %7641 = vmatmul.mubr.f32.gmra.mrb[0].mxu0 %v7441
      %v7642 = vpop.f32.mrb[0].mxu0
      %v7643 = vadd.f32 0.0, %v7642
      %v7644 = vpop.f32.mrb[0].mxu0
      %7645 = vmatprep.mubr.f32.mxu0 0.0
      %7646 = vmatmul.mubr.f32.gmra.mrb[0].mxu0 %v7444
      %v7647 = vpop.f32.mrb[0].mxu0
      %v7648 = vadd.f32 0.0, %v7647
      %v7649 = vpop.f32.mrb[0].mxu0
      %7650 = vmatprep.mubr.f32.mxu0 0.0
      %7651 = vmatmul.mubr.f32.gmra.mrb[0].mxu0 %v7447
      %v7652 = vpop.f32.mrb[0].mxu0
      %v7653 = vadd.f32 0.0, %v7652
      %v7654 = vpop.f32.mrb[0].mxu0
      %7655 = vmatprep.mubr.f32.mxu0 0.0
      %7656 = vmatmul.mubr.f32.gmra.mrb[0].mxu0 %v7450
      %v7657 = vpop.f32.mrb[0].mxu0
      %v7658 = vadd.f32 0.0, %v7657
      %v7659 = vpop.f32.mrb[0].mxu0
      %7660 = vmatprep.mubr.f32.mxu0 0.0
      %7661 = vmatmul.mubr.f32.gmra.mrb[0].mxu0 %v7453
      %v7662 = vpop.f32.mrb[0].mxu0
      %v7663 = vadd.f32 0.0, %v7662
      %v7664 = vpop.f32.mrb[0].mxu0
      %7665 = vmatprep.mubr.f32.mxu0 0.0
      %7666 = vmatmul.mubr.f32.gmra.mrb[0].mxu0 %v7456
      %v7667 = vpop.f32.mrb[0].mxu0
      %v7668 = vadd.f32 0.0, %v7667
      %v7669 = vpop.f32.mrb[0].mxu0
      %7670 = vmatprep.mubr.f32.mxu0 0.0
      %7671 = vmatmul.mubr.f32.gmra.mrb[0].mxu0 %v7459
      %v7672 = vpop.f32.mrb[0].mxu0
      %v7673 = vadd.f32 0.0, %v7672
      %v7674 = vpop.f32.mrb[0].mxu0
      %7675 = vmatprep.mubr.f32.mxu0 0.0
      %7676 = vmatmul.mubr.f32.gmra.mrb[0].mxu0 %v7462
      %v7677 = vpop.f32.mrb[0].mxu0
      %v7678 = vadd.f32 0.0, %v7677
      %v7679 = vpop.f32.mrb[0].mxu0
      %7680 = vmatprep.mubr.f32.mxu0 0.0
      %7681 = vmatmul.mubr.f32.gmra.mrb[0].mxu0 %v7465
      %v7682 = vpop.f32.mrb[0].mxu0
      %v7683 = vadd.f32 0.0, %v7682
      %v7684 = vpop.f32.mrb[0].mxu0
      %7685 = vmatprep.mubr.f32.mxu0 0.0
      %7686 = vmatmul.mubr.f32.gmra.mrb[0].mxu0 %v7468
      %v7687 = vpop.f32.mrb[0].mxu0
      %v7688 = vadd.f32 0.0, %v7687
      %v7689 = vpop.f32.mrb[0].mxu0
      %7690 = vmatprep.mubr.f32.mxu0 0.0
      %7691 = vmatmul.mubr.f32.gmra.mrb[0].mxu0 %v7471
      %v7692 = vpop.f32.mrb[0].mxu0
      %v7693 = vadd.f32 0.0, %v7692
      %v7694 = vpop.f32.mrb[0].mxu0
      %7695 = vmatprep.mubr.f32.mxu0 0.0
      %7696 = vmatmul.mubr.f32.gmra.mrb[0].mxu0 %v7474
      %v7697 = vpop.f32.mrb[0].mxu0
      %v7698 = vadd.f32 0.0, %v7697
      %v7699 = vpop.f32.mrb[0].mxu0
      %7700 = vdwg.mxu0
      %v7701 = vadd.f32 %v7183, %v7543
      %v7702 = vadd.f32 %v7188, %v7548
      %v7703 = vadd.f32 %v7193, %v7553
      %v7704 = vadd.f32 %v7198, %v7558
      %v7705 = vadd.f32 %v7203, %v7563
      %v7706 = vadd.f32 %v7208, %v7568
      %v7707 = vadd.f32 %v7213, %v7573
      %v7708 = vadd.f32 %v7218, %v7578
      %v7709 = vadd.f32 %v7223, %v7583
      %v7710 = vadd.f32 %v7228, %v7588
      %v7711 = vadd.f32 %v7233, %v7593
      %v7712 = vadd.f32 %v7238, %v7598
      %v7713 = vadd.f32 %v7243, %v7603
      %v7714 = vadd.f32 %v7248, %v7608
      %v7715 = vadd.f32 %v7253, %v7613
      %v7716 = vadd.f32 %v7258, %v7618
      %v7717 = vadd.f32 %v7263, %v7623
      %v7718 = vadd.f32 %v7268, %v7628
      %v7719 = vadd.f32 %v7273, %v7633
      %v7720 = vadd.f32 %v7278, %v7638
      %v7721 = vadd.f32 %v7283, %v7643
      %v7722 = vadd.f32 %v7288, %v7648
      %v7723 = vadd.f32 %v7293, %v7653
      %v7724 = vadd.f32 %v7298, %v7658
      %v7725 = vadd.f32 %v7303, %v7663
      %v7726 = vadd.f32 %v7308, %v7668
      %v7727 = vadd.f32 %v7313, %v7673
      %v7728 = vadd.f32 %v7318, %v7678
      %v7729 = vadd.f32 %v7323, %v7683
      %v7730 = vadd.f32 %v7328, %v7688
      %v7731 = vadd.f32 %v7333, %v7693
      %v7732 = vadd.f32 %v7338, %v7698
      %v7733 = vadd.f32 %v472, %v7701
      %v7734 = vadd.f32 %v473, %v7702
      %v7735 = vadd.f32 %v474, %v7703
      %v7736 = vadd.f32 %v475, %v7704
      %v7737 = vadd.f32 %v476, %v7705
      %v7738 = vadd.f32 %v477, %v7706
      %v7739 = vadd.f32 %v478, %v7707
      %v7740 = vadd.f32 %v479, %v7708
      %v7741 = vadd.f32 %v480, %v7709
      %v7742 = vadd.f32 %v481, %v7710
      %v7743 = vadd.f32 %v482, %v7711
      %v7744 = vadd.f32 %v483, %v7712
      %v7745 = vadd.f32 %v484, %v7713
      %v7746 = vadd.f32 %v485, %v7714
      %v7747 = vadd.f32 %v486, %v7715
      %v7748 = vadd.f32 %v487, %v7716
      %v7749 = vadd.f32 %v488, %v7717
      %v7750 = vadd.f32 %v489, %v7718
      %v7751 = vadd.f32 %v490, %v7719
      %v7752 = vadd.f32 %v491, %v7720
      %v7753 = vadd.f32 %v492, %v7721
      %v7754 = vadd.f32 %v493, %v7722
      %v7755 = vadd.f32 %v494, %v7723
      %v7756 = vadd.f32 %v495, %v7724
      %v7757 = vadd.f32 %v496, %v7725
      %v7758 = vadd.f32 %v497, %v7726
      %v7759 = vadd.f32 %v498, %v7727
      %v7760 = vadd.f32 %v499, %v7728
      %v7761 = vadd.f32 %v500, %v7729
      %v7762 = vadd.f32 %v501, %v7730
      %v7763 = vadd.f32 %v502, %v7731
      %v7764 = vadd.f32 %v503, %v7732
      %v7765 = vld [vmem:[#allocation4] sm:$0x1]
      %v7767 = vlaneseq
      %v7768 = vshrl.u32 %v7767, 7
      %v7769 = vsub.s32 0, %v7768
      %v7770 = vrot.slane %v7765, %v7769
      %v7772 = vadd.f32 %v7733, %v7770
      %v7773 = vadd.f32 %v7734, %v7770
      %v7774 = vadd.f32 %v7735, %v7770
      %v7775 = vadd.f32 %v7736, %v7770
      %v7776 = vadd.f32 %v7737, %v7770
      %v7777 = vadd.f32 %v7738, %v7770
      %v7778 = vadd.f32 %v7739, %v7770
      %v7779 = vadd.f32 %v7740, %v7770
      %v7780 = vadd.f32 %v7741, %v7770
      %v7781 = vadd.f32 %v7742, %v7770
      %v7782 = vadd.f32 %v7743, %v7770
      %v7783 = vadd.f32 %v7744, %v7770
      %v7784 = vadd.f32 %v7745, %v7770
      %v7785 = vadd.f32 %v7746, %v7770
      %v7786 = vadd.f32 %v7747, %v7770
      %v7787 = vadd.f32 %v7748, %v7770
      %v7788 = vadd.f32 %v7749, %v7770
      %v7789 = vadd.f32 %v7750, %v7770
      %v7790 = vadd.f32 %v7751, %v7770
      %v7791 = vadd.f32 %v7752, %v7770
      %v7792 = vadd.f32 %v7753, %v7770
      %v7793 = vadd.f32 %v7754, %v7770
      %v7794 = vadd.f32 %v7755, %v7770
      %v7795 = vadd.f32 %v7756, %v7770
      %v7796 = vadd.f32 %v7757, %v7770
      %v7797 = vadd.f32 %v7758, %v7770
      %v7798 = vadd.f32 %v7759, %v7770
      %v7799 = vadd.f32 %v7760, %v7770
      %v7800 = vadd.f32 %v7761, %v7770
      %v7801 = vadd.f32 %v7762, %v7770
      %v7802 = vadd.f32 %v7763, %v7770
      %v7803 = vadd.f32 %v7764, %v7770
      %7804 = vst.msk [vmem:[%s428] sm:$0xff] %vm856, %v7772
      %7805 = vst.msk [vmem:[%s428 + $0x8] sm:$0xff] %vm856, %v7773
      %7806 = vst.msk [vmem:[%s428 + $0x10] sm:$0xff] %vm856, %v7774
      %7807 = vst.msk [vmem:[%s428 + $0x18] sm:$0xff] %vm856, %v7775
      %7808 = vst.msk [vmem:[%s428 + $0x20] sm:$0xff] %vm856, %v7776
      %7809 = vst.msk [vmem:[%s428 + $0x28] sm:$0xff] %vm856, %v7777
      %7810 = vst.msk [vmem:[%s428 + $0x30] sm:$0xff] %vm856, %v7778
      %7811 = vst.msk [vmem:[%s428 + $0x38] sm:$0xff] %vm856, %v7779
      %7812 = vst.msk [vmem:[%s428 + $0x40] sm:$0xff] %vm856, %v7780
      %7813 = vst.msk [vmem:[%s428 + $0x48] sm:$0xff] %vm856, %v7781
      %7814 = vst.msk [vmem:[%s428 + $0x50] sm:$0xff] %vm856, %v7782
      %7815 = vst.msk [vmem:[%s428 + $0x58] sm:$0xff] %vm856, %v7783
      %7816 = vst.msk [vmem:[%s428 + $0x60] sm:$0xff] %vm856, %v7784
      %7817 = vst.msk [vmem:[%s428 + $0x68] sm:$0xff] %vm856, %v7785
      %7818 = vst.msk [vmem:[%s428 + $0x70] sm:$0xff] %vm856, %v7786
      %7819 = vst.msk [vmem:[%s428 + $0x78] sm:$0xff] %vm856, %v7787
      %7820 = vst.msk [vmem:[%s428 + $0x80] sm:$0xff] %vm856, %v7788
      %7821 = vst.msk [vmem:[%s428 + $0x88] sm:$0xff] %vm856, %v7789
      %7822 = vst.msk [vmem:[%s428 + $0x90] sm:$0xff] %vm856, %v7790
      %7823 = vst.msk [vmem:[%s428 + $0x98] sm:$0xff] %vm856, %v7791
      %7824 = vst.msk [vmem:[%s428 + $0xa0] sm:$0xff] %vm856, %v7792
      %7825 = vst.msk [vmem:[%s428 + $0xa8] sm:$0xff] %vm856, %v7793
      %7826 = vst.msk [vmem:[%s428 + $0xb0] sm:$0xff] %vm856, %v7794
      %7827 = vst.msk [vmem:[%s428 + $0xb8] sm:$0xff] %vm856, %v7795
      %7828 = vst.msk [vmem:[%s428 + $0xc0] sm:$0xff] %vm856, %v7796
      %7829 = vst.msk [vmem:[%s428 + $0xc8] sm:$0xff] %vm856, %v7797
      %7830 = vst.msk [vmem:[%s428 + $0xd0] sm:$0xff] %vm856, %v7798
      %7831 = vst.msk [vmem:[%s428 + $0xd8] sm:$0xff] %vm856, %v7799
      %7832 = vst.msk [vmem:[%s428 + $0xe0] sm:$0xff] %vm856, %v7800
      %7833 = vst.msk [vmem:[%s428 + $0xe8] sm:$0xff] %vm856, %v7801
      %7834 = vst.msk [vmem:[%s428 + $0xf0] sm:$0xff] %vm856, %v7802
      %7835 = vst.msk [vmem:[%s428 + $0xf8] sm:$0xff] %vm856, %v7803
      %p7836 = scmp.lt.s32.totalorder %s24, 1
      %s7837 = scalar_select %p7836, %s24, 1
      %s7838 = smul.addr %s7837, 32
      %s7839 = smul.addr %s7838, 8
      %s7840 = scalar_lea.vmem %s11, %s7839
      // Predicated region
      $region72: #{context_adjustment_forward.1} parent=63 // pred_check
        %p7841 = pneg %p288
      $region73: #{context_adjustment_forward.1} parent=63 // pred_check_branch
        %7843 = sbr.rel (%p7841) target = $region75
      $region74: #{context_adjustment_forward.1} parent=63 // pred_region
        _
      $region75: #{context_adjustment_forward.1} parent=63 // pred_fallthru
        _
    $region64: #{context_adjustment_forward.1} parent=5 // pred_fallthru
      _
    %p7844 = scmp.le.s32.totalorder 2, %s19
    // Predicated region
    $region76: #{context_adjustment_forward.1} parent=5 // pred_check
      %p7845 = pneg %p7844
    $region77: #{context_adjustment_forward.1} parent=5 // pred_check_branch
      %7847 = sbr.rel (%p7845) target = $region79
    $region78: #{context_adjustment_forward.1} parent=5 // pred_region
      %s7848 = ssub.s32 %s19, 2
      // Predicated region
      $region80: #{context_adjustment_forward.1} parent=78 // pred_check
        %p7849 = pneg %p294
      $region81: #{context_adjustment_forward.1} parent=78 // pred_check_branch
        %7851 = sbr.rel (%p7849) target = $region83
      $region82: #{context_adjustment_forward.1} parent=78 // pred_region
        %p7852 = scmp.lt.s32.totalorder %s25, 1
        %s7853 = scalar_select %p7852, %s25, 1
        %s7854 = smul.addr %s7853, 32
        %s7855 = smul.addr %s7854, 8
        %s7856 = scalar_lea.vmem %s11, %s7855
      $region83: #{context_adjustment_forward.1} parent=78 // pred_fallthru
        _
    $region79: #{context_adjustment_forward.1} parent=5 // pred_fallthru
      _
  $region6: #{context_adjustment_forward.1} parent=0 // loop_footer
    %s23 = sadd.s32 1, %s19
  $region7: #{context_adjustment_forward.1} parent=0 // loop_footer_branch
    %18 = sbr.rel target = $region3
  $region8: #{context_adjustment_forward.1} parent=0 // loop_exit
    _

</llo_original>
